<compile_context>
chip_gen: v7x
topology: tpu7x:2x2x1
jax: 0.10.0
libtpu: 0.0.40
codegen_flags: <defaults>
</compile_context>

<pallas_src>
import math

import jax
import jax.numpy as jnp
from jax.experimental import pallas as pl
from jax.experimental.pallas import tpu as pltpu


NEG_INF = -1e30  # large finite negative: exp(NEG_INF - m) underflows to exactly 0, no NaNs.
VMEM_LIMIT = 32 * 1024 * 1024  # == v6e/v7x default scoped limit, raises v5e's 16 MiB; safe on 64 MiB v7x.


# -----------------------------------------------------------------------------
# Kernel 1: fused Q/K/V projection (tiled GEMM, shared x tile, f32 accumulators)
#           with rotate-half RoPE applied to Q and K in the epilogue.
#   Wq/bq carry the 1/sqrt(hd) scale and the per-head deinterleave permutation
#   (Wk/bk carry the permutation), so interleaved RoPE == rotate-half here.
# -----------------------------------------------------------------------------
def qkv_proj_rope_kernel(x_ref, wq_ref, wk_ref, wv_ref, bq_ref, bk_ref, bv_ref,
                         cos_ref, sin_ref, q_ref, k_ref, v_ref,
                         acc_q, acc_k, acc_v):
    @pl.when(pl.program_id(2) == 0)
    def _init():
        acc_q[...] = jnp.zeros(acc_q.shape, jnp.float32)
        acc_k[...] = jnp.zeros(acc_k.shape, jnp.float32)
        acc_v[...] = jnp.zeros(acc_v.shape, jnp.float32)

    x = x_ref[...]  # stays in input dtype (bf16 inputs -> full MXU rate)
    acc_q[...] += jnp.dot(x, wq_ref[...], preferred_element_type=jnp.float32)
    acc_k[...] += jnp.dot(x, wk_ref[...], preferred_element_type=jnp.float32)
    acc_v[...] += jnp.dot(x, wv_ref[...], preferred_element_type=jnp.float32)

    @pl.when(pl.program_id(2) == pl.num_programs(2) - 1)
    def _finalize():
        hd = cos_ref.shape[1]
        cos = cos_ref[...]          # (blk_m, hd) f32, fetched once per row block
        sin = sin_ref[...]
        v_ref[...] = (acc_v[...] + bv_ref[...]).astype(v_ref.dtype)
        # rotate-half RoPE per head slice (lane-aligned 128-wide slices, XLU roll)
        for hb in range(q_ref.shape[1] // hd):
            lo, hi = hb * hd, (hb + 1) * hd
            qa = acc_q[:, lo:hi] + bq_ref[:, lo:hi]
            ka = acc_k[:, lo:hi] + bk_ref[:, lo:hi]
            q_ref[:, lo:hi] = (qa * cos + pltpu.roll(qa, shift=hd // 2, axis=1) * sin
                               ).astype(q_ref.dtype)
            k_ref[:, lo:hi] = (ka * cos + pltpu.roll(ka, shift=hd // 2, axis=1) * sin
                               ).astype(k_ref.dtype)


# -----------------------------------------------------------------------------
# Kernel 2: causal flash attention (Q already RoPE'd and pre-scaled, K RoPE'd).
#   Grid (B, H, q_tiles, kv_tiles); online softmax state in VMEM scratch.
# -----------------------------------------------------------------------------
def flash_attn_kernel(q_ref, k_ref, v_ref, o_ref, m_sc, l_sc, acc_sc):
    qi = pl.program_id(2)
    ki = pl.program_id(3)
    blk_q = q_ref.shape[0]
    blk_kv = k_ref.shape[0]
    q_first = qi * blk_q
    k_first = ki * blk_kv

    @pl.when(ki == 0)
    def _init():
        m_sc[...] = jnp.full(m_sc.shape, NEG_INF, jnp.float32)
        l_sc[...] = jnp.zeros(l_sc.shape, jnp.float32)
        acc_sc[...] = jnp.zeros(acc_sc.shape, jnp.float32)

    def scores():
        return jax.lax.dot_general(
            q_ref[...], k_ref[...],
            dimension_numbers=(((1,), (1,)), ((), ())),
            preferred_element_type=jnp.float32)          # (blk_q, blk_kv)

    def online_softmax_update(s):
        m_prev = m_sc[...]
        m_new = jnp.maximum(m_prev, jnp.max(s, axis=-1, keepdims=True))
        alpha = jnp.exp(m_prev - m_new)
        p = jnp.exp(s - m_new)
        l_sc[...] = alpha * l_sc[...] + jnp.sum(p, axis=-1, keepdims=True)
        acc_sc[...] = alpha * acc_sc[...] + jnp.dot(
            p.astype(v_ref.dtype), v_ref[...], preferred_element_type=jnp.float32)
        m_sc[...] = m_new

    fully_visible = k_first + blk_kv - 1 <= q_first       # whole tile below diagonal
    contributes = k_first <= q_first + blk_q - 1           # at least one unmasked entry

    @pl.when(fully_visible)
    def _full_tile():                                       # no mask work at all
        online_softmax_update(scores())

    @pl.when(contributes & jnp.logical_not(fully_visible))
    def _diag_tile():                                        # per-element causal mask
        s = scores()
        row = q_first + jax.lax.broadcasted_iota(jnp.int32, (blk_q, 1), 0)
        col = k_first + jax.lax.broadcasted_iota(jnp.int32, (1, blk_kv), 1)
        online_softmax_update(jnp.where(col <= row, s, NEG_INF))

    @pl.when(ki == pl.num_programs(3) - 1)
    def _finalize():
        inv_l = pl.reciprocal(l_sc[...], approx=True)     # EUP slot (nearly free)
        inv_l = inv_l * (2.0 - l_sc[...] * inv_l)         # one Newton step for accuracy
        o_ref[...] = (acc_sc[...] * inv_l).astype(o_ref.dtype)


# -----------------------------------------------------------------------------
# Kernel 3: output projection (tiled GEMM + bias).
# -----------------------------------------------------------------------------
def linear_kernel(x_ref, w_ref, b_ref, o_ref, acc):
    @pl.when(pl.program_id(2) == 0)
    def _init():
        acc[...] = jnp.zeros(acc.shape, jnp.float32)

    acc[...] += jnp.dot(x_ref[...], w_ref[...], preferred_element_type=jnp.float32)

    @pl.when(pl.program_id(2) == pl.num_programs(2) - 1)
    def _finalize():
        o_ref[...] = (acc[...] + b_ref[...]).astype(o_ref.dtype)


# -----------------------------------------------------------------------------
# Host-side helpers + wrapper.
# -----------------------------------------------------------------------------
def _rope_tables(T, head_dim):
    """cos/sin tables in rotate-half layout, shape (T, head_dim), float32."""
    pos = jnp.arange(T, dtype=jnp.float32)[:, None]
    dim = jnp.arange(head_dim // 2, dtype=jnp.float32)[None, :]
    theta = pos / jnp.exp(2.0 * dim / head_dim * math.log(10000.0))
    cos_h = jnp.cos(theta)
    sin_h = jnp.sin(theta)
    cos_t = jnp.concatenate([cos_h, cos_h], axis=1)       # (T, hd)
    sin_t = jnp.concatenate([-sin_h, sin_h], axis=1)      # (T, hd): -sin | +sin
    return cos_t, sin_t


def multi_head_attention(x, params, n_heads, *,
                         block_m=512, block_n=512, block_c=512,
                         block_q=512, block_kv=256, compute_dtype=None):
    B, T, D = x.shape
    assert D % n_heads == 0
    hd = D // n_heads
    # lane-aligned head_dim keeps every tile/store unmasked (vst, not vst.msk)
    assert hd % 128 == 0, "head_dim must be a multiple of 128 for this kernel"
    wq, bq, wk, bk, wv, bv, wo, bo = params

    blk_m = min(block_m, B * T)
    blk_n = min(block_n, D)
    blk_c = min(block_c, D)
    blk_q = min(block_q, T)
    blk_kv = min(block_kv, T)
    assert (B * T) % blk_m == 0 and D % blk_n == 0 and D % blk_c == 0
    assert blk_n % hd == 0                      # epilogue RoPE works per head slice
    assert T % blk_q == 0 and T % blk_kv == 0

    dt = compute_dtype if compute_dtype is not None else x.dtype

    # --- one-time host-side constant prep (folded into the weights) -----------
    # Per-head deinterleave permutation (even features first, then odd).  Applied
    # identically to q and k it leaves q.k scores unchanged while turning
    # interleaved RoPE into the rotate-half form used inside the kernel.
    p_local = jnp.concatenate([jnp.arange(0, hd, 2), jnp.arange(1, hd, 2)])
    perm = (jnp.arange(n_heads)[:, None] * hd + p_local[None, :]).reshape(D)
    scale = 1.0 / math.sqrt(hd)                 # folded into Wq/bq (scale once, not O(T^2))

    x2 = x.reshape(B * T, D).astype(dt)
    wq_t = (wq.T[:, perm] * scale).astype(dt)
    bq_p = (bq[perm] * scale).astype(jnp.float32)[None, :]
    wk_t = wk.T[:, perm].astype(dt)
    bk_p = bk[perm].astype(jnp.float32)[None, :]
    wv_t = wv.T.astype(dt)
    bv_p = bv.astype(jnp.float32)[None, :]
    wo_t = wo.T.astype(dt)
    bo_p = bo.astype(jnp.float32)[None, :]

    cos_t, sin_t = _rope_tables(T, hd)          # (T, hd) f32
    cos_bt = jnp.tile(cos_t, (B, 1))            # (B*T, hd): row r -> position r % T
    sin_bt = jnp.tile(sin_t, (B, 1))

    gemm_cparams = pltpu.CompilerParams(
        dimension_semantics=("parallel", "parallel", "arbitrary"),
        vmem_limit_bytes=VMEM_LIMIT)

    # --- 1) fused QKV projection + RoPE epilogue -------------------------------
    grid_mm = ((B * T) // blk_m, D // blk_n, D // blk_c)

    q, k, v = pl.pallas_call(
        qkv_proj_rope_kernel,
        out_shape=[jax.ShapeDtypeStruct((B * T, D), dt),
                   jax.ShapeDtypeStruct((B * T, D), dt),
                   jax.ShapeDtypeStruct((B * T, D), dt)],
        grid_spec=pltpu.PrefetchScalarGridSpec(
            num_scalar_prefetch=0,
            grid=grid_mm,
            in_specs=[
                pl.BlockSpec((blk_m, blk_c), lambda i, j, kk: (i, kk)),   # x
                pl.BlockSpec((blk_c, blk_n), lambda i, j, kk: (kk, j)),   # Wq^T (perm+scale)
                pl.BlockSpec((blk_c, blk_n), lambda i, j, kk: (kk, j)),   # Wk^T (perm)
                pl.BlockSpec((blk_c, blk_n), lambda i, j, kk: (kk, j)),   # Wv^T
                pl.BlockSpec((1, blk_n), lambda i, j, kk: (0, j)),        # bq (f32)
                pl.BlockSpec((1, blk_n), lambda i, j, kk: (0, j)),        # bk (f32)
                pl.BlockSpec((1, blk_n), lambda i, j, kk: (0, j)),        # bv (f32)
                pl.BlockSpec((blk_m, hd), lambda i, j, kk: (i, 0)),       # cos (per row)
                pl.BlockSpec((blk_m, hd), lambda i, j, kk: (i, 0)),       # sin (per row)
            ],
            out_specs=[
                pl.BlockSpec((blk_m, blk_n), lambda i, j, kk: (i, j)),
                pl.BlockSpec((blk_m, blk_n), lambda i, j, kk: (i, j)),
                pl.BlockSpec((blk_m, blk_n), lambda i, j, kk: (i, j)),
            ],
            scratch_shapes=[
                pltpu.VMEM((blk_m, blk_n), jnp.float32),
                pltpu.VMEM((blk_m, blk_n), jnp.float32),
                pltpu.VMEM((blk_m, blk_n), jnp.float32),
            ],
        ),
        compiler_params=gemm_cparams,
    )(x2, wq_t, wk_t, wv_t, bq_p, bk_p, bv_p, cos_bt, sin_bt)

    # --- 2) flash attention (no head split/merge: heads indexed via BlockSpec) --
    nq = T // blk_q
    nk = T // blk_kv

    def q_map(b, h, i, j):
        return (b * nq + i, h)

    def kv_map(b, h, i, j):
        # Clamp to the last KV tile the current q tile can see: fully-masked
        # tiles keep the same block index, so Pallas skips their DMA entirely.
        last = (i * blk_q + (blk_q - 1)) // blk_kv
        return (b * nk + jnp.minimum(j, last), h)

    ctx = pl.pallas_call(
        flash_attn_kernel,
        out_shape=jax.ShapeDtypeStruct((B * T, D), dt),
        grid_spec=pltpu.PrefetchScalarGridSpec(
            num_scalar_prefetch=0,
            grid=(B, n_heads, nq, nk),
            in_specs=[
                pl.BlockSpec((blk_q, hd), q_map),     # q (pre-scaled, RoPE'd)
                pl.BlockSpec((blk_kv, hd), kv_map),   # k (RoPE'd)
                pl.BlockSpec((blk_kv, hd), kv_map),   # v
            ],
            out_specs=pl.BlockSpec((blk_q, hd), q_map),
            scratch_shapes=[
                pltpu.VMEM((blk_q, 1), jnp.float32),    # running max
                pltpu.VMEM((blk_q, 1), jnp.float32),    # running sum
                pltpu.VMEM((blk_q, hd), jnp.float32),   # output accumulator
            ],
        ),
        compiler_params=pltpu.CompilerParams(
            dimension_semantics=("parallel", "parallel", "parallel", "arbitrary"),
            vmem_limit_bytes=VMEM_LIMIT),
    )(q, k, v)

    # --- 3) output projection ---------------------------------------------------
    out = pl.pallas_call(
        linear_kernel,
        out_shape=jax.ShapeDtypeStruct((B * T, D), dt),
        grid_spec=pltpu.PrefetchScalarGridSpec(
            num_scalar_prefetch=0,
            grid=grid_mm,
            in_specs=[
                pl.BlockSpec((blk_m, blk_c), lambda i, j, kk: (i, kk)),
                pl.BlockSpec((blk_c, blk_n), lambda i, j, kk: (kk, j)),
                pl.BlockSpec((1, blk_n), lambda i, j, kk: (0, j)),
            ],
            out_specs=pl.BlockSpec((blk_m, blk_n), lambda i, j, kk: (i, j)),
            scratch_shapes=[pltpu.VMEM((blk_m, blk_n), jnp.float32)],
        ),
        compiler_params=gemm_cparams,
    )(ctx, wo_t, bo_p)

    return out.reshape(B, T, D)


# -----------------------------------------------------------------------------
# Plain-JAX reference mirroring the PyTorch module semantics.
# -----------------------------------------------------------------------------
def mha_reference(x, params, n_heads):
    B, T, D = x.shape
    head_dim = D // n_heads
    wq, bq, wk, bk, wv, bv, wo, bo = params

    def rope(z):  # z: (B, H, T, hd), interleaved RoPE
        pos = jnp.arange(T, dtype=jnp.float32)[:, None]
        dim = jnp.arange(head_dim // 2, dtype=jnp.float32)[None, :]
        theta = pos / jnp.exp(2.0 * dim / head_dim * math.log(10000.0))
        sin, cos = jnp.sin(theta), jnp.cos(theta)           # (T, hd/2)
        z1, z2 = z[..., ::2], z[..., 1::2]
        o1 = z1 * cos - z2 * sin
        o2 = z1 * sin + z2 * cos
        return jnp.stack([o1, o2], axis=-1).reshape(z.shape)

    def split(z):
        return z.reshape(B, T, n_heads, head_dim).transpose(0, 2, 1, 3)

    q = rope(split(x @ wq.T + bq))
    k = rope(split(x @ wk.T + bk))
    v = split(x @ wv.T + bv)
    s = (q @ k.transpose(0, 1, 3, 2)) / math.sqrt(head_dim)
    mask = jnp.tril(jnp.ones((T, T), bool))
    s = jnp.where(mask, s, -jnp.inf)
    p = jax.nn.softmax(s, axis=-1)
    out = (p @ v).transpose(0, 2, 1, 3).reshape(B, T, D)
    return out @ wo.T + bo


if __name__ == "__main__":
    # Small but TPU-aligned shapes: lanes = 128-multiples, head_dim = 128.
    B, T, D, n_heads = 2, 128, 512, 4

    key = jax.random.PRNGKey(0)
    keys = jax.random.split(key, 9)
    x = jax.random.normal(keys[0], (B, T, D), jnp.float32)
    params = (
        jax.random.normal(keys[1], (D, D), jnp.float32) * 0.05,  # Wq
        jax.random.normal(keys[2], (D,), jnp.float32) * 0.05,    # bq
        jax.random.normal(keys[3], (D, D), jnp.float32) * 0.05,  # Wk
        jax.random.normal(keys[4], (D,), jnp.float32) * 0.05,    # bk
        jax.random.normal(keys[5], (D, D), jnp.float32) * 0.05,  # Wv
        jax.random.normal(keys[6], (D,), jnp.float32) * 0.05,    # bv
        jax.random.normal(keys[7], (D, D), jnp.float32) * 0.05,  # Wo
        jax.random.normal(keys[8], (D,), jnp.float32) * 0.05,    # bo
    )

    ref = jax.block_until_ready(mha_reference(x, params, n_heads))

    # f32 run (tight numerical check); blk_q/blk_kv = 64 so the demo exercises the
    # multi-step online softmax, the diagonal-mask branch, and the KV DMA clamp.
    out = multi_head_attention(x, params, n_heads, block_q=64, block_kv=64)
    out = jax.block_until_ready(out)
    assert out.shape == (B, T, D)
    max_err = float(jnp.max(jnp.abs(out - ref)))
    assert jnp.allclose(out, ref, atol=2e-3, rtol=2e-3), max_err

    # bf16 run (full MXU-rate path requested by the perf review); looser check.
    out_bf16 = multi_head_attention(x, params, n_heads, block_q=64, block_kv=64,
                                    compute_dtype=jnp.bfloat16)
    out_bf16 = jax.block_until_ready(out_bf16).astype(jnp.float32)
    err = jnp.abs(out_bf16 - ref)
    assert bool(jnp.all(jnp.isfinite(out_bf16)))
    assert float(jnp.mean(err)) < 5e-2 and float(jnp.max(err)) < 5e-1, (
        float(jnp.mean(err)), float(jnp.max(err)))

    print("KERNEL_OK")
</pallas_src>

<mosaic_0001>
module attributes {stable_mosaic.version = 11 : i64} {
  func.func @qkv_proj_rope_kernel(%arg0: i32, %arg1: i32, %arg2: i32, %arg3: memref<256x512xf32, #tpu.memory_space<vmem>>, %arg4: memref<512x512xf32, #tpu.memory_space<vmem>>, %arg5: memref<512x512xf32, #tpu.memory_space<vmem>>, %arg6: memref<512x512xf32, #tpu.memory_space<vmem>>, %arg7: memref<1x512xf32, #tpu.memory_space<vmem>>, %arg8: memref<1x512xf32, #tpu.memory_space<vmem>>, %arg9: memref<1x512xf32, #tpu.memory_space<vmem>>, %arg10: memref<256x128xf32, #tpu.memory_space<vmem>>, %arg11: memref<256x128xf32, #tpu.memory_space<vmem>>, %arg12: memref<256x512xf32, #tpu.memory_space<vmem>>, %arg13: memref<256x512xf32, #tpu.memory_space<vmem>>, %arg14: memref<256x512xf32, #tpu.memory_space<vmem>>, %arg15: memref<256x512xf32, #tpu.memory_space<vmem>>, %arg16: memref<256x512xf32, #tpu.memory_space<vmem>>, %arg17: memref<256x512xf32, #tpu.memory_space<vmem>>) attributes {dimension_semantics = [#tpu.dimension_semantics<parallel>, #tpu.dimension_semantics<parallel>, #tpu.dimension_semantics<arbitrary>], iteration_bounds = array<i64: 1, 1, 1>, scalar_prefetch = 0 : i64, scratch_operands = 3 : i64, tpu.core_type = #tpu.core_type<tc>, window_params = [{transform_indices = @transform_0, window_bounds = array<i64: 256, 512>}, {transform_indices = @transform_1, window_bounds = array<i64: 512, 512>}, {transform_indices = @transform_2, window_bounds = array<i64: 512, 512>}, {transform_indices = @transform_3, window_bounds = array<i64: 512, 512>}, {transform_indices = @transform_4, window_bounds = array<i64: 1, 512>}, {transform_indices = @transform_5, window_bounds = array<i64: 1, 512>}, {transform_indices = @transform_6, window_bounds = array<i64: 1, 512>}, {transform_indices = @transform_7, window_bounds = array<i64: 256, 128>}, {transform_indices = @transform_8, window_bounds = array<i64: 256, 128>}, {transform_indices = @transform_9, window_bounds = array<i64: 256, 512>}, {transform_indices = @transform_10, window_bounds = array<i64: 256, 512>}, {transform_indices = @transform_11, window_bounds = array<i64: 256, 512>}]} {
    %c0_i32 = arith.constant 0 : i32
    %0 = arith.cmpi eq, %arg2, %c0_i32 : i32
    %1 = arith.extui %0 : i1 to i32
    %c0_i32_0 = arith.constant 0 : i32
    %2 = arith.cmpi ne, %1, %c0_i32_0 : i32
    scf.if %2 {
      %cst_24 = arith.constant 0.000000e+00 : f32
      %22 = vector.broadcast %cst_24 : f32 to vector<256x512xf32>
      %c0_25 = arith.constant 0 : index
      %c0_26 = arith.constant 0 : index
      %23 = vector.load %arg15[%c0_25, %c0_26] : memref<256x512xf32, #tpu.memory_space<vmem>>, vector<256x512xf32>
      tpu.vector_store %arg15[%c0_25, %c0_26], %22 {strides = array<i32>} : memref<256x512xf32, #tpu.memory_space<vmem>>, vector<256x512xf32>,
      %cst_27 = arith.constant 0.000000e+00 : f32
      %24 = vector.broadcast %cst_27 : f32 to vector<256x512xf32>
      %c0_28 = arith.constant 0 : index
      %c0_29 = arith.constant 0 : index
      %25 = vector.load %arg16[%c0_28, %c0_29] : memref<256x512xf32, #tpu.memory_space<vmem>>, vector<256x512xf32>
      tpu.vector_store %arg16[%c0_28, %c0_29], %24 {strides = array<i32>} : memref<256x512xf32, #tpu.memory_space<vmem>>, vector<256x512xf32>,
      %cst_30 = arith.constant 0.000000e+00 : f32
      %26 = vector.broadcast %cst_30 : f32 to vector<256x512xf32>
      %c0_31 = arith.constant 0 : index
      %c0_32 = arith.constant 0 : index
      %27 = vector.load %arg17[%c0_31, %c0_32] : memref<256x512xf32, #tpu.memory_space<vmem>>, vector<256x512xf32>
      tpu.vector_store %arg17[%c0_31, %c0_32], %26 {strides = array<i32>} : memref<256x512xf32, #tpu.memory_space<vmem>>, vector<256x512xf32>,
    } else {
    }
    %c0 = arith.constant 0 : index
    %c0_1 = arith.constant 0 : index
    %3 = vector.load %arg3[%c0, %c0_1] : memref<256x512xf32, #tpu.memory_space<vmem>>, vector<256x512xf32>
    %c0_2 = arith.constant 0 : index
    %c0_3 = arith.constant 0 : index
    %4 = vector.load %arg15[%c0_2, %c0_3] : memref<256x512xf32, #tpu.memory_space<vmem>>, vector<256x512xf32>
    %c0_4 = arith.constant 0 : index
    %c0_5 = arith.constant 0 : index
    %5 = vector.load %arg4[%c0_4, %c0_5] : memref<512x512xf32, #tpu.memory_space<vmem>>, vector<512x512xf32>
    %cst = arith.constant dense<0.000000e+00> : vector<256x512xf32>
    %6 = tpu.matmul %3, %5, %cst {dimension_numbers = #tpu.dot_dimension_numbers<[1], [0], [0], [1], [0, 0, 1, 1], [], []>} : vector<256x512xf32>, vector<512x512xf32>, vector<256x512xf32> -> vector<256x512xf32>
    %7 = arith.addf %4, %6 : vector<256x512xf32>
    %c0_6 = arith.constant 0 : index
    %c0_7 = arith.constant 0 : index
    %8 = vector.load %arg15[%c0_6, %c0_7] : memref<256x512xf32, #tpu.memory_space<vmem>>, vector<256x512xf32>
    tpu.vector_store %arg15[%c0_6, %c0_7], %7 {strides = array<i32>} : memref<256x512xf32, #tpu.memory_space<vmem>>, vector<256x512xf32>,
    %c0_8 = arith.constant 0 : index
    %c0_9 = arith.constant 0 : index
    %9 = vector.load %arg16[%c0_8, %c0_9] : memref<256x512xf32, #tpu.memory_space<vmem>>, vector<256x512xf32>
    %c0_10 = arith.constant 0 : index
    %c0_11 = arith.constant 0 : index
    %10 = vector.load %arg5[%c0_10, %c0_11] : memref<512x512xf32, #tpu.memory_space<vmem>>, vector<512x512xf32>
    %cst_12 = arith.constant dense<0.000000e+00> : vector<256x512xf32>
    %11 = tpu.matmul %3, %10, %cst_12 {dimension_numbers = #tpu.dot_dimension_numbers<[1], [0], [0], [1], [0, 0, 1, 1], [], []>} : vector<256x512xf32>, vector<512x512xf32>, vector<256x512xf32> -> vector<256x512xf32>
    %12 = arith.addf %9, %11 : vector<256x512xf32>
    %c0_13 = arith.constant 0 : index
    %c0_14 = arith.constant 0 : index
    %13 = vector.load %arg16[%c0_13, %c0_14] : memref<256x512xf32, #tpu.memory_space<vmem>>, vector<256x512xf32>
    tpu.vector_store %arg16[%c0_13, %c0_14], %12 {strides = array<i32>} : memref<256x512xf32, #tpu.memory_space<vmem>>, vector<256x512xf32>,
    %c0_15 = arith.constant 0 : index
    %c0_16 = arith.constant 0 : index
    %14 = vector.load %arg17[%c0_15, %c0_16] : memref<256x512xf32, #tpu.memory_space<vmem>>, vector<256x512xf32>
    %c0_17 = arith.constant 0 : index
    %c0_18 = arith.constant 0 : index
    %15 = vector.load %arg6[%c0_17, %c0_18] : memref<512x512xf32, #tpu.memory_space<vmem>>, vector<512x512xf32>
    %cst_19 = arith.constant dense<0.000000e+00> : vector<256x512xf32>
    %16 = tpu.matmul %3, %15, %cst_19 {dimension_numbers = #tpu.dot_dimension_numbers<[1], [0], [0], [1], [0, 0, 1, 1], [], []>} : vector<256x512xf32>, vector<512x512xf32>, vector<256x512xf32> -> vector<256x512xf32>
    %17 = arith.addf %14, %16 : vector<256x512xf32>
    %c0_20 = arith.constant 0 : index
    %c0_21 = arith.constant 0 : index
    %18 = vector.load %arg17[%c0_20, %c0_21] : memref<256x512xf32, #tpu.memory_space<vmem>>, vector<256x512xf32>
    tpu.vector_store %arg17[%c0_20, %c0_21], %17 {strides = array<i32>} : memref<256x512xf32, #tpu.memory_space<vmem>>, vector<256x512xf32>,
    %c0_i32_22 = arith.constant 0 : i32
    %19 = arith.cmpi eq, %arg2, %c0_i32_22 : i32
    %20 = arith.extui %19 : i1 to i32
    %c0_i32_23 = arith.constant 0 : i32
    %21 = arith.cmpi ne, %20, %c0_i32_23 : i32
    scf.if %21 {
      %c0_24 = arith.constant 0 : index
      %c0_25 = arith.constant 0 : index
      %22 = vector.load %arg10[%c0_24, %c0_25] : memref<256x128xf32, #tpu.memory_space<vmem>>, vector<256x128xf32>
      %c0_26 = arith.constant 0 : index
      %c0_27 = arith.constant 0 : index
      %23 = vector.load %arg11[%c0_26, %c0_27] : memref<256x128xf32, #tpu.memory_space<vmem>>, vector<256x128xf32>
      %c0_28 = arith.constant 0 : index
      %c0_29 = arith.constant 0 : index
      %24 = vector.load %arg17[%c0_28, %c0_29] : memref<256x512xf32, #tpu.memory_space<vmem>>, vector<256x512xf32>
      %c0_30 = arith.constant 0 : index
      %c0_31 = arith.constant 0 : index
      %25 = vector.load %arg9[%c0_30, %c0_31] : memref<1x512xf32, #tpu.memory_space<vmem>>, vector<1x512xf32>
      %26 = vector.broadcast %25 : vector<1x512xf32> to vector<256x512xf32>
      %27 = arith.addf %24, %26 : vector<256x512xf32>
      %c0_32 = arith.constant 0 : index
      %c0_33 = arith.constant 0 : index
      %28 = vector.load %arg14[%c0_32, %c0_33] : memref<256x512xf32, #tpu.memory_space<vmem>>, vector<256x512xf32>
      tpu.vector_store %arg14[%c0_32, %c0_33], %27 {strides = array<i32>} : memref<256x512xf32, #tpu.memory_space<vmem>>, vector<256x512xf32>,
      %c0_34 = arith.constant 0 : index
      %c0_35 = arith.constant 0 : index
      %29 = vector.load %arg15[%c0_34, %c0_35] : memref<256x512xf32, #tpu.memory_space<vmem>>, vector<256x128xf32>
      %c0_36 = arith.constant 0 : index
      %c0_37 = arith.constant 0 : index
      %30 = vector.load %arg7[%c0_36, %c0_37] : memref<1x512xf32, #tpu.memory_space<vmem>>, vector<1x128xf32>
      %31 = vector.broadcast %30 : vector<1x128xf32> to vector<256x128xf32>
      %32 = arith.addf %29, %31 : vector<256x128xf32>
      %c0_38 = arith.constant 0 : index
      %c0_39 = arith.constant 0 : index
      %33 = vector.load %arg16[%c0_38, %c0_39] : memref<256x512xf32, #tpu.memory_space<vmem>>, vector<256x128xf32>
      %c0_40 = arith.constant 0 : index
      %c0_41 = arith.constant 0 : index
      %34 = vector.load %arg8[%c0_40, %c0_41] : memref<1x512xf32, #tpu.memory_space<vmem>>, vector<1x128xf32>
      %35 = vector.broadcast %34 : vector<1x128xf32> to vector<256x128xf32>
      %36 = arith.addf %33, %35 : vector<256x128xf32>
      %37 = arith.mulf %32, %22 : vector<256x128xf32>
      %c64_i32 = arith.constant 64 : i32
      %38 = tpu.dynamic_rotate %32 by %c64_i32 dim 1 : vector<256x128xf32>, i32 -> vector<256x128xf32>
      %39 = arith.mulf %38, %23 : vector<256x128xf32>
      %40 = arith.addf %37, %39 : vector<256x128xf32>
      %c0_42 = arith.constant 0 : index
      %c0_43 = arith.constant 0 : index
      %41 = vector.load %arg12[%c0_42, %c0_43] : memref<256x512xf32, #tpu.memory_space<vmem>>, vector<256x128xf32>
      tpu.vector_store %arg12[%c0_42, %c0_43], %40 {strides = array<i32>} : memref<256x512xf32, #tpu.memory_space<vmem>>, vector<256x128xf32>,
      %42 = arith.mulf %36, %22 : vector<256x128xf32>
      %c64_i32_44 = arith.constant 64 : i32
      %43 = tpu.dynamic_rotate %36 by %c64_i32_44 dim 1 : vector<256x128xf32>, i32 -> vector<256x128xf32>
      %44 = arith.mulf %43, %23 : vector<256x128xf32>
      %45 = arith.addf %42, %44 : vector<256x128xf32>
      %c0_45 = arith.constant 0 : index
      %c0_46 = arith.constant 0 : index
      %46 = vector.load %arg13[%c0_45, %c0_46] : memref<256x512xf32, #tpu.memory_space<vmem>>, vector<256x128xf32>
      tpu.vector_store %arg13[%c0_45, %c0_46], %45 {strides = array<i32>} : memref<256x512xf32, #tpu.memory_space<vmem>>, vector<256x128xf32>,
      %c0_47 = arith.constant 0 : index
      %c128 = arith.constant 128 : index
      %47 = vector.load %arg15[%c0_47, %c128] : memref<256x512xf32, #tpu.memory_space<vmem>>, vector<256x128xf32>
      %c0_48 = arith.constant 0 : index
      %c128_49 = arith.constant 128 : index
      %48 = vector.load %arg7[%c0_48, %c128_49] : memref<1x512xf32, #tpu.memory_space<vmem>>, vector<1x128xf32>
      %49 = vector.broadcast %48 : vector<1x128xf32> to vector<256x128xf32>
      %50 = arith.addf %47, %49 : vector<256x128xf32>
      %c0_50 = arith.constant 0 : index
      %c128_51 = arith.constant 128 : index
      %51 = vector.load %arg16[%c0_50, %c128_51] : memref<256x512xf32, #tpu.memory_space<vmem>>, vector<256x128xf32>
      %c0_52 = arith.constant 0 : index
      %c128_53 = arith.constant 128 : index
      %52 = vector.load %arg8[%c0_52, %c128_53] : memref<1x512xf32, #tpu.memory_space<vmem>>, vector<1x128xf32>
      %53 = vector.broadcast %52 : vector<1x128xf32> to vector<256x128xf32>
      %54 = arith.addf %51, %53 : vector<256x128xf32>
      %55 = arith.mulf %50, %22 : vector<256x128xf32>
      %c64_i32_54 = arith.constant 64 : i32
      %56 = tpu.dynamic_rotate %50 by %c64_i32_54 dim 1 : vector<256x128xf32>, i32 -> vector<256x128xf32>
      %57 = arith.mulf %56, %23 : vector<256x128xf32>
      %58 = arith.addf %55, %57 : vector<256x128xf32>
      %c0_55 = arith.constant 0 : index
      %c128_56 = arith.constant 128 : index
      %59 = vector.load %arg12[%c0_55, %c128_56] : memref<256x512xf32, #tpu.memory_space<vmem>>, vector<256x128xf32>
      tpu.vector_store %arg12[%c0_55, %c128_56], %58 {strides = array<i32>} : memref<256x512xf32, #tpu.memory_space<vmem>>, vector<256x128xf32>,
      %60 = arith.mulf %54, %22 : vector<256x128xf32>
      %c64_i32_57 = arith.constant 64 : i32
      %61 = tpu.dynamic_rotate %54 by %c64_i32_57 dim 1 : vector<256x128xf32>, i32 -> vector<256x128xf32>
      %62 = arith.mulf %61, %23 : vector<256x128xf32>
      %63 = arith.addf %60, %62 : vector<256x128xf32>
      %c0_58 = arith.constant 0 : index
      %c128_59 = arith.constant 128 : index
      %64 = vector.load %arg13[%c0_58, %c128_59] : memref<256x512xf32, #tpu.memory_space<vmem>>, vector<256x128xf32>
      tpu.vector_store %arg13[%c0_58, %c128_59], %63 {strides = array<i32>} : memref<256x512xf32, #tpu.memory_space<vmem>>, vector<256x128xf32>,
      %c0_60 = arith.constant 0 : index
      %c256 = arith.constant 256 : index
      %65 = vector.load %arg15[%c0_60, %c256] : memref<256x512xf32, #tpu.memory_space<vmem>>, vector<256x128xf32>
      %c0_61 = arith.constant 0 : index
      %c256_62 = arith.constant 256 : index
      %66 = vector.load %arg7[%c0_61, %c256_62] : memref<1x512xf32, #tpu.memory_space<vmem>>, vector<1x128xf32>
      %67 = vector.broadcast %66 : vector<1x128xf32> to vector<256x128xf32>
      %68 = arith.addf %65, %67 : vector<256x128xf32>
      %c0_63 = arith.constant 0 : index
      %c256_64 = arith.constant 256 : index
      %69 = vector.load %arg16[%c0_63, %c256_64] : memref<256x512xf32, #tpu.memory_space<vmem>>, vector<256x128xf32>
      %c0_65 = arith.constant 0 : index
      %c256_66 = arith.constant 256 : index
      %70 = vector.load %arg8[%c0_65, %c256_66] : memref<1x512xf32, #tpu.memory_space<vmem>>, vector<1x128xf32>
      %71 = vector.broadcast %70 : vector<1x128xf32> to vector<256x128xf32>
      %72 = arith.addf %69, %71 : vector<256x128xf32>
      %73 = arith.mulf %68, %22 : vector<256x128xf32>
      %c64_i32_67 = arith.constant 64 : i32
      %74 = tpu.dynamic_rotate %68 by %c64_i32_67 dim 1 : vector<256x128xf32>, i32 -> vector<256x128xf32>
      %75 = arith.mulf %74, %23 : vector<256x128xf32>
      %76 = arith.addf %73, %75 : vector<256x128xf32>
      %c0_68 = arith.constant 0 : index
      %c256_69 = arith.constant 256 : index
      %77 = vector.load %arg12[%c0_68, %c256_69] : memref<256x512xf32, #tpu.memory_space<vmem>>, vector<256x128xf32>
      tpu.vector_store %arg12[%c0_68, %c256_69], %76 {strides = array<i32>} : memref<256x512xf32, #tpu.memory_space<vmem>>, vector<256x128xf32>,
      %78 = arith.mulf %72, %22 : vector<256x128xf32>
      %c64_i32_70 = arith.constant 64 : i32
      %79 = tpu.dynamic_rotate %72 by %c64_i32_70 dim 1 : vector<256x128xf32>, i32 -> vector<256x128xf32>
      %80 = arith.mulf %79, %23 : vector<256x128xf32>
      %81 = arith.addf %78, %80 : vector<256x128xf32>
      %c0_71 = arith.constant 0 : index
      %c256_72 = arith.constant 256 : index
      %82 = vector.load %arg13[%c0_71, %c256_72] : memref<256x512xf32, #tpu.memory_space<vmem>>, vector<256x128xf32>
      tpu.vector_store %arg13[%c0_71, %c256_72], %81 {strides = array<i32>} : memref<256x512xf32, #tpu.memory_space<vmem>>, vector<256x128xf32>,
      %c0_73 = arith.constant 0 : index
      %c384 = arith.constant 384 : index
      %83 = vector.load %arg15[%c0_73, %c384] : memref<256x512xf32, #tpu.memory_space<vmem>>, vector<256x128xf32>
      %c0_74 = arith.constant 0 : index
      %c384_75 = arith.constant 384 : index
      %84 = vector.load %arg7[%c0_74, %c384_75] : memref<1x512xf32, #tpu.memory_space<vmem>>, vector<1x128xf32>
      %85 = vector.broadcast %84 : vector<1x128xf32> to vector<256x128xf32>
      %86 = arith.addf %83, %85 : vector<256x128xf32>
      %c0_76 = arith.constant 0 : index
      %c384_77 = arith.constant 384 : index
      %87 = vector.load %arg16[%c0_76, %c384_77] : memref<256x512xf32, #tpu.memory_space<vmem>>, vector<256x128xf32>
      %c0_78 = arith.constant 0 : index
      %c384_79 = arith.constant 384 : index
      %88 = vector.load %arg8[%c0_78, %c384_79] : memref<1x512xf32, #tpu.memory_space<vmem>>, vector<1x128xf32>
      %89 = vector.broadcast %88 : vector<1x128xf32> to vector<256x128xf32>
      %90 = arith.addf %87, %89 : vector<256x128xf32>
      %91 = arith.mulf %86, %22 : vector<256x128xf32>
      %c64_i32_80 = arith.constant 64 : i32
      %92 = tpu.dynamic_rotate %86 by %c64_i32_80 dim 1 : vector<256x128xf32>, i32 -> vector<256x128xf32>
      %93 = arith.mulf %92, %23 : vector<256x128xf32>
      %94 = arith.addf %91, %93 : vector<256x128xf32>
      %c0_81 = arith.constant 0 : index
      %c384_82 = arith.constant 384 : index
      %95 = vector.load %arg12[%c0_81, %c384_82] : memref<256x512xf32, #tpu.memory_space<vmem>>, vector<256x128xf32>
      tpu.vector_store %arg12[%c0_81, %c384_82], %94 {strides = array<i32>} : memref<256x512xf32, #tpu.memory_space<vmem>>, vector<256x128xf32>,
      %96 = arith.mulf %90, %22 : vector<256x128xf32>
      %c64_i32_83 = arith.constant 64 : i32
      %97 = tpu.dynamic_rotate %90 by %c64_i32_83 dim 1 : vector<256x128xf32>, i32 -> vector<256x128xf32>
      %98 = arith.mulf %97, %23 : vector<256x128xf32>
      %99 = arith.addf %96, %98 : vector<256x128xf32>
      %c0_84 = arith.constant 0 : index
      %c384_85 = arith.constant 384 : index
      %100 = vector.load %arg13[%c0_84, %c384_85] : memref<256x512xf32, #tpu.memory_space<vmem>>, vector<256x128xf32>
      tpu.vector_store %arg13[%c0_84, %c384_85], %99 {strides = array<i32>} : memref<256x512xf32, #tpu.memory_space<vmem>>, vector<256x128xf32>,
    } else {
    }
    return
  }
  func.func @transform_0(%arg0: i32, %arg1: i32, %arg2: i32) -> (i32, i32) {
    %c0_i32 = arith.constant 0 : i32
    return %arg0, %arg2 : i32, i32
  }
  func.func @transform_1(%arg0: i32, %arg1: i32, %arg2: i32) -> (i32, i32) {
    %c0_i32 = arith.constant 0 : i32
    return %arg2, %arg1 : i32, i32
  }
  func.func @transform_2(%arg0: i32, %arg1: i32, %arg2: i32) -> (i32, i32) {
    %c0_i32 = arith.constant 0 : i32
    return %arg2, %arg1 : i32, i32
  }
  func.func @transform_3(%arg0: i32, %arg1: i32, %arg2: i32) -> (i32, i32) {
    %c0_i32 = arith.constant 0 : i32
    return %arg2, %arg1 : i32, i32
  }
  func.func @transform_4(%arg0: i32, %arg1: i32, %arg2: i32) -> (i32, i32) {
    %c0_i32 = arith.constant 0 : i32
    %c0_i32_0 = arith.constant 0 : i32
    return %c0_i32, %arg1 : i32, i32
  }
  func.func @transform_5(%arg0: i32, %arg1: i32, %arg2: i32) -> (i32, i32) {
    %c0_i32 = arith.constant 0 : i32
    %c0_i32_0 = arith.constant 0 : i32
    return %c0_i32, %arg1 : i32, i32
  }
  func.func @transform_6(%arg0: i32, %arg1: i32, %arg2: i32) -> (i32, i32) {
    %c0_i32 = arith.constant 0 : i32
    %c0_i32_0 = arith.constant 0 : i32
    return %c0_i32, %arg1 : i32, i32
  }
  func.func @transform_7(%arg0: i32, %arg1: i32, %arg2: i32) -> (i32, i32) {
    %c0_i32 = arith.constant 0 : i32
    %c0_i32_0 = arith.constant 0 : i32
    return %arg0, %c0_i32 : i32, i32
  }
  func.func @transform_8(%arg0: i32, %arg1: i32, %arg2: i32) -> (i32, i32) {
    %c0_i32 = arith.constant 0 : i32
    %c0_i32_0 = arith.constant 0 : i32
    return %arg0, %c0_i32 : i32, i32
  }
  func.func @transform_9(%arg0: i32, %arg1: i32, %arg2: i32) -> (i32, i32) {
    %c0_i32 = arith.constant 0 : i32
    return %arg0, %arg1 : i32, i32
  }
  func.func @transform_10(%arg0: i32, %arg1: i32, %arg2: i32) -> (i32, i32) {
    %c0_i32 = arith.constant 0 : i32
    return %arg0, %arg1 : i32, i32
  }
  func.func @transform_11(%arg0: i32, %arg1: i32, %arg2: i32) -> (i32, i32) {
    %c0_i32 = arith.constant 0 : i32
    return %arg0, %arg1 : i32, i32
  }
}

</mosaic_0001>

<llo_original>
// kernel: tpu_custom_call.1
$region0: #{tpu_custom_call.1}
  #allocation0 [shape = 'u32[]', space=smem, size = 0x4, offset = 0x4, fixed_abs, tag = 'smem constant byte address 0x4 - core index']
  #allocation1 [shape = 'u32[144,128]{1,0:T(1,128)}', space=vmem, size = 0x12000, scoped, tag = 'internal scratch']
  #allocation2 [shape = 'f32[256,512]{1,0:T(8,128)}', space=vmem, size = 0x80000, scoped, tag = 'scratch operand']
  #allocation3 [shape = 'f32[256,512]{1,0:T(8,128)}', space=vmem, size = 0x80000, scoped, tag = 'scratch operand']
  #allocation4 [shape = 'f32[256,512]{1,0:T(8,128)}', space=vmem, size = 0x80000, scoped, tag = 'scratch operand']
  %s0 = inlined_call_operand.hbm [shape: f32[256,512], index: 0, kind: input, shape index: {}]
  %s1 = inlined_call_operand.hbm [shape: f32[512,512], index: 1, kind: input, shape index: {}]
  %s2 = inlined_call_operand.hbm [shape: f32[512,512], index: 2, kind: input, shape index: {}]
  %s3 = inlined_call_operand.hbm [shape: f32[512,512], index: 3, kind: input, shape index: {}]
  %s4 = inlined_call_operand.vmem [shape: f32[1,512], index: 4, kind: input, shape index: {}]
  %s5 = inlined_call_operand.vmem [shape: f32[1,512], index: 5, kind: input, shape index: {}]
  %s6 = inlined_call_operand.vmem [shape: f32[1,512], index: 6, kind: input, shape index: {}]
  %s7 = inlined_call_operand.hbm [shape: f32[256,128], index: 7, kind: input, shape index: {}]
  %s8 = inlined_call_operand.hbm [shape: f32[256,128], index: 8, kind: input, shape index: {}]
  %s9 = inlined_call_operand.hbm [shape: f32[256,512], index: 9, kind: output, shape index: {0}]
  %s10 = inlined_call_operand.hbm [shape: f32[256,512], index: 10, kind: output, shape index: {1}]
  %s11 = inlined_call_operand.hbm [shape: f32[256,512], index: 11, kind: output, shape index: {2}]
  %12 = xla_tuple %s9, %s10, %s11
  %s13 = sld [smem:[#allocation0]]
  $region94: #{tpu_custom_call.1} parent=0
    _
  %s15 = ssub.s32 1, %s13
  %s16 = scalar_select 0, %s15, %s13
  $region1: #{tpu_custom_call.1} parent=0
    #allocation5 [shape = 'u8[524288]{0}', space=vmem, size = 0x80000, scoped, tag = 'input window, operand 0, single buffered']
    #allocation6 [shape = 's32[1]{0}', space=sflag, size = 0x4, scoped, tag = 'scoped memory for tpu_custom_call.1']
    #allocation7 [shape = 's32[1]{0}', space=sflag, size = 0x4, scoped, tag = 'scoped memory for tpu_custom_call.1']
    #allocation8 [shape = 'u8[1048576]{0}', space=vmem, size = 0x100000, scoped, tag = 'input window, operand 1, single buffered']
    #allocation9 [shape = 's32[1]{0}', space=sflag, size = 0x4, scoped, tag = 'scoped memory for tpu_custom_call.1']
    #allocation10 [shape = 'u8[1048576]{0}', space=vmem, size = 0x100000, scoped, tag = 'input window, operand 2, single buffered']
    #allocation11 [shape = 'u8[1048576]{0}', space=vmem, size = 0x100000, scoped, tag = 'input window, operand 3, single buffered']
    #allocation12 [shape = 's32[1]{0}', space=sflag, size = 0x4, scoped, tag = 'scoped memory for tpu_custom_call.1']
    #allocation13 [shape = 'u8[131072]{0}', space=vmem, size = 0x20000, scoped, tag = 'input window, operand 7, single buffered']
    #allocation14 [shape = 'u8[131072]{0}', space=vmem, size = 0x20000, scoped, tag = 'input window, operand 8, single buffered']
    #allocation15 [shape = 's32[1]{0}', space=sflag, size = 0x4, scoped, tag = 'scoped memory for tpu_custom_call.1']
    #allocation16 [shape = 'u8[524288]{0}', space=vmem, size = 0x80000, scoped, tag = 'output window, operand 0, single buffered']
    #allocation17 [shape = 'u8[524288]{0}', space=vmem, size = 0x80000, scoped, tag = 'output window, operand 1, single buffered']
    #allocation18 [shape = 's32[1]{0}', space=sflag, size = 0x4, scoped, tag = 'scoped memory for tpu_custom_call.1']
    #allocation19 [shape = 'u8[524288]{0}', space=vmem, size = 0x80000, scoped, tag = 'output window, operand 2, single buffered']
    %17 = vsyncpa [#allocation6], 0
    %18 = vsyncpa [#allocation9], 0
    %19 = vsyncpa [#allocation12], 0
    %20 = vsyncpa [#allocation15], 0
    %21 = vsyncpa [#allocation7], 0
    %22 = vsyncpa [#allocation18], 0
    // Predicated region
    $region2: #{tpu_custom_call.1} parent=1 // pred_check
      _
    $region3: #{tpu_custom_call.1} parent=1 // pred_check_branch
      %24 = sbr.rel (0) target = $region5
    $region4: #{tpu_custom_call.1} parent=1 // pred_region
      %s26 = ssub.s32 16384, 16384
      %27 = vsyncadd [#allocation6], %s26
      %s28 = sshll.u32 [#allocation5], 4
      %s29 = int_to_ptr.vmem [resolvable:$true] %s28
      %34 = dma.hbm_to_vmem [thread:$0]  %s0, 16384, %s29, [#allocation6], 512, 512, 32
    $region5: #{tpu_custom_call.1} parent=1 // pred_fallthru
      _
    // Predicated region
    $region6: #{tpu_custom_call.1} parent=1 // pred_check
      _
    $region7: #{tpu_custom_call.1} parent=1 // pred_check_branch
      %36 = sbr.rel (0) target = $region9
    $region8: #{tpu_custom_call.1} parent=1 // pred_region
      %s38 = ssub.s32 32768, 32768
      %39 = vsyncadd [#allocation9], %s38
      %s40 = sshll.u32 [#allocation8], 4
      %s41 = int_to_ptr.vmem [resolvable:$true] %s40
      %46 = dma.hbm_to_vmem [thread:$0]  %s1, 32768, %s41, [#allocation9], 512, 512, 32
    $region9: #{tpu_custom_call.1} parent=1 // pred_fallthru
      _
    // Predicated region
    $region10: #{tpu_custom_call.1} parent=1 // pred_check
      _
    $region11: #{tpu_custom_call.1} parent=1 // pred_check_branch
      %48 = sbr.rel (0) target = $region13
    $region12: #{tpu_custom_call.1} parent=1 // pred_region
      %s50 = ssub.s32 32768, 32768
      %51 = vsyncadd [#allocation9], %s50
      %s52 = sshll.u32 [#allocation10], 4
      %s53 = int_to_ptr.vmem [resolvable:$true] %s52
      %58 = dma.hbm_to_vmem [thread:$0]  %s2, 32768, %s53, [#allocation9], 512, 512, 32
    $region13: #{tpu_custom_call.1} parent=1 // pred_fallthru
      _
    // Predicated region
    $region14: #{tpu_custom_call.1} parent=1 // pred_check
      _
    $region15: #{tpu_custom_call.1} parent=1 // pred_check_branch
      %60 = sbr.rel (0) target = $region17
    $region16: #{tpu_custom_call.1} parent=1 // pred_region
      %s62 = ssub.s32 32768, 32768
      %63 = vsyncadd [#allocation12], %s62
      %s64 = sshll.u32 [#allocation11], 4
      %s65 = int_to_ptr.vmem [resolvable:$true] %s64
      %70 = dma.hbm_to_vmem [thread:$0]  %s3, 32768, %s65, [#allocation12], 512, 512, 32
    $region17: #{tpu_custom_call.1} parent=1 // pred_fallthru
      _
    // Predicated region
    $region18: #{tpu_custom_call.1} parent=1 // pred_check
      _
    $region19: #{tpu_custom_call.1} parent=1 // pred_check_branch
      %72 = sbr.rel (0) target = $region21
    $region20: #{tpu_custom_call.1} parent=1 // pred_region
      _
    $region21: #{tpu_custom_call.1} parent=1 // pred_fallthru
      _
    // Predicated region
    $region22: #{tpu_custom_call.1} parent=1 // pred_check
      _
    $region23: #{tpu_custom_call.1} parent=1 // pred_check_branch
      %74 = sbr.rel (0) target = $region25
    $region24: #{tpu_custom_call.1} parent=1 // pred_region
      _
    $region25: #{tpu_custom_call.1} parent=1 // pred_fallthru
      _
    // Predicated region
    $region26: #{tpu_custom_call.1} parent=1 // pred_check
      _
    $region27: #{tpu_custom_call.1} parent=1 // pred_check_branch
      %76 = sbr.rel (0) target = $region29
    $region28: #{tpu_custom_call.1} parent=1 // pred_region
      _
    $region29: #{tpu_custom_call.1} parent=1 // pred_fallthru
      _
    // Predicated region
    $region30: #{tpu_custom_call.1} parent=1 // pred_check
      _
    $region31: #{tpu_custom_call.1} parent=1 // pred_check_branch
      %78 = sbr.rel (0) target = $region33
    $region32: #{tpu_custom_call.1} parent=1 // pred_region
      %s80 = ssub.s32 4096, 4096
      %81 = vsyncadd [#allocation12], %s80
      %s82 = sshll.u32 [#allocation13], 4
      %s83 = int_to_ptr.vmem [resolvable:$true] %s82
      %88 = dma.hbm_to_vmem [thread:$0]  %s7, 4096, %s83, [#allocation12], 128, 128, 8
    $region33: #{tpu_custom_call.1} parent=1 // pred_fallthru
      _
    // Predicated region
    $region34: #{tpu_custom_call.1} parent=1 // pred_check
      _
    $region35: #{tpu_custom_call.1} parent=1 // pred_check_branch
      %90 = sbr.rel (0) target = $region37
    $region36: #{tpu_custom_call.1} parent=1 // pred_region
      %s92 = ssub.s32 4096, 4096
      %93 = vsyncadd [#allocation15], %s92
      %s94 = sshll.u32 [#allocation14], 4
      %s95 = int_to_ptr.vmem [resolvable:$true] %s94
      %100 = dma.hbm_to_vmem [thread:$0]  %s8, 4096, %s95, [#allocation15], 128, 128, 8
    $region37: #{tpu_custom_call.1} parent=1 // pred_fallthru
      _
    // Predicated region
    $region38: #{tpu_custom_call.1} parent=1 // pred_check
      _
    $region39: #{tpu_custom_call.1} parent=1 // pred_check_branch
      %102 = sbr.rel (0) target = $region41
    $region40: #{tpu_custom_call.1} parent=1 // pred_region
      %103 = dma.done [#allocation6], 16384
    $region41: #{tpu_custom_call.1} parent=1 // pred_fallthru
      _
    // Predicated region
    $region42: #{tpu_custom_call.1} parent=1 // pred_check
      _
    $region43: #{tpu_custom_call.1} parent=1 // pred_check_branch
      %105 = sbr.rel (0) target = $region45
    $region44: #{tpu_custom_call.1} parent=1 // pred_region
      %106 = dma.done [#allocation9], 32768
    $region45: #{tpu_custom_call.1} parent=1 // pred_fallthru
      _
    // Predicated region
    $region46: #{tpu_custom_call.1} parent=1 // pred_check
      _
    $region47: #{tpu_custom_call.1} parent=1 // pred_check_branch
      %108 = sbr.rel (0) target = $region49
    $region48: #{tpu_custom_call.1} parent=1 // pred_region
      %109 = dma.done [#allocation9], 32768
    $region49: #{tpu_custom_call.1} parent=1 // pred_fallthru
      _
    // Predicated region
    $region50: #{tpu_custom_call.1} parent=1 // pred_check
      _
    $region51: #{tpu_custom_call.1} parent=1 // pred_check_branch
      %111 = sbr.rel (0) target = $region53
    $region52: #{tpu_custom_call.1} parent=1 // pred_region
      %112 = dma.done [#allocation12], 32768
    $region53: #{tpu_custom_call.1} parent=1 // pred_fallthru
      _
    // Predicated region
    $region54: #{tpu_custom_call.1} parent=1 // pred_check
      _
    $region55: #{tpu_custom_call.1} parent=1 // pred_check_branch
      %114 = sbr.rel (0) target = $region57
    $region56: #{tpu_custom_call.1} parent=1 // pred_region
      %115 = dma.done [#allocation12], 4096
    $region57: #{tpu_custom_call.1} parent=1 // pred_fallthru
      _
    // Predicated region
    $region58: #{tpu_custom_call.1} parent=1 // pred_check
      _
    $region59: #{tpu_custom_call.1} parent=1 // pred_check_branch
      %117 = sbr.rel (0) target = $region61
    $region60: #{tpu_custom_call.1} parent=1 // pred_region
      %118 = dma.done [#allocation15], 4096
    $region61: #{tpu_custom_call.1} parent=1 // pred_fallthru
      _
    %p119 = scmp.eq.s32.totalorder 0, 0
    // Predicated region
    $region62: #{tpu_custom_call.1} parent=1 // pred_check
      %p120 = pneg %p119
    $region63: #{tpu_custom_call.1} parent=1 // pred_check_branch
      %122 = sbr.rel (%p120) target = $region65
    $region64: #{tpu_custom_call.1} parent=1 // pred_region
      %123 = vst [vmem:[#allocation2] sm:$0xff] 0.0
      %124 = vst [vmem:[#allocation2 + $0x8] sm:$0xff] 0.0
      %125 = vst [vmem:[#allocation2 + $0x10] sm:$0xff] 0.0
      %126 = vst [vmem:[#allocation2 + $0x18] sm:$0xff] 0.0
      %127 = vst [vmem:[#allocation2 + $0x20] sm:$0xff] 0.0
      %128 = vst [vmem:[#allocation2 + $0x28] sm:$0xff] 0.0
      %129 = vst [vmem:[#allocation2 + $0x30] sm:$0xff] 0.0
      %130 = vst [vmem:[#allocation2 + $0x38] sm:$0xff] 0.0
      %131 = vst [vmem:[#allocation2 + $0x40] sm:$0xff] 0.0
      %132 = vst [vmem:[#allocation2 + $0x48] sm:$0xff] 0.0
      %133 = vst [vmem:[#allocation2 + $0x50] sm:$0xff] 0.0
      %134 = vst [vmem:[#allocation2 + $0x58] sm:$0xff] 0.0
      %135 = vst [vmem:[#allocation2 + $0x60] sm:$0xff] 0.0
      %136 = vst [vmem:[#allocation2 + $0x68] sm:$0xff] 0.0
      %137 = vst [vmem:[#allocation2 + $0x70] sm:$0xff] 0.0
      %138 = vst [vmem:[#allocation2 + $0x78] sm:$0xff] 0.0
      %139 = vst [vmem:[#allocation2 + $0x80] sm:$0xff] 0.0
      %140 = vst [vmem:[#allocation2 + $0x88] sm:$0xff] 0.0
      %141 = vst [vmem:[#allocation2 + $0x90] sm:$0xff] 0.0
      %142 = vst [vmem:[#allocation2 + $0x98] sm:$0xff] 0.0
      %143 = vst [vmem:[#allocation2 + $0xa0] sm:$0xff] 0.0
      %144 = vst [vmem:[#allocation2 + $0xa8] sm:$0xff] 0.0
      %145 = vst [vmem:[#allocation2 + $0xb0] sm:$0xff] 0.0
      %146 = vst [vmem:[#allocation2 + $0xb8] sm:$0xff] 0.0
      %147 = vst [vmem:[#allocation2 + $0xc0] sm:$0xff] 0.0
      %148 = vst [vmem:[#allocation2 + $0xc8] sm:$0xff] 0.0
      %149 = vst [vmem:[#allocation2 + $0xd0] sm:$0xff] 0.0
      %150 = vst [vmem:[#allocation2 + $0xd8] sm:$0xff] 0.0
      %151 = vst [vmem:[#allocation2 + $0xe0] sm:$0xff] 0.0
      %152 = vst [vmem:[#allocation2 + $0xe8] sm:$0xff] 0.0
      %153 = vst [vmem:[#allocation2 + $0xf0] sm:$0xff] 0.0
      %154 = vst [vmem:[#allocation2 + $0xf8] sm:$0xff] 0.0
      %155 = vst [vmem:[#allocation2 + $0x100] sm:$0xff] 0.0
      %156 = vst [vmem:[#allocation2 + $0x108] sm:$0xff] 0.0
      %157 = vst [vmem:[#allocation2 + $0x110] sm:$0xff] 0.0
      %158 = vst [vmem:[#allocation2 + $0x118] sm:$0xff] 0.0
      %159 = vst [vmem:[#allocation2 + $0x120] sm:$0xff] 0.0
      %160 = vst [vmem:[#allocation2 + $0x128] sm:$0xff] 0.0
      %161 = vst [vmem:[#allocation2 + $0x130] sm:$0xff] 0.0
      %162 = vst [vmem:[#allocation2 + $0x138] sm:$0xff] 0.0
      %163 = vst [vmem:[#allocation2 + $0x140] sm:$0xff] 0.0
      %164 = vst [vmem:[#allocation2 + $0x148] sm:$0xff] 0.0
      %165 = vst [vmem:[#allocation2 + $0x150] sm:$0xff] 0.0
      %166 = vst [vmem:[#allocation2 + $0x158] sm:$0xff] 0.0
      %167 = vst [vmem:[#allocation2 + $0x160] sm:$0xff] 0.0
      %168 = vst [vmem:[#allocation2 + $0x168] sm:$0xff] 0.0
      %169 = vst [vmem:[#allocation2 + $0x170] sm:$0xff] 0.0
      %170 = vst [vmem:[#allocation2 + $0x178] sm:$0xff] 0.0
      %171 = vst [vmem:[#allocation2 + $0x180] sm:$0xff] 0.0
      %172 = vst [vmem:[#allocation2 + $0x188] sm:$0xff] 0.0
      %173 = vst [vmem:[#allocation2 + $0x190] sm:$0xff] 0.0
      %174 = vst [vmem:[#allocation2 + $0x198] sm:$0xff] 0.0
      %175 = vst [vmem:[#allocation2 + $0x1a0] sm:$0xff] 0.0
      %176 = vst [vmem:[#allocation2 + $0x1a8] sm:$0xff] 0.0
      %177 = vst [vmem:[#allocation2 + $0x1b0] sm:$0xff] 0.0
      %178 = vst [vmem:[#allocation2 + $0x1b8] sm:$0xff] 0.0
      %179 = vst [vmem:[#allocation2 + $0x1c0] sm:$0xff] 0.0
      %180 = vst [vmem:[#allocation2 + $0x1c8] sm:$0xff] 0.0
      %181 = vst [vmem:[#allocation2 + $0x1d0] sm:$0xff] 0.0
      %182 = vst [vmem:[#allocation2 + $0x1d8] sm:$0xff] 0.0
      %183 = vst [vmem:[#allocation2 + $0x1e0] sm:$0xff] 0.0
      %184 = vst [vmem:[#allocation2 + $0x1e8] sm:$0xff] 0.0
      %185 = vst [vmem:[#allocation2 + $0x1f0] sm:$0xff] 0.0
      %186 = vst [vmem:[#allocation2 + $0x1f8] sm:$0xff] 0.0
      %187 = vst [vmem:[#allocation2 + $0x200] sm:$0xff] 0.0
      %188 = vst [vmem:[#allocation2 + $0x208] sm:$0xff] 0.0
      %189 = vst [vmem:[#allocation2 + $0x210] sm:$0xff] 0.0
      %190 = vst [vmem:[#allocation2 + $0x218] sm:$0xff] 0.0
      %191 = vst [vmem:[#allocation2 + $0x220] sm:$0xff] 0.0
      %192 = vst [vmem:[#allocation2 + $0x228] sm:$0xff] 0.0
      %193 = vst [vmem:[#allocation2 + $0x230] sm:$0xff] 0.0
      %194 = vst [vmem:[#allocation2 + $0x238] sm:$0xff] 0.0
      %195 = vst [vmem:[#allocation2 + $0x240] sm:$0xff] 0.0
      %196 = vst [vmem:[#allocation2 + $0x248] sm:$0xff] 0.0
      %197 = vst [vmem:[#allocation2 + $0x250] sm:$0xff] 0.0
      %198 = vst [vmem:[#allocation2 + $0x258] sm:$0xff] 0.0
      %199 = vst [vmem:[#allocation2 + $0x260] sm:$0xff] 0.0
      %200 = vst [vmem:[#allocation2 + $0x268] sm:$0xff] 0.0
      %201 = vst [vmem:[#allocation2 + $0x270] sm:$0xff] 0.0
      %202 = vst [vmem:[#allocation2 + $0x278] sm:$0xff] 0.0
      %203 = vst [vmem:[#allocation2 + $0x280] sm:$0xff] 0.0
      %204 = vst [vmem:[#allocation2 + $0x288] sm:$0xff] 0.0
      %205 = vst [vmem:[#allocation2 + $0x290] sm:$0xff] 0.0
      %206 = vst [vmem:[#allocation2 + $0x298] sm:$0xff] 0.0
      %207 = vst [vmem:[#allocation2 + $0x2a0] sm:$0xff] 0.0
      %208 = vst [vmem:[#allocation2 + $0x2a8] sm:$0xff] 0.0
      %209 = vst [vmem:[#allocation2 + $0x2b0] sm:$0xff] 0.0
      %210 = vst [vmem:[#allocation2 + $0x2b8] sm:$0xff] 0.0
      %211 = vst [vmem:[#allocation2 + $0x2c0] sm:$0xff] 0.0
      %212 = vst [vmem:[#allocation2 + $0x2c8] sm:$0xff] 0.0
      %213 = vst [vmem:[#allocation2 + $0x2d0] sm:$0xff] 0.0
      %214 = vst [vmem:[#allocation2 + $0x2d8] sm:$0xff] 0.0
      %215 = vst [vmem:[#allocation2 + $0x2e0] sm:$0xff] 0.0
      %216 = vst [vmem:[#allocation2 + $0x2e8] sm:$0xff] 0.0
      %217 = vst [vmem:[#allocation2 + $0x2f0] sm:$0xff] 0.0
      %218 = vst [vmem:[#allocation2 + $0x2f8] sm:$0xff] 0.0
      %219 = vst [vmem:[#allocation2 + $0x300] sm:$0xff] 0.0
      %220 = vst [vmem:[#allocation2 + $0x308] sm:$0xff] 0.0
      %221 = vst [vmem:[#allocation2 + $0x310] sm:$0xff] 0.0
      %222 = vst [vmem:[#allocation2 + $0x318] sm:$0xff] 0.0
      %223 = vst [vmem:[#allocation2 + $0x320] sm:$0xff] 0.0
      %224 = vst [vmem:[#allocation2 + $0x328] sm:$0xff] 0.0
      %225 = vst [vmem:[#allocation2 + $0x330] sm:$0xff] 0.0
      %226 = vst [vmem:[#allocation2 + $0x338] sm:$0xff] 0.0
      %227 = vst [vmem:[#allocation2 + $0x340] sm:$0xff] 0.0
      %228 = vst [vmem:[#allocation2 + $0x348] sm:$0xff] 0.0
      %229 = vst [vmem:[#allocation2 + $0x350] sm:$0xff] 0.0
      %230 = vst [vmem:[#allocation2 + $0x358] sm:$0xff] 0.0
      %231 = vst [vmem:[#allocation2 + $0x360] sm:$0xff] 0.0
      %232 = vst [vmem:[#allocation2 + $0x368] sm:$0xff] 0.0
      %233 = vst [vmem:[#allocation2 + $0x370] sm:$0xff] 0.0
      %234 = vst [vmem:[#allocation2 + $0x378] sm:$0xff] 0.0
      %235 = vst [vmem:[#allocation2 + $0x380] sm:$0xff] 0.0
      %236 = vst [vmem:[#allocation2 + $0x388] sm:$0xff] 0.0
      %237 = vst [vmem:[#allocation2 + $0x390] sm:$0xff] 0.0
      %238 = vst [vmem:[#allocation2 + $0x398] sm:$0xff] 0.0
      %239 = vst [vmem:[#allocation2 + $0x3a0] sm:$0xff] 0.0
      %240 = vst [vmem:[#allocation2 + $0x3a8] sm:$0xff] 0.0
      %241 = vst [vmem:[#allocation2 + $0x3b0] sm:$0xff] 0.0
      %242 = vst [vmem:[#allocation2 + $0x3b8] sm:$0xff] 0.0
      %243 = vst [vmem:[#allocation2 + $0x3c0] sm:$0xff] 0.0
      %244 = vst [vmem:[#allocation2 + $0x3c8] sm:$0xff] 0.0
      %245 = vst [vmem:[#allocation2 + $0x3d0] sm:$0xff] 0.0
      %246 = vst [vmem:[#allocation2 + $0x3d8] sm:$0xff] 0.0
      %247 = vst [vmem:[#allocation2 + $0x3e0] sm:$0xff] 0.0
      %248 = vst [vmem:[#allocation2 + $0x3e8] sm:$0xff] 0.0
      %249 = vst [vmem:[#allocation2 + $0x3f0] sm:$0xff] 0.0
      %250 = vst [vmem:[#allocation2 + $0x3f8] sm:$0xff] 0.0
      %251 = vst [vmem:[#allocation3] sm:$0xff] 0.0
      %252 = vst [vmem:[#allocation3 + $0x8] sm:$0xff] 0.0
      %253 = vst [vmem:[#allocation3 + $0x10] sm:$0xff] 0.0
      %254 = vst [vmem:[#allocation3 + $0x18] sm:$0xff] 0.0
      %255 = vst [vmem:[#allocation3 + $0x20] sm:$0xff] 0.0
      %256 = vst [vmem:[#allocation3 + $0x28] sm:$0xff] 0.0
      %257 = vst [vmem:[#allocation3 + $0x30] sm:$0xff] 0.0
      %258 = vst [vmem:[#allocation3 + $0x38] sm:$0xff] 0.0
      %259 = vst [vmem:[#allocation3 + $0x40] sm:$0xff] 0.0
      %260 = vst [vmem:[#allocation3 + $0x48] sm:$0xff] 0.0
      %261 = vst [vmem:[#allocation3 + $0x50] sm:$0xff] 0.0
      %262 = vst [vmem:[#allocation3 + $0x58] sm:$0xff] 0.0
      %263 = vst [vmem:[#allocation3 + $0x60] sm:$0xff] 0.0
      %264 = vst [vmem:[#allocation3 + $0x68] sm:$0xff] 0.0
      %265 = vst [vmem:[#allocation3 + $0x70] sm:$0xff] 0.0
      %266 = vst [vmem:[#allocation3 + $0x78] sm:$0xff] 0.0
      %267 = vst [vmem:[#allocation3 + $0x80] sm:$0xff] 0.0
      %268 = vst [vmem:[#allocation3 + $0x88] sm:$0xff] 0.0
      %269 = vst [vmem:[#allocation3 + $0x90] sm:$0xff] 0.0
      %270 = vst [vmem:[#allocation3 + $0x98] sm:$0xff] 0.0
      %271 = vst [vmem:[#allocation3 + $0xa0] sm:$0xff] 0.0
      %272 = vst [vmem:[#allocation3 + $0xa8] sm:$0xff] 0.0
      %273 = vst [vmem:[#allocation3 + $0xb0] sm:$0xff] 0.0
      %274 = vst [vmem:[#allocation3 + $0xb8] sm:$0xff] 0.0
      %275 = vst [vmem:[#allocation3 + $0xc0] sm:$0xff] 0.0
      %276 = vst [vmem:[#allocation3 + $0xc8] sm:$0xff] 0.0
      %277 = vst [vmem:[#allocation3 + $0xd0] sm:$0xff] 0.0
      %278 = vst [vmem:[#allocation3 + $0xd8] sm:$0xff] 0.0
      %279 = vst [vmem:[#allocation3 + $0xe0] sm:$0xff] 0.0
      %280 = vst [vmem:[#allocation3 + $0xe8] sm:$0xff] 0.0
      %281 = vst [vmem:[#allocation3 + $0xf0] sm:$0xff] 0.0
      %282 = vst [vmem:[#allocation3 + $0xf8] sm:$0xff] 0.0
      %283 = vst [vmem:[#allocation3 + $0x100] sm:$0xff] 0.0
      %284 = vst [vmem:[#allocation3 + $0x108] sm:$0xff] 0.0
      %285 = vst [vmem:[#allocation3 + $0x110] sm:$0xff] 0.0
      %286 = vst [vmem:[#allocation3 + $0x118] sm:$0xff] 0.0
      %287 = vst [vmem:[#allocation3 + $0x120] sm:$0xff] 0.0
      %288 = vst [vmem:[#allocation3 + $0x128] sm:$0xff] 0.0
      %289 = vst [vmem:[#allocation3 + $0x130] sm:$0xff] 0.0
      %290 = vst [vmem:[#allocation3 + $0x138] sm:$0xff] 0.0
      %291 = vst [vmem:[#allocation3 + $0x140] sm:$0xff] 0.0
      %292 = vst [vmem:[#allocation3 + $0x148] sm:$0xff] 0.0
      %293 = vst [vmem:[#allocation3 + $0x150] sm:$0xff] 0.0
      %294 = vst [vmem:[#allocation3 + $0x158] sm:$0xff] 0.0
      %295 = vst [vmem:[#allocation3 + $0x160] sm:$0xff] 0.0
      %296 = vst [vmem:[#allocation3 + $0x168] sm:$0xff] 0.0
      %297 = vst [vmem:[#allocation3 + $0x170] sm:$0xff] 0.0
      %298 = vst [vmem:[#allocation3 + $0x178] sm:$0xff] 0.0
      %299 = vst [vmem:[#allocation3 + $0x180] sm:$0xff] 0.0
      %300 = vst [vmem:[#allocation3 + $0x188] sm:$0xff] 0.0
      %301 = vst [vmem:[#allocation3 + $0x190] sm:$0xff] 0.0
      %302 = vst [vmem:[#allocation3 + $0x198] sm:$0xff] 0.0
      %303 = vst [vmem:[#allocation3 + $0x1a0] sm:$0xff] 0.0
      %304 = vst [vmem:[#allocation3 + $0x1a8] sm:$0xff] 0.0
      %305 = vst [vmem:[#allocation3 + $0x1b0] sm:$0xff] 0.0
      %306 = vst [vmem:[#allocation3 + $0x1b8] sm:$0xff] 0.0
      %307 = vst [vmem:[#allocation3 + $0x1c0] sm:$0xff] 0.0
      %308 = vst [vmem:[#allocation3 + $0x1c8] sm:$0xff] 0.0
      %309 = vst [vmem:[#allocation3 + $0x1d0] sm:$0xff] 0.0
      %310 = vst [vmem:[#allocation3 + $0x1d8] sm:$0xff] 0.0
      %311 = vst [vmem:[#allocation3 + $0x1e0] sm:$0xff] 0.0
      %312 = vst [vmem:[#allocation3 + $0x1e8] sm:$0xff] 0.0
      %313 = vst [vmem:[#allocation3 + $0x1f0] sm:$0xff] 0.0
      %314 = vst [vmem:[#allocation3 + $0x1f8] sm:$0xff] 0.0
      %315 = vst [vmem:[#allocation3 + $0x200] sm:$0xff] 0.0
      %316 = vst [vmem:[#allocation3 + $0x208] sm:$0xff] 0.0
      %317 = vst [vmem:[#allocation3 + $0x210] sm:$0xff] 0.0
      %318 = vst [vmem:[#allocation3 + $0x218] sm:$0xff] 0.0
      %319 = vst [vmem:[#allocation3 + $0x220] sm:$0xff] 0.0
      %320 = vst [vmem:[#allocation3 + $0x228] sm:$0xff] 0.0
      %321 = vst [vmem:[#allocation3 + $0x230] sm:$0xff] 0.0
      %322 = vst [vmem:[#allocation3 + $0x238] sm:$0xff] 0.0
      %323 = vst [vmem:[#allocation3 + $0x240] sm:$0xff] 0.0
      %324 = vst [vmem:[#allocation3 + $0x248] sm:$0xff] 0.0
      %325 = vst [vmem:[#allocation3 + $0x250] sm:$0xff] 0.0
      %326 = vst [vmem:[#allocation3 + $0x258] sm:$0xff] 0.0
      %327 = vst [vmem:[#allocation3 + $0x260] sm:$0xff] 0.0
      %328 = vst [vmem:[#allocation3 + $0x268] sm:$0xff] 0.0
      %329 = vst [vmem:[#allocation3 + $0x270] sm:$0xff] 0.0
      %330 = vst [vmem:[#allocation3 + $0x278] sm:$0xff] 0.0
      %331 = vst [vmem:[#allocation3 + $0x280] sm:$0xff] 0.0
      %332 = vst [vmem:[#allocation3 + $0x288] sm:$0xff] 0.0
      %333 = vst [vmem:[#allocation3 + $0x290] sm:$0xff] 0.0
      %334 = vst [vmem:[#allocation3 + $0x298] sm:$0xff] 0.0
      %335 = vst [vmem:[#allocation3 + $0x2a0] sm:$0xff] 0.0
      %336 = vst [vmem:[#allocation3 + $0x2a8] sm:$0xff] 0.0
      %337 = vst [vmem:[#allocation3 + $0x2b0] sm:$0xff] 0.0
      %338 = vst [vmem:[#allocation3 + $0x2b8] sm:$0xff] 0.0
      %339 = vst [vmem:[#allocation3 + $0x2c0] sm:$0xff] 0.0
      %340 = vst [vmem:[#allocation3 + $0x2c8] sm:$0xff] 0.0
      %341 = vst [vmem:[#allocation3 + $0x2d0] sm:$0xff] 0.0
      %342 = vst [vmem:[#allocation3 + $0x2d8] sm:$0xff] 0.0
      %343 = vst [vmem:[#allocation3 + $0x2e0] sm:$0xff] 0.0
      %344 = vst [vmem:[#allocation3 + $0x2e8] sm:$0xff] 0.0
      %345 = vst [vmem:[#allocation3 + $0x2f0] sm:$0xff] 0.0
      %346 = vst [vmem:[#allocation3 + $0x2f8] sm:$0xff] 0.0
      %347 = vst [vmem:[#allocation3 + $0x300] sm:$0xff] 0.0
      %348 = vst [vmem:[#allocation3 + $0x308] sm:$0xff] 0.0
      %349 = vst [vmem:[#allocation3 + $0x310] sm:$0xff] 0.0
      %350 = vst [vmem:[#allocation3 + $0x318] sm:$0xff] 0.0
      %351 = vst [vmem:[#allocation3 + $0x320] sm:$0xff] 0.0
      %352 = vst [vmem:[#allocation3 + $0x328] sm:$0xff] 0.0
      %353 = vst [vmem:[#allocation3 + $0x330] sm:$0xff] 0.0
      %354 = vst [vmem:[#allocation3 + $0x338] sm:$0xff] 0.0
      %355 = vst [vmem:[#allocation3 + $0x340] sm:$0xff] 0.0
      %356 = vst [vmem:[#allocation3 + $0x348] sm:$0xff] 0.0
      %357 = vst [vmem:[#allocation3 + $0x350] sm:$0xff] 0.0
      %358 = vst [vmem:[#allocation3 + $0x358] sm:$0xff] 0.0
      %359 = vst [vmem:[#allocation3 + $0x360] sm:$0xff] 0.0
      %360 = vst [vmem:[#allocation3 + $0x368] sm:$0xff] 0.0
      %361 = vst [vmem:[#allocation3 + $0x370] sm:$0xff] 0.0
      %362 = vst [vmem:[#allocation3 + $0x378] sm:$0xff] 0.0
      %363 = vst [vmem:[#allocation3 + $0x380] sm:$0xff] 0.0
      %364 = vst [vmem:[#allocation3 + $0x388] sm:$0xff] 0.0
      %365 = vst [vmem:[#allocation3 + $0x390] sm:$0xff] 0.0
      %366 = vst [vmem:[#allocation3 + $0x398] sm:$0xff] 0.0
      %367 = vst [vmem:[#allocation3 + $0x3a0] sm:$0xff] 0.0
      %368 = vst [vmem:[#allocation3 + $0x3a8] sm:$0xff] 0.0
      %369 = vst [vmem:[#allocation3 + $0x3b0] sm:$0xff] 0.0
      %370 = vst [vmem:[#allocation3 + $0x3b8] sm:$0xff] 0.0
      %371 = vst [vmem:[#allocation3 + $0x3c0] sm:$0xff] 0.0
      %372 = vst [vmem:[#allocation3 + $0x3c8] sm:$0xff] 0.0
      %373 = vst [vmem:[#allocation3 + $0x3d0] sm:$0xff] 0.0
      %374 = vst [vmem:[#allocation3 + $0x3d8] sm:$0xff] 0.0
      %375 = vst [vmem:[#allocation3 + $0x3e0] sm:$0xff] 0.0
      %376 = vst [vmem:[#allocation3 + $0x3e8] sm:$0xff] 0.0
      %377 = vst [vmem:[#allocation3 + $0x3f0] sm:$0xff] 0.0
      %378 = vst [vmem:[#allocation3 + $0x3f8] sm:$0xff] 0.0
      %379 = vst [vmem:[#allocation4] sm:$0xff] 0.0
      %380 = vst [vmem:[#allocation4 + $0x8] sm:$0xff] 0.0
      %381 = vst [vmem:[#allocation4 + $0x10] sm:$0xff] 0.0
      %382 = vst [vmem:[#allocation4 + $0x18] sm:$0xff] 0.0
      %383 = vst [vmem:[#allocation4 + $0x20] sm:$0xff] 0.0
      %384 = vst [vmem:[#allocation4 + $0x28] sm:$0xff] 0.0
      %385 = vst [vmem:[#allocation4 + $0x30] sm:$0xff] 0.0
      %386 = vst [vmem:[#allocation4 + $0x38] sm:$0xff] 0.0
      %387 = vst [vmem:[#allocation4 + $0x40] sm:$0xff] 0.0
      %388 = vst [vmem:[#allocation4 + $0x48] sm:$0xff] 0.0
      %389 = vst [vmem:[#allocation4 + $0x50] sm:$0xff] 0.0
      %390 = vst [vmem:[#allocation4 + $0x58] sm:$0xff] 0.0
      %391 = vst [vmem:[#allocation4 + $0x60] sm:$0xff] 0.0
      %392 = vst [vmem:[#allocation4 + $0x68] sm:$0xff] 0.0
      %393 = vst [vmem:[#allocation4 + $0x70] sm:$0xff] 0.0
      %394 = vst [vmem:[#allocation4 + $0x78] sm:$0xff] 0.0
      %395 = vst [vmem:[#allocation4 + $0x80] sm:$0xff] 0.0
      %396 = vst [vmem:[#allocation4 + $0x88] sm:$0xff] 0.0
      %397 = vst [vmem:[#allocation4 + $0x90] sm:$0xff] 0.0
      %398 = vst [vmem:[#allocation4 + $0x98] sm:$0xff] 0.0
      %399 = vst [vmem:[#allocation4 + $0xa0] sm:$0xff] 0.0
      %400 = vst [vmem:[#allocation4 + $0xa8] sm:$0xff] 0.0
      %401 = vst [vmem:[#allocation4 + $0xb0] sm:$0xff] 0.0
      %402 = vst [vmem:[#allocation4 + $0xb8] sm:$0xff] 0.0
      %403 = vst [vmem:[#allocation4 + $0xc0] sm:$0xff] 0.0
      %404 = vst [vmem:[#allocation4 + $0xc8] sm:$0xff] 0.0
      %405 = vst [vmem:[#allocation4 + $0xd0] sm:$0xff] 0.0
      %406 = vst [vmem:[#allocation4 + $0xd8] sm:$0xff] 0.0
      %407 = vst [vmem:[#allocation4 + $0xe0] sm:$0xff] 0.0
      %408 = vst [vmem:[#allocation4 + $0xe8] sm:$0xff] 0.0
      %409 = vst [vmem:[#allocation4 + $0xf0] sm:$0xff] 0.0
      %410 = vst [vmem:[#allocation4 + $0xf8] sm:$0xff] 0.0
      %411 = vst [vmem:[#allocation4 + $0x100] sm:$0xff] 0.0
      %412 = vst [vmem:[#allocation4 + $0x108] sm:$0xff] 0.0
      %413 = vst [vmem:[#allocation4 + $0x110] sm:$0xff] 0.0
      %414 = vst [vmem:[#allocation4 + $0x118] sm:$0xff] 0.0
      %415 = vst [vmem:[#allocation4 + $0x120] sm:$0xff] 0.0
      %416 = vst [vmem:[#allocation4 + $0x128] sm:$0xff] 0.0
      %417 = vst [vmem:[#allocation4 + $0x130] sm:$0xff] 0.0
      %418 = vst [vmem:[#allocation4 + $0x138] sm:$0xff] 0.0
      %419 = vst [vmem:[#allocation4 + $0x140] sm:$0xff] 0.0
      %420 = vst [vmem:[#allocation4 + $0x148] sm:$0xff] 0.0
      %421 = vst [vmem:[#allocation4 + $0x150] sm:$0xff] 0.0
      %422 = vst [vmem:[#allocation4 + $0x158] sm:$0xff] 0.0
      %423 = vst [vmem:[#allocation4 + $0x160] sm:$0xff] 0.0
      %424 = vst [vmem:[#allocation4 + $0x168] sm:$0xff] 0.0
      %425 = vst [vmem:[#allocation4 + $0x170] sm:$0xff] 0.0
      %426 = vst [vmem:[#allocation4 + $0x178] sm:$0xff] 0.0
      %427 = vst [vmem:[#allocation4 + $0x180] sm:$0xff] 0.0
      %428 = vst [vmem:[#allocation4 + $0x188] sm:$0xff] 0.0
      %429 = vst [vmem:[#allocation4 + $0x190] sm:$0xff] 0.0
      %430 = vst [vmem:[#allocation4 + $0x198] sm:$0xff] 0.0
      %431 = vst [vmem:[#allocation4 + $0x1a0] sm:$0xff] 0.0
      %432 = vst [vmem:[#allocation4 + $0x1a8] sm:$0xff] 0.0
      %433 = vst [vmem:[#allocation4 + $0x1b0] sm:$0xff] 0.0
      %434 = vst [vmem:[#allocation4 + $0x1b8] sm:$0xff] 0.0
      %435 = vst [vmem:[#allocation4 + $0x1c0] sm:$0xff] 0.0
      %436 = vst [vmem:[#allocation4 + $0x1c8] sm:$0xff] 0.0
      %437 = vst [vmem:[#allocation4 + $0x1d0] sm:$0xff] 0.0
      %438 = vst [vmem:[#allocation4 + $0x1d8] sm:$0xff] 0.0
      %439 = vst [vmem:[#allocation4 + $0x1e0] sm:$0xff] 0.0
      %440 = vst [vmem:[#allocation4 + $0x1e8] sm:$0xff] 0.0
      %441 = vst [vmem:[#allocation4 + $0x1f0] sm:$0xff] 0.0
      %442 = vst [vmem:[#allocation4 + $0x1f8] sm:$0xff] 0.0
      %443 = vst [vmem:[#allocation4 + $0x200] sm:$0xff] 0.0
      %444 = vst [vmem:[#allocation4 + $0x208] sm:$0xff] 0.0
      %445 = vst [vmem:[#allocation4 + $0x210] sm:$0xff] 0.0
      %446 = vst [vmem:[#allocation4 + $0x218] sm:$0xff] 0.0
      %447 = vst [vmem:[#allocation4 + $0x220] sm:$0xff] 0.0
      %448 = vst [vmem:[#allocation4 + $0x228] sm:$0xff] 0.0
      %449 = vst [vmem:[#allocation4 + $0x230] sm:$0xff] 0.0
      %450 = vst [vmem:[#allocation4 + $0x238] sm:$0xff] 0.0
      %451 = vst [vmem:[#allocation4 + $0x240] sm:$0xff] 0.0
      %452 = vst [vmem:[#allocation4 + $0x248] sm:$0xff] 0.0
      %453 = vst [vmem:[#allocation4 + $0x250] sm:$0xff] 0.0
      %454 = vst [vmem:[#allocation4 + $0x258] sm:$0xff] 0.0
      %455 = vst [vmem:[#allocation4 + $0x260] sm:$0xff] 0.0
      %456 = vst [vmem:[#allocation4 + $0x268] sm:$0xff] 0.0
      %457 = vst [vmem:[#allocation4 + $0x270] sm:$0xff] 0.0
      %458 = vst [vmem:[#allocation4 + $0x278] sm:$0xff] 0.0
      %459 = vst [vmem:[#allocation4 + $0x280] sm:$0xff] 0.0
      %460 = vst [vmem:[#allocation4 + $0x288] sm:$0xff] 0.0
      %461 = vst [vmem:[#allocation4 + $0x290] sm:$0xff] 0.0
      %462 = vst [vmem:[#allocation4 + $0x298] sm:$0xff] 0.0
      %463 = vst [vmem:[#allocation4 + $0x2a0] sm:$0xff] 0.0
      %464 = vst [vmem:[#allocation4 + $0x2a8] sm:$0xff] 0.0
      %465 = vst [vmem:[#allocation4 + $0x2b0] sm:$0xff] 0.0
      %466 = vst [vmem:[#allocation4 + $0x2b8] sm:$0xff] 0.0
      %467 = vst [vmem:[#allocation4 + $0x2c0] sm:$0xff] 0.0
      %468 = vst [vmem:[#allocation4 + $0x2c8] sm:$0xff] 0.0
      %469 = vst [vmem:[#allocation4 + $0x2d0] sm:$0xff] 0.0
      %470 = vst [vmem:[#allocation4 + $0x2d8] sm:$0xff] 0.0
      %471 = vst [vmem:[#allocation4 + $0x2e0] sm:$0xff] 0.0
      %472 = vst [vmem:[#allocation4 + $0x2e8] sm:$0xff] 0.0
      %473 = vst [vmem:[#allocation4 + $0x2f0] sm:$0xff] 0.0
      %474 = vst [vmem:[#allocation4 + $0x2f8] sm:$0xff] 0.0
      %475 = vst [vmem:[#allocation4 + $0x300] sm:$0xff] 0.0
      %476 = vst [vmem:[#allocation4 + $0x308] sm:$0xff] 0.0
      %477 = vst [vmem:[#allocation4 + $0x310] sm:$0xff] 0.0
      %478 = vst [vmem:[#allocation4 + $0x318] sm:$0xff] 0.0
      %479 = vst [vmem:[#allocation4 + $0x320] sm:$0xff] 0.0
      %480 = vst [vmem:[#allocation4 + $0x328] sm:$0xff] 0.0
      %481 = vst [vmem:[#allocation4 + $0x330] sm:$0xff] 0.0
      %482 = vst [vmem:[#allocation4 + $0x338] sm:$0xff] 0.0
      %483 = vst [vmem:[#allocation4 + $0x340] sm:$0xff] 0.0
      %484 = vst [vmem:[#allocation4 + $0x348] sm:$0xff] 0.0
      %485 = vst [vmem:[#allocation4 + $0x350] sm:$0xff] 0.0
      %486 = vst [vmem:[#allocation4 + $0x358] sm:$0xff] 0.0
      %487 = vst [vmem:[#allocation4 + $0x360] sm:$0xff] 0.0
      %488 = vst [vmem:[#allocation4 + $0x368] sm:$0xff] 0.0
      %489 = vst [vmem:[#allocation4 + $0x370] sm:$0xff] 0.0
      %490 = vst [vmem:[#allocation4 + $0x378] sm:$0xff] 0.0
      %491 = vst [vmem:[#allocation4 + $0x380] sm:$0xff] 0.0
      %492 = vst [vmem:[#allocation4 + $0x388] sm:$0xff] 0.0
      %493 = vst [vmem:[#allocation4 + $0x390] sm:$0xff] 0.0
      %494 = vst [vmem:[#allocation4 + $0x398] sm:$0xff] 0.0
      %495 = vst [vmem:[#allocation4 + $0x3a0] sm:$0xff] 0.0
      %496 = vst [vmem:[#allocation4 + $0x3a8] sm:$0xff] 0.0
      %497 = vst [vmem:[#allocation4 + $0x3b0] sm:$0xff] 0.0
      %498 = vst [vmem:[#allocation4 + $0x3b8] sm:$0xff] 0.0
      %499 = vst [vmem:[#allocation4 + $0x3c0] sm:$0xff] 0.0
      %500 = vst [vmem:[#allocation4 + $0x3c8] sm:$0xff] 0.0
      %501 = vst [vmem:[#allocation4 + $0x3d0] sm:$0xff] 0.0
      %502 = vst [vmem:[#allocation4 + $0x3d8] sm:$0xff] 0.0
      %503 = vst [vmem:[#allocation4 + $0x3e0] sm:$0xff] 0.0
      %504 = vst [vmem:[#allocation4 + $0x3e8] sm:$0xff] 0.0
      %505 = vst [vmem:[#allocation4 + $0x3f0] sm:$0xff] 0.0
      %506 = vst [vmem:[#allocation4 + $0x3f8] sm:$0xff] 0.0
    $region65: #{tpu_custom_call.1} parent=1 // pred_fallthru
      _
    %v507 = vld [vmem:[#allocation5] sm:$0xff]
    %v508 = vld [vmem:[#allocation5 + $0x8] sm:$0xff]
    %v509 = vld [vmem:[#allocation5 + $0x10] sm:$0xff]
    %v510 = vld [vmem:[#allocation5 + $0x18] sm:$0xff]
    %v511 = vld [vmem:[#allocation5 + $0x20] sm:$0xff]
    %v512 = vld [vmem:[#allocation5 + $0x28] sm:$0xff]
    %v513 = vld [vmem:[#allocation5 + $0x30] sm:$0xff]
    %v514 = vld [vmem:[#allocation5 + $0x38] sm:$0xff]
    %v515 = vld [vmem:[#allocation5 + $0x40] sm:$0xff]
    %v516 = vld [vmem:[#allocation5 + $0x48] sm:$0xff]
    %v517 = vld [vmem:[#allocation5 + $0x50] sm:$0xff]
    %v518 = vld [vmem:[#allocation5 + $0x58] sm:$0xff]
    %v519 = vld [vmem:[#allocation5 + $0x60] sm:$0xff]
    %v520 = vld [vmem:[#allocation5 + $0x68] sm:$0xff]
    %v521 = vld [vmem:[#allocation5 + $0x70] sm:$0xff]
    %v522 = vld [vmem:[#allocation5 + $0x78] sm:$0xff]
    %v523 = vld [vmem:[#allocation5 + $0x80] sm:$0xff]
    %v524 = vld [vmem:[#allocation5 + $0x88] sm:$0xff]
    %v525 = vld [vmem:[#allocation5 + $0x90] sm:$0xff]
    %v526 = vld [vmem:[#allocation5 + $0x98] sm:$0xff]
    %v527 = vld [vmem:[#allocation5 + $0xa0] sm:$0xff]
    %v528 = vld [vmem:[#allocation5 + $0xa8] sm:$0xff]
    %v529 = vld [vmem:[#allocation5 + $0xb0] sm:$0xff]
    %v530 = vld [vmem:[#allocation5 + $0xb8] sm:$0xff]
    %v531 = vld [vmem:[#allocation5 + $0xc0] sm:$0xff]
    %v532 = vld [vmem:[#allocation5 + $0xc8] sm:$0xff]
    %v533 = vld [vmem:[#allocation5 + $0xd0] sm:$0xff]
    %v534 = vld [vmem:[#allocation5 + $0xd8] sm:$0xff]
    %v535 = vld [vmem:[#allocation5 + $0xe0] sm:$0xff]
    %v536 = vld [vmem:[#allocation5 + $0xe8] sm:$0xff]
    %v537 = vld [vmem:[#allocation5 + $0xf0] sm:$0xff]
    %v538 = vld [vmem:[#allocation5 + $0xf8] sm:$0xff]
    %v539 = vld [vmem:[#allocation5 + $0x100] sm:$0xff]
    %v540 = vld [vmem:[#allocation5 + $0x108] sm:$0xff]
    %v541 = vld [vmem:[#allocation5 + $0x110] sm:$0xff]
    %v542 = vld [vmem:[#allocation5 + $0x118] sm:$0xff]
    %v543 = vld [vmem:[#allocation5 + $0x120] sm:$0xff]
    %v544 = vld [vmem:[#allocation5 + $0x128] sm:$0xff]
    %v545 = vld [vmem:[#allocation5 + $0x130] sm:$0xff]
    %v546 = vld [vmem:[#allocation5 + $0x138] sm:$0xff]
    %v547 = vld [vmem:[#allocation5 + $0x140] sm:$0xff]
    %v548 = vld [vmem:[#allocation5 + $0x148] sm:$0xff]
    %v549 = vld [vmem:[#allocation5 + $0x150] sm:$0xff]
    %v550 = vld [vmem:[#allocation5 + $0x158] sm:$0xff]
    %v551 = vld [vmem:[#allocation5 + $0x160] sm:$0xff]
    %v552 = vld [vmem:[#allocation5 + $0x168] sm:$0xff]
    %v553 = vld [vmem:[#allocation5 + $0x170] sm:$0xff]
    %v554 = vld [vmem:[#allocation5 + $0x178] sm:$0xff]
    %v555 = vld [vmem:[#allocation5 + $0x180] sm:$0xff]
    %v556 = vld [vmem:[#allocation5 + $0x188] sm:$0xff]
    %v557 = vld [vmem:[#allocation5 + $0x190] sm:$0xff]
    %v558 = vld [vmem:[#allocation5 + $0x198] sm:$0xff]
    %v559 = vld [vmem:[#allocation5 + $0x1a0] sm:$0xff]
    %v560 = vld [vmem:[#allocation5 + $0x1a8] sm:$0xff]
    %v561 = vld [vmem:[#allocation5 + $0x1b0] sm:$0xff]
    %v562 = vld [vmem:[#allocation5 + $0x1b8] sm:$0xff]
    %v563 = vld [vmem:[#allocation5 + $0x1c0] sm:$0xff]
    %v564 = vld [vmem:[#allocation5 + $0x1c8] sm:$0xff]
    %v565 = vld [vmem:[#allocation5 + $0x1d0] sm:$0xff]
    %v566 = vld [vmem:[#allocation5 + $0x1d8] sm:$0xff]
    %v567 = vld [vmem:[#allocation5 + $0x1e0] sm:$0xff]
    %v568 = vld [vmem:[#allocation5 + $0x1e8] sm:$0xff]
    %v569 = vld [vmem:[#allocation5 + $0x1f0] sm:$0xff]
    %v570 = vld [vmem:[#allocation5 + $0x1f8] sm:$0xff]
    %v571 = vld [vmem:[#allocation5 + $0x200] sm:$0xff]
    %v572 = vld [vmem:[#allocation5 + $0x208] sm:$0xff]
    %v573 = vld [vmem:[#allocation5 + $0x210] sm:$0xff]
    %v574 = vld [vmem:[#allocation5 + $0x218] sm:$0xff]
    %v575 = vld [vmem:[#allocation5 + $0x220] sm:$0xff]
    %v576 = vld [vmem:[#allocation5 + $0x228] sm:$0xff]
    %v577 = vld [vmem:[#allocation5 + $0x230] sm:$0xff]
    %v578 = vld [vmem:[#allocation5 + $0x238] sm:$0xff]
    %v579 = vld [vmem:[#allocation5 + $0x240] sm:$0xff]
    %v580 = vld [vmem:[#allocation5 + $0x248] sm:$0xff]
    %v581 = vld [vmem:[#allocation5 + $0x250] sm:$0xff]
    %v582 = vld [vmem:[#allocation5 + $0x258] sm:$0xff]
    %v583 = vld [vmem:[#allocation5 + $0x260] sm:$0xff]
    %v584 = vld [vmem:[#allocation5 + $0x268] sm:$0xff]
    %v585 = vld [vmem:[#allocation5 + $0x270] sm:$0xff]
    %v586 = vld [vmem:[#allocation5 + $0x278] sm:$0xff]
    %v587 = vld [vmem:[#allocation5 + $0x280] sm:$0xff]
    %v588 = vld [vmem:[#allocation5 + $0x288] sm:$0xff]
    %v589 = vld [vmem:[#allocation5 + $0x290] sm:$0xff]
    %v590 = vld [vmem:[#allocation5 + $0x298] sm:$0xff]
    %v591 = vld [vmem:[#allocation5 + $0x2a0] sm:$0xff]
    %v592 = vld [vmem:[#allocation5 + $0x2a8] sm:$0xff]
    %v593 = vld [vmem:[#allocation5 + $0x2b0] sm:$0xff]
    %v594 = vld [vmem:[#allocation5 + $0x2b8] sm:$0xff]
    %v595 = vld [vmem:[#allocation5 + $0x2c0] sm:$0xff]
    %v596 = vld [vmem:[#allocation5 + $0x2c8] sm:$0xff]
    %v597 = vld [vmem:[#allocation5 + $0x2d0] sm:$0xff]
    %v598 = vld [vmem:[#allocation5 + $0x2d8] sm:$0xff]
    %v599 = vld [vmem:[#allocation5 + $0x2e0] sm:$0xff]
    %v600 = vld [vmem:[#allocation5 + $0x2e8] sm:$0xff]
    %v601 = vld [vmem:[#allocation5 + $0x2f0] sm:$0xff]
    %v602 = vld [vmem:[#allocation5 + $0x2f8] sm:$0xff]
    %v603 = vld [vmem:[#allocation5 + $0x300] sm:$0xff]
    %v604 = vld [vmem:[#allocation5 + $0x308] sm:$0xff]
    %v605 = vld [vmem:[#allocation5 + $0x310] sm:$0xff]
    %v606 = vld [vmem:[#allocation5 + $0x318] sm:$0xff]
    %v607 = vld [vmem:[#allocation5 + $0x320] sm:$0xff]
    %v608 = vld [vmem:[#allocation5 + $0x328] sm:$0xff]
    %v609 = vld [vmem:[#allocation5 + $0x330] sm:$0xff]
    %v610 = vld [vmem:[#allocation5 + $0x338] sm:$0xff]
    %v611 = vld [vmem:[#allocation5 + $0x340] sm:$0xff]
    %v612 = vld [vmem:[#allocation5 + $0x348] sm:$0xff]
    %v613 = vld [vmem:[#allocation5 + $0x350] sm:$0xff]
    %v614 = vld [vmem:[#allocation5 + $0x358] sm:$0xff]
    %v615 = vld [vmem:[#allocation5 + $0x360] sm:$0xff]
    %v616 = vld [vmem:[#allocation5 + $0x368] sm:$0xff]
    %v617 = vld [vmem:[#allocation5 + $0x370] sm:$0xff]
    %v618 = vld [vmem:[#allocation5 + $0x378] sm:$0xff]
    %v619 = vld [vmem:[#allocation5 + $0x380] sm:$0xff]
    %v620 = vld [vmem:[#allocation5 + $0x388] sm:$0xff]
    %v621 = vld [vmem:[#allocation5 + $0x390] sm:$0xff]
    %v622 = vld [vmem:[#allocation5 + $0x398] sm:$0xff]
    %v623 = vld [vmem:[#allocation5 + $0x3a0] sm:$0xff]
    %v624 = vld [vmem:[#allocation5 + $0x3a8] sm:$0xff]
    %v625 = vld [vmem:[#allocation5 + $0x3b0] sm:$0xff]
    %v626 = vld [vmem:[#allocation5 + $0x3b8] sm:$0xff]
    %v627 = vld [vmem:[#allocation5 + $0x3c0] sm:$0xff]
    %v628 = vld [vmem:[#allocation5 + $0x3c8] sm:$0xff]
    %v629 = vld [vmem:[#allocation5 + $0x3d0] sm:$0xff]
    %v630 = vld [vmem:[#allocation5 + $0x3d8] sm:$0xff]
    %v631 = vld [vmem:[#allocation5 + $0x3e0] sm:$0xff]
    %v632 = vld [vmem:[#allocation5 + $0x3e8] sm:$0xff]
    %v633 = vld [vmem:[#allocation5 + $0x3f0] sm:$0xff]
    %v634 = vld [vmem:[#allocation5 + $0x3f8] sm:$0xff]
    %v635 = vld [vmem:[#allocation2] sm:$0xff]
    %v636 = vld [vmem:[#allocation2 + $0x8] sm:$0xff]
    %v637 = vld [vmem:[#allocation2 + $0x10] sm:$0xff]
    %v638 = vld [vmem:[#allocation2 + $0x18] sm:$0xff]
    %v639 = vld [vmem:[#allocation2 + $0x20] sm:$0xff]
    %v640 = vld [vmem:[#allocation2 + $0x28] sm:$0xff]
    %v641 = vld [vmem:[#allocation2 + $0x30] sm:$0xff]
    %v642 = vld [vmem:[#allocation2 + $0x38] sm:$0xff]
    %v643 = vld [vmem:[#allocation2 + $0x40] sm:$0xff]
    %v644 = vld [vmem:[#allocation2 + $0x48] sm:$0xff]
    %v645 = vld [vmem:[#allocation2 + $0x50] sm:$0xff]
    %v646 = vld [vmem:[#allocation2 + $0x58] sm:$0xff]
    %v647 = vld [vmem:[#allocation2 + $0x60] sm:$0xff]
    %v648 = vld [vmem:[#allocation2 + $0x68] sm:$0xff]
    %v649 = vld [vmem:[#allocation2 + $0x70] sm:$0xff]
    %v650 = vld [vmem:[#allocation2 + $0x78] sm:$0xff]
    %v651 = vld [vmem:[#allocation2 + $0x80] sm:$0xff]
    %v652 = vld [vmem:[#allocation2 + $0x88] sm:$0xff]
    %v653 = vld [vmem:[#allocation2 + $0x90] sm:$0xff]
    %v654 = vld [vmem:[#allocation2 + $0x98] sm:$0xff]
    %v655 = vld [vmem:[#allocation2 + $0xa0] sm:$0xff]
    %v656 = vld [vmem:[#allocation2 + $0xa8] sm:$0xff]
    %v657 = vld [vmem:[#allocation2 + $0xb0] sm:$0xff]
    %v658 = vld [vmem:[#allocation2 + $0xb8] sm:$0xff]
    %v659 = vld [vmem:[#allocation2 + $0xc0] sm:$0xff]
    %v660 = vld [vmem:[#allocation2 + $0xc8] sm:$0xff]
    %v661 = vld [vmem:[#allocation2 + $0xd0] sm:$0xff]
    %v662 = vld [vmem:[#allocation2 + $0xd8] sm:$0xff]
    %v663 = vld [vmem:[#allocation2 + $0xe0] sm:$0xff]
    %v664 = vld [vmem:[#allocation2 + $0xe8] sm:$0xff]
    %v665 = vld [vmem:[#allocation2 + $0xf0] sm:$0xff]
    %v666 = vld [vmem:[#allocation2 + $0xf8] sm:$0xff]
    %v667 = vld [vmem:[#allocation2 + $0x100] sm:$0xff]
    %v668 = vld [vmem:[#allocation2 + $0x108] sm:$0xff]
    %v669 = vld [vmem:[#allocation2 + $0x110] sm:$0xff]
    %v670 = vld [vmem:[#allocation2 + $0x118] sm:$0xff]
    %v671 = vld [vmem:[#allocation2 + $0x120] sm:$0xff]
    %v672 = vld [vmem:[#allocation2 + $0x128] sm:$0xff]
    %v673 = vld [vmem:[#allocation2 + $0x130] sm:$0xff]
    %v674 = vld [vmem:[#allocation2 + $0x138] sm:$0xff]
    %v675 = vld [vmem:[#allocation2 + $0x140] sm:$0xff]
    %v676 = vld [vmem:[#allocation2 + $0x148] sm:$0xff]
    %v677 = vld [vmem:[#allocation2 + $0x150] sm:$0xff]
    %v678 = vld [vmem:[#allocation2 + $0x158] sm:$0xff]
    %v679 = vld [vmem:[#allocation2 + $0x160] sm:$0xff]
    %v680 = vld [vmem:[#allocation2 + $0x168] sm:$0xff]
    %v681 = vld [vmem:[#allocation2 + $0x170] sm:$0xff]
    %v682 = vld [vmem:[#allocation2 + $0x178] sm:$0xff]
    %v683 = vld [vmem:[#allocation2 + $0x180] sm:$0xff]
    %v684 = vld [vmem:[#allocation2 + $0x188] sm:$0xff]
    %v685 = vld [vmem:[#allocation2 + $0x190] sm:$0xff]
    %v686 = vld [vmem:[#allocation2 + $0x198] sm:$0xff]
    %v687 = vld [vmem:[#allocation2 + $0x1a0] sm:$0xff]
    %v688 = vld [vmem:[#allocation2 + $0x1a8] sm:$0xff]
    %v689 = vld [vmem:[#allocation2 + $0x1b0] sm:$0xff]
    %v690 = vld [vmem:[#allocation2 + $0x1b8] sm:$0xff]
    %v691 = vld [vmem:[#allocation2 + $0x1c0] sm:$0xff]
    %v692 = vld [vmem:[#allocation2 + $0x1c8] sm:$0xff]
    %v693 = vld [vmem:[#allocation2 + $0x1d0] sm:$0xff]
    %v694 = vld [vmem:[#allocation2 + $0x1d8] sm:$0xff]
    %v695 = vld [vmem:[#allocation2 + $0x1e0] sm:$0xff]
    %v696 = vld [vmem:[#allocation2 + $0x1e8] sm:$0xff]
    %v697 = vld [vmem:[#allocation2 + $0x1f0] sm:$0xff]
    %v698 = vld [vmem:[#allocation2 + $0x1f8] sm:$0xff]
    %v699 = vld [vmem:[#allocation2 + $0x200] sm:$0xff]
    %v700 = vld [vmem:[#allocation2 + $0x208] sm:$0xff]
    %v701 = vld [vmem:[#allocation2 + $0x210] sm:$0xff]
    %v702 = vld [vmem:[#allocation2 + $0x218] sm:$0xff]
    %v703 = vld [vmem:[#allocation2 + $0x220] sm:$0xff]
    %v704 = vld [vmem:[#allocation2 + $0x228] sm:$0xff]
    %v705 = vld [vmem:[#allocation2 + $0x230] sm:$0xff]
    %v706 = vld [vmem:[#allocation2 + $0x238] sm:$0xff]
    %v707 = vld [vmem:[#allocation2 + $0x240] sm:$0xff]
    %v708 = vld [vmem:[#allocation2 + $0x248] sm:$0xff]
    %v709 = vld [vmem:[#allocation2 + $0x250] sm:$0xff]
    %v710 = vld [vmem:[#allocation2 + $0x258] sm:$0xff]
    %v711 = vld [vmem:[#allocation2 + $0x260] sm:$0xff]
    %v712 = vld [vmem:[#allocation2 + $0x268] sm:$0xff]
    %v713 = vld [vmem:[#allocation2 + $0x270] sm:$0xff]
    %v714 = vld [vmem:[#allocation2 + $0x278] sm:$0xff]
    %v715 = vld [vmem:[#allocation2 + $0x280] sm:$0xff]
    %v716 = vld [vmem:[#allocation2 + $0x288] sm:$0xff]
    %v717 = vld [vmem:[#allocation2 + $0x290] sm:$0xff]
    %v718 = vld [vmem:[#allocation2 + $0x298] sm:$0xff]
    %v719 = vld [vmem:[#allocation2 + $0x2a0] sm:$0xff]
    %v720 = vld [vmem:[#allocation2 + $0x2a8] sm:$0xff]
    %v721 = vld [vmem:[#allocation2 + $0x2b0] sm:$0xff]
    %v722 = vld [vmem:[#allocation2 + $0x2b8] sm:$0xff]
    %v723 = vld [vmem:[#allocation2 + $0x2c0] sm:$0xff]
    %v724 = vld [vmem:[#allocation2 + $0x2c8] sm:$0xff]
    %v725 = vld [vmem:[#allocation2 + $0x2d0] sm:$0xff]
    %v726 = vld [vmem:[#allocation2 + $0x2d8] sm:$0xff]
    %v727 = vld [vmem:[#allocation2 + $0x2e0] sm:$0xff]
    %v728 = vld [vmem:[#allocation2 + $0x2e8] sm:$0xff]
    %v729 = vld [vmem:[#allocation2 + $0x2f0] sm:$0xff]
    %v730 = vld [vmem:[#allocation2 + $0x2f8] sm:$0xff]
    %v731 = vld [vmem:[#allocation2 + $0x300] sm:$0xff]
    %v732 = vld [vmem:[#allocation2 + $0x308] sm:$0xff]
    %v733 = vld [vmem:[#allocation2 + $0x310] sm:$0xff]
    %v734 = vld [vmem:[#allocation2 + $0x318] sm:$0xff]
    %v735 = vld [vmem:[#allocation2 + $0x320] sm:$0xff]
    %v736 = vld [vmem:[#allocation2 + $0x328] sm:$0xff]
    %v737 = vld [vmem:[#allocation2 + $0x330] sm:$0xff]
    %v738 = vld [vmem:[#allocation2 + $0x338] sm:$0xff]
    %v739 = vld [vmem:[#allocation2 + $0x340] sm:$0xff]
    %v740 = vld [vmem:[#allocation2 + $0x348] sm:$0xff]
    %v741 = vld [vmem:[#allocation2 + $0x350] sm:$0xff]
    %v742 = vld [vmem:[#allocation2 + $0x358] sm:$0xff]
    %v743 = vld [vmem:[#allocation2 + $0x360] sm:$0xff]
    %v744 = vld [vmem:[#allocation2 + $0x368] sm:$0xff]
    %v745 = vld [vmem:[#allocation2 + $0x370] sm:$0xff]
    %v746 = vld [vmem:[#allocation2 + $0x378] sm:$0xff]
    %v747 = vld [vmem:[#allocation2 + $0x380] sm:$0xff]
    %v748 = vld [vmem:[#allocation2 + $0x388] sm:$0xff]
    %v749 = vld [vmem:[#allocation2 + $0x390] sm:$0xff]
    %v750 = vld [vmem:[#allocation2 + $0x398] sm:$0xff]
    %v751 = vld [vmem:[#allocation2 + $0x3a0] sm:$0xff]
    %v752 = vld [vmem:[#allocation2 + $0x3a8] sm:$0xff]
    %v753 = vld [vmem:[#allocation2 + $0x3b0] sm:$0xff]
    %v754 = vld [vmem:[#allocation2 + $0x3b8] sm:$0xff]
    %v755 = vld [vmem:[#allocation2 + $0x3c0] sm:$0xff]
    %v756 = vld [vmem:[#allocation2 + $0x3c8] sm:$0xff]
    %v757 = vld [vmem:[#allocation2 + $0x3d0] sm:$0xff]
    %v758 = vld [vmem:[#allocation2 + $0x3d8] sm:$0xff]
    %v759 = vld [vmem:[#allocation2 + $0x3e0] sm:$0xff]
    %v760 = vld [vmem:[#allocation2 + $0x3e8] sm:$0xff]
    %v761 = vld [vmem:[#allocation2 + $0x3f0] sm:$0xff]
    %v762 = vld [vmem:[#allocation2 + $0x3f8] sm:$0xff]
    %v763 = vld [vmem:[#allocation8] sm:$0xff]
    %v764 = vld [vmem:[#allocation8 + $0x8] sm:$0xff]
    %v765 = vld [vmem:[#allocation8 + $0x10] sm:$0xff]
    %v766 = vld [vmem:[#allocation8 + $0x18] sm:$0xff]
    %v767 = vld [vmem:[#allocation8 + $0x20] sm:$0xff]
    %v768 = vld [vmem:[#allocation8 + $0x28] sm:$0xff]
    %v769 = vld [vmem:[#allocation8 + $0x30] sm:$0xff]
    %v770 = vld [vmem:[#allocation8 + $0x38] sm:$0xff]
    %v771 = vld [vmem:[#allocation8 + $0x40] sm:$0xff]
    %v772 = vld [vmem:[#allocation8 + $0x48] sm:$0xff]
    %v773 = vld [vmem:[#allocation8 + $0x50] sm:$0xff]
    %v774 = vld [vmem:[#allocation8 + $0x58] sm:$0xff]
    %v775 = vld [vmem:[#allocation8 + $0x60] sm:$0xff]
    %v776 = vld [vmem:[#allocation8 + $0x68] sm:$0xff]
    %v777 = vld [vmem:[#allocation8 + $0x70] sm:$0xff]
    %v778 = vld [vmem:[#allocation8 + $0x78] sm:$0xff]
    %v779 = vld [vmem:[#allocation8 + $0x80] sm:$0xff]
    %v780 = vld [vmem:[#allocation8 + $0x88] sm:$0xff]
    %v781 = vld [vmem:[#allocation8 + $0x90] sm:$0xff]
    %v782 = vld [vmem:[#allocation8 + $0x98] sm:$0xff]
    %v783 = vld [vmem:[#allocation8 + $0xa0] sm:$0xff]
    %v784 = vld [vmem:[#allocation8 + $0xa8] sm:$0xff]
    %v785 = vld [vmem:[#allocation8 + $0xb0] sm:$0xff]
    %v786 = vld [vmem:[#allocation8 + $0xb8] sm:$0xff]
    %v787 = vld [vmem:[#allocation8 + $0xc0] sm:$0xff]
    %v788 = vld [vmem:[#allocation8 + $0xc8] sm:$0xff]
    %v789 = vld [vmem:[#allocation8 + $0xd0] sm:$0xff]
    %v790 = vld [vmem:[#allocation8 + $0xd8] sm:$0xff]
    %v791 = vld [vmem:[#allocation8 + $0xe0] sm:$0xff]
    %v792 = vld [vmem:[#allocation8 + $0xe8] sm:$0xff]
    %v793 = vld [vmem:[#allocation8 + $0xf0] sm:$0xff]
    %v794 = vld [vmem:[#allocation8 + $0xf8] sm:$0xff]
    %v795 = vld [vmem:[#allocation8 + $0x100] sm:$0xff]
    %v796 = vld [vmem:[#allocation8 + $0x108] sm:$0xff]
    %v797 = vld [vmem:[#allocation8 + $0x110] sm:$0xff]
    %v798 = vld [vmem:[#allocation8 + $0x118] sm:$0xff]
    %v799 = vld [vmem:[#allocation8 + $0x120] sm:$0xff]
    %v800 = vld [vmem:[#allocation8 + $0x128] sm:$0xff]
    %v801 = vld [vmem:[#allocation8 + $0x130] sm:$0xff]
    %v802 = vld [vmem:[#allocation8 + $0x138] sm:$0xff]
    %v803 = vld [vmem:[#allocation8 + $0x140] sm:$0xff]
    %v804 = vld [vmem:[#allocation8 + $0x148] sm:$0xff]
    %v805 = vld [vmem:[#allocation8 + $0x150] sm:$0xff]
    %v806 = vld [vmem:[#allocation8 + $0x158] sm:$0xff]
    %v807 = vld [vmem:[#allocation8 + $0x160] sm:$0xff]
    %v808 = vld [vmem:[#allocation8 + $0x168] sm:$0xff]
    %v809 = vld [vmem:[#allocation8 + $0x170] sm:$0xff]
    %v810 = vld [vmem:[#allocation8 + $0x178] sm:$0xff]
    %v811 = vld [vmem:[#allocation8 + $0x180] sm:$0xff]
    %v812 = vld [vmem:[#allocation8 + $0x188] sm:$0xff]
    %v813 = vld [vmem:[#allocation8 + $0x190] sm:$0xff]
    %v814 = vld [vmem:[#allocation8 + $0x198] sm:$0xff]
    %v815 = vld [vmem:[#allocation8 + $0x1a0] sm:$0xff]
    %v816 = vld [vmem:[#allocation8 + $0x1a8] sm:$0xff]
    %v817 = vld [vmem:[#allocation8 + $0x1b0] sm:$0xff]
    %v818 = vld [vmem:[#allocation8 + $0x1b8] sm:$0xff]
    %v819 = vld [vmem:[#allocation8 + $0x1c0] sm:$0xff]
    %v820 = vld [vmem:[#allocation8 + $0x1c8] sm:$0xff]
    %v821 = vld [vmem:[#allocation8 + $0x1d0] sm:$0xff]
    %v822 = vld [vmem:[#allocation8 + $0x1d8] sm:$0xff]
    %v823 = vld [vmem:[#allocation8 + $0x1e0] sm:$0xff]
    %v824 = vld [vmem:[#allocation8 + $0x1e8] sm:$0xff]
    %v825 = vld [vmem:[#allocation8 + $0x1f0] sm:$0xff]
    %v826 = vld [vmem:[#allocation8 + $0x1f8] sm:$0xff]
    %v827 = vld [vmem:[#allocation8 + $0x200] sm:$0xff]
    %v828 = vld [vmem:[#allocation8 + $0x208] sm:$0xff]
    %v829 = vld [vmem:[#allocation8 + $0x210] sm:$0xff]
    %v830 = vld [vmem:[#allocation8 + $0x218] sm:$0xff]
    %v831 = vld [vmem:[#allocation8 + $0x220] sm:$0xff]
    %v832 = vld [vmem:[#allocation8 + $0x228] sm:$0xff]
    %v833 = vld [vmem:[#allocation8 + $0x230] sm:$0xff]
    %v834 = vld [vmem:[#allocation8 + $0x238] sm:$0xff]
    %v835 = vld [vmem:[#allocation8 + $0x240] sm:$0xff]
    %v836 = vld [vmem:[#allocation8 + $0x248] sm:$0xff]
    %v837 = vld [vmem:[#allocation8 + $0x250] sm:$0xff]
    %v838 = vld [vmem:[#allocation8 + $0x258] sm:$0xff]
    %v839 = vld [vmem:[#allocation8 + $0x260] sm:$0xff]
    %v840 = vld [vmem:[#allocation8 + $0x268] sm:$0xff]
    %v841 = vld [vmem:[#allocation8 + $0x270] sm:$0xff]
    %v842 = vld [vmem:[#allocation8 + $0x278] sm:$0xff]
    %v843 = vld [vmem:[#allocation8 + $0x280] sm:$0xff]
    %v844 = vld [vmem:[#allocation8 + $0x288] sm:$0xff]
    %v845 = vld [vmem:[#allocation8 + $0x290] sm:$0xff]
    %v846 = vld [vmem:[#allocation8 + $0x298] sm:$0xff]
    %v847 = vld [vmem:[#allocation8 + $0x2a0] sm:$0xff]
    %v848 = vld [vmem:[#allocation8 + $0x2a8] sm:$0xff]
    %v849 = vld [vmem:[#allocation8 + $0x2b0] sm:$0xff]
    %v850 = vld [vmem:[#allocation8 + $0x2b8] sm:$0xff]
    %v851 = vld [vmem:[#allocation8 + $0x2c0] sm:$0xff]
    %v852 = vld [vmem:[#allocation8 + $0x2c8] sm:$0xff]
    %v853 = vld [vmem:[#allocation8 + $0x2d0] sm:$0xff]
    %v854 = vld [vmem:[#allocation8 + $0x2d8] sm:$0xff]
    %v855 = vld [vmem:[#allocation8 + $0x2e0] sm:$0xff]
    %v856 = vld [vmem:[#allocation8 + $0x2e8] sm:$0xff]
    %v857 = vld [vmem:[#allocation8 + $0x2f0] sm:$0xff]
    %v858 = vld [vmem:[#allocation8 + $0x2f8] sm:$0xff]
    %v859 = vld [vmem:[#allocation8 + $0x300] sm:$0xff]
    %v860 = vld [vmem:[#allocation8 + $0x308] sm:$0xff]
    %v861 = vld [vmem:[#allocation8 + $0x310] sm:$0xff]
    %v862 = vld [vmem:[#allocation8 + $0x318] sm:$0xff]
    %v863 = vld [vmem:[#allocation8 + $0x320] sm:$0xff]
    %v864 = vld [vmem:[#allocation8 + $0x328] sm:$0xff]
    %v865 = vld [vmem:[#allocation8 + $0x330] sm:$0xff]
    %v866 = vld [vmem:[#allocation8 + $0x338] sm:$0xff]
    %v867 = vld [vmem:[#allocation8 + $0x340] sm:$0xff]
    %v868 = vld [vmem:[#allocation8 + $0x348] sm:$0xff]
    %v869 = vld [vmem:[#allocation8 + $0x350] sm:$0xff]
    %v870 = vld [vmem:[#allocation8 + $0x358] sm:$0xff]
    %v871 = vld [vmem:[#allocation8 + $0x360] sm:$0xff]
    %v872 = vld [vmem:[#allocation8 + $0x368] sm:$0xff]
    %v873 = vld [vmem:[#allocation8 + $0x370] sm:$0xff]
    %v874 = vld [vmem:[#allocation8 + $0x378] sm:$0xff]
    %v875 = vld [vmem:[#allocation8 + $0x380] sm:$0xff]
    %v876 = vld [vmem:[#allocation8 + $0x388] sm:$0xff]
    %v877 = vld [vmem:[#allocation8 + $0x390] sm:$0xff]
    %v878 = vld [vmem:[#allocation8 + $0x398] sm:$0xff]
    %v879 = vld [vmem:[#allocation8 + $0x3a0] sm:$0xff]
    %v880 = vld [vmem:[#allocation8 + $0x3a8] sm:$0xff]
    %v881 = vld [vmem:[#allocation8 + $0x3b0] sm:$0xff]
    %v882 = vld [vmem:[#allocation8 + $0x3b8] sm:$0xff]
    %v883 = vld [vmem:[#allocation8 + $0x3c0] sm:$0xff]
    %v884 = vld [vmem:[#allocation8 + $0x3c8] sm:$0xff]
    %v885 = vld [vmem:[#allocation8 + $0x3d0] sm:$0xff]
    %v886 = vld [vmem:[#allocation8 + $0x3d8] sm:$0xff]
    %v887 = vld [vmem:[#allocation8 + $0x3e0] sm:$0xff]
    %v888 = vld [vmem:[#allocation8 + $0x3e8] sm:$0xff]
    %v889 = vld [vmem:[#allocation8 + $0x3f0] sm:$0xff]
    %v890 = vld [vmem:[#allocation8 + $0x3f8] sm:$0xff]
    %v891 = vld [vmem:[#allocation8 + $0x400] sm:$0xff]
    %v892 = vld [vmem:[#allocation8 + $0x408] sm:$0xff]
    %v893 = vld [vmem:[#allocation8 + $0x410] sm:$0xff]
    %v894 = vld [vmem:[#allocation8 + $0x418] sm:$0xff]
    %v895 = vld [vmem:[#allocation8 + $0x420] sm:$0xff]
    %v896 = vld [vmem:[#allocation8 + $0x428] sm:$0xff]
    %v897 = vld [vmem:[#allocation8 + $0x430] sm:$0xff]
    %v898 = vld [vmem:[#allocation8 + $0x438] sm:$0xff]
    %v899 = vld [vmem:[#allocation8 + $0x440] sm:$0xff]
    %v900 = vld [vmem:[#allocation8 + $0x448] sm:$0xff]
    %v901 = vld [vmem:[#allocation8 + $0x450] sm:$0xff]
    %v902 = vld [vmem:[#allocation8 + $0x458] sm:$0xff]
    %v903 = vld [vmem:[#allocation8 + $0x460] sm:$0xff]
    %v904 = vld [vmem:[#allocation8 + $0x468] sm:$0xff]
    %v905 = vld [vmem:[#allocation8 + $0x470] sm:$0xff]
    %v906 = vld [vmem:[#allocation8 + $0x478] sm:$0xff]
    %v907 = vld [vmem:[#allocation8 + $0x480] sm:$0xff]
    %v908 = vld [vmem:[#allocation8 + $0x488] sm:$0xff]
    %v909 = vld [vmem:[#allocation8 + $0x490] sm:$0xff]
    %v910 = vld [vmem:[#allocation8 + $0x498] sm:$0xff]
    %v911 = vld [vmem:[#allocation8 + $0x4a0] sm:$0xff]
    %v912 = vld [vmem:[#allocation8 + $0x4a8] sm:$0xff]
    %v913 = vld [vmem:[#allocation8 + $0x4b0] sm:$0xff]
    %v914 = vld [vmem:[#allocation8 + $0x4b8] sm:$0xff]
    %v915 = vld [vmem:[#allocation8 + $0x4c0] sm:$0xff]
    %v916 = vld [vmem:[#allocation8 + $0x4c8] sm:$0xff]
    %v917 = vld [vmem:[#allocation8 + $0x4d0] sm:$0xff]
    %v918 = vld [vmem:[#allocation8 + $0x4d8] sm:$0xff]
    %v919 = vld [vmem:[#allocation8 + $0x4e0] sm:$0xff]
    %v920 = vld [vmem:[#allocation8 + $0x4e8] sm:$0xff]
    %v921 = vld [vmem:[#allocation8 + $0x4f0] sm:$0xff]
    %v922 = vld [vmem:[#allocation8 + $0x4f8] sm:$0xff]
    %v923 = vld [vmem:[#allocation8 + $0x500] sm:$0xff]
    %v924 = vld [vmem:[#allocation8 + $0x508] sm:$0xff]
    %v925 = vld [vmem:[#allocation8 + $0x510] sm:$0xff]
    %v926 = vld [vmem:[#allocation8 + $0x518] sm:$0xff]
    %v927 = vld [vmem:[#allocation8 + $0x520] sm:$0xff]
    %v928 = vld [vmem:[#allocation8 + $0x528] sm:$0xff]
    %v929 = vld [vmem:[#allocation8 + $0x530] sm:$0xff]
    %v930 = vld [vmem:[#allocation8 + $0x538] sm:$0xff]
    %v931 = vld [vmem:[#allocation8 + $0x540] sm:$0xff]
    %v932 = vld [vmem:[#allocation8 + $0x548] sm:$0xff]
    %v933 = vld [vmem:[#allocation8 + $0x550] sm:$0xff]
    %v934 = vld [vmem:[#allocation8 + $0x558] sm:$0xff]
    %v935 = vld [vmem:[#allocation8 + $0x560] sm:$0xff]
    %v936 = vld [vmem:[#allocation8 + $0x568] sm:$0xff]
    %v937 = vld [vmem:[#allocation8 + $0x570] sm:$0xff]
    %v938 = vld [vmem:[#allocation8 + $0x578] sm:$0xff]
    %v939 = vld [vmem:[#allocation8 + $0x580] sm:$0xff]
    %v940 = vld [vmem:[#allocation8 + $0x588] sm:$0xff]
    %v941 = vld [vmem:[#allocation8 + $0x590] sm:$0xff]
    %v942 = vld [vmem:[#allocation8 + $0x598] sm:$0xff]
    %v943 = vld [vmem:[#allocation8 + $0x5a0] sm:$0xff]
    %v944 = vld [vmem:[#allocation8 + $0x5a8] sm:$0xff]
    %v945 = vld [vmem:[#allocation8 + $0x5b0] sm:$0xff]
    %v946 = vld [vmem:[#allocation8 + $0x5b8] sm:$0xff]
    %v947 = vld [vmem:[#allocation8 + $0x5c0] sm:$0xff]
    %v948 = vld [vmem:[#allocation8 + $0x5c8] sm:$0xff]
    %v949 = vld [vmem:[#allocation8 + $0x5d0] sm:$0xff]
    %v950 = vld [vmem:[#allocation8 + $0x5d8] sm:$0xff]
    %v951 = vld [vmem:[#allocation8 + $0x5e0] sm:$0xff]
    %v952 = vld [vmem:[#allocation8 + $0x5e8] sm:$0xff]
    %v953 = vld [vmem:[#allocation8 + $0x5f0] sm:$0xff]
    %v954 = vld [vmem:[#allocation8 + $0x5f8] sm:$0xff]
    %v955 = vld [vmem:[#allocation8 + $0x600] sm:$0xff]
    %v956 = vld [vmem:[#allocation8 + $0x608] sm:$0xff]
    %v957 = vld [vmem:[#allocation8 + $0x610] sm:$0xff]
    %v958 = vld [vmem:[#allocation8 + $0x618] sm:$0xff]
    %v959 = vld [vmem:[#allocation8 + $0x620] sm:$0xff]
    %v960 = vld [vmem:[#allocation8 + $0x628] sm:$0xff]
    %v961 = vld [vmem:[#allocation8 + $0x630] sm:$0xff]
    %v962 = vld [vmem:[#allocation8 + $0x638] sm:$0xff]
    %v963 = vld [vmem:[#allocation8 + $0x640] sm:$0xff]
    %v964 = vld [vmem:[#allocation8 + $0x648] sm:$0xff]
    %v965 = vld [vmem:[#allocation8 + $0x650] sm:$0xff]
    %v966 = vld [vmem:[#allocation8 + $0x658] sm:$0xff]
    %v967 = vld [vmem:[#allocation8 + $0x660] sm:$0xff]
    %v968 = vld [vmem:[#allocation8 + $0x668] sm:$0xff]
    %v969 = vld [vmem:[#allocation8 + $0x670] sm:$0xff]
    %v970 = vld [vmem:[#allocation8 + $0x678] sm:$0xff]
    %v971 = vld [vmem:[#allocation8 + $0x680] sm:$0xff]
    %v972 = vld [vmem:[#allocation8 + $0x688] sm:$0xff]
    %v973 = vld [vmem:[#allocation8 + $0x690] sm:$0xff]
    %v974 = vld [vmem:[#allocation8 + $0x698] sm:$0xff]
    %v975 = vld [vmem:[#allocation8 + $0x6a0] sm:$0xff]
    %v976 = vld [vmem:[#allocation8 + $0x6a8] sm:$0xff]
    %v977 = vld [vmem:[#allocation8 + $0x6b0] sm:$0xff]
    %v978 = vld [vmem:[#allocation8 + $0x6b8] sm:$0xff]
    %v979 = vld [vmem:[#allocation8 + $0x6c0] sm:$0xff]
    %v980 = vld [vmem:[#allocation8 + $0x6c8] sm:$0xff]
    %v981 = vld [vmem:[#allocation8 + $0x6d0] sm:$0xff]
    %v982 = vld [vmem:[#allocation8 + $0x6d8] sm:$0xff]
    %v983 = vld [vmem:[#allocation8 + $0x6e0] sm:$0xff]
    %v984 = vld [vmem:[#allocation8 + $0x6e8] sm:$0xff]
    %v985 = vld [vmem:[#allocation8 + $0x6f0] sm:$0xff]
    %v986 = vld [vmem:[#allocation8 + $0x6f8] sm:$0xff]
    %v987 = vld [vmem:[#allocation8 + $0x700] sm:$0xff]
    %v988 = vld [vmem:[#allocation8 + $0x708] sm:$0xff]
    %v989 = vld [vmem:[#allocation8 + $0x710] sm:$0xff]
    %v990 = vld [vmem:[#allocation8 + $0x718] sm:$0xff]
    %v991 = vld [vmem:[#allocation8 + $0x720] sm:$0xff]
    %v992 = vld [vmem:[#allocation8 + $0x728] sm:$0xff]
    %v993 = vld [vmem:[#allocation8 + $0x730] sm:$0xff]
    %v994 = vld [vmem:[#allocation8 + $0x738] sm:$0xff]
    %v995 = vld [vmem:[#allocation8 + $0x740] sm:$0xff]
    %v996 = vld [vmem:[#allocation8 + $0x748] sm:$0xff]
    %v997 = vld [vmem:[#allocation8 + $0x750] sm:$0xff]
    %v998 = vld [vmem:[#allocation8 + $0x758] sm:$0xff]
    %v999 = vld [vmem:[#allocation8 + $0x760] sm:$0xff]
    %v1000 = vld [vmem:[#allocation8 + $0x768] sm:$0xff]
    %v1001 = vld [vmem:[#allocation8 + $0x770] sm:$0xff]
    %v1002 = vld [vmem:[#allocation8 + $0x778] sm:$0xff]
    %v1003 = vld [vmem:[#allocation8 + $0x780] sm:$0xff]
    %v1004 = vld [vmem:[#allocation8 + $0x788] sm:$0xff]
    %v1005 = vld [vmem:[#allocation8 + $0x790] sm:$0xff]
    %v1006 = vld [vmem:[#allocation8 + $0x798] sm:$0xff]
    %v1007 = vld [vmem:[#allocation8 + $0x7a0] sm:$0xff]
    %v1008 = vld [vmem:[#allocation8 + $0x7a8] sm:$0xff]
    %v1009 = vld [vmem:[#allocation8 + $0x7b0] sm:$0xff]
    %v1010 = vld [vmem:[#allocation8 + $0x7b8] sm:$0xff]
    %v1011 = vld [vmem:[#allocation8 + $0x7c0] sm:$0xff]
    %v1012 = vld [vmem:[#allocation8 + $0x7c8] sm:$0xff]
    %v1013 = vld [vmem:[#allocation8 + $0x7d0] sm:$0xff]
    %v1014 = vld [vmem:[#allocation8 + $0x7d8] sm:$0xff]
    %v1015 = vld [vmem:[#allocation8 + $0x7e0] sm:$0xff]
    %v1016 = vld [vmem:[#allocation8 + $0x7e8] sm:$0xff]
    %v1017 = vld [vmem:[#allocation8 + $0x7f0] sm:$0xff]
    %v1018 = vld [vmem:[#allocation8 + $0x7f8] sm:$0xff]
    %1019 = vmatprep.subr.mxu0 %v764
    %1020 = vmatpush1.msra.mxu0 %v763
    %1021 = vmatprep.subr.mxu0 %v768
    %1022 = vmatpush1.msra.mxu0 %v767
    %1023 = vmatprep.subr.mxu0 %v772
    %1024 = vmatpush1.msra.mxu0 %v771
    %1025 = vmatprep.subr.mxu0 %v776
    %1026 = vmatpush1.msra.mxu0 %v775
    %1027 = vmatprep.subr.mxu0 %v780
    %1028 = vmatpush1.msra.mxu0 %v779
    %1029 = vmatprep.subr.mxu0 %v784
    %1030 = vmatpush1.msra.mxu0 %v783
    %1031 = vmatprep.subr.mxu0 %v788
    %1032 = vmatpush1.msra.mxu0 %v787
    %1033 = vmatprep.subr.mxu0 %v792
    %1034 = vmatpush1.msra.mxu0 %v791
    %1035 = vmatprep.subr.mxu0 %v796
    %1036 = vmatpush1.msra.mxu0 %v795
    %1037 = vmatprep.subr.mxu0 %v800
    %1038 = vmatpush1.msra.mxu0 %v799
    %1039 = vmatprep.subr.mxu0 %v804
    %1040 = vmatpush1.msra.mxu0 %v803
    %1041 = vmatprep.subr.mxu0 %v808
    %1042 = vmatpush1.msra.mxu0 %v807
    %1043 = vmatprep.subr.mxu0 %v812
    %1044 = vmatpush1.msra.mxu0 %v811
    %1045 = vmatprep.subr.mxu0 %v816
    %1046 = vmatpush1.msra.mxu0 %v815
    %1047 = vmatprep.subr.mxu0 %v820
    %1048 = vmatpush1.msra.mxu0 %v819
    %1049 = vmatprep.subr.mxu0 %v824
    %1050 = vmatpush1.msra.mxu0 %v823
    %1051 = vmatprep.subr.mxu0 %v828
    %1052 = vmatpush1.msra.mxu0 %v827
    %1053 = vmatprep.subr.mxu0 %v832
    %1054 = vmatpush1.msra.mxu0 %v831
    %1055 = vmatprep.subr.mxu0 %v836
    %1056 = vmatpush1.msra.mxu0 %v835
    %1057 = vmatprep.subr.mxu0 %v840
    %1058 = vmatpush1.msra.mxu0 %v839
    %1059 = vmatprep.subr.mxu0 %v844
    %1060 = vmatpush1.msra.mxu0 %v843
    %1061 = vmatprep.subr.mxu0 %v848
    %1062 = vmatpush1.msra.mxu0 %v847
    %1063 = vmatprep.subr.mxu0 %v852
    %1064 = vmatpush1.msra.mxu0 %v851
    %1065 = vmatprep.subr.mxu0 %v856
    %1066 = vmatpush1.msra.mxu0 %v855
    %1067 = vmatprep.subr.mxu0 %v860
    %1068 = vmatpush1.msra.mxu0 %v859
    %1069 = vmatprep.subr.mxu0 %v864
    %1070 = vmatpush1.msra.mxu0 %v863
    %1071 = vmatprep.subr.mxu0 %v868
    %1072 = vmatpush1.msra.mxu0 %v867
    %1073 = vmatprep.subr.mxu0 %v872
    %1074 = vmatpush1.msra.mxu0 %v871
    %1075 = vmatprep.subr.mxu0 %v876
    %1076 = vmatpush1.msra.mxu0 %v875
    %1077 = vmatprep.subr.mxu0 %v880
    %1078 = vmatpush1.msra.mxu0 %v879
    %1079 = vmatprep.subr.mxu0 %v884
    %1080 = vmatpush1.msra.mxu0 %v883
    %1081 = vmatprep.subr.mxu0 %v888
    %1082 = vmatpush1.msra.mxu0 %v887
    %1083 = vmatprep.mubr.f32.mxu0 %v508
    %1084 = vmatmul.mubr.f32.gmra.mrb[0].mxu0 %v507
    %v1085 = vpop.f32.mrb[0].mxu0
    %v1086 = vadd.f32 0.0, %v1085
    %v1087 = vpop.f32.mrb[0].mxu0
    %v1088 = vadd.f32 0.0, %v1087
    %1089 = vmatprep.mubr.f32.mxu0 %v512
    %1090 = vmatmul.mubr.f32.gmra.mrb[0].mxu0 %v511
    %v1091 = vpop.f32.mrb[0].mxu0
    %v1092 = vadd.f32 0.0, %v1091
    %v1093 = vpop.f32.mrb[0].mxu0
    %v1094 = vadd.f32 0.0, %v1093
    %1095 = vmatprep.mubr.f32.mxu0 %v516
    %1096 = vmatmul.mubr.f32.gmra.mrb[0].mxu0 %v515
    %v1097 = vpop.f32.mrb[0].mxu0
    %v1098 = vadd.f32 0.0, %v1097
    %v1099 = vpop.f32.mrb[0].mxu0
    %v1100 = vadd.f32 0.0, %v1099
    %1101 = vmatprep.mubr.f32.mxu0 %v520
    %1102 = vmatmul.mubr.f32.gmra.mrb[0].mxu0 %v519
    %v1103 = vpop.f32.mrb[0].mxu0
    %v1104 = vadd.f32 0.0, %v1103
    %v1105 = vpop.f32.mrb[0].mxu0
    %v1106 = vadd.f32 0.0, %v1105
    %1107 = vmatprep.mubr.f32.mxu0 %v524
    %1108 = vmatmul.mubr.f32.gmra.mrb[0].mxu0 %v523
    %v1109 = vpop.f32.mrb[0].mxu0
    %v1110 = vadd.f32 0.0, %v1109
    %v1111 = vpop.f32.mrb[0].mxu0
    %v1112 = vadd.f32 0.0, %v1111
    %1113 = vmatprep.mubr.f32.mxu0 %v528
    %1114 = vmatmul.mubr.f32.gmra.mrb[0].mxu0 %v527
    %v1115 = vpop.f32.mrb[0].mxu0
    %v1116 = vadd.f32 0.0, %v1115
    %v1117 = vpop.f32.mrb[0].mxu0
    %v1118 = vadd.f32 0.0, %v1117
    %1119 = vmatprep.mubr.f32.mxu0 %v532
    %1120 = vmatmul.mubr.f32.gmra.mrb[0].mxu0 %v531
    %v1121 = vpop.f32.mrb[0].mxu0
    %v1122 = vadd.f32 0.0, %v1121
    %v1123 = vpop.f32.mrb[0].mxu0
    %v1124 = vadd.f32 0.0, %v1123
    %1125 = vmatprep.mubr.f32.mxu0 %v536
    %1126 = vmatmul.mubr.f32.gmra.mrb[0].mxu0 %v535
    %v1127 = vpop.f32.mrb[0].mxu0
    %v1128 = vadd.f32 0.0, %v1127
    %v1129 = vpop.f32.mrb[0].mxu0
    %v1130 = vadd.f32 0.0, %v1129
    %1131 = vmatprep.mubr.f32.mxu0 %v540
    %1132 = vmatmul.mubr.f32.gmra.mrb[0].mxu0 %v539
    %v1133 = vpop.f32.mrb[0].mxu0
    %v1134 = vadd.f32 0.0, %v1133
    %v1135 = vpop.f32.mrb[0].mxu0
    %v1136 = vadd.f32 0.0, %v1135
    %1137 = vmatprep.mubr.f32.mxu0 %v544
    %1138 = vmatmul.mubr.f32.gmra.mrb[0].mxu0 %v543
    %v1139 = vpop.f32.mrb[0].mxu0
    %v1140 = vadd.f32 0.0, %v1139
    %v1141 = vpop.f32.mrb[0].mxu0
    %v1142 = vadd.f32 0.0, %v1141
    %1143 = vmatprep.mubr.f32.mxu0 %v548
    %1144 = vmatmul.mubr.f32.gmra.mrb[0].mxu0 %v547
    %v1145 = vpop.f32.mrb[0].mxu0
    %v1146 = vadd.f32 0.0, %v1145
    %v1147 = vpop.f32.mrb[0].mxu0
    %v1148 = vadd.f32 0.0, %v1147
    %1149 = vmatprep.mubr.f32.mxu0 %v552
    %1150 = vmatmul.mubr.f32.gmra.mrb[0].mxu0 %v551
    %v1151 = vpop.f32.mrb[0].mxu0
    %v1152 = vadd.f32 0.0, %v1151
    %v1153 = vpop.f32.mrb[0].mxu0
    %v1154 = vadd.f32 0.0, %v1153
    %1155 = vmatprep.mubr.f32.mxu0 %v556
    %1156 = vmatmul.mubr.f32.gmra.mrb[0].mxu0 %v555
    %v1157 = vpop.f32.mrb[0].mxu0
    %v1158 = vadd.f32 0.0, %v1157
    %v1159 = vpop.f32.mrb[0].mxu0
    %v1160 = vadd.f32 0.0, %v1159
    %1161 = vmatprep.mubr.f32.mxu0 %v560
    %1162 = vmatmul.mubr.f32.gmra.mrb[0].mxu0 %v559
    %v1163 = vpop.f32.mrb[0].mxu0
    %v1164 = vadd.f32 0.0, %v1163
    %v1165 = vpop.f32.mrb[0].mxu0
    %v1166 = vadd.f32 0.0, %v1165
    %1167 = vmatprep.mubr.f32.mxu0 %v564
    %1168 = vmatmul.mubr.f32.gmra.mrb[0].mxu0 %v563
    %v1169 = vpop.f32.mrb[0].mxu0
    %v1170 = vadd.f32 0.0, %v1169
    %v1171 = vpop.f32.mrb[0].mxu0
    %v1172 = vadd.f32 0.0, %v1171
    %1173 = vmatprep.mubr.f32.mxu0 %v568
    %1174 = vmatmul.mubr.f32.gmra.mrb[0].mxu0 %v567
    %v1175 = vpop.f32.mrb[0].mxu0
    %v1176 = vadd.f32 0.0, %v1175
    %v1177 = vpop.f32.mrb[0].mxu0
    %v1178 = vadd.f32 0.0, %v1177
    %1179 = vmatprep.mubr.f32.mxu0 %v572
    %1180 = vmatmul.mubr.f32.gmra.mrb[0].mxu0 %v571
    %v1181 = vpop.f32.mrb[0].mxu0
    %v1182 = vadd.f32 0.0, %v1181
    %v1183 = vpop.f32.mrb[0].mxu0
    %v1184 = vadd.f32 0.0, %v1183
    %1185 = vmatprep.mubr.f32.mxu0 %v576
    %1186 = vmatmul.mubr.f32.gmra.mrb[0].mxu0 %v575
    %v1187 = vpop.f32.mrb[0].mxu0
    %v1188 = vadd.f32 0.0, %v1187
    %v1189 = vpop.f32.mrb[0].mxu0
    %v1190 = vadd.f32 0.0, %v1189
    %1191 = vmatprep.mubr.f32.mxu0 %v580
    %1192 = vmatmul.mubr.f32.gmra.mrb[0].mxu0 %v579
    %v1193 = vpop.f32.mrb[0].mxu0
    %v1194 = vadd.f32 0.0, %v1193
    %v1195 = vpop.f32.mrb[0].mxu0
    %v1196 = vadd.f32 0.0, %v1195
    %1197 = vmatprep.mubr.f32.mxu0 %v584
    %1198 = vmatmul.mubr.f32.gmra.mrb[0].mxu0 %v583
    %v1199 = vpop.f32.mrb[0].mxu0
    %v1200 = vadd.f32 0.0, %v1199
    %v1201 = vpop.f32.mrb[0].mxu0
    %v1202 = vadd.f32 0.0, %v1201
    %1203 = vmatprep.mubr.f32.mxu0 %v588
    %1204 = vmatmul.mubr.f32.gmra.mrb[0].mxu0 %v587
    %v1205 = vpop.f32.mrb[0].mxu0
    %v1206 = vadd.f32 0.0, %v1205
    %v1207 = vpop.f32.mrb[0].mxu0
    %v1208 = vadd.f32 0.0, %v1207
    %1209 = vmatprep.mubr.f32.mxu0 %v592
    %1210 = vmatmul.mubr.f32.gmra.mrb[0].mxu0 %v591
    %v1211 = vpop.f32.mrb[0].mxu0
    %v1212 = vadd.f32 0.0, %v1211
    %v1213 = vpop.f32.mrb[0].mxu0
    %v1214 = vadd.f32 0.0, %v1213
    %1215 = vmatprep.mubr.f32.mxu0 %v596
    %1216 = vmatmul.mubr.f32.gmra.mrb[0].mxu0 %v595
    %v1217 = vpop.f32.mrb[0].mxu0
    %v1218 = vadd.f32 0.0, %v1217
    %v1219 = vpop.f32.mrb[0].mxu0
    %v1220 = vadd.f32 0.0, %v1219
    %1221 = vmatprep.mubr.f32.mxu0 %v600
    %1222 = vmatmul.mubr.f32.gmra.mrb[0].mxu0 %v599
    %v1223 = vpop.f32.mrb[0].mxu0
    %v1224 = vadd.f32 0.0, %v1223
    %v1225 = vpop.f32.mrb[0].mxu0
    %v1226 = vadd.f32 0.0, %v1225
    %1227 = vmatprep.mubr.f32.mxu0 %v604
    %1228 = vmatmul.mubr.f32.gmra.mrb[0].mxu0 %v603
    %v1229 = vpop.f32.mrb[0].mxu0
    %v1230 = vadd.f32 0.0, %v1229
    %v1231 = vpop.f32.mrb[0].mxu0
    %v1232 = vadd.f32 0.0, %v1231
    %1233 = vmatprep.mubr.f32.mxu0 %v608
    %1234 = vmatmul.mubr.f32.gmra.mrb[0].mxu0 %v607
    %v1235 = vpop.f32.mrb[0].mxu0
    %v1236 = vadd.f32 0.0, %v1235
    %v1237 = vpop.f32.mrb[0].mxu0
    %v1238 = vadd.f32 0.0, %v1237
    %1239 = vmatprep.mubr.f32.mxu0 %v612
    %1240 = vmatmul.mubr.f32.gmra.mrb[0].mxu0 %v611
    %v1241 = vpop.f32.mrb[0].mxu0
    %v1242 = vadd.f32 0.0, %v1241
    %v1243 = vpop.f32.mrb[0].mxu0
    %v1244 = vadd.f32 0.0, %v1243
    %1245 = vmatprep.mubr.f32.mxu0 %v616
    %1246 = vmatmul.mubr.f32.gmra.mrb[0].mxu0 %v615
    %v1247 = vpop.f32.mrb[0].mxu0
    %v1248 = vadd.f32 0.0, %v1247
    %v1249 = vpop.f32.mrb[0].mxu0
    %v1250 = vadd.f32 0.0, %v1249
    %1251 = vmatprep.mubr.f32.mxu0 %v620
    %1252 = vmatmul.mubr.f32.gmra.mrb[0].mxu0 %v619
    %v1253 = vpop.f32.mrb[0].mxu0
    %v1254 = vadd.f32 0.0, %v1253
    %v1255 = vpop.f32.mrb[0].mxu0
    %v1256 = vadd.f32 0.0, %v1255
    %1257 = vmatprep.mubr.f32.mxu0 %v624
    %1258 = vmatmul.mubr.f32.gmra.mrb[0].mxu0 %v623
    %v1259 = vpop.f32.mrb[0].mxu0
    %v1260 = vadd.f32 0.0, %v1259
    %v1261 = vpop.f32.mrb[0].mxu0
    %v1262 = vadd.f32 0.0, %v1261
    %1263 = vmatprep.mubr.f32.mxu0 %v628
    %1264 = vmatmul.mubr.f32.gmra.mrb[0].mxu0 %v627
    %v1265 = vpop.f32.mrb[0].mxu0
    %v1266 = vadd.f32 0.0, %v1265
    %v1267 = vpop.f32.mrb[0].mxu0
    %v1268 = vadd.f32 0.0, %v1267
    %1269 = vmatprep.mubr.f32.mxu0 %v632
    %1270 = vmatmul.mubr.f32.gmra.mrb[0].mxu0 %v631
    %v1271 = vpop.f32.mrb[0].mxu0
    %v1272 = vadd.f32 0.0, %v1271
    %v1273 = vpop.f32.mrb[0].mxu0
    %v1274 = vadd.f32 0.0, %v1273
    %1275 = vdwg.mxu0
    %1276 = vmatprep.subr.mxu0 %v892
    %1277 = vmatpush1.msra.mxu0 %v891
    %1278 = vmatprep.subr.mxu0 %v896
    %1279 = vmatpush1.msra.mxu0 %v895
    %1280 = vmatprep.subr.mxu0 %v900
    %1281 = vmatpush1.msra.mxu0 %v899
    %1282 = vmatprep.subr.mxu0 %v904
    %1283 = vmatpush1.msra.mxu0 %v903
    %1284 = vmatprep.subr.mxu0 %v908
    %1285 = vmatpush1.msra.mxu0 %v907
    %1286 = vmatprep.subr.mxu0 %v912
    %1287 = vmatpush1.msra.mxu0 %v911
    %1288 = vmatprep.subr.mxu0 %v916
    %1289 = vmatpush1.msra.mxu0 %v915
    %1290 = vmatprep.subr.mxu0 %v920
    %1291 = vmatpush1.msra.mxu0 %v919
    %1292 = vmatprep.subr.mxu0 %v924
    %1293 = vmatpush1.msra.mxu0 %v923
    %1294 = vmatprep.subr.mxu0 %v928
    %1295 = vmatpush1.msra.mxu0 %v927
    %1296 = vmatprep.subr.mxu0 %v932
    %1297 = vmatpush1.msra.mxu0 %v931
    %1298 = vmatprep.subr.mxu0 %v936
    %1299 = vmatpush1.msra.mxu0 %v935
    %1300 = vmatprep.subr.mxu0 %v940
    %1301 = vmatpush1.msra.mxu0 %v939
    %1302 = vmatprep.subr.mxu0 %v944
    %1303 = vmatpush1.msra.mxu0 %v943
    %1304 = vmatprep.subr.mxu0 %v948
    %1305 = vmatpush1.msra.mxu0 %v947
    %1306 = vmatprep.subr.mxu0 %v952
    %1307 = vmatpush1.msra.mxu0 %v951
    %1308 = vmatprep.subr.mxu0 %v956
    %1309 = vmatpush1.msra.mxu0 %v955
    %1310 = vmatprep.subr.mxu0 %v960
    %1311 = vmatpush1.msra.mxu0 %v959
    %1312 = vmatprep.subr.mxu0 %v964
    %1313 = vmatpush1.msra.mxu0 %v963
    %1314 = vmatprep.subr.mxu0 %v968
    %1315 = vmatpush1.msra.mxu0 %v967
    %1316 = vmatprep.subr.mxu0 %v972
    %1317 = vmatpush1.msra.mxu0 %v971
    %1318 = vmatprep.subr.mxu0 %v976
    %1319 = vmatpush1.msra.mxu0 %v975
    %1320 = vmatprep.subr.mxu0 %v980
    %1321 = vmatpush1.msra.mxu0 %v979
    %1322 = vmatprep.subr.mxu0 %v984
    %1323 = vmatpush1.msra.mxu0 %v983
    %1324 = vmatprep.subr.mxu0 %v988
    %1325 = vmatpush1.msra.mxu0 %v987
    %1326 = vmatprep.subr.mxu0 %v992
    %1327 = vmatpush1.msra.mxu0 %v991
    %1328 = vmatprep.subr.mxu0 %v996
    %1329 = vmatpush1.msra.mxu0 %v995
    %1330 = vmatprep.subr.mxu0 %v1000
    %1331 = vmatpush1.msra.mxu0 %v999
    %1332 = vmatprep.subr.mxu0 %v1004
    %1333 = vmatpush1.msra.mxu0 %v1003
    %1334 = vmatprep.subr.mxu0 %v1008
    %1335 = vmatpush1.msra.mxu0 %v1007
    %1336 = vmatprep.subr.mxu0 %v1012
    %1337 = vmatpush1.msra.mxu0 %v1011
    %1338 = vmatprep.subr.mxu0 %v1016
    %1339 = vmatpush1.msra.mxu0 %v1015
    %1340 = vmatprep.mubr.f32.mxu0 %v510
    %1341 = vmatmul.mubr.f32.gmra.mrb[0].mxu0 %v509
    %v1342 = vpop.f32.mrb[0].mxu0
    %v1343 = vadd.f32 %v1086, %v1342
    %v1344 = vpop.f32.mrb[0].mxu0
    %v1345 = vadd.f32 %v1088, %v1344
    %1346 = vmatprep.mubr.f32.mxu0 %v514
    %1347 = vmatmul.mubr.f32.gmra.mrb[0].mxu0 %v513
    %v1348 = vpop.f32.mrb[0].mxu0
    %v1349 = vadd.f32 %v1092, %v1348
    %v1350 = vpop.f32.mrb[0].mxu0
    %v1351 = vadd.f32 %v1094, %v1350
    %1352 = vmatprep.mubr.f32.mxu0 %v518
    %1353 = vmatmul.mubr.f32.gmra.mrb[0].mxu0 %v517
    %v1354 = vpop.f32.mrb[0].mxu0
    %v1355 = vadd.f32 %v1098, %v1354
    %v1356 = vpop.f32.mrb[0].mxu0
    %v1357 = vadd.f32 %v1100, %v1356
    %1358 = vmatprep.mubr.f32.mxu0 %v522
    %1359 = vmatmul.mubr.f32.gmra.mrb[0].mxu0 %v521
    %v1360 = vpop.f32.mrb[0].mxu0
    %v1361 = vadd.f32 %v1104, %v1360
    %v1362 = vpop.f32.mrb[0].mxu0
    %v1363 = vadd.f32 %v1106, %v1362
    %1364 = vmatprep.mubr.f32.mxu0 %v526
    %1365 = vmatmul.mubr.f32.gmra.mrb[0].mxu0 %v525
    %v1366 = vpop.f32.mrb[0].mxu0
    %v1367 = vadd.f32 %v1110, %v1366
    %v1368 = vpop.f32.mrb[0].mxu0
    %v1369 = vadd.f32 %v1112, %v1368
    %1370 = vmatprep.mubr.f32.mxu0 %v530
    %1371 = vmatmul.mubr.f32.gmra.mrb[0].mxu0 %v529
    %v1372 = vpop.f32.mrb[0].mxu0
    %v1373 = vadd.f32 %v1116, %v1372
    %v1374 = vpop.f32.mrb[0].mxu0
    %v1375 = vadd.f32 %v1118, %v1374
    %1376 = vmatprep.mubr.f32.mxu0 %v534
    %1377 = vmatmul.mubr.f32.gmra.mrb[0].mxu0 %v533
    %v1378 = vpop.f32.mrb[0].mxu0
    %v1379 = vadd.f32 %v1122, %v1378
    %v1380 = vpop.f32.mrb[0].mxu0
    %v1381 = vadd.f32 %v1124, %v1380
    %1382 = vmatprep.mubr.f32.mxu0 %v538
    %1383 = vmatmul.mubr.f32.gmra.mrb[0].mxu0 %v537
    %v1384 = vpop.f32.mrb[0].mxu0
    %v1385 = vadd.f32 %v1128, %v1384
    %v1386 = vpop.f32.mrb[0].mxu0
    %v1387 = vadd.f32 %v1130, %v1386
    %1388 = vmatprep.mubr.f32.mxu0 %v542
    %1389 = vmatmul.mubr.f32.gmra.mrb[0].mxu0 %v541
    %v1390 = vpop.f32.mrb[0].mxu0
    %v1391 = vadd.f32 %v1134, %v1390
    %v1392 = vpop.f32.mrb[0].mxu0
    %v1393 = vadd.f32 %v1136, %v1392
    %1394 = vmatprep.mubr.f32.mxu0 %v546
    %1395 = vmatmul.mubr.f32.gmra.mrb[0].mxu0 %v545
    %v1396 = vpop.f32.mrb[0].mxu0
    %v1397 = vadd.f32 %v1140, %v1396
    %v1398 = vpop.f32.mrb[0].mxu0
    %v1399 = vadd.f32 %v1142, %v1398
    %1400 = vmatprep.mubr.f32.mxu0 %v550
    %1401 = vmatmul.mubr.f32.gmra.mrb[0].mxu0 %v549
    %v1402 = vpop.f32.mrb[0].mxu0
    %v1403 = vadd.f32 %v1146, %v1402
    %v1404 = vpop.f32.mrb[0].mxu0
    %v1405 = vadd.f32 %v1148, %v1404
    %1406 = vmatprep.mubr.f32.mxu0 %v554
    %1407 = vmatmul.mubr.f32.gmra.mrb[0].mxu0 %v553
    %v1408 = vpop.f32.mrb[0].mxu0
    %v1409 = vadd.f32 %v1152, %v1408
    %v1410 = vpop.f32.mrb[0].mxu0
    %v1411 = vadd.f32 %v1154, %v1410
    %1412 = vmatprep.mubr.f32.mxu0 %v558
    %1413 = vmatmul.mubr.f32.gmra.mrb[0].mxu0 %v557
    %v1414 = vpop.f32.mrb[0].mxu0
    %v1415 = vadd.f32 %v1158, %v1414
    %v1416 = vpop.f32.mrb[0].mxu0
    %v1417 = vadd.f32 %v1160, %v1416
    %1418 = vmatprep.mubr.f32.mxu0 %v562
    %1419 = vmatmul.mubr.f32.gmra.mrb[0].mxu0 %v561
    %v1420 = vpop.f32.mrb[0].mxu0
    %v1421 = vadd.f32 %v1164, %v1420
    %v1422 = vpop.f32.mrb[0].mxu0
    %v1423 = vadd.f32 %v1166, %v1422
    %1424 = vmatprep.mubr.f32.mxu0 %v566
    %1425 = vmatmul.mubr.f32.gmra.mrb[0].mxu0 %v565
    %v1426 = vpop.f32.mrb[0].mxu0
    %v1427 = vadd.f32 %v1170, %v1426
    %v1428 = vpop.f32.mrb[0].mxu0
    %v1429 = vadd.f32 %v1172, %v1428
    %1430 = vmatprep.mubr.f32.mxu0 %v570
    %1431 = vmatmul.mubr.f32.gmra.mrb[0].mxu0 %v569
    %v1432 = vpop.f32.mrb[0].mxu0
    %v1433 = vadd.f32 %v1176, %v1432
    %v1434 = vpop.f32.mrb[0].mxu0
    %v1435 = vadd.f32 %v1178, %v1434
    %1436 = vmatprep.mubr.f32.mxu0 %v574
    %1437 = vmatmul.mubr.f32.gmra.mrb[0].mxu0 %v573
    %v1438 = vpop.f32.mrb[0].mxu0
    %v1439 = vadd.f32 %v1182, %v1438
    %v1440 = vpop.f32.mrb[0].mxu0
    %v1441 = vadd.f32 %v1184, %v1440
    %1442 = vmatprep.mubr.f32.mxu0 %v578
    %1443 = vmatmul.mubr.f32.gmra.mrb[0].mxu0 %v577
    %v1444 = vpop.f32.mrb[0].mxu0
    %v1445 = vadd.f32 %v1188, %v1444
    %v1446 = vpop.f32.mrb[0].mxu0
    %v1447 = vadd.f32 %v1190, %v1446
    %1448 = vmatprep.mubr.f32.mxu0 %v582
    %1449 = vmatmul.mubr.f32.gmra.mrb[0].mxu0 %v581
    %v1450 = vpop.f32.mrb[0].mxu0
    %v1451 = vadd.f32 %v1194, %v1450
    %v1452 = vpop.f32.mrb[0].mxu0
    %v1453 = vadd.f32 %v1196, %v1452
    %1454 = vmatprep.mubr.f32.mxu0 %v586
    %1455 = vmatmul.mubr.f32.gmra.mrb[0].mxu0 %v585
    %v1456 = vpop.f32.mrb[0].mxu0
    %v1457 = vadd.f32 %v1200, %v1456
    %v1458 = vpop.f32.mrb[0].mxu0
    %v1459 = vadd.f32 %v1202, %v1458
    %1460 = vmatprep.mubr.f32.mxu0 %v590
    %1461 = vmatmul.mubr.f32.gmra.mrb[0].mxu0 %v589
    %v1462 = vpop.f32.mrb[0].mxu0
    %v1463 = vadd.f32 %v1206, %v1462
    %v1464 = vpop.f32.mrb[0].mxu0
    %v1465 = vadd.f32 %v1208, %v1464
    %1466 = vmatprep.mubr.f32.mxu0 %v594
    %1467 = vmatmul.mubr.f32.gmra.mrb[0].mxu0 %v593
    %v1468 = vpop.f32.mrb[0].mxu0
    %v1469 = vadd.f32 %v1212, %v1468
    %v1470 = vpop.f32.mrb[0].mxu0
    %v1471 = vadd.f32 %v1214, %v1470
    %1472 = vmatprep.mubr.f32.mxu0 %v598
    %1473 = vmatmul.mubr.f32.gmra.mrb[0].mxu0 %v597
    %v1474 = vpop.f32.mrb[0].mxu0
    %v1475 = vadd.f32 %v1218, %v1474
    %v1476 = vpop.f32.mrb[0].mxu0
    %v1477 = vadd.f32 %v1220, %v1476
    %1478 = vmatprep.mubr.f32.mxu0 %v602
    %1479 = vmatmul.mubr.f32.gmra.mrb[0].mxu0 %v601
    %v1480 = vpop.f32.mrb[0].mxu0
    %v1481 = vadd.f32 %v1224, %v1480
    %v1482 = vpop.f32.mrb[0].mxu0
    %v1483 = vadd.f32 %v1226, %v1482
    %1484 = vmatprep.mubr.f32.mxu0 %v606
    %1485 = vmatmul.mubr.f32.gmra.mrb[0].mxu0 %v605
    %v1486 = vpop.f32.mrb[0].mxu0
    %v1487 = vadd.f32 %v1230, %v1486
    %v1488 = vpop.f32.mrb[0].mxu0
    %v1489 = vadd.f32 %v1232, %v1488
    %1490 = vmatprep.mubr.f32.mxu0 %v610
    %1491 = vmatmul.mubr.f32.gmra.mrb[0].mxu0 %v609
    %v1492 = vpop.f32.mrb[0].mxu0
    %v1493 = vadd.f32 %v1236, %v1492
    %v1494 = vpop.f32.mrb[0].mxu0
    %v1495 = vadd.f32 %v1238, %v1494
    %1496 = vmatprep.mubr.f32.mxu0 %v614
    %1497 = vmatmul.mubr.f32.gmra.mrb[0].mxu0 %v613
    %v1498 = vpop.f32.mrb[0].mxu0
    %v1499 = vadd.f32 %v1242, %v1498
    %v1500 = vpop.f32.mrb[0].mxu0
    %v1501 = vadd.f32 %v1244, %v1500
    %1502 = vmatprep.mubr.f32.mxu0 %v618
    %1503 = vmatmul.mubr.f32.gmra.mrb[0].mxu0 %v617
    %v1504 = vpop.f32.mrb[0].mxu0
    %v1505 = vadd.f32 %v1248, %v1504
    %v1506 = vpop.f32.mrb[0].mxu0
    %v1507 = vadd.f32 %v1250, %v1506
    %1508 = vmatprep.mubr.f32.mxu0 %v622
    %1509 = vmatmul.mubr.f32.gmra.mrb[0].mxu0 %v621
    %v1510 = vpop.f32.mrb[0].mxu0
    %v1511 = vadd.f32 %v1254, %v1510
    %v1512 = vpop.f32.mrb[0].mxu0
    %v1513 = vadd.f32 %v1256, %v1512
    %1514 = vmatprep.mubr.f32.mxu0 %v626
    %1515 = vmatmul.mubr.f32.gmra.mrb[0].mxu0 %v625
    %v1516 = vpop.f32.mrb[0].mxu0
    %v1517 = vadd.f32 %v1260, %v1516
    %v1518 = vpop.f32.mrb[0].mxu0
    %v1519 = vadd.f32 %v1262, %v1518
    %1520 = vmatprep.mubr.f32.mxu0 %v630
    %1521 = vmatmul.mubr.f32.gmra.mrb[0].mxu0 %v629
    %v1522 = vpop.f32.mrb[0].mxu0
    %v1523 = vadd.f32 %v1266, %v1522
    %v1524 = vpop.f32.mrb[0].mxu0
    %v1525 = vadd.f32 %v1268, %v1524
    %1526 = vmatprep.mubr.f32.mxu0 %v634
    %1527 = vmatmul.mubr.f32.gmra.mrb[0].mxu0 %v633
    %v1528 = vpop.f32.mrb[0].mxu0
    %v1529 = vadd.f32 %v1272, %v1528
    %v1530 = vpop.f32.mrb[0].mxu0
    %v1531 = vadd.f32 %v1274, %v1530
    %1532 = vdwg.mxu0
    %1533 = vmatprep.subr.mxu0 %v766
    %1534 = vmatpush1.msra.mxu0 %v765
    %1535 = vmatprep.subr.mxu0 %v770
    %1536 = vmatpush1.msra.mxu0 %v769
    %1537 = vmatprep.subr.mxu0 %v774
    %1538 = vmatpush1.msra.mxu0 %v773
    %1539 = vmatprep.subr.mxu0 %v778
    %1540 = vmatpush1.msra.mxu0 %v777
    %1541 = vmatprep.subr.mxu0 %v782
    %1542 = vmatpush1.msra.mxu0 %v781
    %1543 = vmatprep.subr.mxu0 %v786
    %1544 = vmatpush1.msra.mxu0 %v785
    %1545 = vmatprep.subr.mxu0 %v790
    %1546 = vmatpush1.msra.mxu0 %v789
    %1547 = vmatprep.subr.mxu0 %v794
    %1548 = vmatpush1.msra.mxu0 %v793
    %1549 = vmatprep.subr.mxu0 %v798
    %1550 = vmatpush1.msra.mxu0 %v797
    %1551 = vmatprep.subr.mxu0 %v802
    %1552 = vmatpush1.msra.mxu0 %v801
    %1553 = vmatprep.subr.mxu0 %v806
    %1554 = vmatpush1.msra.mxu0 %v805
    %1555 = vmatprep.subr.mxu0 %v810
    %1556 = vmatpush1.msra.mxu0 %v809
    %1557 = vmatprep.subr.mxu0 %v814
    %1558 = vmatpush1.msra.mxu0 %v813
    %1559 = vmatprep.subr.mxu0 %v818
    %1560 = vmatpush1.msra.mxu0 %v817
    %1561 = vmatprep.subr.mxu0 %v822
    %1562 = vmatpush1.msra.mxu0 %v821
    %1563 = vmatprep.subr.mxu0 %v826
    %1564 = vmatpush1.msra.mxu0 %v825
    %1565 = vmatprep.subr.mxu0 %v830
    %1566 = vmatpush1.msra.mxu0 %v829
    %1567 = vmatprep.subr.mxu0 %v834
    %1568 = vmatpush1.msra.mxu0 %v833
    %1569 = vmatprep.subr.mxu0 %v838
    %1570 = vmatpush1.msra.mxu0 %v837
    %1571 = vmatprep.subr.mxu0 %v842
    %1572 = vmatpush1.msra.mxu0 %v841
    %1573 = vmatprep.subr.mxu0 %v846
    %1574 = vmatpush1.msra.mxu0 %v845
    %1575 = vmatprep.subr.mxu0 %v850
    %1576 = vmatpush1.msra.mxu0 %v849
    %1577 = vmatprep.subr.mxu0 %v854
    %1578 = vmatpush1.msra.mxu0 %v853
    %1579 = vmatprep.subr.mxu0 %v858
    %1580 = vmatpush1.msra.mxu0 %v857
    %1581 = vmatprep.subr.mxu0 %v862
    %1582 = vmatpush1.msra.mxu0 %v861
    %1583 = vmatprep.subr.mxu0 %v866
    %1584 = vmatpush1.msra.mxu0 %v865
    %1585 = vmatprep.subr.mxu0 %v870
    %1586 = vmatpush1.msra.mxu0 %v869
    %1587 = vmatprep.subr.mxu0 %v874
    %1588 = vmatpush1.msra.mxu0 %v873
    %1589 = vmatprep.subr.mxu0 %v878
    %1590 = vmatpush1.msra.mxu0 %v877
    %1591 = vmatprep.subr.mxu0 %v882
    %1592 = vmatpush1.msra.mxu0 %v881
    %1593 = vmatprep.subr.mxu0 %v886
    %1594 = vmatpush1.msra.mxu0 %v885
    %1595 = vmatprep.subr.mxu0 %v890
    %1596 = vmatpush1.msra.mxu0 %v889
    %1597 = vmatprep.mubr.f32.mxu0 %v508
    %1598 = vmatmul.mubr.f32.gmra.mrb[0].mxu0 %v507
    %v1599 = vpop.f32.mrb[0].mxu0
    %v1600 = vadd.f32 0.0, %v1599
    %v1601 = vpop.f32.mrb[0].mxu0
    %v1602 = vadd.f32 0.0, %v1601
    %1603 = vmatprep.mubr.f32.mxu0 %v512
    %1604 = vmatmul.mubr.f32.gmra.mrb[0].mxu0 %v511
    %v1605 = vpop.f32.mrb[0].mxu0
    %v1606 = vadd.f32 0.0, %v1605
    %v1607 = vpop.f32.mrb[0].mxu0
    %v1608 = vadd.f32 0.0, %v1607
    %1609 = vmatprep.mubr.f32.mxu0 %v516
    %1610 = vmatmul.mubr.f32.gmra.mrb[0].mxu0 %v515
    %v1611 = vpop.f32.mrb[0].mxu0
    %v1612 = vadd.f32 0.0, %v1611
    %v1613 = vpop.f32.mrb[0].mxu0
    %v1614 = vadd.f32 0.0, %v1613
    %1615 = vmatprep.mubr.f32.mxu0 %v520
    %1616 = vmatmul.mubr.f32.gmra.mrb[0].mxu0 %v519
    %v1617 = vpop.f32.mrb[0].mxu0
    %v1618 = vadd.f32 0.0, %v1617
    %v1619 = vpop.f32.mrb[0].mxu0
    %v1620 = vadd.f32 0.0, %v1619
    %1621 = vmatprep.mubr.f32.mxu0 %v524
    %1622 = vmatmul.mubr.f32.gmra.mrb[0].mxu0 %v523
    %v1623 = vpop.f32.mrb[0].mxu0
    %v1624 = vadd.f32 0.0, %v1623
    %v1625 = vpop.f32.mrb[0].mxu0
    %v1626 = vadd.f32 0.0, %v1625
    %1627 = vmatprep.mubr.f32.mxu0 %v528
    %1628 = vmatmul.mubr.f32.gmra.mrb[0].mxu0 %v527
    %v1629 = vpop.f32.mrb[0].mxu0
    %v1630 = vadd.f32 0.0, %v1629
    %v1631 = vpop.f32.mrb[0].mxu0
    %v1632 = vadd.f32 0.0, %v1631
    %1633 = vmatprep.mubr.f32.mxu0 %v532
    %1634 = vmatmul.mubr.f32.gmra.mrb[0].mxu0 %v531
    %v1635 = vpop.f32.mrb[0].mxu0
    %v1636 = vadd.f32 0.0, %v1635
    %v1637 = vpop.f32.mrb[0].mxu0
    %v1638 = vadd.f32 0.0, %v1637
    %1639 = vmatprep.mubr.f32.mxu0 %v536
    %1640 = vmatmul.mubr.f32.gmra.mrb[0].mxu0 %v535
    %v1641 = vpop.f32.mrb[0].mxu0
    %v1642 = vadd.f32 0.0, %v1641
    %v1643 = vpop.f32.mrb[0].mxu0
    %v1644 = vadd.f32 0.0, %v1643
    %1645 = vmatprep.mubr.f32.mxu0 %v540
    %1646 = vmatmul.mubr.f32.gmra.mrb[0].mxu0 %v539
    %v1647 = vpop.f32.mrb[0].mxu0
    %v1648 = vadd.f32 0.0, %v1647
    %v1649 = vpop.f32.mrb[0].mxu0
    %v1650 = vadd.f32 0.0, %v1649
    %1651 = vmatprep.mubr.f32.mxu0 %v544
    %1652 = vmatmul.mubr.f32.gmra.mrb[0].mxu0 %v543
    %v1653 = vpop.f32.mrb[0].mxu0
    %v1654 = vadd.f32 0.0, %v1653
    %v1655 = vpop.f32.mrb[0].mxu0
    %v1656 = vadd.f32 0.0, %v1655
    %1657 = vmatprep.mubr.f32.mxu0 %v548
    %1658 = vmatmul.mubr.f32.gmra.mrb[0].mxu0 %v547
    %v1659 = vpop.f32.mrb[0].mxu0
    %v1660 = vadd.f32 0.0, %v1659
    %v1661 = vpop.f32.mrb[0].mxu0
    %v1662 = vadd.f32 0.0, %v1661
    %1663 = vmatprep.mubr.f32.mxu0 %v552
    %1664 = vmatmul.mubr.f32.gmra.mrb[0].mxu0 %v551
    %v1665 = vpop.f32.mrb[0].mxu0
    %v1666 = vadd.f32 0.0, %v1665
    %v1667 = vpop.f32.mrb[0].mxu0
    %v1668 = vadd.f32 0.0, %v1667
    %1669 = vmatprep.mubr.f32.mxu0 %v556
    %1670 = vmatmul.mubr.f32.gmra.mrb[0].mxu0 %v555
    %v1671 = vpop.f32.mrb[0].mxu0
    %v1672 = vadd.f32 0.0, %v1671
    %v1673 = vpop.f32.mrb[0].mxu0
    %v1674 = vadd.f32 0.0, %v1673
    %1675 = vmatprep.mubr.f32.mxu0 %v560
    %1676 = vmatmul.mubr.f32.gmra.mrb[0].mxu0 %v559
    %v1677 = vpop.f32.mrb[0].mxu0
    %v1678 = vadd.f32 0.0, %v1677
    %v1679 = vpop.f32.mrb[0].mxu0
    %v1680 = vadd.f32 0.0, %v1679
    %1681 = vmatprep.mubr.f32.mxu0 %v564
    %1682 = vmatmul.mubr.f32.gmra.mrb[0].mxu0 %v563
    %v1683 = vpop.f32.mrb[0].mxu0
    %v1684 = vadd.f32 0.0, %v1683
    %v1685 = vpop.f32.mrb[0].mxu0
    %v1686 = vadd.f32 0.0, %v1685
    %1687 = vmatprep.mubr.f32.mxu0 %v568
    %1688 = vmatmul.mubr.f32.gmra.mrb[0].mxu0 %v567
    %v1689 = vpop.f32.mrb[0].mxu0
    %v1690 = vadd.f32 0.0, %v1689
    %v1691 = vpop.f32.mrb[0].mxu0
    %v1692 = vadd.f32 0.0, %v1691
    %1693 = vmatprep.mubr.f32.mxu0 %v572
    %1694 = vmatmul.mubr.f32.gmra.mrb[0].mxu0 %v571
    %v1695 = vpop.f32.mrb[0].mxu0
    %v1696 = vadd.f32 0.0, %v1695
    %v1697 = vpop.f32.mrb[0].mxu0
    %v1698 = vadd.f32 0.0, %v1697
    %1699 = vmatprep.mubr.f32.mxu0 %v576
    %1700 = vmatmul.mubr.f32.gmra.mrb[0].mxu0 %v575
    %v1701 = vpop.f32.mrb[0].mxu0
    %v1702 = vadd.f32 0.0, %v1701
    %v1703 = vpop.f32.mrb[0].mxu0
    %v1704 = vadd.f32 0.0, %v1703
    %1705 = vmatprep.mubr.f32.mxu0 %v580
    %1706 = vmatmul.mubr.f32.gmra.mrb[0].mxu0 %v579
    %v1707 = vpop.f32.mrb[0].mxu0
    %v1708 = vadd.f32 0.0, %v1707
    %v1709 = vpop.f32.mrb[0].mxu0
    %v1710 = vadd.f32 0.0, %v1709
    %1711 = vmatprep.mubr.f32.mxu0 %v584
    %1712 = vmatmul.mubr.f32.gmra.mrb[0].mxu0 %v583
    %v1713 = vpop.f32.mrb[0].mxu0
    %v1714 = vadd.f32 0.0, %v1713
    %v1715 = vpop.f32.mrb[0].mxu0
    %v1716 = vadd.f32 0.0, %v1715
    %1717 = vmatprep.mubr.f32.mxu0 %v588
    %1718 = vmatmul.mubr.f32.gmra.mrb[0].mxu0 %v587
    %v1719 = vpop.f32.mrb[0].mxu0
    %v1720 = vadd.f32 0.0, %v1719
    %v1721 = vpop.f32.mrb[0].mxu0
    %v1722 = vadd.f32 0.0, %v1721
    %1723 = vmatprep.mubr.f32.mxu0 %v592
    %1724 = vmatmul.mubr.f32.gmra.mrb[0].mxu0 %v591
    %v1725 = vpop.f32.mrb[0].mxu0
    %v1726 = vadd.f32 0.0, %v1725
    %v1727 = vpop.f32.mrb[0].mxu0
    %v1728 = vadd.f32 0.0, %v1727
    %1729 = vmatprep.mubr.f32.mxu0 %v596
    %1730 = vmatmul.mubr.f32.gmra.mrb[0].mxu0 %v595
    %v1731 = vpop.f32.mrb[0].mxu0
    %v1732 = vadd.f32 0.0, %v1731
    %v1733 = vpop.f32.mrb[0].mxu0
    %v1734 = vadd.f32 0.0, %v1733
    %1735 = vmatprep.mubr.f32.mxu0 %v600
    %1736 = vmatmul.mubr.f32.gmra.mrb[0].mxu0 %v599
    %v1737 = vpop.f32.mrb[0].mxu0
    %v1738 = vadd.f32 0.0, %v1737
    %v1739 = vpop.f32.mrb[0].mxu0
    %v1740 = vadd.f32 0.0, %v1739
    %1741 = vmatprep.mubr.f32.mxu0 %v604
    %1742 = vmatmul.mubr.f32.gmra.mrb[0].mxu0 %v603
    %v1743 = vpop.f32.mrb[0].mxu0
    %v1744 = vadd.f32 0.0, %v1743
    %v1745 = vpop.f32.mrb[0].mxu0
    %v1746 = vadd.f32 0.0, %v1745
    %1747 = vmatprep.mubr.f32.mxu0 %v608
    %1748 = vmatmul.mubr.f32.gmra.mrb[0].mxu0 %v607
    %v1749 = vpop.f32.mrb[0].mxu0
    %v1750 = vadd.f32 0.0, %v1749
    %v1751 = vpop.f32.mrb[0].mxu0
    %v1752 = vadd.f32 0.0, %v1751
    %1753 = vmatprep.mubr.f32.mxu0 %v612
    %1754 = vmatmul.mubr.f32.gmra.mrb[0].mxu0 %v611
    %v1755 = vpop.f32.mrb[0].mxu0
    %v1756 = vadd.f32 0.0, %v1755
    %v1757 = vpop.f32.mrb[0].mxu0
    %v1758 = vadd.f32 0.0, %v1757
    %1759 = vmatprep.mubr.f32.mxu0 %v616
    %1760 = vmatmul.mubr.f32.gmra.mrb[0].mxu0 %v615
    %v1761 = vpop.f32.mrb[0].mxu0
    %v1762 = vadd.f32 0.0, %v1761
    %v1763 = vpop.f32.mrb[0].mxu0
    %v1764 = vadd.f32 0.0, %v1763
    %1765 = vmatprep.mubr.f32.mxu0 %v620
    %1766 = vmatmul.mubr.f32.gmra.mrb[0].mxu0 %v619
    %v1767 = vpop.f32.mrb[0].mxu0
    %v1768 = vadd.f32 0.0, %v1767
    %v1769 = vpop.f32.mrb[0].mxu0
    %v1770 = vadd.f32 0.0, %v1769
    %1771 = vmatprep.mubr.f32.mxu0 %v624
    %1772 = vmatmul.mubr.f32.gmra.mrb[0].mxu0 %v623
    %v1773 = vpop.f32.mrb[0].mxu0
    %v1774 = vadd.f32 0.0, %v1773
    %v1775 = vpop.f32.mrb[0].mxu0
    %v1776 = vadd.f32 0.0, %v1775
    %1777 = vmatprep.mubr.f32.mxu0 %v628
    %1778 = vmatmul.mubr.f32.gmra.mrb[0].mxu0 %v627
    %v1779 = vpop.f32.mrb[0].mxu0
    %v1780 = vadd.f32 0.0, %v1779
    %v1781 = vpop.f32.mrb[0].mxu0
    %v1782 = vadd.f32 0.0, %v1781
    %1783 = vmatprep.mubr.f32.mxu0 %v632
    %1784 = vmatmul.mubr.f32.gmra.mrb[0].mxu0 %v631
    %v1785 = vpop.f32.mrb[0].mxu0
    %v1786 = vadd.f32 0.0, %v1785
    %v1787 = vpop.f32.mrb[0].mxu0
    %v1788 = vadd.f32 0.0, %v1787
    %1789 = vdwg.mxu0
    %1790 = vmatprep.subr.mxu0 %v894
    %1791 = vmatpush1.msra.mxu0 %v893
    %1792 = vmatprep.subr.mxu0 %v898
    %1793 = vmatpush1.msra.mxu0 %v897
    %1794 = vmatprep.subr.mxu0 %v902
    %1795 = vmatpush1.msra.mxu0 %v901
    %1796 = vmatprep.subr.mxu0 %v906
    %1797 = vmatpush1.msra.mxu0 %v905
    %1798 = vmatprep.subr.mxu0 %v910
    %1799 = vmatpush1.msra.mxu0 %v909
    %1800 = vmatprep.subr.mxu0 %v914
    %1801 = vmatpush1.msra.mxu0 %v913
    %1802 = vmatprep.subr.mxu0 %v918
    %1803 = vmatpush1.msra.mxu0 %v917
    %1804 = vmatprep.subr.mxu0 %v922
    %1805 = vmatpush1.msra.mxu0 %v921
    %1806 = vmatprep.subr.mxu0 %v926
    %1807 = vmatpush1.msra.mxu0 %v925
    %1808 = vmatprep.subr.mxu0 %v930
    %1809 = vmatpush1.msra.mxu0 %v929
    %1810 = vmatprep.subr.mxu0 %v934
    %1811 = vmatpush1.msra.mxu0 %v933
    %1812 = vmatprep.subr.mxu0 %v938
    %1813 = vmatpush1.msra.mxu0 %v937
    %1814 = vmatprep.subr.mxu0 %v942
    %1815 = vmatpush1.msra.mxu0 %v941
    %1816 = vmatprep.subr.mxu0 %v946
    %1817 = vmatpush1.msra.mxu0 %v945
    %1818 = vmatprep.subr.mxu0 %v950
    %1819 = vmatpush1.msra.mxu0 %v949
    %1820 = vmatprep.subr.mxu0 %v954
    %1821 = vmatpush1.msra.mxu0 %v953
    %1822 = vmatprep.subr.mxu0 %v958
    %1823 = vmatpush1.msra.mxu0 %v957
    %1824 = vmatprep.subr.mxu0 %v962
    %1825 = vmatpush1.msra.mxu0 %v961
    %1826 = vmatprep.subr.mxu0 %v966
    %1827 = vmatpush1.msra.mxu0 %v965
    %1828 = vmatprep.subr.mxu0 %v970
    %1829 = vmatpush1.msra.mxu0 %v969
    %1830 = vmatprep.subr.mxu0 %v974
    %1831 = vmatpush1.msra.mxu0 %v973
    %1832 = vmatprep.subr.mxu0 %v978
    %1833 = vmatpush1.msra.mxu0 %v977
    %1834 = vmatprep.subr.mxu0 %v982
    %1835 = vmatpush1.msra.mxu0 %v981
    %1836 = vmatprep.subr.mxu0 %v986
    %1837 = vmatpush1.msra.mxu0 %v985
    %1838 = vmatprep.subr.mxu0 %v990
    %1839 = vmatpush1.msra.mxu0 %v989
    %1840 = vmatprep.subr.mxu0 %v994
    %1841 = vmatpush1.msra.mxu0 %v993
    %1842 = vmatprep.subr.mxu0 %v998
    %1843 = vmatpush1.msra.mxu0 %v997
    %1844 = vmatprep.subr.mxu0 %v1002
    %1845 = vmatpush1.msra.mxu0 %v1001
    %1846 = vmatprep.subr.mxu0 %v1006
    %1847 = vmatpush1.msra.mxu0 %v1005
    %1848 = vmatprep.subr.mxu0 %v1010
    %1849 = vmatpush1.msra.mxu0 %v1009
    %1850 = vmatprep.subr.mxu0 %v1014
    %1851 = vmatpush1.msra.mxu0 %v1013
    %1852 = vmatprep.subr.mxu0 %v1018
    %1853 = vmatpush1.msra.mxu0 %v1017
    %1854 = vmatprep.mubr.f32.mxu0 %v510
    %1855 = vmatmul.mubr.f32.gmra.mrb[0].mxu0 %v509
    %v1856 = vpop.f32.mrb[0].mxu0
    %v1857 = vadd.f32 %v1600, %v1856
    %v1858 = vpop.f32.mrb[0].mxu0
    %v1859 = vadd.f32 %v1602, %v1858
    %1860 = vmatprep.mubr.f32.mxu0 %v514
    %1861 = vmatmul.mubr.f32.gmra.mrb[0].mxu0 %v513
    %v1862 = vpop.f32.mrb[0].mxu0
    %v1863 = vadd.f32 %v1606, %v1862
    %v1864 = vpop.f32.mrb[0].mxu0
    %v1865 = vadd.f32 %v1608, %v1864
    %1866 = vmatprep.mubr.f32.mxu0 %v518
    %1867 = vmatmul.mubr.f32.gmra.mrb[0].mxu0 %v517
    %v1868 = vpop.f32.mrb[0].mxu0
    %v1869 = vadd.f32 %v1612, %v1868
    %v1870 = vpop.f32.mrb[0].mxu0
    %v1871 = vadd.f32 %v1614, %v1870
    %1872 = vmatprep.mubr.f32.mxu0 %v522
    %1873 = vmatmul.mubr.f32.gmra.mrb[0].mxu0 %v521
    %v1874 = vpop.f32.mrb[0].mxu0
    %v1875 = vadd.f32 %v1618, %v1874
    %v1876 = vpop.f32.mrb[0].mxu0
    %v1877 = vadd.f32 %v1620, %v1876
    %1878 = vmatprep.mubr.f32.mxu0 %v526
    %1879 = vmatmul.mubr.f32.gmra.mrb[0].mxu0 %v525
    %v1880 = vpop.f32.mrb[0].mxu0
    %v1881 = vadd.f32 %v1624, %v1880
    %v1882 = vpop.f32.mrb[0].mxu0
    %v1883 = vadd.f32 %v1626, %v1882
    %1884 = vmatprep.mubr.f32.mxu0 %v530
    %1885 = vmatmul.mubr.f32.gmra.mrb[0].mxu0 %v529
    %v1886 = vpop.f32.mrb[0].mxu0
    %v1887 = vadd.f32 %v1630, %v1886
    %v1888 = vpop.f32.mrb[0].mxu0
    %v1889 = vadd.f32 %v1632, %v1888
    %1890 = vmatprep.mubr.f32.mxu0 %v534
    %1891 = vmatmul.mubr.f32.gmra.mrb[0].mxu0 %v533
    %v1892 = vpop.f32.mrb[0].mxu0
    %v1893 = vadd.f32 %v1636, %v1892
    %v1894 = vpop.f32.mrb[0].mxu0
    %v1895 = vadd.f32 %v1638, %v1894
    %1896 = vmatprep.mubr.f32.mxu0 %v538
    %1897 = vmatmul.mubr.f32.gmra.mrb[0].mxu0 %v537
    %v1898 = vpop.f32.mrb[0].mxu0
    %v1899 = vadd.f32 %v1642, %v1898
    %v1900 = vpop.f32.mrb[0].mxu0
    %v1901 = vadd.f32 %v1644, %v1900
    %1902 = vmatprep.mubr.f32.mxu0 %v542
    %1903 = vmatmul.mubr.f32.gmra.mrb[0].mxu0 %v541
    %v1904 = vpop.f32.mrb[0].mxu0
    %v1905 = vadd.f32 %v1648, %v1904
    %v1906 = vpop.f32.mrb[0].mxu0
    %v1907 = vadd.f32 %v1650, %v1906
    %1908 = vmatprep.mubr.f32.mxu0 %v546
    %1909 = vmatmul.mubr.f32.gmra.mrb[0].mxu0 %v545
    %v1910 = vpop.f32.mrb[0].mxu0
    %v1911 = vadd.f32 %v1654, %v1910
    %v1912 = vpop.f32.mrb[0].mxu0
    %v1913 = vadd.f32 %v1656, %v1912
    %1914 = vmatprep.mubr.f32.mxu0 %v550
    %1915 = vmatmul.mubr.f32.gmra.mrb[0].mxu0 %v549
    %v1916 = vpop.f32.mrb[0].mxu0
    %v1917 = vadd.f32 %v1660, %v1916
    %v1918 = vpop.f32.mrb[0].mxu0
    %v1919 = vadd.f32 %v1662, %v1918
    %1920 = vmatprep.mubr.f32.mxu0 %v554
    %1921 = vmatmul.mubr.f32.gmra.mrb[0].mxu0 %v553
    %v1922 = vpop.f32.mrb[0].mxu0
    %v1923 = vadd.f32 %v1666, %v1922
    %v1924 = vpop.f32.mrb[0].mxu0
    %v1925 = vadd.f32 %v1668, %v1924
    %1926 = vmatprep.mubr.f32.mxu0 %v558
    %1927 = vmatmul.mubr.f32.gmra.mrb[0].mxu0 %v557
    %v1928 = vpop.f32.mrb[0].mxu0
    %v1929 = vadd.f32 %v1672, %v1928
    %v1930 = vpop.f32.mrb[0].mxu0
    %v1931 = vadd.f32 %v1674, %v1930
    %1932 = vmatprep.mubr.f32.mxu0 %v562
    %1933 = vmatmul.mubr.f32.gmra.mrb[0].mxu0 %v561
    %v1934 = vpop.f32.mrb[0].mxu0
    %v1935 = vadd.f32 %v1678, %v1934
    %v1936 = vpop.f32.mrb[0].mxu0
    %v1937 = vadd.f32 %v1680, %v1936
    %1938 = vmatprep.mubr.f32.mxu0 %v566
    %1939 = vmatmul.mubr.f32.gmra.mrb[0].mxu0 %v565
    %v1940 = vpop.f32.mrb[0].mxu0
    %v1941 = vadd.f32 %v1684, %v1940
    %v1942 = vpop.f32.mrb[0].mxu0
    %v1943 = vadd.f32 %v1686, %v1942
    %1944 = vmatprep.mubr.f32.mxu0 %v570
    %1945 = vmatmul.mubr.f32.gmra.mrb[0].mxu0 %v569
    %v1946 = vpop.f32.mrb[0].mxu0
    %v1947 = vadd.f32 %v1690, %v1946
    %v1948 = vpop.f32.mrb[0].mxu0
    %v1949 = vadd.f32 %v1692, %v1948
    %1950 = vmatprep.mubr.f32.mxu0 %v574
    %1951 = vmatmul.mubr.f32.gmra.mrb[0].mxu0 %v573
    %v1952 = vpop.f32.mrb[0].mxu0
    %v1953 = vadd.f32 %v1696, %v1952
    %v1954 = vpop.f32.mrb[0].mxu0
    %v1955 = vadd.f32 %v1698, %v1954
    %1956 = vmatprep.mubr.f32.mxu0 %v578
    %1957 = vmatmul.mubr.f32.gmra.mrb[0].mxu0 %v577
    %v1958 = vpop.f32.mrb[0].mxu0
    %v1959 = vadd.f32 %v1702, %v1958
    %v1960 = vpop.f32.mrb[0].mxu0
    %v1961 = vadd.f32 %v1704, %v1960
    %1962 = vmatprep.mubr.f32.mxu0 %v582
    %1963 = vmatmul.mubr.f32.gmra.mrb[0].mxu0 %v581
    %v1964 = vpop.f32.mrb[0].mxu0
    %v1965 = vadd.f32 %v1708, %v1964
    %v1966 = vpop.f32.mrb[0].mxu0
    %v1967 = vadd.f32 %v1710, %v1966
    %1968 = vmatprep.mubr.f32.mxu0 %v586
    %1969 = vmatmul.mubr.f32.gmra.mrb[0].mxu0 %v585
    %v1970 = vpop.f32.mrb[0].mxu0
    %v1971 = vadd.f32 %v1714, %v1970
    %v1972 = vpop.f32.mrb[0].mxu0
    %v1973 = vadd.f32 %v1716, %v1972
    %1974 = vmatprep.mubr.f32.mxu0 %v590
    %1975 = vmatmul.mubr.f32.gmra.mrb[0].mxu0 %v589
    %v1976 = vpop.f32.mrb[0].mxu0
    %v1977 = vadd.f32 %v1720, %v1976
    %v1978 = vpop.f32.mrb[0].mxu0
    %v1979 = vadd.f32 %v1722, %v1978
    %1980 = vmatprep.mubr.f32.mxu0 %v594
    %1981 = vmatmul.mubr.f32.gmra.mrb[0].mxu0 %v593
    %v1982 = vpop.f32.mrb[0].mxu0
    %v1983 = vadd.f32 %v1726, %v1982
    %v1984 = vpop.f32.mrb[0].mxu0
    %v1985 = vadd.f32 %v1728, %v1984
    %1986 = vmatprep.mubr.f32.mxu0 %v598
    %1987 = vmatmul.mubr.f32.gmra.mrb[0].mxu0 %v597
    %v1988 = vpop.f32.mrb[0].mxu0
    %v1989 = vadd.f32 %v1732, %v1988
    %v1990 = vpop.f32.mrb[0].mxu0
    %v1991 = vadd.f32 %v1734, %v1990
    %1992 = vmatprep.mubr.f32.mxu0 %v602
    %1993 = vmatmul.mubr.f32.gmra.mrb[0].mxu0 %v601
    %v1994 = vpop.f32.mrb[0].mxu0
    %v1995 = vadd.f32 %v1738, %v1994
    %v1996 = vpop.f32.mrb[0].mxu0
    %v1997 = vadd.f32 %v1740, %v1996
    %1998 = vmatprep.mubr.f32.mxu0 %v606
    %1999 = vmatmul.mubr.f32.gmra.mrb[0].mxu0 %v605
    %v2000 = vpop.f32.mrb[0].mxu0
    %v2001 = vadd.f32 %v1744, %v2000
    %v2002 = vpop.f32.mrb[0].mxu0
    %v2003 = vadd.f32 %v1746, %v2002
    %2004 = vmatprep.mubr.f32.mxu0 %v610
    %2005 = vmatmul.mubr.f32.gmra.mrb[0].mxu0 %v609
    %v2006 = vpop.f32.mrb[0].mxu0
    %v2007 = vadd.f32 %v1750, %v2006
    %v2008 = vpop.f32.mrb[0].mxu0
    %v2009 = vadd.f32 %v1752, %v2008
    %2010 = vmatprep.mubr.f32.mxu0 %v614
    %2011 = vmatmul.mubr.f32.gmra.mrb[0].mxu0 %v613
    %v2012 = vpop.f32.mrb[0].mxu0
    %v2013 = vadd.f32 %v1756, %v2012
    %v2014 = vpop.f32.mrb[0].mxu0
    %v2015 = vadd.f32 %v1758, %v2014
    %2016 = vmatprep.mubr.f32.mxu0 %v618
    %2017 = vmatmul.mubr.f32.gmra.mrb[0].mxu0 %v617
    %v2018 = vpop.f32.mrb[0].mxu0
    %v2019 = vadd.f32 %v1762, %v2018
    %v2020 = vpop.f32.mrb[0].mxu0
    %v2021 = vadd.f32 %v1764, %v2020
    %2022 = vmatprep.mubr.f32.mxu0 %v622
    %2023 = vmatmul.mubr.f32.gmra.mrb[0].mxu0 %v621
    %v2024 = vpop.f32.mrb[0].mxu0
    %v2025 = vadd.f32 %v1768, %v2024
    %v2026 = vpop.f32.mrb[0].mxu0
    %v2027 = vadd.f32 %v1770, %v2026
    %2028 = vmatprep.mubr.f32.mxu0 %v626
    %2029 = vmatmul.mubr.f32.gmra.mrb[0].mxu0 %v625
    %v2030 = vpop.f32.mrb[0].mxu0
    %v2031 = vadd.f32 %v1774, %v2030
    %v2032 = vpop.f32.mrb[0].mxu0
    %v2033 = vadd.f32 %v1776, %v2032
    %2034 = vmatprep.mubr.f32.mxu0 %v630
    %2035 = vmatmul.mubr.f32.gmra.mrb[0].mxu0 %v629
    %v2036 = vpop.f32.mrb[0].mxu0
    %v2037 = vadd.f32 %v1780, %v2036
    %v2038 = vpop.f32.mrb[0].mxu0
    %v2039 = vadd.f32 %v1782, %v2038
    %2040 = vmatprep.mubr.f32.mxu0 %v634
    %2041 = vmatmul.mubr.f32.gmra.mrb[0].mxu0 %v633
    %v2042 = vpop.f32.mrb[0].mxu0
    %v2043 = vadd.f32 %v1786, %v2042
    %v2044 = vpop.f32.mrb[0].mxu0
    %v2045 = vadd.f32 %v1788, %v2044
    %2046 = vdwg.mxu0
    %v2047 = vadd.f32 %v635, %v1343
    %v2048 = vadd.f32 %v636, %v1345
    %v2049 = vadd.f32 %v637, %v1857
    %v2050 = vadd.f32 %v638, %v1859
    %v2051 = vadd.f32 %v639, %v1349
    %v2052 = vadd.f32 %v640, %v1351
    %v2053 = vadd.f32 %v641, %v1863
    %v2054 = vadd.f32 %v642, %v1865
    %v2055 = vadd.f32 %v643, %v1355
    %v2056 = vadd.f32 %v644, %v1357
    %v2057 = vadd.f32 %v645, %v1869
    %v2058 = vadd.f32 %v646, %v1871
    %v2059 = vadd.f32 %v647, %v1361
    %v2060 = vadd.f32 %v648, %v1363
    %v2061 = vadd.f32 %v649, %v1875
    %v2062 = vadd.f32 %v650, %v1877
    %v2063 = vadd.f32 %v651, %v1367
    %v2064 = vadd.f32 %v652, %v1369
    %v2065 = vadd.f32 %v653, %v1881
    %v2066 = vadd.f32 %v654, %v1883
    %v2067 = vadd.f32 %v655, %v1373
    %v2068 = vadd.f32 %v656, %v1375
    %v2069 = vadd.f32 %v657, %v1887
    %v2070 = vadd.f32 %v658, %v1889
    %v2071 = vadd.f32 %v659, %v1379
    %v2072 = vadd.f32 %v660, %v1381
    %v2073 = vadd.f32 %v661, %v1893
    %v2074 = vadd.f32 %v662, %v1895
    %v2075 = vadd.f32 %v663, %v1385
    %v2076 = vadd.f32 %v664, %v1387
    %v2077 = vadd.f32 %v665, %v1899
    %v2078 = vadd.f32 %v666, %v1901
    %v2079 = vadd.f32 %v667, %v1391
    %v2080 = vadd.f32 %v668, %v1393
    %v2081 = vadd.f32 %v669, %v1905
    %v2082 = vadd.f32 %v670, %v1907
    %v2083 = vadd.f32 %v671, %v1397
    %v2084 = vadd.f32 %v672, %v1399
    %v2085 = vadd.f32 %v673, %v1911
    %v2086 = vadd.f32 %v674, %v1913
    %v2087 = vadd.f32 %v675, %v1403
    %v2088 = vadd.f32 %v676, %v1405
    %v2089 = vadd.f32 %v677, %v1917
    %v2090 = vadd.f32 %v678, %v1919
    %v2091 = vadd.f32 %v679, %v1409
    %v2092 = vadd.f32 %v680, %v1411
    %v2093 = vadd.f32 %v681, %v1923
    %v2094 = vadd.f32 %v682, %v1925
    %v2095 = vadd.f32 %v683, %v1415
    %v2096 = vadd.f32 %v684, %v1417
    %v2097 = vadd.f32 %v685, %v1929
    %v2098 = vadd.f32 %v686, %v1931
    %v2099 = vadd.f32 %v687, %v1421
    %v2100 = vadd.f32 %v688, %v1423
    %v2101 = vadd.f32 %v689, %v1935
    %v2102 = vadd.f32 %v690, %v1937
    %v2103 = vadd.f32 %v691, %v1427
    %v2104 = vadd.f32 %v692, %v1429
    %v2105 = vadd.f32 %v693, %v1941
    %v2106 = vadd.f32 %v694, %v1943
    %v2107 = vadd.f32 %v695, %v1433
    %v2108 = vadd.f32 %v696, %v1435
    %v2109 = vadd.f32 %v697, %v1947
    %v2110 = vadd.f32 %v698, %v1949
    %v2111 = vadd.f32 %v699, %v1439
    %v2112 = vadd.f32 %v700, %v1441
    %v2113 = vadd.f32 %v701, %v1953
    %v2114 = vadd.f32 %v702, %v1955
    %v2115 = vadd.f32 %v703, %v1445
    %v2116 = vadd.f32 %v704, %v1447
    %v2117 = vadd.f32 %v705, %v1959
    %v2118 = vadd.f32 %v706, %v1961
    %v2119 = vadd.f32 %v707, %v1451
    %v2120 = vadd.f32 %v708, %v1453
    %v2121 = vadd.f32 %v709, %v1965
    %v2122 = vadd.f32 %v710, %v1967
    %v2123 = vadd.f32 %v711, %v1457
    %v2124 = vadd.f32 %v712, %v1459
    %v2125 = vadd.f32 %v713, %v1971
    %v2126 = vadd.f32 %v714, %v1973
    %v2127 = vadd.f32 %v715, %v1463
    %v2128 = vadd.f32 %v716, %v1465
    %v2129 = vadd.f32 %v717, %v1977
    %v2130 = vadd.f32 %v718, %v1979
    %v2131 = vadd.f32 %v719, %v1469
    %v2132 = vadd.f32 %v720, %v1471
    %v2133 = vadd.f32 %v721, %v1983
    %v2134 = vadd.f32 %v722, %v1985
    %v2135 = vadd.f32 %v723, %v1475
    %v2136 = vadd.f32 %v724, %v1477
    %v2137 = vadd.f32 %v725, %v1989
    %v2138 = vadd.f32 %v726, %v1991
    %v2139 = vadd.f32 %v727, %v1481
    %v2140 = vadd.f32 %v728, %v1483
    %v2141 = vadd.f32 %v729, %v1995
    %v2142 = vadd.f32 %v730, %v1997
    %v2143 = vadd.f32 %v731, %v1487
    %v2144 = vadd.f32 %v732, %v1489
    %v2145 = vadd.f32 %v733, %v2001
    %v2146 = vadd.f32 %v734, %v2003
    %v2147 = vadd.f32 %v735, %v1493
    %v2148 = vadd.f32 %v736, %v1495
    %v2149 = vadd.f32 %v737, %v2007
    %v2150 = vadd.f32 %v738, %v2009
    %v2151 = vadd.f32 %v739, %v1499
    %v2152 = vadd.f32 %v740, %v1501
    %v2153 = vadd.f32 %v741, %v2013
    %v2154 = vadd.f32 %v742, %v2015
    %v2155 = vadd.f32 %v743, %v1505
    %v2156 = vadd.f32 %v744, %v1507
    %v2157 = vadd.f32 %v745, %v2019
    %v2158 = vadd.f32 %v746, %v2021
    %v2159 = vadd.f32 %v747, %v1511
    %v2160 = vadd.f32 %v748, %v1513
    %v2161 = vadd.f32 %v749, %v2025
    %v2162 = vadd.f32 %v750, %v2027
    %v2163 = vadd.f32 %v751, %v1517
    %v2164 = vadd.f32 %v752, %v1519
    %v2165 = vadd.f32 %v753, %v2031
    %v2166 = vadd.f32 %v754, %v2033
    %v2167 = vadd.f32 %v755, %v1523
    %v2168 = vadd.f32 %v756, %v1525
    %v2169 = vadd.f32 %v757, %v2037
    %v2170 = vadd.f32 %v758, %v2039
    %v2171 = vadd.f32 %v759, %v1529
    %v2172 = vadd.f32 %v760, %v1531
    %v2173 = vadd.f32 %v761, %v2043
    %v2174 = vadd.f32 %v762, %v2045
    %2175 = vst [vmem:[#allocation2] sm:$0xff] %v2047
    %2176 = vst [vmem:[#allocation2 + $0x8] sm:$0xff] %v2048
    %2177 = vst [vmem:[#allocation2 + $0x10] sm:$0xff] %v2049
    %2178 = vst [vmem:[#allocation2 + $0x18] sm:$0xff] %v2050
    %2179 = vst [vmem:[#allocation2 + $0x20] sm:$0xff] %v2051
    %2180 = vst [vmem:[#allocation2 + $0x28] sm:$0xff] %v2052
    %2181 = vst [vmem:[#allocation2 + $0x30] sm:$0xff] %v2053
    %2182 = vst [vmem:[#allocation2 + $0x38] sm:$0xff] %v2054
    %2183 = vst [vmem:[#allocation2 + $0x40] sm:$0xff] %v2055
    %2184 = vst [vmem:[#allocation2 + $0x48] sm:$0xff] %v2056
    %2185 = vst [vmem:[#allocation2 + $0x50] sm:$0xff] %v2057
    %2186 = vst [vmem:[#allocation2 + $0x58] sm:$0xff] %v2058
    %2187 = vst [vmem:[#allocation2 + $0x60] sm:$0xff] %v2059
    %2188 = vst [vmem:[#allocation2 + $0x68] sm:$0xff] %v2060
    %2189 = vst [vmem:[#allocation2 + $0x70] sm:$0xff] %v2061
    %2190 = vst [vmem:[#allocation2 + $0x78] sm:$0xff] %v2062
    %2191 = vst [vmem:[#allocation2 + $0x80] sm:$0xff] %v2063
    %2192 = vst [vmem:[#allocation2 + $0x88] sm:$0xff] %v2064
    %2193 = vst [vmem:[#allocation2 + $0x90] sm:$0xff] %v2065
    %2194 = vst [vmem:[#allocation2 + $0x98] sm:$0xff] %v2066
    %2195 = vst [vmem:[#allocation2 + $0xa0] sm:$0xff] %v2067
    %2196 = vst [vmem:[#allocation2 + $0xa8] sm:$0xff] %v2068
    %2197 = vst [vmem:[#allocation2 + $0xb0] sm:$0xff] %v2069
    %2198 = vst [vmem:[#allocation2 + $0xb8] sm:$0xff] %v2070
    %2199 = vst [vmem:[#allocation2 + $0xc0] sm:$0xff] %v2071
    %2200 = vst [vmem:[#allocation2 + $0xc8] sm:$0xff] %v2072
    %2201 = vst [vmem:[#allocation2 + $0xd0] sm:$0xff] %v2073
    %2202 = vst [vmem:[#allocation2 + $0xd8] sm:$0xff] %v2074
    %2203 = vst [vmem:[#allocation2 + $0xe0] sm:$0xff] %v2075
    %2204 = vst [vmem:[#allocation2 + $0xe8] sm:$0xff] %v2076
    %2205 = vst [vmem:[#allocation2 + $0xf0] sm:$0xff] %v2077
    %2206 = vst [vmem:[#allocation2 + $0xf8] sm:$0xff] %v2078
    %2207 = vst [vmem:[#allocation2 + $0x100] sm:$0xff] %v2079
    %2208 = vst [vmem:[#allocation2 + $0x108] sm:$0xff] %v2080
    %2209 = vst [vmem:[#allocation2 + $0x110] sm:$0xff] %v2081
    %2210 = vst [vmem:[#allocation2 + $0x118] sm:$0xff] %v2082
    %2211 = vst [vmem:[#allocation2 + $0x120] sm:$0xff] %v2083
    %2212 = vst [vmem:[#allocation2 + $0x128] sm:$0xff] %v2084
    %2213 = vst [vmem:[#allocation2 + $0x130] sm:$0xff] %v2085
    %2214 = vst [vmem:[#allocation2 + $0x138] sm:$0xff] %v2086
    %2215 = vst [vmem:[#allocation2 + $0x140] sm:$0xff] %v2087
    %2216 = vst [vmem:[#allocation2 + $0x148] sm:$0xff] %v2088
    %2217 = vst [vmem:[#allocation2 + $0x150] sm:$0xff] %v2089
    %2218 = vst [vmem:[#allocation2 + $0x158] sm:$0xff] %v2090
    %2219 = vst [vmem:[#allocation2 + $0x160] sm:$0xff] %v2091
    %2220 = vst [vmem:[#allocation2 + $0x168] sm:$0xff] %v2092
    %2221 = vst [vmem:[#allocation2 + $0x170] sm:$0xff] %v2093
    %2222 = vst [vmem:[#allocation2 + $0x178] sm:$0xff] %v2094
    %2223 = vst [vmem:[#allocation2 + $0x180] sm:$0xff] %v2095
    %2224 = vst [vmem:[#allocation2 + $0x188] sm:$0xff] %v2096
    %2225 = vst [vmem:[#allocation2 + $0x190] sm:$0xff] %v2097
    %2226 = vst [vmem:[#allocation2 + $0x198] sm:$0xff] %v2098
    %2227 = vst [vmem:[#allocation2 + $0x1a0] sm:$0xff] %v2099
    %2228 = vst [vmem:[#allocation2 + $0x1a8] sm:$0xff] %v2100
    %2229 = vst [vmem:[#allocation2 + $0x1b0] sm:$0xff] %v2101
    %2230 = vst [vmem:[#allocation2 + $0x1b8] sm:$0xff] %v2102
    %2231 = vst [vmem:[#allocation2 + $0x1c0] sm:$0xff] %v2103
    %2232 = vst [vmem:[#allocation2 + $0x1c8] sm:$0xff] %v2104
    %2233 = vst [vmem:[#allocation2 + $0x1d0] sm:$0xff] %v2105
    %2234 = vst [vmem:[#allocation2 + $0x1d8] sm:$0xff] %v2106
    %2235 = vst [vmem:[#allocation2 + $0x1e0] sm:$0xff] %v2107
    %2236 = vst [vmem:[#allocation2 + $0x1e8] sm:$0xff] %v2108
    %2237 = vst [vmem:[#allocation2 + $0x1f0] sm:$0xff] %v2109
    %2238 = vst [vmem:[#allocation2 + $0x1f8] sm:$0xff] %v2110
    %2239 = vst [vmem:[#allocation2 + $0x200] sm:$0xff] %v2111
    %2240 = vst [vmem:[#allocation2 + $0x208] sm:$0xff] %v2112
    %2241 = vst [vmem:[#allocation2 + $0x210] sm:$0xff] %v2113
    %2242 = vst [vmem:[#allocation2 + $0x218] sm:$0xff] %v2114
    %2243 = vst [vmem:[#allocation2 + $0x220] sm:$0xff] %v2115
    %2244 = vst [vmem:[#allocation2 + $0x228] sm:$0xff] %v2116
    %2245 = vst [vmem:[#allocation2 + $0x230] sm:$0xff] %v2117
    %2246 = vst [vmem:[#allocation2 + $0x238] sm:$0xff] %v2118
    %2247 = vst [vmem:[#allocation2 + $0x240] sm:$0xff] %v2119
    %2248 = vst [vmem:[#allocation2 + $0x248] sm:$0xff] %v2120
    %2249 = vst [vmem:[#allocation2 + $0x250] sm:$0xff] %v2121
    %2250 = vst [vmem:[#allocation2 + $0x258] sm:$0xff] %v2122
    %2251 = vst [vmem:[#allocation2 + $0x260] sm:$0xff] %v2123
    %2252 = vst [vmem:[#allocation2 + $0x268] sm:$0xff] %v2124
    %2253 = vst [vmem:[#allocation2 + $0x270] sm:$0xff] %v2125
    %2254 = vst [vmem:[#allocation2 + $0x278] sm:$0xff] %v2126
    %2255 = vst [vmem:[#allocation2 + $0x280] sm:$0xff] %v2127
    %2256 = vst [vmem:[#allocation2 + $0x288] sm:$0xff] %v2128
    %2257 = vst [vmem:[#allocation2 + $0x290] sm:$0xff] %v2129
    %2258 = vst [vmem:[#allocation2 + $0x298] sm:$0xff] %v2130
    %2259 = vst [vmem:[#allocation2 + $0x2a0] sm:$0xff] %v2131
    %2260 = vst [vmem:[#allocation2 + $0x2a8] sm:$0xff] %v2132
    %2261 = vst [vmem:[#allocation2 + $0x2b0] sm:$0xff] %v2133
    %2262 = vst [vmem:[#allocation2 + $0x2b8] sm:$0xff] %v2134
    %2263 = vst [vmem:[#allocation2 + $0x2c0] sm:$0xff] %v2135
    %2264 = vst [vmem:[#allocation2 + $0x2c8] sm:$0xff] %v2136
    %2265 = vst [vmem:[#allocation2 + $0x2d0] sm:$0xff] %v2137
    %2266 = vst [vmem:[#allocation2 + $0x2d8] sm:$0xff] %v2138
    %2267 = vst [vmem:[#allocation2 + $0x2e0] sm:$0xff] %v2139
    %2268 = vst [vmem:[#allocation2 + $0x2e8] sm:$0xff] %v2140
    %2269 = vst [vmem:[#allocation2 + $0x2f0] sm:$0xff] %v2141
    %2270 = vst [vmem:[#allocation2 + $0x2f8] sm:$0xff] %v2142
    %2271 = vst [vmem:[#allocation2 + $0x300] sm:$0xff] %v2143
    %2272 = vst [vmem:[#allocation2 + $0x308] sm:$0xff] %v2144
    %2273 = vst [vmem:[#allocation2 + $0x310] sm:$0xff] %v2145
    %2274 = vst [vmem:[#allocation2 + $0x318] sm:$0xff] %v2146
    %2275 = vst [vmem:[#allocation2 + $0x320] sm:$0xff] %v2147
    %2276 = vst [vmem:[#allocation2 + $0x328] sm:$0xff] %v2148
    %2277 = vst [vmem:[#allocation2 + $0x330] sm:$0xff] %v2149
    %2278 = vst [vmem:[#allocation2 + $0x338] sm:$0xff] %v2150
    %2279 = vst [vmem:[#allocation2 + $0x340] sm:$0xff] %v2151
    %2280 = vst [vmem:[#allocation2 + $0x348] sm:$0xff] %v2152
    %2281 = vst [vmem:[#allocation2 + $0x350] sm:$0xff] %v2153
    %2282 = vst [vmem:[#allocation2 + $0x358] sm:$0xff] %v2154
    %2283 = vst [vmem:[#allocation2 + $0x360] sm:$0xff] %v2155
    %2284 = vst [vmem:[#allocation2 + $0x368] sm:$0xff] %v2156
    %2285 = vst [vmem:[#allocation2 + $0x370] sm:$0xff] %v2157
    %2286 = vst [vmem:[#allocation2 + $0x378] sm:$0xff] %v2158
    %2287 = vst [vmem:[#allocation2 + $0x380] sm:$0xff] %v2159
    %2288 = vst [vmem:[#allocation2 + $0x388] sm:$0xff] %v2160
    %2289 = vst [vmem:[#allocation2 + $0x390] sm:$0xff] %v2161
    %2290 = vst [vmem:[#allocation2 + $0x398] sm:$0xff] %v2162
    %2291 = vst [vmem:[#allocation2 + $0x3a0] sm:$0xff] %v2163
    %2292 = vst [vmem:[#allocation2 + $0x3a8] sm:$0xff] %v2164
    %2293 = vst [vmem:[#allocation2 + $0x3b0] sm:$0xff] %v2165
    %2294 = vst [vmem:[#allocation2 + $0x3b8] sm:$0xff] %v2166
    %2295 = vst [vmem:[#allocation2 + $0x3c0] sm:$0xff] %v2167
    %2296 = vst [vmem:[#allocation2 + $0x3c8] sm:$0xff] %v2168
    %2297 = vst [vmem:[#allocation2 + $0x3d0] sm:$0xff] %v2169
    %2298 = vst [vmem:[#allocation2 + $0x3d8] sm:$0xff] %v2170
    %2299 = vst [vmem:[#allocation2 + $0x3e0] sm:$0xff] %v2171
    %2300 = vst [vmem:[#allocation2 + $0x3e8] sm:$0xff] %v2172
    %2301 = vst [vmem:[#allocation2 + $0x3f0] sm:$0xff] %v2173
    %2302 = vst [vmem:[#allocation2 + $0x3f8] sm:$0xff] %v2174
    %v2303 = vld [vmem:[#allocation3] sm:$0xff]
    %v2304 = vld [vmem:[#allocation3 + $0x8] sm:$0xff]
    %v2305 = vld [vmem:[#allocation3 + $0x10] sm:$0xff]
    %v2306 = vld [vmem:[#allocation3 + $0x18] sm:$0xff]
    %v2307 = vld [vmem:[#allocation3 + $0x20] sm:$0xff]
    %v2308 = vld [vmem:[#allocation3 + $0x28] sm:$0xff]
    %v2309 = vld [vmem:[#allocation3 + $0x30] sm:$0xff]
    %v2310 = vld [vmem:[#allocation3 + $0x38] sm:$0xff]
    %v2311 = vld [vmem:[#allocation3 + $0x40] sm:$0xff]
    %v2312 = vld [vmem:[#allocation3 + $0x48] sm:$0xff]
    %v2313 = vld [vmem:[#allocation3 + $0x50] sm:$0xff]
    %v2314 = vld [vmem:[#allocation3 + $0x58] sm:$0xff]
    %v2315 = vld [vmem:[#allocation3 + $0x60] sm:$0xff]
    %v2316 = vld [vmem:[#allocation3 + $0x68] sm:$0xff]
    %v2317 = vld [vmem:[#allocation3 + $0x70] sm:$0xff]
    %v2318 = vld [vmem:[#allocation3 + $0x78] sm:$0xff]
    %v2319 = vld [vmem:[#allocation3 + $0x80] sm:$0xff]
    %v2320 = vld [vmem:[#allocation3 + $0x88] sm:$0xff]
    %v2321 = vld [vmem:[#allocation3 + $0x90] sm:$0xff]
    %v2322 = vld [vmem:[#allocation3 + $0x98] sm:$0xff]
    %v2323 = vld [vmem:[#allocation3 + $0xa0] sm:$0xff]
    %v2324 = vld [vmem:[#allocation3 + $0xa8] sm:$0xff]
    %v2325 = vld [vmem:[#allocation3 + $0xb0] sm:$0xff]
    %v2326 = vld [vmem:[#allocation3 + $0xb8] sm:$0xff]
    %v2327 = vld [vmem:[#allocation3 + $0xc0] sm:$0xff]
    %v2328 = vld [vmem:[#allocation3 + $0xc8] sm:$0xff]
    %v2329 = vld [vmem:[#allocation3 + $0xd0] sm:$0xff]
    %v2330 = vld [vmem:[#allocation3 + $0xd8] sm:$0xff]
    %v2331 = vld [vmem:[#allocation3 + $0xe0] sm:$0xff]
    %v2332 = vld [vmem:[#allocation3 + $0xe8] sm:$0xff]
    %v2333 = vld [vmem:[#allocation3 + $0xf0] sm:$0xff]
    %v2334 = vld [vmem:[#allocation3 + $0xf8] sm:$0xff]
    %v2335 = vld [vmem:[#allocation3 + $0x100] sm:$0xff]
    %v2336 = vld [vmem:[#allocation3 + $0x108] sm:$0xff]
    %v2337 = vld [vmem:[#allocation3 + $0x110] sm:$0xff]
    %v2338 = vld [vmem:[#allocation3 + $0x118] sm:$0xff]
    %v2339 = vld [vmem:[#allocation3 + $0x120] sm:$0xff]
    %v2340 = vld [vmem:[#allocation3 + $0x128] sm:$0xff]
    %v2341 = vld [vmem:[#allocation3 + $0x130] sm:$0xff]
    %v2342 = vld [vmem:[#allocation3 + $0x138] sm:$0xff]
    %v2343 = vld [vmem:[#allocation3 + $0x140] sm:$0xff]
    %v2344 = vld [vmem:[#allocation3 + $0x148] sm:$0xff]
    %v2345 = vld [vmem:[#allocation3 + $0x150] sm:$0xff]
    %v2346 = vld [vmem:[#allocation3 + $0x158] sm:$0xff]
    %v2347 = vld [vmem:[#allocation3 + $0x160] sm:$0xff]
    %v2348 = vld [vmem:[#allocation3 + $0x168] sm:$0xff]
    %v2349 = vld [vmem:[#allocation3 + $0x170] sm:$0xff]
    %v2350 = vld [vmem:[#allocation3 + $0x178] sm:$0xff]
    %v2351 = vld [vmem:[#allocation3 + $0x180] sm:$0xff]
    %v2352 = vld [vmem:[#allocation3 + $0x188] sm:$0xff]
    %v2353 = vld [vmem:[#allocation3 + $0x190] sm:$0xff]
    %v2354 = vld [vmem:[#allocation3 + $0x198] sm:$0xff]
    %v2355 = vld [vmem:[#allocation3 + $0x1a0] sm:$0xff]
    %v2356 = vld [vmem:[#allocation3 + $0x1a8] sm:$0xff]
    %v2357 = vld [vmem:[#allocation3 + $0x1b0] sm:$0xff]
    %v2358 = vld [vmem:[#allocation3 + $0x1b8] sm:$0xff]
    %v2359 = vld [vmem:[#allocation3 + $0x1c0] sm:$0xff]
    %v2360 = vld [vmem:[#allocation3 + $0x1c8] sm:$0xff]
    %v2361 = vld [vmem:[#allocation3 + $0x1d0] sm:$0xff]
    %v2362 = vld [vmem:[#allocation3 + $0x1d8] sm:$0xff]
    %v2363 = vld [vmem:[#allocation3 + $0x1e0] sm:$0xff]
    %v2364 = vld [vmem:[#allocation3 + $0x1e8] sm:$0xff]
    %v2365 = vld [vmem:[#allocation3 + $0x1f0] sm:$0xff]
    %v2366 = vld [vmem:[#allocation3 + $0x1f8] sm:$0xff]
    %v2367 = vld [vmem:[#allocation3 + $0x200] sm:$0xff]
    %v2368 = vld [vmem:[#allocation3 + $0x208] sm:$0xff]
    %v2369 = vld [vmem:[#allocation3 + $0x210] sm:$0xff]
    %v2370 = vld [vmem:[#allocation3 + $0x218] sm:$0xff]
    %v2371 = vld [vmem:[#allocation3 + $0x220] sm:$0xff]
    %v2372 = vld [vmem:[#allocation3 + $0x228] sm:$0xff]
    %v2373 = vld [vmem:[#allocation3 + $0x230] sm:$0xff]
    %v2374 = vld [vmem:[#allocation3 + $0x238] sm:$0xff]
    %v2375 = vld [vmem:[#allocation3 + $0x240] sm:$0xff]
    %v2376 = vld [vmem:[#allocation3 + $0x248] sm:$0xff]
    %v2377 = vld [vmem:[#allocation3 + $0x250] sm:$0xff]
    %v2378 = vld [vmem:[#allocation3 + $0x258] sm:$0xff]
    %v2379 = vld [vmem:[#allocation3 + $0x260] sm:$0xff]
    %v2380 = vld [vmem:[#allocation3 + $0x268] sm:$0xff]
    %v2381 = vld [vmem:[#allocation3 + $0x270] sm:$0xff]
    %v2382 = vld [vmem:[#allocation3 + $0x278] sm:$0xff]
    %v2383 = vld [vmem:[#allocation3 + $0x280] sm:$0xff]
    %v2384 = vld [vmem:[#allocation3 + $0x288] sm:$0xff]
    %v2385 = vld [vmem:[#allocation3 + $0x290] sm:$0xff]
    %v2386 = vld [vmem:[#allocation3 + $0x298] sm:$0xff]
    %v2387 = vld [vmem:[#allocation3 + $0x2a0] sm:$0xff]
    %v2388 = vld [vmem:[#allocation3 + $0x2a8] sm:$0xff]
    %v2389 = vld [vmem:[#allocation3 + $0x2b0] sm:$0xff]
    %v2390 = vld [vmem:[#allocation3 + $0x2b8] sm:$0xff]
    %v2391 = vld [vmem:[#allocation3 + $0x2c0] sm:$0xff]
    %v2392 = vld [vmem:[#allocation3 + $0x2c8] sm:$0xff]
    %v2393 = vld [vmem:[#allocation3 + $0x2d0] sm:$0xff]
    %v2394 = vld [vmem:[#allocation3 + $0x2d8] sm:$0xff]
    %v2395 = vld [vmem:[#allocation3 + $0x2e0] sm:$0xff]
    %v2396 = vld [vmem:[#allocation3 + $0x2e8] sm:$0xff]
    %v2397 = vld [vmem:[#allocation3 + $0x2f0] sm:$0xff]
    %v2398 = vld [vmem:[#allocation3 + $0x2f8] sm:$0xff]
    %v2399 = vld [vmem:[#allocation3 + $0x300] sm:$0xff]
    %v2400 = vld [vmem:[#allocation3 + $0x308] sm:$0xff]
    %v2401 = vld [vmem:[#allocation3 + $0x310] sm:$0xff]
    %v2402 = vld [vmem:[#allocation3 + $0x318] sm:$0xff]
    %v2403 = vld [vmem:[#allocation3 + $0x320] sm:$0xff]
    %v2404 = vld [vmem:[#allocation3 + $0x328] sm:$0xff]
    %v2405 = vld [vmem:[#allocation3 + $0x330] sm:$0xff]
    %v2406 = vld [vmem:[#allocation3 + $0x338] sm:$0xff]
    %v2407 = vld [vmem:[#allocation3 + $0x340] sm:$0xff]
    %v2408 = vld [vmem:[#allocation3 + $0x348] sm:$0xff]
    %v2409 = vld [vmem:[#allocation3 + $0x350] sm:$0xff]
    %v2410 = vld [vmem:[#allocation3 + $0x358] sm:$0xff]
    %v2411 = vld [vmem:[#allocation3 + $0x360] sm:$0xff]
    %v2412 = vld [vmem:[#allocation3 + $0x368] sm:$0xff]
    %v2413 = vld [vmem:[#allocation3 + $0x370] sm:$0xff]
    %v2414 = vld [vmem:[#allocation3 + $0x378] sm:$0xff]
    %v2415 = vld [vmem:[#allocation3 + $0x380] sm:$0xff]
    %v2416 = vld [vmem:[#allocation3 + $0x388] sm:$0xff]
    %v2417 = vld [vmem:[#allocation3 + $0x390] sm:$0xff]
    %v2418 = vld [vmem:[#allocation3 + $0x398] sm:$0xff]
    %v2419 = vld [vmem:[#allocation3 + $0x3a0] sm:$0xff]
    %v2420 = vld [vmem:[#allocation3 + $0x3a8] sm:$0xff]
    %v2421 = vld [vmem:[#allocation3 + $0x3b0] sm:$0xff]
    %v2422 = vld [vmem:[#allocation3 + $0x3b8] sm:$0xff]
    %v2423 = vld [vmem:[#allocation3 + $0x3c0] sm:$0xff]
    %v2424 = vld [vmem:[#allocation3 + $0x3c8] sm:$0xff]
    %v2425 = vld [vmem:[#allocation3 + $0x3d0] sm:$0xff]
    %v2426 = vld [vmem:[#allocation3 + $0x3d8] sm:$0xff]
    %v2427 = vld [vmem:[#allocation3 + $0x3e0] sm:$0xff]
    %v2428 = vld [vmem:[#allocation3 + $0x3e8] sm:$0xff]
    %v2429 = vld [vmem:[#allocation3 + $0x3f0] sm:$0xff]
    %v2430 = vld [vmem:[#allocation3 + $0x3f8] sm:$0xff]
    %v2431 = vld [vmem:[#allocation10] sm:$0xff]
    %v2432 = vld [vmem:[#allocation10 + $0x8] sm:$0xff]
    %v2433 = vld [vmem:[#allocation10 + $0x10] sm:$0xff]
    %v2434 = vld [vmem:[#allocation10 + $0x18] sm:$0xff]
    %v2435 = vld [vmem:[#allocation10 + $0x20] sm:$0xff]
    %v2436 = vld [vmem:[#allocation10 + $0x28] sm:$0xff]
    %v2437 = vld [vmem:[#allocation10 + $0x30] sm:$0xff]
    %v2438 = vld [vmem:[#allocation10 + $0x38] sm:$0xff]
    %v2439 = vld [vmem:[#allocation10 + $0x40] sm:$0xff]
    %v2440 = vld [vmem:[#allocation10 + $0x48] sm:$0xff]
    %v2441 = vld [vmem:[#allocation10 + $0x50] sm:$0xff]
    %v2442 = vld [vmem:[#allocation10 + $0x58] sm:$0xff]
    %v2443 = vld [vmem:[#allocation10 + $0x60] sm:$0xff]
    %v2444 = vld [vmem:[#allocation10 + $0x68] sm:$0xff]
    %v2445 = vld [vmem:[#allocation10 + $0x70] sm:$0xff]
    %v2446 = vld [vmem:[#allocation10 + $0x78] sm:$0xff]
    %v2447 = vld [vmem:[#allocation10 + $0x80] sm:$0xff]
    %v2448 = vld [vmem:[#allocation10 + $0x88] sm:$0xff]
    %v2449 = vld [vmem:[#allocation10 + $0x90] sm:$0xff]
    %v2450 = vld [vmem:[#allocation10 + $0x98] sm:$0xff]
    %v2451 = vld [vmem:[#allocation10 + $0xa0] sm:$0xff]
    %v2452 = vld [vmem:[#allocation10 + $0xa8] sm:$0xff]
    %v2453 = vld [vmem:[#allocation10 + $0xb0] sm:$0xff]
    %v2454 = vld [vmem:[#allocation10 + $0xb8] sm:$0xff]
    %v2455 = vld [vmem:[#allocation10 + $0xc0] sm:$0xff]
    %v2456 = vld [vmem:[#allocation10 + $0xc8] sm:$0xff]
    %v2457 = vld [vmem:[#allocation10 + $0xd0] sm:$0xff]
    %v2458 = vld [vmem:[#allocation10 + $0xd8] sm:$0xff]
    %v2459 = vld [vmem:[#allocation10 + $0xe0] sm:$0xff]
    %v2460 = vld [vmem:[#allocation10 + $0xe8] sm:$0xff]
    %v2461 = vld [vmem:[#allocation10 + $0xf0] sm:$0xff]
    %v2462 = vld [vmem:[#allocation10 + $0xf8] sm:$0xff]
    %v2463 = vld [vmem:[#allocation10 + $0x100] sm:$0xff]
    %v2464 = vld [vmem:[#allocation10 + $0x108] sm:$0xff]
    %v2465 = vld [vmem:[#allocation10 + $0x110] sm:$0xff]
    %v2466 = vld [vmem:[#allocation10 + $0x118] sm:$0xff]
    %v2467 = vld [vmem:[#allocation10 + $0x120] sm:$0xff]
    %v2468 = vld [vmem:[#allocation10 + $0x128] sm:$0xff]
    %v2469 = vld [vmem:[#allocation10 + $0x130] sm:$0xff]
    %v2470 = vld [vmem:[#allocation10 + $0x138] sm:$0xff]
    %v2471 = vld [vmem:[#allocation10 + $0x140] sm:$0xff]
    %v2472 = vld [vmem:[#allocation10 + $0x148] sm:$0xff]
    %v2473 = vld [vmem:[#allocation10 + $0x150] sm:$0xff]
    %v2474 = vld [vmem:[#allocation10 + $0x158] sm:$0xff]
    %v2475 = vld [vmem:[#allocation10 + $0x160] sm:$0xff]
    %v2476 = vld [vmem:[#allocation10 + $0x168] sm:$0xff]
    %v2477 = vld [vmem:[#allocation10 + $0x170] sm:$0xff]
    %v2478 = vld [vmem:[#allocation10 + $0x178] sm:$0xff]
    %v2479 = vld [vmem:[#allocation10 + $0x180] sm:$0xff]
    %v2480 = vld [vmem:[#allocation10 + $0x188] sm:$0xff]
    %v2481 = vld [vmem:[#allocation10 + $0x190] sm:$0xff]
    %v2482 = vld [vmem:[#allocation10 + $0x198] sm:$0xff]
    %v2483 = vld [vmem:[#allocation10 + $0x1a0] sm:$0xff]
    %v2484 = vld [vmem:[#allocation10 + $0x1a8] sm:$0xff]
    %v2485 = vld [vmem:[#allocation10 + $0x1b0] sm:$0xff]
    %v2486 = vld [vmem:[#allocation10 + $0x1b8] sm:$0xff]
    %v2487 = vld [vmem:[#allocation10 + $0x1c0] sm:$0xff]
    %v2488 = vld [vmem:[#allocation10 + $0x1c8] sm:$0xff]
    %v2489 = vld [vmem:[#allocation10 + $0x1d0] sm:$0xff]
    %v2490 = vld [vmem:[#allocation10 + $0x1d8] sm:$0xff]
    %v2491 = vld [vmem:[#allocation10 + $0x1e0] sm:$0xff]
    %v2492 = vld [vmem:[#allocation10 + $0x1e8] sm:$0xff]
    %v2493 = vld [vmem:[#allocation10 + $0x1f0] sm:$0xff]
    %v2494 = vld [vmem:[#allocation10 + $0x1f8] sm:$0xff]
    %v2495 = vld [vmem:[#allocation10 + $0x200] sm:$0xff]
    %v2496 = vld [vmem:[#allocation10 + $0x208] sm:$0xff]
    %v2497 = vld [vmem:[#allocation10 + $0x210] sm:$0xff]
    %v2498 = vld [vmem:[#allocation10 + $0x218] sm:$0xff]
    %v2499 = vld [vmem:[#allocation10 + $0x220] sm:$0xff]
    %v2500 = vld [vmem:[#allocation10 + $0x228] sm:$0xff]
    %v2501 = vld [vmem:[#allocation10 + $0x230] sm:$0xff]
    %v2502 = vld [vmem:[#allocation10 + $0x238] sm:$0xff]
    %v2503 = vld [vmem:[#allocation10 + $0x240] sm:$0xff]
    %v2504 = vld [vmem:[#allocation10 + $0x248] sm:$0xff]
    %v2505 = vld [vmem:[#allocation10 + $0x250] sm:$0xff]
    %v2506 = vld [vmem:[#allocation10 + $0x258] sm:$0xff]
    %v2507 = vld [vmem:[#allocation10 + $0x260] sm:$0xff]
    %v2508 = vld [vmem:[#allocation10 + $0x268] sm:$0xff]
    %v2509 = vld [vmem:[#allocation10 + $0x270] sm:$0xff]
    %v2510 = vld [vmem:[#allocation10 + $0x278] sm:$0xff]
    %v2511 = vld [vmem:[#allocation10 + $0x280] sm:$0xff]
    %v2512 = vld [vmem:[#allocation10 + $0x288] sm:$0xff]
    %v2513 = vld [vmem:[#allocation10 + $0x290] sm:$0xff]
    %v2514 = vld [vmem:[#allocation10 + $0x298] sm:$0xff]
    %v2515 = vld [vmem:[#allocation10 + $0x2a0] sm:$0xff]
    %v2516 = vld [vmem:[#allocation10 + $0x2a8] sm:$0xff]
    %v2517 = vld [vmem:[#allocation10 + $0x2b0] sm:$0xff]
    %v2518 = vld [vmem:[#allocation10 + $0x2b8] sm:$0xff]
    %v2519 = vld [vmem:[#allocation10 + $0x2c0] sm:$0xff]
    %v2520 = vld [vmem:[#allocation10 + $0x2c8] sm:$0xff]
    %v2521 = vld [vmem:[#allocation10 + $0x2d0] sm:$0xff]
    %v2522 = vld [vmem:[#allocation10 + $0x2d8] sm:$0xff]
    %v2523 = vld [vmem:[#allocation10 + $0x2e0] sm:$0xff]
    %v2524 = vld [vmem:[#allocation10 + $0x2e8] sm:$0xff]
    %v2525 = vld [vmem:[#allocation10 + $0x2f0] sm:$0xff]
    %v2526 = vld [vmem:[#allocation10 + $0x2f8] sm:$0xff]
    %v2527 = vld [vmem:[#allocation10 + $0x300] sm:$0xff]
    %v2528 = vld [vmem:[#allocation10 + $0x308] sm:$0xff]
    %v2529 = vld [vmem:[#allocation10 + $0x310] sm:$0xff]
    %v2530 = vld [vmem:[#allocation10 + $0x318] sm:$0xff]
    %v2531 = vld [vmem:[#allocation10 + $0x320] sm:$0xff]
    %v2532 = vld [vmem:[#allocation10 + $0x328] sm:$0xff]
    %v2533 = vld [vmem:[#allocation10 + $0x330] sm:$0xff]
    %v2534 = vld [vmem:[#allocation10 + $0x338] sm:$0xff]
    %v2535 = vld [vmem:[#allocation10 + $0x340] sm:$0xff]
    %v2536 = vld [vmem:[#allocation10 + $0x348] sm:$0xff]
    %v2537 = vld [vmem:[#allocation10 + $0x350] sm:$0xff]
    %v2538 = vld [vmem:[#allocation10 + $0x358] sm:$0xff]
    %v2539 = vld [vmem:[#allocation10 + $0x360] sm:$0xff]
    %v2540 = vld [vmem:[#allocation10 + $0x368] sm:$0xff]
    %v2541 = vld [vmem:[#allocation10 + $0x370] sm:$0xff]
    %v2542 = vld [vmem:[#allocation10 + $0x378] sm:$0xff]
    %v2543 = vld [vmem:[#allocation10 + $0x380] sm:$0xff]
    %v2544 = vld [vmem:[#allocation10 + $0x388] sm:$0xff]
    %v2545 = vld [vmem:[#allocation10 + $0x390] sm:$0xff]
    %v2546 = vld [vmem:[#allocation10 + $0x398] sm:$0xff]
    %v2547 = vld [vmem:[#allocation10 + $0x3a0] sm:$0xff]
    %v2548 = vld [vmem:[#allocation10 + $0x3a8] sm:$0xff]
    %v2549 = vld [vmem:[#allocation10 + $0x3b0] sm:$0xff]
    %v2550 = vld [vmem:[#allocation10 + $0x3b8] sm:$0xff]
    %v2551 = vld [vmem:[#allocation10 + $0x3c0] sm:$0xff]
    %v2552 = vld [vmem:[#allocation10 + $0x3c8] sm:$0xff]
    %v2553 = vld [vmem:[#allocation10 + $0x3d0] sm:$0xff]
    %v2554 = vld [vmem:[#allocation10 + $0x3d8] sm:$0xff]
    %v2555 = vld [vmem:[#allocation10 + $0x3e0] sm:$0xff]
    %v2556 = vld [vmem:[#allocation10 + $0x3e8] sm:$0xff]
    %v2557 = vld [vmem:[#allocation10 + $0x3f0] sm:$0xff]
    %v2558 = vld [vmem:[#allocation10 + $0x3f8] sm:$0xff]
    %v2559 = vld [vmem:[#allocation10 + $0x400] sm:$0xff]
    %v2560 = vld [vmem:[#allocation10 + $0x408] sm:$0xff]
    %v2561 = vld [vmem:[#allocation10 + $0x410] sm:$0xff]
    %v2562 = vld [vmem:[#allocation10 + $0x418] sm:$0xff]
    %v2563 = vld [vmem:[#allocation10 + $0x420] sm:$0xff]
    %v2564 = vld [vmem:[#allocation10 + $0x428] sm:$0xff]
    %v2565 = vld [vmem:[#allocation10 + $0x430] sm:$0xff]
    %v2566 = vld [vmem:[#allocation10 + $0x438] sm:$0xff]
    %v2567 = vld [vmem:[#allocation10 + $0x440] sm:$0xff]
    %v2568 = vld [vmem:[#allocation10 + $0x448] sm:$0xff]
    %v2569 = vld [vmem:[#allocation10 + $0x450] sm:$0xff]
    %v2570 = vld [vmem:[#allocation10 + $0x458] sm:$0xff]
    %v2571 = vld [vmem:[#allocation10 + $0x460] sm:$0xff]
    %v2572 = vld [vmem:[#allocation10 + $0x468] sm:$0xff]
    %v2573 = vld [vmem:[#allocation10 + $0x470] sm:$0xff]
    %v2574 = vld [vmem:[#allocation10 + $0x478] sm:$0xff]
    %v2575 = vld [vmem:[#allocation10 + $0x480] sm:$0xff]
    %v2576 = vld [vmem:[#allocation10 + $0x488] sm:$0xff]
    %v2577 = vld [vmem:[#allocation10 + $0x490] sm:$0xff]
    %v2578 = vld [vmem:[#allocation10 + $0x498] sm:$0xff]
    %v2579 = vld [vmem:[#allocation10 + $0x4a0] sm:$0xff]
    %v2580 = vld [vmem:[#allocation10 + $0x4a8] sm:$0xff]
    %v2581 = vld [vmem:[#allocation10 + $0x4b0] sm:$0xff]
    %v2582 = vld [vmem:[#allocation10 + $0x4b8] sm:$0xff]
    %v2583 = vld [vmem:[#allocation10 + $0x4c0] sm:$0xff]
    %v2584 = vld [vmem:[#allocation10 + $0x4c8] sm:$0xff]
    %v2585 = vld [vmem:[#allocation10 + $0x4d0] sm:$0xff]
    %v2586 = vld [vmem:[#allocation10 + $0x4d8] sm:$0xff]
    %v2587 = vld [vmem:[#allocation10 + $0x4e0] sm:$0xff]
    %v2588 = vld [vmem:[#allocation10 + $0x4e8] sm:$0xff]
    %v2589 = vld [vmem:[#allocation10 + $0x4f0] sm:$0xff]
    %v2590 = vld [vmem:[#allocation10 + $0x4f8] sm:$0xff]
    %v2591 = vld [vmem:[#allocation10 + $0x500] sm:$0xff]
    %v2592 = vld [vmem:[#allocation10 + $0x508] sm:$0xff]
    %v2593 = vld [vmem:[#allocation10 + $0x510] sm:$0xff]
    %v2594 = vld [vmem:[#allocation10 + $0x518] sm:$0xff]
    %v2595 = vld [vmem:[#allocation10 + $0x520] sm:$0xff]
    %v2596 = vld [vmem:[#allocation10 + $0x528] sm:$0xff]
    %v2597 = vld [vmem:[#allocation10 + $0x530] sm:$0xff]
    %v2598 = vld [vmem:[#allocation10 + $0x538] sm:$0xff]
    %v2599 = vld [vmem:[#allocation10 + $0x540] sm:$0xff]
    %v2600 = vld [vmem:[#allocation10 + $0x548] sm:$0xff]
    %v2601 = vld [vmem:[#allocation10 + $0x550] sm:$0xff]
    %v2602 = vld [vmem:[#allocation10 + $0x558] sm:$0xff]
    %v2603 = vld [vmem:[#allocation10 + $0x560] sm:$0xff]
    %v2604 = vld [vmem:[#allocation10 + $0x568] sm:$0xff]
    %v2605 = vld [vmem:[#allocation10 + $0x570] sm:$0xff]
    %v2606 = vld [vmem:[#allocation10 + $0x578] sm:$0xff]
    %v2607 = vld [vmem:[#allocation10 + $0x580] sm:$0xff]
    %v2608 = vld [vmem:[#allocation10 + $0x588] sm:$0xff]
    %v2609 = vld [vmem:[#allocation10 + $0x590] sm:$0xff]
    %v2610 = vld [vmem:[#allocation10 + $0x598] sm:$0xff]
    %v2611 = vld [vmem:[#allocation10 + $0x5a0] sm:$0xff]
    %v2612 = vld [vmem:[#allocation10 + $0x5a8] sm:$0xff]
    %v2613 = vld [vmem:[#allocation10 + $0x5b0] sm:$0xff]
    %v2614 = vld [vmem:[#allocation10 + $0x5b8] sm:$0xff]
    %v2615 = vld [vmem:[#allocation10 + $0x5c0] sm:$0xff]
    %v2616 = vld [vmem:[#allocation10 + $0x5c8] sm:$0xff]
    %v2617 = vld [vmem:[#allocation10 + $0x5d0] sm:$0xff]
    %v2618 = vld [vmem:[#allocation10 + $0x5d8] sm:$0xff]
    %v2619 = vld [vmem:[#allocation10 + $0x5e0] sm:$0xff]
    %v2620 = vld [vmem:[#allocation10 + $0x5e8] sm:$0xff]
    %v2621 = vld [vmem:[#allocation10 + $0x5f0] sm:$0xff]
    %v2622 = vld [vmem:[#allocation10 + $0x5f8] sm:$0xff]
    %v2623 = vld [vmem:[#allocation10 + $0x600] sm:$0xff]
    %v2624 = vld [vmem:[#allocation10 + $0x608] sm:$0xff]
    %v2625 = vld [vmem:[#allocation10 + $0x610] sm:$0xff]
    %v2626 = vld [vmem:[#allocation10 + $0x618] sm:$0xff]
    %v2627 = vld [vmem:[#allocation10 + $0x620] sm:$0xff]
    %v2628 = vld [vmem:[#allocation10 + $0x628] sm:$0xff]
    %v2629 = vld [vmem:[#allocation10 + $0x630] sm:$0xff]
    %v2630 = vld [vmem:[#allocation10 + $0x638] sm:$0xff]
    %v2631 = vld [vmem:[#allocation10 + $0x640] sm:$0xff]
    %v2632 = vld [vmem:[#allocation10 + $0x648] sm:$0xff]
    %v2633 = vld [vmem:[#allocation10 + $0x650] sm:$0xff]
    %v2634 = vld [vmem:[#allocation10 + $0x658] sm:$0xff]
    %v2635 = vld [vmem:[#allocation10 + $0x660] sm:$0xff]
    %v2636 = vld [vmem:[#allocation10 + $0x668] sm:$0xff]
    %v2637 = vld [vmem:[#allocation10 + $0x670] sm:$0xff]
    %v2638 = vld [vmem:[#allocation10 + $0x678] sm:$0xff]
    %v2639 = vld [vmem:[#allocation10 + $0x680] sm:$0xff]
    %v2640 = vld [vmem:[#allocation10 + $0x688] sm:$0xff]
    %v2641 = vld [vmem:[#allocation10 + $0x690] sm:$0xff]
    %v2642 = vld [vmem:[#allocation10 + $0x698] sm:$0xff]
    %v2643 = vld [vmem:[#allocation10 + $0x6a0] sm:$0xff]
    %v2644 = vld [vmem:[#allocation10 + $0x6a8] sm:$0xff]
    %v2645 = vld [vmem:[#allocation10 + $0x6b0] sm:$0xff]
    %v2646 = vld [vmem:[#allocation10 + $0x6b8] sm:$0xff]
    %v2647 = vld [vmem:[#allocation10 + $0x6c0] sm:$0xff]
    %v2648 = vld [vmem:[#allocation10 + $0x6c8] sm:$0xff]
    %v2649 = vld [vmem:[#allocation10 + $0x6d0] sm:$0xff]
    %v2650 = vld [vmem:[#allocation10 + $0x6d8] sm:$0xff]
    %v2651 = vld [vmem:[#allocation10 + $0x6e0] sm:$0xff]
    %v2652 = vld [vmem:[#allocation10 + $0x6e8] sm:$0xff]
    %v2653 = vld [vmem:[#allocation10 + $0x6f0] sm:$0xff]
    %v2654 = vld [vmem:[#allocation10 + $0x6f8] sm:$0xff]
    %v2655 = vld [vmem:[#allocation10 + $0x700] sm:$0xff]
    %v2656 = vld [vmem:[#allocation10 + $0x708] sm:$0xff]
    %v2657 = vld [vmem:[#allocation10 + $0x710] sm:$0xff]
    %v2658 = vld [vmem:[#allocation10 + $0x718] sm:$0xff]
    %v2659 = vld [vmem:[#allocation10 + $0x720] sm:$0xff]
    %v2660 = vld [vmem:[#allocation10 + $0x728] sm:$0xff]
    %v2661 = vld [vmem:[#allocation10 + $0x730] sm:$0xff]
    %v2662 = vld [vmem:[#allocation10 + $0x738] sm:$0xff]
    %v2663 = vld [vmem:[#allocation10 + $0x740] sm:$0xff]
    %v2664 = vld [vmem:[#allocation10 + $0x748] sm:$0xff]
    %v2665 = vld [vmem:[#allocation10 + $0x750] sm:$0xff]
    %v2666 = vld [vmem:[#allocation10 + $0x758] sm:$0xff]
    %v2667 = vld [vmem:[#allocation10 + $0x760] sm:$0xff]
    %v2668 = vld [vmem:[#allocation10 + $0x768] sm:$0xff]
    %v2669 = vld [vmem:[#allocation10 + $0x770] sm:$0xff]
    %v2670 = vld [vmem:[#allocation10 + $0x778] sm:$0xff]
    %v2671 = vld [vmem:[#allocation10 + $0x780] sm:$0xff]
    %v2672 = vld [vmem:[#allocation10 + $0x788] sm:$0xff]
    %v2673 = vld [vmem:[#allocation10 + $0x790] sm:$0xff]
    %v2674 = vld [vmem:[#allocation10 + $0x798] sm:$0xff]
    %v2675 = vld [vmem:[#allocation10 + $0x7a0] sm:$0xff]
    %v2676 = vld [vmem:[#allocation10 + $0x7a8] sm:$0xff]
    %v2677 = vld [vmem:[#allocation10 + $0x7b0] sm:$0xff]
    %v2678 = vld [vmem:[#allocation10 + $0x7b8] sm:$0xff]
    %v2679 = vld [vmem:[#allocation10 + $0x7c0] sm:$0xff]
    %v2680 = vld [vmem:[#allocation10 + $0x7c8] sm:$0xff]
    %v2681 = vld [vmem:[#allocation10 + $0x7d0] sm:$0xff]
    %v2682 = vld [vmem:[#allocation10 + $0x7d8] sm:$0xff]
    %v2683 = vld [vmem:[#allocation10 + $0x7e0] sm:$0xff]
    %v2684 = vld [vmem:[#allocation10 + $0x7e8] sm:$0xff]
    %v2685 = vld [vmem:[#allocation10 + $0x7f0] sm:$0xff]
    %v2686 = vld [vmem:[#allocation10 + $0x7f8] sm:$0xff]
    %2687 = vmatprep.subr.mxu0 %v2432
    %2688 = vmatpush1.msra.mxu0 %v2431
    %2689 = vmatprep.subr.mxu0 %v2436
    %2690 = vmatpush1.msra.mxu0 %v2435
    %2691 = vmatprep.subr.mxu0 %v2440
    %2692 = vmatpush1.msra.mxu0 %v2439
    %2693 = vmatprep.subr.mxu0 %v2444
    %2694 = vmatpush1.msra.mxu0 %v2443
    %2695 = vmatprep.subr.mxu0 %v2448
    %2696 = vmatpush1.msra.mxu0 %v2447
    %2697 = vmatprep.subr.mxu0 %v2452
    %2698 = vmatpush1.msra.mxu0 %v2451
    %2699 = vmatprep.subr.mxu0 %v2456
    %2700 = vmatpush1.msra.mxu0 %v2455
    %2701 = vmatprep.subr.mxu0 %v2460
    %2702 = vmatpush1.msra.mxu0 %v2459
    %2703 = vmatprep.subr.mxu0 %v2464
    %2704 = vmatpush1.msra.mxu0 %v2463
    %2705 = vmatprep.subr.mxu0 %v2468
    %2706 = vmatpush1.msra.mxu0 %v2467
    %2707 = vmatprep.subr.mxu0 %v2472
    %2708 = vmatpush1.msra.mxu0 %v2471
    %2709 = vmatprep.subr.mxu0 %v2476
    %2710 = vmatpush1.msra.mxu0 %v2475
    %2711 = vmatprep.subr.mxu0 %v2480
    %2712 = vmatpush1.msra.mxu0 %v2479
    %2713 = vmatprep.subr.mxu0 %v2484
    %2714 = vmatpush1.msra.mxu0 %v2483
    %2715 = vmatprep.subr.mxu0 %v2488
    %2716 = vmatpush1.msra.mxu0 %v2487
    %2717 = vmatprep.subr.mxu0 %v2492
    %2718 = vmatpush1.msra.mxu0 %v2491
    %2719 = vmatprep.subr.mxu0 %v2496
    %2720 = vmatpush1.msra.mxu0 %v2495
    %2721 = vmatprep.subr.mxu0 %v2500
    %2722 = vmatpush1.msra.mxu0 %v2499
    %2723 = vmatprep.subr.mxu0 %v2504
    %2724 = vmatpush1.msra.mxu0 %v2503
    %2725 = vmatprep.subr.mxu0 %v2508
    %2726 = vmatpush1.msra.mxu0 %v2507
    %2727 = vmatprep.subr.mxu0 %v2512
    %2728 = vmatpush1.msra.mxu0 %v2511
    %2729 = vmatprep.subr.mxu0 %v2516
    %2730 = vmatpush1.msra.mxu0 %v2515
    %2731 = vmatprep.subr.mxu0 %v2520
    %2732 = vmatpush1.msra.mxu0 %v2519
    %2733 = vmatprep.subr.mxu0 %v2524
    %2734 = vmatpush1.msra.mxu0 %v2523
    %2735 = vmatprep.subr.mxu0 %v2528
    %2736 = vmatpush1.msra.mxu0 %v2527
    %2737 = vmatprep.subr.mxu0 %v2532
    %2738 = vmatpush1.msra.mxu0 %v2531
    %2739 = vmatprep.subr.mxu0 %v2536
    %2740 = vmatpush1.msra.mxu0 %v2535
    %2741 = vmatprep.subr.mxu0 %v2540
    %2742 = vmatpush1.msra.mxu0 %v2539
    %2743 = vmatprep.subr.mxu0 %v2544
    %2744 = vmatpush1.msra.mxu0 %v2543
    %2745 = vmatprep.subr.mxu0 %v2548
    %2746 = vmatpush1.msra.mxu0 %v2547
    %2747 = vmatprep.subr.mxu0 %v2552
    %2748 = vmatpush1.msra.mxu0 %v2551
    %2749 = vmatprep.subr.mxu0 %v2556
    %2750 = vmatpush1.msra.mxu0 %v2555
    %2751 = vmatprep.mubr.f32.mxu0 %v508
    %2752 = vmatmul.mubr.f32.gmra.mrb[0].mxu0 %v507
    %v2753 = vpop.f32.mrb[0].mxu0
    %v2754 = vadd.f32 0.0, %v2753
    %v2755 = vpop.f32.mrb[0].mxu0
    %v2756 = vadd.f32 0.0, %v2755
    %2757 = vmatprep.mubr.f32.mxu0 %v512
    %2758 = vmatmul.mubr.f32.gmra.mrb[0].mxu0 %v511
    %v2759 = vpop.f32.mrb[0].mxu0
    %v2760 = vadd.f32 0.0, %v2759
    %v2761 = vpop.f32.mrb[0].mxu0
    %v2762 = vadd.f32 0.0, %v2761
    %2763 = vmatprep.mubr.f32.mxu0 %v516
    %2764 = vmatmul.mubr.f32.gmra.mrb[0].mxu0 %v515
    %v2765 = vpop.f32.mrb[0].mxu0
    %v2766 = vadd.f32 0.0, %v2765
    %v2767 = vpop.f32.mrb[0].mxu0
    %v2768 = vadd.f32 0.0, %v2767
    %2769 = vmatprep.mubr.f32.mxu0 %v520
    %2770 = vmatmul.mubr.f32.gmra.mrb[0].mxu0 %v519
    %v2771 = vpop.f32.mrb[0].mxu0
    %v2772 = vadd.f32 0.0, %v2771
    %v2773 = vpop.f32.mrb[0].mxu0
    %v2774 = vadd.f32 0.0, %v2773
    %2775 = vmatprep.mubr.f32.mxu0 %v524
    %2776 = vmatmul.mubr.f32.gmra.mrb[0].mxu0 %v523
    %v2777 = vpop.f32.mrb[0].mxu0
    %v2778 = vadd.f32 0.0, %v2777
    %v2779 = vpop.f32.mrb[0].mxu0
    %v2780 = vadd.f32 0.0, %v2779
    %2781 = vmatprep.mubr.f32.mxu0 %v528
    %2782 = vmatmul.mubr.f32.gmra.mrb[0].mxu0 %v527
    %v2783 = vpop.f32.mrb[0].mxu0
    %v2784 = vadd.f32 0.0, %v2783
    %v2785 = vpop.f32.mrb[0].mxu0
    %v2786 = vadd.f32 0.0, %v2785
    %2787 = vmatprep.mubr.f32.mxu0 %v532
    %2788 = vmatmul.mubr.f32.gmra.mrb[0].mxu0 %v531
    %v2789 = vpop.f32.mrb[0].mxu0
    %v2790 = vadd.f32 0.0, %v2789
    %v2791 = vpop.f32.mrb[0].mxu0
    %v2792 = vadd.f32 0.0, %v2791
    %2793 = vmatprep.mubr.f32.mxu0 %v536
    %2794 = vmatmul.mubr.f32.gmra.mrb[0].mxu0 %v535
    %v2795 = vpop.f32.mrb[0].mxu0
    %v2796 = vadd.f32 0.0, %v2795
    %v2797 = vpop.f32.mrb[0].mxu0
    %v2798 = vadd.f32 0.0, %v2797
    %2799 = vmatprep.mubr.f32.mxu0 %v540
    %2800 = vmatmul.mubr.f32.gmra.mrb[0].mxu0 %v539
    %v2801 = vpop.f32.mrb[0].mxu0
    %v2802 = vadd.f32 0.0, %v2801
    %v2803 = vpop.f32.mrb[0].mxu0
    %v2804 = vadd.f32 0.0, %v2803
    %2805 = vmatprep.mubr.f32.mxu0 %v544
    %2806 = vmatmul.mubr.f32.gmra.mrb[0].mxu0 %v543
    %v2807 = vpop.f32.mrb[0].mxu0
    %v2808 = vadd.f32 0.0, %v2807
    %v2809 = vpop.f32.mrb[0].mxu0
    %v2810 = vadd.f32 0.0, %v2809
    %2811 = vmatprep.mubr.f32.mxu0 %v548
    %2812 = vmatmul.mubr.f32.gmra.mrb[0].mxu0 %v547
    %v2813 = vpop.f32.mrb[0].mxu0
    %v2814 = vadd.f32 0.0, %v2813
    %v2815 = vpop.f32.mrb[0].mxu0
    %v2816 = vadd.f32 0.0, %v2815
    %2817 = vmatprep.mubr.f32.mxu0 %v552
    %2818 = vmatmul.mubr.f32.gmra.mrb[0].mxu0 %v551
    %v2819 = vpop.f32.mrb[0].mxu0
    %v2820 = vadd.f32 0.0, %v2819
    %v2821 = vpop.f32.mrb[0].mxu0
    %v2822 = vadd.f32 0.0, %v2821
    %2823 = vmatprep.mubr.f32.mxu0 %v556
    %2824 = vmatmul.mubr.f32.gmra.mrb[0].mxu0 %v555
    %v2825 = vpop.f32.mrb[0].mxu0
    %v2826 = vadd.f32 0.0, %v2825
    %v2827 = vpop.f32.mrb[0].mxu0
    %v2828 = vadd.f32 0.0, %v2827
    %2829 = vmatprep.mubr.f32.mxu0 %v560
    %2830 = vmatmul.mubr.f32.gmra.mrb[0].mxu0 %v559
    %v2831 = vpop.f32.mrb[0].mxu0
    %v2832 = vadd.f32 0.0, %v2831
    %v2833 = vpop.f32.mrb[0].mxu0
    %v2834 = vadd.f32 0.0, %v2833
    %2835 = vmatprep.mubr.f32.mxu0 %v564
    %2836 = vmatmul.mubr.f32.gmra.mrb[0].mxu0 %v563
    %v2837 = vpop.f32.mrb[0].mxu0
    %v2838 = vadd.f32 0.0, %v2837
    %v2839 = vpop.f32.mrb[0].mxu0
    %v2840 = vadd.f32 0.0, %v2839
    %2841 = vmatprep.mubr.f32.mxu0 %v568
    %2842 = vmatmul.mubr.f32.gmra.mrb[0].mxu0 %v567
    %v2843 = vpop.f32.mrb[0].mxu0
    %v2844 = vadd.f32 0.0, %v2843
    %v2845 = vpop.f32.mrb[0].mxu0
    %v2846 = vadd.f32 0.0, %v2845
    %2847 = vmatprep.mubr.f32.mxu0 %v572
    %2848 = vmatmul.mubr.f32.gmra.mrb[0].mxu0 %v571
    %v2849 = vpop.f32.mrb[0].mxu0
    %v2850 = vadd.f32 0.0, %v2849
    %v2851 = vpop.f32.mrb[0].mxu0
    %v2852 = vadd.f32 0.0, %v2851
    %2853 = vmatprep.mubr.f32.mxu0 %v576
    %2854 = vmatmul.mubr.f32.gmra.mrb[0].mxu0 %v575
    %v2855 = vpop.f32.mrb[0].mxu0
    %v2856 = vadd.f32 0.0, %v2855
    %v2857 = vpop.f32.mrb[0].mxu0
    %v2858 = vadd.f32 0.0, %v2857
    %2859 = vmatprep.mubr.f32.mxu0 %v580
    %2860 = vmatmul.mubr.f32.gmra.mrb[0].mxu0 %v579
    %v2861 = vpop.f32.mrb[0].mxu0
    %v2862 = vadd.f32 0.0, %v2861
    %v2863 = vpop.f32.mrb[0].mxu0
    %v2864 = vadd.f32 0.0, %v2863
    %2865 = vmatprep.mubr.f32.mxu0 %v584
    %2866 = vmatmul.mubr.f32.gmra.mrb[0].mxu0 %v583
    %v2867 = vpop.f32.mrb[0].mxu0
    %v2868 = vadd.f32 0.0, %v2867
    %v2869 = vpop.f32.mrb[0].mxu0
    %v2870 = vadd.f32 0.0, %v2869
    %2871 = vmatprep.mubr.f32.mxu0 %v588
    %2872 = vmatmul.mubr.f32.gmra.mrb[0].mxu0 %v587
    %v2873 = vpop.f32.mrb[0].mxu0
    %v2874 = vadd.f32 0.0, %v2873
    %v2875 = vpop.f32.mrb[0].mxu0
    %v2876 = vadd.f32 0.0, %v2875
    %2877 = vmatprep.mubr.f32.mxu0 %v592
    %2878 = vmatmul.mubr.f32.gmra.mrb[0].mxu0 %v591
    %v2879 = vpop.f32.mrb[0].mxu0
    %v2880 = vadd.f32 0.0, %v2879
    %v2881 = vpop.f32.mrb[0].mxu0
    %v2882 = vadd.f32 0.0, %v2881
    %2883 = vmatprep.mubr.f32.mxu0 %v596
    %2884 = vmatmul.mubr.f32.gmra.mrb[0].mxu0 %v595
    %v2885 = vpop.f32.mrb[0].mxu0
    %v2886 = vadd.f32 0.0, %v2885
    %v2887 = vpop.f32.mrb[0].mxu0
    %v2888 = vadd.f32 0.0, %v2887
    %2889 = vmatprep.mubr.f32.mxu0 %v600
    %2890 = vmatmul.mubr.f32.gmra.mrb[0].mxu0 %v599
    %v2891 = vpop.f32.mrb[0].mxu0
    %v2892 = vadd.f32 0.0, %v2891
    %v2893 = vpop.f32.mrb[0].mxu0
    %v2894 = vadd.f32 0.0, %v2893
    %2895 = vmatprep.mubr.f32.mxu0 %v604
    %2896 = vmatmul.mubr.f32.gmra.mrb[0].mxu0 %v603
    %v2897 = vpop.f32.mrb[0].mxu0
    %v2898 = vadd.f32 0.0, %v2897
    %v2899 = vpop.f32.mrb[0].mxu0
    %v2900 = vadd.f32 0.0, %v2899
    %2901 = vmatprep.mubr.f32.mxu0 %v608
    %2902 = vmatmul.mubr.f32.gmra.mrb[0].mxu0 %v607
    %v2903 = vpop.f32.mrb[0].mxu0
    %v2904 = vadd.f32 0.0, %v2903
    %v2905 = vpop.f32.mrb[0].mxu0
    %v2906 = vadd.f32 0.0, %v2905
    %2907 = vmatprep.mubr.f32.mxu0 %v612
    %2908 = vmatmul.mubr.f32.gmra.mrb[0].mxu0 %v611
    %v2909 = vpop.f32.mrb[0].mxu0
    %v2910 = vadd.f32 0.0, %v2909
    %v2911 = vpop.f32.mrb[0].mxu0
    %v2912 = vadd.f32 0.0, %v2911
    %2913 = vmatprep.mubr.f32.mxu0 %v616
    %2914 = vmatmul.mubr.f32.gmra.mrb[0].mxu0 %v615
    %v2915 = vpop.f32.mrb[0].mxu0
    %v2916 = vadd.f32 0.0, %v2915
    %v2917 = vpop.f32.mrb[0].mxu0
    %v2918 = vadd.f32 0.0, %v2917
    %2919 = vmatprep.mubr.f32.mxu0 %v620
    %2920 = vmatmul.mubr.f32.gmra.mrb[0].mxu0 %v619
    %v2921 = vpop.f32.mrb[0].mxu0
    %v2922 = vadd.f32 0.0, %v2921
    %v2923 = vpop.f32.mrb[0].mxu0
    %v2924 = vadd.f32 0.0, %v2923
    %2925 = vmatprep.mubr.f32.mxu0 %v624
    %2926 = vmatmul.mubr.f32.gmra.mrb[0].mxu0 %v623
    %v2927 = vpop.f32.mrb[0].mxu0
    %v2928 = vadd.f32 0.0, %v2927
    %v2929 = vpop.f32.mrb[0].mxu0
    %v2930 = vadd.f32 0.0, %v2929
    %2931 = vmatprep.mubr.f32.mxu0 %v628
    %2932 = vmatmul.mubr.f32.gmra.mrb[0].mxu0 %v627
    %v2933 = vpop.f32.mrb[0].mxu0
    %v2934 = vadd.f32 0.0, %v2933
    %v2935 = vpop.f32.mrb[0].mxu0
    %v2936 = vadd.f32 0.0, %v2935
    %2937 = vmatprep.mubr.f32.mxu0 %v632
    %2938 = vmatmul.mubr.f32.gmra.mrb[0].mxu0 %v631
    %v2939 = vpop.f32.mrb[0].mxu0
    %v2940 = vadd.f32 0.0, %v2939
    %v2941 = vpop.f32.mrb[0].mxu0
    %v2942 = vadd.f32 0.0, %v2941
    %2943 = vdwg.mxu0
    %2944 = vmatprep.subr.mxu0 %v2560
    %2945 = vmatpush1.msra.mxu0 %v2559
    %2946 = vmatprep.subr.mxu0 %v2564
    %2947 = vmatpush1.msra.mxu0 %v2563
    %2948 = vmatprep.subr.mxu0 %v2568
    %2949 = vmatpush1.msra.mxu0 %v2567
    %2950 = vmatprep.subr.mxu0 %v2572
    %2951 = vmatpush1.msra.mxu0 %v2571
    %2952 = vmatprep.subr.mxu0 %v2576
    %2953 = vmatpush1.msra.mxu0 %v2575
    %2954 = vmatprep.subr.mxu0 %v2580
    %2955 = vmatpush1.msra.mxu0 %v2579
    %2956 = vmatprep.subr.mxu0 %v2584
    %2957 = vmatpush1.msra.mxu0 %v2583
    %2958 = vmatprep.subr.mxu0 %v2588
    %2959 = vmatpush1.msra.mxu0 %v2587
    %2960 = vmatprep.subr.mxu0 %v2592
    %2961 = vmatpush1.msra.mxu0 %v2591
    %2962 = vmatprep.subr.mxu0 %v2596
    %2963 = vmatpush1.msra.mxu0 %v2595
    %2964 = vmatprep.subr.mxu0 %v2600
    %2965 = vmatpush1.msra.mxu0 %v2599
    %2966 = vmatprep.subr.mxu0 %v2604
    %2967 = vmatpush1.msra.mxu0 %v2603
    %2968 = vmatprep.subr.mxu0 %v2608
    %2969 = vmatpush1.msra.mxu0 %v2607
    %2970 = vmatprep.subr.mxu0 %v2612
    %2971 = vmatpush1.msra.mxu0 %v2611
    %2972 = vmatprep.subr.mxu0 %v2616
    %2973 = vmatpush1.msra.mxu0 %v2615
    %2974 = vmatprep.subr.mxu0 %v2620
    %2975 = vmatpush1.msra.mxu0 %v2619
    %2976 = vmatprep.subr.mxu0 %v2624
    %2977 = vmatpush1.msra.mxu0 %v2623
    %2978 = vmatprep.subr.mxu0 %v2628
    %2979 = vmatpush1.msra.mxu0 %v2627
    %2980 = vmatprep.subr.mxu0 %v2632
    %2981 = vmatpush1.msra.mxu0 %v2631
    %2982 = vmatprep.subr.mxu0 %v2636
    %2983 = vmatpush1.msra.mxu0 %v2635
    %2984 = vmatprep.subr.mxu0 %v2640
    %2985 = vmatpush1.msra.mxu0 %v2639
    %2986 = vmatprep.subr.mxu0 %v2644
    %2987 = vmatpush1.msra.mxu0 %v2643
    %2988 = vmatprep.subr.mxu0 %v2648
    %2989 = vmatpush1.msra.mxu0 %v2647
    %2990 = vmatprep.subr.mxu0 %v2652
    %2991 = vmatpush1.msra.mxu0 %v2651
    %2992 = vmatprep.subr.mxu0 %v2656
    %2993 = vmatpush1.msra.mxu0 %v2655
    %2994 = vmatprep.subr.mxu0 %v2660
    %2995 = vmatpush1.msra.mxu0 %v2659
    %2996 = vmatprep.subr.mxu0 %v2664
    %2997 = vmatpush1.msra.mxu0 %v2663
    %2998 = vmatprep.subr.mxu0 %v2668
    %2999 = vmatpush1.msra.mxu0 %v2667
    %3000 = vmatprep.subr.mxu0 %v2672
    %3001 = vmatpush1.msra.mxu0 %v2671
    %3002 = vmatprep.subr.mxu0 %v2676
    %3003 = vmatpush1.msra.mxu0 %v2675
    %3004 = vmatprep.subr.mxu0 %v2680
    %3005 = vmatpush1.msra.mxu0 %v2679
    %3006 = vmatprep.subr.mxu0 %v2684
    %3007 = vmatpush1.msra.mxu0 %v2683
    %3008 = vmatprep.mubr.f32.mxu0 %v510
    %3009 = vmatmul.mubr.f32.gmra.mrb[0].mxu0 %v509
    %v3010 = vpop.f32.mrb[0].mxu0
    %v3011 = vadd.f32 %v2754, %v3010
    %v3012 = vpop.f32.mrb[0].mxu0
    %v3013 = vadd.f32 %v2756, %v3012
    %3014 = vmatprep.mubr.f32.mxu0 %v514
    %3015 = vmatmul.mubr.f32.gmra.mrb[0].mxu0 %v513
    %v3016 = vpop.f32.mrb[0].mxu0
    %v3017 = vadd.f32 %v2760, %v3016
    %v3018 = vpop.f32.mrb[0].mxu0
    %v3019 = vadd.f32 %v2762, %v3018
    %3020 = vmatprep.mubr.f32.mxu0 %v518
    %3021 = vmatmul.mubr.f32.gmra.mrb[0].mxu0 %v517
    %v3022 = vpop.f32.mrb[0].mxu0
    %v3023 = vadd.f32 %v2766, %v3022
    %v3024 = vpop.f32.mrb[0].mxu0
    %v3025 = vadd.f32 %v2768, %v3024
    %3026 = vmatprep.mubr.f32.mxu0 %v522
    %3027 = vmatmul.mubr.f32.gmra.mrb[0].mxu0 %v521
    %v3028 = vpop.f32.mrb[0].mxu0
    %v3029 = vadd.f32 %v2772, %v3028
    %v3030 = vpop.f32.mrb[0].mxu0
    %v3031 = vadd.f32 %v2774, %v3030
    %3032 = vmatprep.mubr.f32.mxu0 %v526
    %3033 = vmatmul.mubr.f32.gmra.mrb[0].mxu0 %v525
    %v3034 = vpop.f32.mrb[0].mxu0
    %v3035 = vadd.f32 %v2778, %v3034
    %v3036 = vpop.f32.mrb[0].mxu0
    %v3037 = vadd.f32 %v2780, %v3036
    %3038 = vmatprep.mubr.f32.mxu0 %v530
    %3039 = vmatmul.mubr.f32.gmra.mrb[0].mxu0 %v529
    %v3040 = vpop.f32.mrb[0].mxu0
    %v3041 = vadd.f32 %v2784, %v3040
    %v3042 = vpop.f32.mrb[0].mxu0
    %v3043 = vadd.f32 %v2786, %v3042
    %3044 = vmatprep.mubr.f32.mxu0 %v534
    %3045 = vmatmul.mubr.f32.gmra.mrb[0].mxu0 %v533
    %v3046 = vpop.f32.mrb[0].mxu0
    %v3047 = vadd.f32 %v2790, %v3046
    %v3048 = vpop.f32.mrb[0].mxu0
    %v3049 = vadd.f32 %v2792, %v3048
    %3050 = vmatprep.mubr.f32.mxu0 %v538
    %3051 = vmatmul.mubr.f32.gmra.mrb[0].mxu0 %v537
    %v3052 = vpop.f32.mrb[0].mxu0
    %v3053 = vadd.f32 %v2796, %v3052
    %v3054 = vpop.f32.mrb[0].mxu0
    %v3055 = vadd.f32 %v2798, %v3054
    %3056 = vmatprep.mubr.f32.mxu0 %v542
    %3057 = vmatmul.mubr.f32.gmra.mrb[0].mxu0 %v541
    %v3058 = vpop.f32.mrb[0].mxu0
    %v3059 = vadd.f32 %v2802, %v3058
    %v3060 = vpop.f32.mrb[0].mxu0
    %v3061 = vadd.f32 %v2804, %v3060
    %3062 = vmatprep.mubr.f32.mxu0 %v546
    %3063 = vmatmul.mubr.f32.gmra.mrb[0].mxu0 %v545
    %v3064 = vpop.f32.mrb[0].mxu0
    %v3065 = vadd.f32 %v2808, %v3064
    %v3066 = vpop.f32.mrb[0].mxu0
    %v3067 = vadd.f32 %v2810, %v3066
    %3068 = vmatprep.mubr.f32.mxu0 %v550
    %3069 = vmatmul.mubr.f32.gmra.mrb[0].mxu0 %v549
    %v3070 = vpop.f32.mrb[0].mxu0
    %v3071 = vadd.f32 %v2814, %v3070
    %v3072 = vpop.f32.mrb[0].mxu0
    %v3073 = vadd.f32 %v2816, %v3072
    %3074 = vmatprep.mubr.f32.mxu0 %v554
    %3075 = vmatmul.mubr.f32.gmra.mrb[0].mxu0 %v553
    %v3076 = vpop.f32.mrb[0].mxu0
    %v3077 = vadd.f32 %v2820, %v3076
    %v3078 = vpop.f32.mrb[0].mxu0
    %v3079 = vadd.f32 %v2822, %v3078
    %3080 = vmatprep.mubr.f32.mxu0 %v558
    %3081 = vmatmul.mubr.f32.gmra.mrb[0].mxu0 %v557
    %v3082 = vpop.f32.mrb[0].mxu0
    %v3083 = vadd.f32 %v2826, %v3082
    %v3084 = vpop.f32.mrb[0].mxu0
    %v3085 = vadd.f32 %v2828, %v3084
    %3086 = vmatprep.mubr.f32.mxu0 %v562
    %3087 = vmatmul.mubr.f32.gmra.mrb[0].mxu0 %v561
    %v3088 = vpop.f32.mrb[0].mxu0
    %v3089 = vadd.f32 %v2832, %v3088
    %v3090 = vpop.f32.mrb[0].mxu0
    %v3091 = vadd.f32 %v2834, %v3090
    %3092 = vmatprep.mubr.f32.mxu0 %v566
    %3093 = vmatmul.mubr.f32.gmra.mrb[0].mxu0 %v565
    %v3094 = vpop.f32.mrb[0].mxu0
    %v3095 = vadd.f32 %v2838, %v3094
    %v3096 = vpop.f32.mrb[0].mxu0
    %v3097 = vadd.f32 %v2840, %v3096
    %3098 = vmatprep.mubr.f32.mxu0 %v570
    %3099 = vmatmul.mubr.f32.gmra.mrb[0].mxu0 %v569
    %v3100 = vpop.f32.mrb[0].mxu0
    %v3101 = vadd.f32 %v2844, %v3100
    %v3102 = vpop.f32.mrb[0].mxu0
    %v3103 = vadd.f32 %v2846, %v3102
    %3104 = vmatprep.mubr.f32.mxu0 %v574
    %3105 = vmatmul.mubr.f32.gmra.mrb[0].mxu0 %v573
    %v3106 = vpop.f32.mrb[0].mxu0
    %v3107 = vadd.f32 %v2850, %v3106
    %v3108 = vpop.f32.mrb[0].mxu0
    %v3109 = vadd.f32 %v2852, %v3108
    %3110 = vmatprep.mubr.f32.mxu0 %v578
    %3111 = vmatmul.mubr.f32.gmra.mrb[0].mxu0 %v577
    %v3112 = vpop.f32.mrb[0].mxu0
    %v3113 = vadd.f32 %v2856, %v3112
    %v3114 = vpop.f32.mrb[0].mxu0
    %v3115 = vadd.f32 %v2858, %v3114
    %3116 = vmatprep.mubr.f32.mxu0 %v582
    %3117 = vmatmul.mubr.f32.gmra.mrb[0].mxu0 %v581
    %v3118 = vpop.f32.mrb[0].mxu0
    %v3119 = vadd.f32 %v2862, %v3118
    %v3120 = vpop.f32.mrb[0].mxu0
    %v3121 = vadd.f32 %v2864, %v3120
    %3122 = vmatprep.mubr.f32.mxu0 %v586
    %3123 = vmatmul.mubr.f32.gmra.mrb[0].mxu0 %v585
    %v3124 = vpop.f32.mrb[0].mxu0
    %v3125 = vadd.f32 %v2868, %v3124
    %v3126 = vpop.f32.mrb[0].mxu0
    %v3127 = vadd.f32 %v2870, %v3126
    %3128 = vmatprep.mubr.f32.mxu0 %v590
    %3129 = vmatmul.mubr.f32.gmra.mrb[0].mxu0 %v589
    %v3130 = vpop.f32.mrb[0].mxu0
    %v3131 = vadd.f32 %v2874, %v3130
    %v3132 = vpop.f32.mrb[0].mxu0
    %v3133 = vadd.f32 %v2876, %v3132
    %3134 = vmatprep.mubr.f32.mxu0 %v594
    %3135 = vmatmul.mubr.f32.gmra.mrb[0].mxu0 %v593
    %v3136 = vpop.f32.mrb[0].mxu0
    %v3137 = vadd.f32 %v2880, %v3136
    %v3138 = vpop.f32.mrb[0].mxu0
    %v3139 = vadd.f32 %v2882, %v3138
    %3140 = vmatprep.mubr.f32.mxu0 %v598
    %3141 = vmatmul.mubr.f32.gmra.mrb[0].mxu0 %v597
    %v3142 = vpop.f32.mrb[0].mxu0
    %v3143 = vadd.f32 %v2886, %v3142
    %v3144 = vpop.f32.mrb[0].mxu0
    %v3145 = vadd.f32 %v2888, %v3144
    %3146 = vmatprep.mubr.f32.mxu0 %v602
    %3147 = vmatmul.mubr.f32.gmra.mrb[0].mxu0 %v601
    %v3148 = vpop.f32.mrb[0].mxu0
    %v3149 = vadd.f32 %v2892, %v3148
    %v3150 = vpop.f32.mrb[0].mxu0
    %v3151 = vadd.f32 %v2894, %v3150
    %3152 = vmatprep.mubr.f32.mxu0 %v606
    %3153 = vmatmul.mubr.f32.gmra.mrb[0].mxu0 %v605
    %v3154 = vpop.f32.mrb[0].mxu0
    %v3155 = vadd.f32 %v2898, %v3154
    %v3156 = vpop.f32.mrb[0].mxu0
    %v3157 = vadd.f32 %v2900, %v3156
    %3158 = vmatprep.mubr.f32.mxu0 %v610
    %3159 = vmatmul.mubr.f32.gmra.mrb[0].mxu0 %v609
    %v3160 = vpop.f32.mrb[0].mxu0
    %v3161 = vadd.f32 %v2904, %v3160
    %v3162 = vpop.f32.mrb[0].mxu0
    %v3163 = vadd.f32 %v2906, %v3162
    %3164 = vmatprep.mubr.f32.mxu0 %v614
    %3165 = vmatmul.mubr.f32.gmra.mrb[0].mxu0 %v613
    %v3166 = vpop.f32.mrb[0].mxu0
    %v3167 = vadd.f32 %v2910, %v3166
    %v3168 = vpop.f32.mrb[0].mxu0
    %v3169 = vadd.f32 %v2912, %v3168
    %3170 = vmatprep.mubr.f32.mxu0 %v618
    %3171 = vmatmul.mubr.f32.gmra.mrb[0].mxu0 %v617
    %v3172 = vpop.f32.mrb[0].mxu0
    %v3173 = vadd.f32 %v2916, %v3172
    %v3174 = vpop.f32.mrb[0].mxu0
    %v3175 = vadd.f32 %v2918, %v3174
    %3176 = vmatprep.mubr.f32.mxu0 %v622
    %3177 = vmatmul.mubr.f32.gmra.mrb[0].mxu0 %v621
    %v3178 = vpop.f32.mrb[0].mxu0
    %v3179 = vadd.f32 %v2922, %v3178
    %v3180 = vpop.f32.mrb[0].mxu0
    %v3181 = vadd.f32 %v2924, %v3180
    %3182 = vmatprep.mubr.f32.mxu0 %v626
    %3183 = vmatmul.mubr.f32.gmra.mrb[0].mxu0 %v625
    %v3184 = vpop.f32.mrb[0].mxu0
    %v3185 = vadd.f32 %v2928, %v3184
    %v3186 = vpop.f32.mrb[0].mxu0
    %v3187 = vadd.f32 %v2930, %v3186
    %3188 = vmatprep.mubr.f32.mxu0 %v630
    %3189 = vmatmul.mubr.f32.gmra.mrb[0].mxu0 %v629
    %v3190 = vpop.f32.mrb[0].mxu0
    %v3191 = vadd.f32 %v2934, %v3190
    %v3192 = vpop.f32.mrb[0].mxu0
    %v3193 = vadd.f32 %v2936, %v3192
    %3194 = vmatprep.mubr.f32.mxu0 %v634
    %3195 = vmatmul.mubr.f32.gmra.mrb[0].mxu0 %v633
    %v3196 = vpop.f32.mrb[0].mxu0
    %v3197 = vadd.f32 %v2940, %v3196
    %v3198 = vpop.f32.mrb[0].mxu0
    %v3199 = vadd.f32 %v2942, %v3198
    %3200 = vdwg.mxu0
    %3201 = vmatprep.subr.mxu0 %v2434
    %3202 = vmatpush1.msra.mxu0 %v2433
    %3203 = vmatprep.subr.mxu0 %v2438
    %3204 = vmatpush1.msra.mxu0 %v2437
    %3205 = vmatprep.subr.mxu0 %v2442
    %3206 = vmatpush1.msra.mxu0 %v2441
    %3207 = vmatprep.subr.mxu0 %v2446
    %3208 = vmatpush1.msra.mxu0 %v2445
    %3209 = vmatprep.subr.mxu0 %v2450
    %3210 = vmatpush1.msra.mxu0 %v2449
    %3211 = vmatprep.subr.mxu0 %v2454
    %3212 = vmatpush1.msra.mxu0 %v2453
    %3213 = vmatprep.subr.mxu0 %v2458
    %3214 = vmatpush1.msra.mxu0 %v2457
    %3215 = vmatprep.subr.mxu0 %v2462
    %3216 = vmatpush1.msra.mxu0 %v2461
    %3217 = vmatprep.subr.mxu0 %v2466
    %3218 = vmatpush1.msra.mxu0 %v2465
    %3219 = vmatprep.subr.mxu0 %v2470
    %3220 = vmatpush1.msra.mxu0 %v2469
    %3221 = vmatprep.subr.mxu0 %v2474
    %3222 = vmatpush1.msra.mxu0 %v2473
    %3223 = vmatprep.subr.mxu0 %v2478
    %3224 = vmatpush1.msra.mxu0 %v2477
    %3225 = vmatprep.subr.mxu0 %v2482
    %3226 = vmatpush1.msra.mxu0 %v2481
    %3227 = vmatprep.subr.mxu0 %v2486
    %3228 = vmatpush1.msra.mxu0 %v2485
    %3229 = vmatprep.subr.mxu0 %v2490
    %3230 = vmatpush1.msra.mxu0 %v2489
    %3231 = vmatprep.subr.mxu0 %v2494
    %3232 = vmatpush1.msra.mxu0 %v2493
    %3233 = vmatprep.subr.mxu0 %v2498
    %3234 = vmatpush1.msra.mxu0 %v2497
    %3235 = vmatprep.subr.mxu0 %v2502
    %3236 = vmatpush1.msra.mxu0 %v2501
    %3237 = vmatprep.subr.mxu0 %v2506
    %3238 = vmatpush1.msra.mxu0 %v2505
    %3239 = vmatprep.subr.mxu0 %v2510
    %3240 = vmatpush1.msra.mxu0 %v2509
    %3241 = vmatprep.subr.mxu0 %v2514
    %3242 = vmatpush1.msra.mxu0 %v2513
    %3243 = vmatprep.subr.mxu0 %v2518
    %3244 = vmatpush1.msra.mxu0 %v2517
    %3245 = vmatprep.subr.mxu0 %v2522
    %3246 = vmatpush1.msra.mxu0 %v2521
    %3247 = vmatprep.subr.mxu0 %v2526
    %3248 = vmatpush1.msra.mxu0 %v2525
    %3249 = vmatprep.subr.mxu0 %v2530
    %3250 = vmatpush1.msra.mxu0 %v2529
    %3251 = vmatprep.subr.mxu0 %v2534
    %3252 = vmatpush1.msra.mxu0 %v2533
    %3253 = vmatprep.subr.mxu0 %v2538
    %3254 = vmatpush1.msra.mxu0 %v2537
    %3255 = vmatprep.subr.mxu0 %v2542
    %3256 = vmatpush1.msra.mxu0 %v2541
    %3257 = vmatprep.subr.mxu0 %v2546
    %3258 = vmatpush1.msra.mxu0 %v2545
    %3259 = vmatprep.subr.mxu0 %v2550
    %3260 = vmatpush1.msra.mxu0 %v2549
    %3261 = vmatprep.subr.mxu0 %v2554
    %3262 = vmatpush1.msra.mxu0 %v2553
    %3263 = vmatprep.subr.mxu0 %v2558
    %3264 = vmatpush1.msra.mxu0 %v2557
    %3265 = vmatprep.mubr.f32.mxu0 %v508
    %3266 = vmatmul.mubr.f32.gmra.mrb[0].mxu0 %v507
    %v3267 = vpop.f32.mrb[0].mxu0
    %v3268 = vadd.f32 0.0, %v3267
    %v3269 = vpop.f32.mrb[0].mxu0
    %v3270 = vadd.f32 0.0, %v3269
    %3271 = vmatprep.mubr.f32.mxu0 %v512
    %3272 = vmatmul.mubr.f32.gmra.mrb[0].mxu0 %v511
    %v3273 = vpop.f32.mrb[0].mxu0
    %v3274 = vadd.f32 0.0, %v3273
    %v3275 = vpop.f32.mrb[0].mxu0
    %v3276 = vadd.f32 0.0, %v3275
    %3277 = vmatprep.mubr.f32.mxu0 %v516
    %3278 = vmatmul.mubr.f32.gmra.mrb[0].mxu0 %v515
    %v3279 = vpop.f32.mrb[0].mxu0
    %v3280 = vadd.f32 0.0, %v3279
    %v3281 = vpop.f32.mrb[0].mxu0
    %v3282 = vadd.f32 0.0, %v3281
    %3283 = vmatprep.mubr.f32.mxu0 %v520
    %3284 = vmatmul.mubr.f32.gmra.mrb[0].mxu0 %v519
    %v3285 = vpop.f32.mrb[0].mxu0
    %v3286 = vadd.f32 0.0, %v3285
    %v3287 = vpop.f32.mrb[0].mxu0
    %v3288 = vadd.f32 0.0, %v3287
    %3289 = vmatprep.mubr.f32.mxu0 %v524
    %3290 = vmatmul.mubr.f32.gmra.mrb[0].mxu0 %v523
    %v3291 = vpop.f32.mrb[0].mxu0
    %v3292 = vadd.f32 0.0, %v3291
    %v3293 = vpop.f32.mrb[0].mxu0
    %v3294 = vadd.f32 0.0, %v3293
    %3295 = vmatprep.mubr.f32.mxu0 %v528
    %3296 = vmatmul.mubr.f32.gmra.mrb[0].mxu0 %v527
    %v3297 = vpop.f32.mrb[0].mxu0
    %v3298 = vadd.f32 0.0, %v3297
    %v3299 = vpop.f32.mrb[0].mxu0
    %v3300 = vadd.f32 0.0, %v3299
    %3301 = vmatprep.mubr.f32.mxu0 %v532
    %3302 = vmatmul.mubr.f32.gmra.mrb[0].mxu0 %v531
    %v3303 = vpop.f32.mrb[0].mxu0
    %v3304 = vadd.f32 0.0, %v3303
    %v3305 = vpop.f32.mrb[0].mxu0
    %v3306 = vadd.f32 0.0, %v3305
    %3307 = vmatprep.mubr.f32.mxu0 %v536
    %3308 = vmatmul.mubr.f32.gmra.mrb[0].mxu0 %v535
    %v3309 = vpop.f32.mrb[0].mxu0
    %v3310 = vadd.f32 0.0, %v3309
    %v3311 = vpop.f32.mrb[0].mxu0
    %v3312 = vadd.f32 0.0, %v3311
    %3313 = vmatprep.mubr.f32.mxu0 %v540
    %3314 = vmatmul.mubr.f32.gmra.mrb[0].mxu0 %v539
    %v3315 = vpop.f32.mrb[0].mxu0
    %v3316 = vadd.f32 0.0, %v3315
    %v3317 = vpop.f32.mrb[0].mxu0
    %v3318 = vadd.f32 0.0, %v3317
    %3319 = vmatprep.mubr.f32.mxu0 %v544
    %3320 = vmatmul.mubr.f32.gmra.mrb[0].mxu0 %v543
    %v3321 = vpop.f32.mrb[0].mxu0
    %v3322 = vadd.f32 0.0, %v3321
    %v3323 = vpop.f32.mrb[0].mxu0
    %v3324 = vadd.f32 0.0, %v3323
    %3325 = vmatprep.mubr.f32.mxu0 %v548
    %3326 = vmatmul.mubr.f32.gmra.mrb[0].mxu0 %v547
    %v3327 = vpop.f32.mrb[0].mxu0
    %v3328 = vadd.f32 0.0, %v3327
    %v3329 = vpop.f32.mrb[0].mxu0
    %v3330 = vadd.f32 0.0, %v3329
    %3331 = vmatprep.mubr.f32.mxu0 %v552
    %3332 = vmatmul.mubr.f32.gmra.mrb[0].mxu0 %v551
    %v3333 = vpop.f32.mrb[0].mxu0
    %v3334 = vadd.f32 0.0, %v3333
    %v3335 = vpop.f32.mrb[0].mxu0
    %v3336 = vadd.f32 0.0, %v3335
    %3337 = vmatprep.mubr.f32.mxu0 %v556
    %3338 = vmatmul.mubr.f32.gmra.mrb[0].mxu0 %v555
    %v3339 = vpop.f32.mrb[0].mxu0
    %v3340 = vadd.f32 0.0, %v3339
    %v3341 = vpop.f32.mrb[0].mxu0
    %v3342 = vadd.f32 0.0, %v3341
    %3343 = vmatprep.mubr.f32.mxu0 %v560
    %3344 = vmatmul.mubr.f32.gmra.mrb[0].mxu0 %v559
    %v3345 = vpop.f32.mrb[0].mxu0
    %v3346 = vadd.f32 0.0, %v3345
    %v3347 = vpop.f32.mrb[0].mxu0
    %v3348 = vadd.f32 0.0, %v3347
    %3349 = vmatprep.mubr.f32.mxu0 %v564
    %3350 = vmatmul.mubr.f32.gmra.mrb[0].mxu0 %v563
    %v3351 = vpop.f32.mrb[0].mxu0
    %v3352 = vadd.f32 0.0, %v3351
    %v3353 = vpop.f32.mrb[0].mxu0
    %v3354 = vadd.f32 0.0, %v3353
    %3355 = vmatprep.mubr.f32.mxu0 %v568
    %3356 = vmatmul.mubr.f32.gmra.mrb[0].mxu0 %v567
    %v3357 = vpop.f32.mrb[0].mxu0
    %v3358 = vadd.f32 0.0, %v3357
    %v3359 = vpop.f32.mrb[0].mxu0
    %v3360 = vadd.f32 0.0, %v3359
    %3361 = vmatprep.mubr.f32.mxu0 %v572
    %3362 = vmatmul.mubr.f32.gmra.mrb[0].mxu0 %v571
    %v3363 = vpop.f32.mrb[0].mxu0
    %v3364 = vadd.f32 0.0, %v3363
    %v3365 = vpop.f32.mrb[0].mxu0
    %v3366 = vadd.f32 0.0, %v3365
    %3367 = vmatprep.mubr.f32.mxu0 %v576
    %3368 = vmatmul.mubr.f32.gmra.mrb[0].mxu0 %v575
    %v3369 = vpop.f32.mrb[0].mxu0
    %v3370 = vadd.f32 0.0, %v3369
    %v3371 = vpop.f32.mrb[0].mxu0
    %v3372 = vadd.f32 0.0, %v3371
    %3373 = vmatprep.mubr.f32.mxu0 %v580
    %3374 = vmatmul.mubr.f32.gmra.mrb[0].mxu0 %v579
    %v3375 = vpop.f32.mrb[0].mxu0
    %v3376 = vadd.f32 0.0, %v3375
    %v3377 = vpop.f32.mrb[0].mxu0
    %v3378 = vadd.f32 0.0, %v3377
    %3379 = vmatprep.mubr.f32.mxu0 %v584
    %3380 = vmatmul.mubr.f32.gmra.mrb[0].mxu0 %v583
    %v3381 = vpop.f32.mrb[0].mxu0
    %v3382 = vadd.f32 0.0, %v3381
    %v3383 = vpop.f32.mrb[0].mxu0
    %v3384 = vadd.f32 0.0, %v3383
    %3385 = vmatprep.mubr.f32.mxu0 %v588
    %3386 = vmatmul.mubr.f32.gmra.mrb[0].mxu0 %v587
    %v3387 = vpop.f32.mrb[0].mxu0
    %v3388 = vadd.f32 0.0, %v3387
    %v3389 = vpop.f32.mrb[0].mxu0
    %v3390 = vadd.f32 0.0, %v3389
    %3391 = vmatprep.mubr.f32.mxu0 %v592
    %3392 = vmatmul.mubr.f32.gmra.mrb[0].mxu0 %v591
    %v3393 = vpop.f32.mrb[0].mxu0
    %v3394 = vadd.f32 0.0, %v3393
    %v3395 = vpop.f32.mrb[0].mxu0
    %v3396 = vadd.f32 0.0, %v3395
    %3397 = vmatprep.mubr.f32.mxu0 %v596
    %3398 = vmatmul.mubr.f32.gmra.mrb[0].mxu0 %v595
    %v3399 = vpop.f32.mrb[0].mxu0
    %v3400 = vadd.f32 0.0, %v3399
    %v3401 = vpop.f32.mrb[0].mxu0
    %v3402 = vadd.f32 0.0, %v3401
    %3403 = vmatprep.mubr.f32.mxu0 %v600
    %3404 = vmatmul.mubr.f32.gmra.mrb[0].mxu0 %v599
    %v3405 = vpop.f32.mrb[0].mxu0
    %v3406 = vadd.f32 0.0, %v3405
    %v3407 = vpop.f32.mrb[0].mxu0
    %v3408 = vadd.f32 0.0, %v3407
    %3409 = vmatprep.mubr.f32.mxu0 %v604
    %3410 = vmatmul.mubr.f32.gmra.mrb[0].mxu0 %v603
    %v3411 = vpop.f32.mrb[0].mxu0
    %v3412 = vadd.f32 0.0, %v3411
    %v3413 = vpop.f32.mrb[0].mxu0
    %v3414 = vadd.f32 0.0, %v3413
    %3415 = vmatprep.mubr.f32.mxu0 %v608
    %3416 = vmatmul.mubr.f32.gmra.mrb[0].mxu0 %v607
    %v3417 = vpop.f32.mrb[0].mxu0
    %v3418 = vadd.f32 0.0, %v3417
    %v3419 = vpop.f32.mrb[0].mxu0
    %v3420 = vadd.f32 0.0, %v3419
    %3421 = vmatprep.mubr.f32.mxu0 %v612
    %3422 = vmatmul.mubr.f32.gmra.mrb[0].mxu0 %v611
    %v3423 = vpop.f32.mrb[0].mxu0
    %v3424 = vadd.f32 0.0, %v3423
    %v3425 = vpop.f32.mrb[0].mxu0
    %v3426 = vadd.f32 0.0, %v3425
    %3427 = vmatprep.mubr.f32.mxu0 %v616
    %3428 = vmatmul.mubr.f32.gmra.mrb[0].mxu0 %v615
    %v3429 = vpop.f32.mrb[0].mxu0
    %v3430 = vadd.f32 0.0, %v3429
    %v3431 = vpop.f32.mrb[0].mxu0
    %v3432 = vadd.f32 0.0, %v3431
    %3433 = vmatprep.mubr.f32.mxu0 %v620
    %3434 = vmatmul.mubr.f32.gmra.mrb[0].mxu0 %v619
    %v3435 = vpop.f32.mrb[0].mxu0
    %v3436 = vadd.f32 0.0, %v3435
    %v3437 = vpop.f32.mrb[0].mxu0
    %v3438 = vadd.f32 0.0, %v3437
    %3439 = vmatprep.mubr.f32.mxu0 %v624
    %3440 = vmatmul.mubr.f32.gmra.mrb[0].mxu0 %v623
    %v3441 = vpop.f32.mrb[0].mxu0
    %v3442 = vadd.f32 0.0, %v3441
    %v3443 = vpop.f32.mrb[0].mxu0
    %v3444 = vadd.f32 0.0, %v3443
    %3445 = vmatprep.mubr.f32.mxu0 %v628
    %3446 = vmatmul.mubr.f32.gmra.mrb[0].mxu0 %v627
    %v3447 = vpop.f32.mrb[0].mxu0
    %v3448 = vadd.f32 0.0, %v3447
    %v3449 = vpop.f32.mrb[0].mxu0
    %v3450 = vadd.f32 0.0, %v3449
    %3451 = vmatprep.mubr.f32.mxu0 %v632
    %3452 = vmatmul.mubr.f32.gmra.mrb[0].mxu0 %v631
    %v3453 = vpop.f32.mrb[0].mxu0
    %v3454 = vadd.f32 0.0, %v3453
    %v3455 = vpop.f32.mrb[0].mxu0
    %v3456 = vadd.f32 0.0, %v3455
    %3457 = vdwg.mxu0
    %3458 = vmatprep.subr.mxu0 %v2562
    %3459 = vmatpush1.msra.mxu0 %v2561
    %3460 = vmatprep.subr.mxu0 %v2566
    %3461 = vmatpush1.msra.mxu0 %v2565
    %3462 = vmatprep.subr.mxu0 %v2570
    %3463 = vmatpush1.msra.mxu0 %v2569
    %3464 = vmatprep.subr.mxu0 %v2574
    %3465 = vmatpush1.msra.mxu0 %v2573
    %3466 = vmatprep.subr.mxu0 %v2578
    %3467 = vmatpush1.msra.mxu0 %v2577
    %3468 = vmatprep.subr.mxu0 %v2582
    %3469 = vmatpush1.msra.mxu0 %v2581
    %3470 = vmatprep.subr.mxu0 %v2586
    %3471 = vmatpush1.msra.mxu0 %v2585
    %3472 = vmatprep.subr.mxu0 %v2590
    %3473 = vmatpush1.msra.mxu0 %v2589
    %3474 = vmatprep.subr.mxu0 %v2594
    %3475 = vmatpush1.msra.mxu0 %v2593
    %3476 = vmatprep.subr.mxu0 %v2598
    %3477 = vmatpush1.msra.mxu0 %v2597
    %3478 = vmatprep.subr.mxu0 %v2602
    %3479 = vmatpush1.msra.mxu0 %v2601
    %3480 = vmatprep.subr.mxu0 %v2606
    %3481 = vmatpush1.msra.mxu0 %v2605
    %3482 = vmatprep.subr.mxu0 %v2610
    %3483 = vmatpush1.msra.mxu0 %v2609
    %3484 = vmatprep.subr.mxu0 %v2614
    %3485 = vmatpush1.msra.mxu0 %v2613
    %3486 = vmatprep.subr.mxu0 %v2618
    %3487 = vmatpush1.msra.mxu0 %v2617
    %3488 = vmatprep.subr.mxu0 %v2622
    %3489 = vmatpush1.msra.mxu0 %v2621
    %3490 = vmatprep.subr.mxu0 %v2626
    %3491 = vmatpush1.msra.mxu0 %v2625
    %3492 = vmatprep.subr.mxu0 %v2630
    %3493 = vmatpush1.msra.mxu0 %v2629
    %3494 = vmatprep.subr.mxu0 %v2634
    %3495 = vmatpush1.msra.mxu0 %v2633
    %3496 = vmatprep.subr.mxu0 %v2638
    %3497 = vmatpush1.msra.mxu0 %v2637
    %3498 = vmatprep.subr.mxu0 %v2642
    %3499 = vmatpush1.msra.mxu0 %v2641
    %3500 = vmatprep.subr.mxu0 %v2646
    %3501 = vmatpush1.msra.mxu0 %v2645
    %3502 = vmatprep.subr.mxu0 %v2650
    %3503 = vmatpush1.msra.mxu0 %v2649
    %3504 = vmatprep.subr.mxu0 %v2654
    %3505 = vmatpush1.msra.mxu0 %v2653
    %3506 = vmatprep.subr.mxu0 %v2658
    %3507 = vmatpush1.msra.mxu0 %v2657
    %3508 = vmatprep.subr.mxu0 %v2662
    %3509 = vmatpush1.msra.mxu0 %v2661
    %3510 = vmatprep.subr.mxu0 %v2666
    %3511 = vmatpush1.msra.mxu0 %v2665
    %3512 = vmatprep.subr.mxu0 %v2670
    %3513 = vmatpush1.msra.mxu0 %v2669
    %3514 = vmatprep.subr.mxu0 %v2674
    %3515 = vmatpush1.msra.mxu0 %v2673
    %3516 = vmatprep.subr.mxu0 %v2678
    %3517 = vmatpush1.msra.mxu0 %v2677
    %3518 = vmatprep.subr.mxu0 %v2682
    %3519 = vmatpush1.msra.mxu0 %v2681
    %3520 = vmatprep.subr.mxu0 %v2686
    %3521 = vmatpush1.msra.mxu0 %v2685
    %3522 = vmatprep.mubr.f32.mxu0 %v510
    %3523 = vmatmul.mubr.f32.gmra.mrb[0].mxu0 %v509
    %v3524 = vpop.f32.mrb[0].mxu0
    %v3525 = vadd.f32 %v3268, %v3524
    %v3526 = vpop.f32.mrb[0].mxu0
    %v3527 = vadd.f32 %v3270, %v3526
    %3528 = vmatprep.mubr.f32.mxu0 %v514
    %3529 = vmatmul.mubr.f32.gmra.mrb[0].mxu0 %v513
    %v3530 = vpop.f32.mrb[0].mxu0
    %v3531 = vadd.f32 %v3274, %v3530
    %v3532 = vpop.f32.mrb[0].mxu0
    %v3533 = vadd.f32 %v3276, %v3532
    %3534 = vmatprep.mubr.f32.mxu0 %v518
    %3535 = vmatmul.mubr.f32.gmra.mrb[0].mxu0 %v517
    %v3536 = vpop.f32.mrb[0].mxu0
    %v3537 = vadd.f32 %v3280, %v3536
    %v3538 = vpop.f32.mrb[0].mxu0
    %v3539 = vadd.f32 %v3282, %v3538
    %3540 = vmatprep.mubr.f32.mxu0 %v522
    %3541 = vmatmul.mubr.f32.gmra.mrb[0].mxu0 %v521
    %v3542 = vpop.f32.mrb[0].mxu0
    %v3543 = vadd.f32 %v3286, %v3542
    %v3544 = vpop.f32.mrb[0].mxu0
    %v3545 = vadd.f32 %v3288, %v3544
    %3546 = vmatprep.mubr.f32.mxu0 %v526
    %3547 = vmatmul.mubr.f32.gmra.mrb[0].mxu0 %v525
    %v3548 = vpop.f32.mrb[0].mxu0
    %v3549 = vadd.f32 %v3292, %v3548
    %v3550 = vpop.f32.mrb[0].mxu0
    %v3551 = vadd.f32 %v3294, %v3550
    %3552 = vmatprep.mubr.f32.mxu0 %v530
    %3553 = vmatmul.mubr.f32.gmra.mrb[0].mxu0 %v529
    %v3554 = vpop.f32.mrb[0].mxu0
    %v3555 = vadd.f32 %v3298, %v3554
    %v3556 = vpop.f32.mrb[0].mxu0
    %v3557 = vadd.f32 %v3300, %v3556
    %3558 = vmatprep.mubr.f32.mxu0 %v534
    %3559 = vmatmul.mubr.f32.gmra.mrb[0].mxu0 %v533
    %v3560 = vpop.f32.mrb[0].mxu0
    %v3561 = vadd.f32 %v3304, %v3560
    %v3562 = vpop.f32.mrb[0].mxu0
    %v3563 = vadd.f32 %v3306, %v3562
    %3564 = vmatprep.mubr.f32.mxu0 %v538
    %3565 = vmatmul.mubr.f32.gmra.mrb[0].mxu0 %v537
    %v3566 = vpop.f32.mrb[0].mxu0
    %v3567 = vadd.f32 %v3310, %v3566
    %v3568 = vpop.f32.mrb[0].mxu0
    %v3569 = vadd.f32 %v3312, %v3568
    %3570 = vmatprep.mubr.f32.mxu0 %v542
    %3571 = vmatmul.mubr.f32.gmra.mrb[0].mxu0 %v541
    %v3572 = vpop.f32.mrb[0].mxu0
    %v3573 = vadd.f32 %v3316, %v3572
    %v3574 = vpop.f32.mrb[0].mxu0
    %v3575 = vadd.f32 %v3318, %v3574
    %3576 = vmatprep.mubr.f32.mxu0 %v546
    %3577 = vmatmul.mubr.f32.gmra.mrb[0].mxu0 %v545
    %v3578 = vpop.f32.mrb[0].mxu0
    %v3579 = vadd.f32 %v3322, %v3578
    %v3580 = vpop.f32.mrb[0].mxu0
    %v3581 = vadd.f32 %v3324, %v3580
    %3582 = vmatprep.mubr.f32.mxu0 %v550
    %3583 = vmatmul.mubr.f32.gmra.mrb[0].mxu0 %v549
    %v3584 = vpop.f32.mrb[0].mxu0
    %v3585 = vadd.f32 %v3328, %v3584
    %v3586 = vpop.f32.mrb[0].mxu0
    %v3587 = vadd.f32 %v3330, %v3586
    %3588 = vmatprep.mubr.f32.mxu0 %v554
    %3589 = vmatmul.mubr.f32.gmra.mrb[0].mxu0 %v553
    %v3590 = vpop.f32.mrb[0].mxu0
    %v3591 = vadd.f32 %v3334, %v3590
    %v3592 = vpop.f32.mrb[0].mxu0
    %v3593 = vadd.f32 %v3336, %v3592
    %3594 = vmatprep.mubr.f32.mxu0 %v558
    %3595 = vmatmul.mubr.f32.gmra.mrb[0].mxu0 %v557
    %v3596 = vpop.f32.mrb[0].mxu0
    %v3597 = vadd.f32 %v3340, %v3596
    %v3598 = vpop.f32.mrb[0].mxu0
    %v3599 = vadd.f32 %v3342, %v3598
    %3600 = vmatprep.mubr.f32.mxu0 %v562
    %3601 = vmatmul.mubr.f32.gmra.mrb[0].mxu0 %v561
    %v3602 = vpop.f32.mrb[0].mxu0
    %v3603 = vadd.f32 %v3346, %v3602
    %v3604 = vpop.f32.mrb[0].mxu0
    %v3605 = vadd.f32 %v3348, %v3604
    %3606 = vmatprep.mubr.f32.mxu0 %v566
    %3607 = vmatmul.mubr.f32.gmra.mrb[0].mxu0 %v565
    %v3608 = vpop.f32.mrb[0].mxu0
    %v3609 = vadd.f32 %v3352, %v3608
    %v3610 = vpop.f32.mrb[0].mxu0
    %v3611 = vadd.f32 %v3354, %v3610
    %3612 = vmatprep.mubr.f32.mxu0 %v570
    %3613 = vmatmul.mubr.f32.gmra.mrb[0].mxu0 %v569
    %v3614 = vpop.f32.mrb[0].mxu0
    %v3615 = vadd.f32 %v3358, %v3614
    %v3616 = vpop.f32.mrb[0].mxu0
    %v3617 = vadd.f32 %v3360, %v3616
    %3618 = vmatprep.mubr.f32.mxu0 %v574
    %3619 = vmatmul.mubr.f32.gmra.mrb[0].mxu0 %v573
    %v3620 = vpop.f32.mrb[0].mxu0
    %v3621 = vadd.f32 %v3364, %v3620
    %v3622 = vpop.f32.mrb[0].mxu0
    %v3623 = vadd.f32 %v3366, %v3622
    %3624 = vmatprep.mubr.f32.mxu0 %v578
    %3625 = vmatmul.mubr.f32.gmra.mrb[0].mxu0 %v577
    %v3626 = vpop.f32.mrb[0].mxu0
    %v3627 = vadd.f32 %v3370, %v3626
    %v3628 = vpop.f32.mrb[0].mxu0
    %v3629 = vadd.f32 %v3372, %v3628
    %3630 = vmatprep.mubr.f32.mxu0 %v582
    %3631 = vmatmul.mubr.f32.gmra.mrb[0].mxu0 %v581
    %v3632 = vpop.f32.mrb[0].mxu0
    %v3633 = vadd.f32 %v3376, %v3632
    %v3634 = vpop.f32.mrb[0].mxu0
    %v3635 = vadd.f32 %v3378, %v3634
    %3636 = vmatprep.mubr.f32.mxu0 %v586
    %3637 = vmatmul.mubr.f32.gmra.mrb[0].mxu0 %v585
    %v3638 = vpop.f32.mrb[0].mxu0
    %v3639 = vadd.f32 %v3382, %v3638
    %v3640 = vpop.f32.mrb[0].mxu0
    %v3641 = vadd.f32 %v3384, %v3640
    %3642 = vmatprep.mubr.f32.mxu0 %v590
    %3643 = vmatmul.mubr.f32.gmra.mrb[0].mxu0 %v589
    %v3644 = vpop.f32.mrb[0].mxu0
    %v3645 = vadd.f32 %v3388, %v3644
    %v3646 = vpop.f32.mrb[0].mxu0
    %v3647 = vadd.f32 %v3390, %v3646
    %3648 = vmatprep.mubr.f32.mxu0 %v594
    %3649 = vmatmul.mubr.f32.gmra.mrb[0].mxu0 %v593
    %v3650 = vpop.f32.mrb[0].mxu0
    %v3651 = vadd.f32 %v3394, %v3650
    %v3652 = vpop.f32.mrb[0].mxu0
    %v3653 = vadd.f32 %v3396, %v3652
    %3654 = vmatprep.mubr.f32.mxu0 %v598
    %3655 = vmatmul.mubr.f32.gmra.mrb[0].mxu0 %v597
    %v3656 = vpop.f32.mrb[0].mxu0
    %v3657 = vadd.f32 %v3400, %v3656
    %v3658 = vpop.f32.mrb[0].mxu0
    %v3659 = vadd.f32 %v3402, %v3658
    %3660 = vmatprep.mubr.f32.mxu0 %v602
    %3661 = vmatmul.mubr.f32.gmra.mrb[0].mxu0 %v601
    %v3662 = vpop.f32.mrb[0].mxu0
    %v3663 = vadd.f32 %v3406, %v3662
    %v3664 = vpop.f32.mrb[0].mxu0
    %v3665 = vadd.f32 %v3408, %v3664
    %3666 = vmatprep.mubr.f32.mxu0 %v606
    %3667 = vmatmul.mubr.f32.gmra.mrb[0].mxu0 %v605
    %v3668 = vpop.f32.mrb[0].mxu0
    %v3669 = vadd.f32 %v3412, %v3668
    %v3670 = vpop.f32.mrb[0].mxu0
    %v3671 = vadd.f32 %v3414, %v3670
    %3672 = vmatprep.mubr.f32.mxu0 %v610
    %3673 = vmatmul.mubr.f32.gmra.mrb[0].mxu0 %v609
    %v3674 = vpop.f32.mrb[0].mxu0
    %v3675 = vadd.f32 %v3418, %v3674
    %v3676 = vpop.f32.mrb[0].mxu0
    %v3677 = vadd.f32 %v3420, %v3676
    %3678 = vmatprep.mubr.f32.mxu0 %v614
    %3679 = vmatmul.mubr.f32.gmra.mrb[0].mxu0 %v613
    %v3680 = vpop.f32.mrb[0].mxu0
    %v3681 = vadd.f32 %v3424, %v3680
    %v3682 = vpop.f32.mrb[0].mxu0
    %v3683 = vadd.f32 %v3426, %v3682
    %3684 = vmatprep.mubr.f32.mxu0 %v618
    %3685 = vmatmul.mubr.f32.gmra.mrb[0].mxu0 %v617
    %v3686 = vpop.f32.mrb[0].mxu0
    %v3687 = vadd.f32 %v3430, %v3686
    %v3688 = vpop.f32.mrb[0].mxu0
    %v3689 = vadd.f32 %v3432, %v3688
    %3690 = vmatprep.mubr.f32.mxu0 %v622
    %3691 = vmatmul.mubr.f32.gmra.mrb[0].mxu0 %v621
    %v3692 = vpop.f32.mrb[0].mxu0
    %v3693 = vadd.f32 %v3436, %v3692
    %v3694 = vpop.f32.mrb[0].mxu0
    %v3695 = vadd.f32 %v3438, %v3694
    %3696 = vmatprep.mubr.f32.mxu0 %v626
    %3697 = vmatmul.mubr.f32.gmra.mrb[0].mxu0 %v625
    %v3698 = vpop.f32.mrb[0].mxu0
    %v3699 = vadd.f32 %v3442, %v3698
    %v3700 = vpop.f32.mrb[0].mxu0
    %v3701 = vadd.f32 %v3444, %v3700
    %3702 = vmatprep.mubr.f32.mxu0 %v630
    %3703 = vmatmul.mubr.f32.gmra.mrb[0].mxu0 %v629
    %v3704 = vpop.f32.mrb[0].mxu0
    %v3705 = vadd.f32 %v3448, %v3704
    %v3706 = vpop.f32.mrb[0].mxu0
    %v3707 = vadd.f32 %v3450, %v3706
    %3708 = vmatprep.mubr.f32.mxu0 %v634
    %3709 = vmatmul.mubr.f32.gmra.mrb[0].mxu0 %v633
    %v3710 = vpop.f32.mrb[0].mxu0
    %v3711 = vadd.f32 %v3454, %v3710
    %v3712 = vpop.f32.mrb[0].mxu0
    %v3713 = vadd.f32 %v3456, %v3712
    %3714 = vdwg.mxu0
    %v3715 = vadd.f32 %v2303, %v3011
    %v3716 = vadd.f32 %v2304, %v3013
    %v3717 = vadd.f32 %v2305, %v3525
    %v3718 = vadd.f32 %v2306, %v3527
    %v3719 = vadd.f32 %v2307, %v3017
    %v3720 = vadd.f32 %v2308, %v3019
    %v3721 = vadd.f32 %v2309, %v3531
    %v3722 = vadd.f32 %v2310, %v3533
    %v3723 = vadd.f32 %v2311, %v3023
    %v3724 = vadd.f32 %v2312, %v3025
    %v3725 = vadd.f32 %v2313, %v3537
    %v3726 = vadd.f32 %v2314, %v3539
    %v3727 = vadd.f32 %v2315, %v3029
    %v3728 = vadd.f32 %v2316, %v3031
    %v3729 = vadd.f32 %v2317, %v3543
    %v3730 = vadd.f32 %v2318, %v3545
    %v3731 = vadd.f32 %v2319, %v3035
    %v3732 = vadd.f32 %v2320, %v3037
    %v3733 = vadd.f32 %v2321, %v3549
    %v3734 = vadd.f32 %v2322, %v3551
    %v3735 = vadd.f32 %v2323, %v3041
    %v3736 = vadd.f32 %v2324, %v3043
    %v3737 = vadd.f32 %v2325, %v3555
    %v3738 = vadd.f32 %v2326, %v3557
    %v3739 = vadd.f32 %v2327, %v3047
    %v3740 = vadd.f32 %v2328, %v3049
    %v3741 = vadd.f32 %v2329, %v3561
    %v3742 = vadd.f32 %v2330, %v3563
    %v3743 = vadd.f32 %v2331, %v3053
    %v3744 = vadd.f32 %v2332, %v3055
    %v3745 = vadd.f32 %v2333, %v3567
    %v3746 = vadd.f32 %v2334, %v3569
    %v3747 = vadd.f32 %v2335, %v3059
    %v3748 = vadd.f32 %v2336, %v3061
    %v3749 = vadd.f32 %v2337, %v3573
    %v3750 = vadd.f32 %v2338, %v3575
    %v3751 = vadd.f32 %v2339, %v3065
    %v3752 = vadd.f32 %v2340, %v3067
    %v3753 = vadd.f32 %v2341, %v3579
    %v3754 = vadd.f32 %v2342, %v3581
    %v3755 = vadd.f32 %v2343, %v3071
    %v3756 = vadd.f32 %v2344, %v3073
    %v3757 = vadd.f32 %v2345, %v3585
    %v3758 = vadd.f32 %v2346, %v3587
    %v3759 = vadd.f32 %v2347, %v3077
    %v3760 = vadd.f32 %v2348, %v3079
    %v3761 = vadd.f32 %v2349, %v3591
    %v3762 = vadd.f32 %v2350, %v3593
    %v3763 = vadd.f32 %v2351, %v3083
    %v3764 = vadd.f32 %v2352, %v3085
    %v3765 = vadd.f32 %v2353, %v3597
    %v3766 = vadd.f32 %v2354, %v3599
    %v3767 = vadd.f32 %v2355, %v3089
    %v3768 = vadd.f32 %v2356, %v3091
    %v3769 = vadd.f32 %v2357, %v3603
    %v3770 = vadd.f32 %v2358, %v3605
    %v3771 = vadd.f32 %v2359, %v3095
    %v3772 = vadd.f32 %v2360, %v3097
    %v3773 = vadd.f32 %v2361, %v3609
    %v3774 = vadd.f32 %v2362, %v3611
    %v3775 = vadd.f32 %v2363, %v3101
    %v3776 = vadd.f32 %v2364, %v3103
    %v3777 = vadd.f32 %v2365, %v3615
    %v3778 = vadd.f32 %v2366, %v3617
    %v3779 = vadd.f32 %v2367, %v3107
    %v3780 = vadd.f32 %v2368, %v3109
    %v3781 = vadd.f32 %v2369, %v3621
    %v3782 = vadd.f32 %v2370, %v3623
    %v3783 = vadd.f32 %v2371, %v3113
    %v3784 = vadd.f32 %v2372, %v3115
    %v3785 = vadd.f32 %v2373, %v3627
    %v3786 = vadd.f32 %v2374, %v3629
    %v3787 = vadd.f32 %v2375, %v3119
    %v3788 = vadd.f32 %v2376, %v3121
    %v3789 = vadd.f32 %v2377, %v3633
    %v3790 = vadd.f32 %v2378, %v3635
    %v3791 = vadd.f32 %v2379, %v3125
    %v3792 = vadd.f32 %v2380, %v3127
    %v3793 = vadd.f32 %v2381, %v3639
    %v3794 = vadd.f32 %v2382, %v3641
    %v3795 = vadd.f32 %v2383, %v3131
    %v3796 = vadd.f32 %v2384, %v3133
    %v3797 = vadd.f32 %v2385, %v3645
    %v3798 = vadd.f32 %v2386, %v3647
    %v3799 = vadd.f32 %v2387, %v3137
    %v3800 = vadd.f32 %v2388, %v3139
    %v3801 = vadd.f32 %v2389, %v3651
    %v3802 = vadd.f32 %v2390, %v3653
    %v3803 = vadd.f32 %v2391, %v3143
    %v3804 = vadd.f32 %v2392, %v3145
    %v3805 = vadd.f32 %v2393, %v3657
    %v3806 = vadd.f32 %v2394, %v3659
    %v3807 = vadd.f32 %v2395, %v3149
    %v3808 = vadd.f32 %v2396, %v3151
    %v3809 = vadd.f32 %v2397, %v3663
    %v3810 = vadd.f32 %v2398, %v3665
    %v3811 = vadd.f32 %v2399, %v3155
    %v3812 = vadd.f32 %v2400, %v3157
    %v3813 = vadd.f32 %v2401, %v3669
    %v3814 = vadd.f32 %v2402, %v3671
    %v3815 = vadd.f32 %v2403, %v3161
    %v3816 = vadd.f32 %v2404, %v3163
    %v3817 = vadd.f32 %v2405, %v3675
    %v3818 = vadd.f32 %v2406, %v3677
    %v3819 = vadd.f32 %v2407, %v3167
    %v3820 = vadd.f32 %v2408, %v3169
    %v3821 = vadd.f32 %v2409, %v3681
    %v3822 = vadd.f32 %v2410, %v3683
    %v3823 = vadd.f32 %v2411, %v3173
    %v3824 = vadd.f32 %v2412, %v3175
    %v3825 = vadd.f32 %v2413, %v3687
    %v3826 = vadd.f32 %v2414, %v3689
    %v3827 = vadd.f32 %v2415, %v3179
    %v3828 = vadd.f32 %v2416, %v3181
    %v3829 = vadd.f32 %v2417, %v3693
    %v3830 = vadd.f32 %v2418, %v3695
    %v3831 = vadd.f32 %v2419, %v3185
    %v3832 = vadd.f32 %v2420, %v3187
    %v3833 = vadd.f32 %v2421, %v3699
    %v3834 = vadd.f32 %v2422, %v3701
    %v3835 = vadd.f32 %v2423, %v3191
    %v3836 = vadd.f32 %v2424, %v3193
    %v3837 = vadd.f32 %v2425, %v3705
    %v3838 = vadd.f32 %v2426, %v3707
    %v3839 = vadd.f32 %v2427, %v3197
    %v3840 = vadd.f32 %v2428, %v3199
    %v3841 = vadd.f32 %v2429, %v3711
    %v3842 = vadd.f32 %v2430, %v3713
    %3843 = vst [vmem:[#allocation3] sm:$0xff] %v3715
    %3844 = vst [vmem:[#allocation3 + $0x8] sm:$0xff] %v3716
    %3845 = vst [vmem:[#allocation3 + $0x10] sm:$0xff] %v3717
    %3846 = vst [vmem:[#allocation3 + $0x18] sm:$0xff] %v3718
    %3847 = vst [vmem:[#allocation3 + $0x20] sm:$0xff] %v3719
    %3848 = vst [vmem:[#allocation3 + $0x28] sm:$0xff] %v3720
    %3849 = vst [vmem:[#allocation3 + $0x30] sm:$0xff] %v3721
    %3850 = vst [vmem:[#allocation3 + $0x38] sm:$0xff] %v3722
    %3851 = vst [vmem:[#allocation3 + $0x40] sm:$0xff] %v3723
    %3852 = vst [vmem:[#allocation3 + $0x48] sm:$0xff] %v3724
    %3853 = vst [vmem:[#allocation3 + $0x50] sm:$0xff] %v3725
    %3854 = vst [vmem:[#allocation3 + $0x58] sm:$0xff] %v3726
    %3855 = vst [vmem:[#allocation3 + $0x60] sm:$0xff] %v3727
    %3856 = vst [vmem:[#allocation3 + $0x68] sm:$0xff] %v3728
    %3857 = vst [vmem:[#allocation3 + $0x70] sm:$0xff] %v3729
    %3858 = vst [vmem:[#allocation3 + $0x78] sm:$0xff] %v3730
    %3859 = vst [vmem:[#allocation3 + $0x80] sm:$0xff] %v3731
    %3860 = vst [vmem:[#allocation3 + $0x88] sm:$0xff] %v3732
    %3861 = vst [vmem:[#allocation3 + $0x90] sm:$0xff] %v3733
    %3862 = vst [vmem:[#allocation3 + $0x98] sm:$0xff] %v3734
    %3863 = vst [vmem:[#allocation3 + $0xa0] sm:$0xff] %v3735
    %3864 = vst [vmem:[#allocation3 + $0xa8] sm:$0xff] %v3736
    %3865 = vst [vmem:[#allocation3 + $0xb0] sm:$0xff] %v3737
    %3866 = vst [vmem:[#allocation3 + $0xb8] sm:$0xff] %v3738
    %3867 = vst [vmem:[#allocation3 + $0xc0] sm:$0xff] %v3739
    %3868 = vst [vmem:[#allocation3 + $0xc8] sm:$0xff] %v3740
    %3869 = vst [vmem:[#allocation3 + $0xd0] sm:$0xff] %v3741
    %3870 = vst [vmem:[#allocation3 + $0xd8] sm:$0xff] %v3742
    %3871 = vst [vmem:[#allocation3 + $0xe0] sm:$0xff] %v3743
    %3872 = vst [vmem:[#allocation3 + $0xe8] sm:$0xff] %v3744
    %3873 = vst [vmem:[#allocation3 + $0xf0] sm:$0xff] %v3745
    %3874 = vst [vmem:[#allocation3 + $0xf8] sm:$0xff] %v3746
    %3875 = vst [vmem:[#allocation3 + $0x100] sm:$0xff] %v3747
    %3876 = vst [vmem:[#allocation3 + $0x108] sm:$0xff] %v3748
    %3877 = vst [vmem:[#allocation3 + $0x110] sm:$0xff] %v3749
    %3878 = vst [vmem:[#allocation3 + $0x118] sm:$0xff] %v3750
    %3879 = vst [vmem:[#allocation3 + $0x120] sm:$0xff] %v3751
    %3880 = vst [vmem:[#allocation3 + $0x128] sm:$0xff] %v3752
    %3881 = vst [vmem:[#allocation3 + $0x130] sm:$0xff] %v3753
    %3882 = vst [vmem:[#allocation3 + $0x138] sm:$0xff] %v3754
    %3883 = vst [vmem:[#allocation3 + $0x140] sm:$0xff] %v3755
    %3884 = vst [vmem:[#allocation3 + $0x148] sm:$0xff] %v3756
    %3885 = vst [vmem:[#allocation3 + $0x150] sm:$0xff] %v3757
    %3886 = vst [vmem:[#allocation3 + $0x158] sm:$0xff] %v3758
    %3887 = vst [vmem:[#allocation3 + $0x160] sm:$0xff] %v3759
    %3888 = vst [vmem:[#allocation3 + $0x168] sm:$0xff] %v3760
    %3889 = vst [vmem:[#allocation3 + $0x170] sm:$0xff] %v3761
    %3890 = vst [vmem:[#allocation3 + $0x178] sm:$0xff] %v3762
    %3891 = vst [vmem:[#allocation3 + $0x180] sm:$0xff] %v3763
    %3892 = vst [vmem:[#allocation3 + $0x188] sm:$0xff] %v3764
    %3893 = vst [vmem:[#allocation3 + $0x190] sm:$0xff] %v3765
    %3894 = vst [vmem:[#allocation3 + $0x198] sm:$0xff] %v3766
    %3895 = vst [vmem:[#allocation3 + $0x1a0] sm:$0xff] %v3767
    %3896 = vst [vmem:[#allocation3 + $0x1a8] sm:$0xff] %v3768
    %3897 = vst [vmem:[#allocation3 + $0x1b0] sm:$0xff] %v3769
    %3898 = vst [vmem:[#allocation3 + $0x1b8] sm:$0xff] %v3770
    %3899 = vst [vmem:[#allocation3 + $0x1c0] sm:$0xff] %v3771
    %3900 = vst [vmem:[#allocation3 + $0x1c8] sm:$0xff] %v3772
    %3901 = vst [vmem:[#allocation3 + $0x1d0] sm:$0xff] %v3773
    %3902 = vst [vmem:[#allocation3 + $0x1d8] sm:$0xff] %v3774
    %3903 = vst [vmem:[#allocation3 + $0x1e0] sm:$0xff] %v3775
    %3904 = vst [vmem:[#allocation3 + $0x1e8] sm:$0xff] %v3776
    %3905 = vst [vmem:[#allocation3 + $0x1f0] sm:$0xff] %v3777
    %3906 = vst [vmem:[#allocation3 + $0x1f8] sm:$0xff] %v3778
    %3907 = vst [vmem:[#allocation3 + $0x200] sm:$0xff] %v3779
    %3908 = vst [vmem:[#allocation3 + $0x208] sm:$0xff] %v3780
    %3909 = vst [vmem:[#allocation3 + $0x210] sm:$0xff] %v3781
    %3910 = vst [vmem:[#allocation3 + $0x218] sm:$0xff] %v3782
    %3911 = vst [vmem:[#allocation3 + $0x220] sm:$0xff] %v3783
    %3912 = vst [vmem:[#allocation3 + $0x228] sm:$0xff] %v3784
    %3913 = vst [vmem:[#allocation3 + $0x230] sm:$0xff] %v3785
    %3914 = vst [vmem:[#allocation3 + $0x238] sm:$0xff] %v3786
    %3915 = vst [vmem:[#allocation3 + $0x240] sm:$0xff] %v3787
    %3916 = vst [vmem:[#allocation3 + $0x248] sm:$0xff] %v3788
    %3917 = vst [vmem:[#allocation3 + $0x250] sm:$0xff] %v3789
    %3918 = vst [vmem:[#allocation3 + $0x258] sm:$0xff] %v3790
    %3919 = vst [vmem:[#allocation3 + $0x260] sm:$0xff] %v3791
    %3920 = vst [vmem:[#allocation3 + $0x268] sm:$0xff] %v3792
    %3921 = vst [vmem:[#allocation3 + $0x270] sm:$0xff] %v3793
    %3922 = vst [vmem:[#allocation3 + $0x278] sm:$0xff] %v3794
    %3923 = vst [vmem:[#allocation3 + $0x280] sm:$0xff] %v3795
    %3924 = vst [vmem:[#allocation3 + $0x288] sm:$0xff] %v3796
    %3925 = vst [vmem:[#allocation3 + $0x290] sm:$0xff] %v3797
    %3926 = vst [vmem:[#allocation3 + $0x298] sm:$0xff] %v3798
    %3927 = vst [vmem:[#allocation3 + $0x2a0] sm:$0xff] %v3799
    %3928 = vst [vmem:[#allocation3 + $0x2a8] sm:$0xff] %v3800
    %3929 = vst [vmem:[#allocation3 + $0x2b0] sm:$0xff] %v3801
    %3930 = vst [vmem:[#allocation3 + $0x2b8] sm:$0xff] %v3802
    %3931 = vst [vmem:[#allocation3 + $0x2c0] sm:$0xff] %v3803
    %3932 = vst [vmem:[#allocation3 + $0x2c8] sm:$0xff] %v3804
    %3933 = vst [vmem:[#allocation3 + $0x2d0] sm:$0xff] %v3805
    %3934 = vst [vmem:[#allocation3 + $0x2d8] sm:$0xff] %v3806
    %3935 = vst [vmem:[#allocation3 + $0x2e0] sm:$0xff] %v3807
    %3936 = vst [vmem:[#allocation3 + $0x2e8] sm:$0xff] %v3808
    %3937 = vst [vmem:[#allocation3 + $0x2f0] sm:$0xff] %v3809
    %3938 = vst [vmem:[#allocation3 + $0x2f8] sm:$0xff] %v3810
    %3939 = vst [vmem:[#allocation3 + $0x300] sm:$0xff] %v3811
    %3940 = vst [vmem:[#allocation3 + $0x308] sm:$0xff] %v3812
    %3941 = vst [vmem:[#allocation3 + $0x310] sm:$0xff] %v3813
    %3942 = vst [vmem:[#allocation3 + $0x318] sm:$0xff] %v3814
    %3943 = vst [vmem:[#allocation3 + $0x320] sm:$0xff] %v3815
    %3944 = vst [vmem:[#allocation3 + $0x328] sm:$0xff] %v3816
    %3945 = vst [vmem:[#allocation3 + $0x330] sm:$0xff] %v3817
    %3946 = vst [vmem:[#allocation3 + $0x338] sm:$0xff] %v3818
    %3947 = vst [vmem:[#allocation3 + $0x340] sm:$0xff] %v3819
    %3948 = vst [vmem:[#allocation3 + $0x348] sm:$0xff] %v3820
    %3949 = vst [vmem:[#allocation3 + $0x350] sm:$0xff] %v3821
    %3950 = vst [vmem:[#allocation3 + $0x358] sm:$0xff] %v3822
    %3951 = vst [vmem:[#allocation3 + $0x360] sm:$0xff] %v3823
    %3952 = vst [vmem:[#allocation3 + $0x368] sm:$0xff] %v3824
    %3953 = vst [vmem:[#allocation3 + $0x370] sm:$0xff] %v3825
    %3954 = vst [vmem:[#allocation3 + $0x378] sm:$0xff] %v3826
    %3955 = vst [vmem:[#allocation3 + $0x380] sm:$0xff] %v3827
    %3956 = vst [vmem:[#allocation3 + $0x388] sm:$0xff] %v3828
    %3957 = vst [vmem:[#allocation3 + $0x390] sm:$0xff] %v3829
    %3958 = vst [vmem:[#allocation3 + $0x398] sm:$0xff] %v3830
    %3959 = vst [vmem:[#allocation3 + $0x3a0] sm:$0xff] %v3831
    %3960 = vst [vmem:[#allocation3 + $0x3a8] sm:$0xff] %v3832
    %3961 = vst [vmem:[#allocation3 + $0x3b0] sm:$0xff] %v3833
    %3962 = vst [vmem:[#allocation3 + $0x3b8] sm:$0xff] %v3834
    %3963 = vst [vmem:[#allocation3 + $0x3c0] sm:$0xff] %v3835
    %3964 = vst [vmem:[#allocation3 + $0x3c8] sm:$0xff] %v3836
    %3965 = vst [vmem:[#allocation3 + $0x3d0] sm:$0xff] %v3837
    %3966 = vst [vmem:[#allocation3 + $0x3d8] sm:$0xff] %v3838
    %3967 = vst [vmem:[#allocation3 + $0x3e0] sm:$0xff] %v3839
    %3968 = vst [vmem:[#allocation3 + $0x3e8] sm:$0xff] %v3840
    %3969 = vst [vmem:[#allocation3 + $0x3f0] sm:$0xff] %v3841
    %3970 = vst [vmem:[#allocation3 + $0x3f8] sm:$0xff] %v3842
    %v3971 = vld [vmem:[#allocation4] sm:$0xff]
    %v3972 = vld [vmem:[#allocation4 + $0x8] sm:$0xff]
    %v3973 = vld [vmem:[#allocation4 + $0x10] sm:$0xff]
    %v3974 = vld [vmem:[#allocation4 + $0x18] sm:$0xff]
    %v3975 = vld [vmem:[#allocation4 + $0x20] sm:$0xff]
    %v3976 = vld [vmem:[#allocation4 + $0x28] sm:$0xff]
    %v3977 = vld [vmem:[#allocation4 + $0x30] sm:$0xff]
    %v3978 = vld [vmem:[#allocation4 + $0x38] sm:$0xff]
    %v3979 = vld [vmem:[#allocation4 + $0x40] sm:$0xff]
    %v3980 = vld [vmem:[#allocation4 + $0x48] sm:$0xff]
    %v3981 = vld [vmem:[#allocation4 + $0x50] sm:$0xff]
    %v3982 = vld [vmem:[#allocation4 + $0x58] sm:$0xff]
    %v3983 = vld [vmem:[#allocation4 + $0x60] sm:$0xff]
    %v3984 = vld [vmem:[#allocation4 + $0x68] sm:$0xff]
    %v3985 = vld [vmem:[#allocation4 + $0x70] sm:$0xff]
    %v3986 = vld [vmem:[#allocation4 + $0x78] sm:$0xff]
    %v3987 = vld [vmem:[#allocation4 + $0x80] sm:$0xff]
    %v3988 = vld [vmem:[#allocation4 + $0x88] sm:$0xff]
    %v3989 = vld [vmem:[#allocation4 + $0x90] sm:$0xff]
    %v3990 = vld [vmem:[#allocation4 + $0x98] sm:$0xff]
    %v3991 = vld [vmem:[#allocation4 + $0xa0] sm:$0xff]
    %v3992 = vld [vmem:[#allocation4 + $0xa8] sm:$0xff]
    %v3993 = vld [vmem:[#allocation4 + $0xb0] sm:$0xff]
    %v3994 = vld [vmem:[#allocation4 + $0xb8] sm:$0xff]
    %v3995 = vld [vmem:[#allocation4 + $0xc0] sm:$0xff]
    %v3996 = vld [vmem:[#allocation4 + $0xc8] sm:$0xff]
    %v3997 = vld [vmem:[#allocation4 + $0xd0] sm:$0xff]
    %v3998 = vld [vmem:[#allocation4 + $0xd8] sm:$0xff]
    %v3999 = vld [vmem:[#allocation4 + $0xe0] sm:$0xff]
    %v4000 = vld [vmem:[#allocation4 + $0xe8] sm:$0xff]
    %v4001 = vld [vmem:[#allocation4 + $0xf0] sm:$0xff]
    %v4002 = vld [vmem:[#allocation4 + $0xf8] sm:$0xff]
    %v4003 = vld [vmem:[#allocation4 + $0x100] sm:$0xff]
    %v4004 = vld [vmem:[#allocation4 + $0x108] sm:$0xff]
    %v4005 = vld [vmem:[#allocation4 + $0x110] sm:$0xff]
    %v4006 = vld [vmem:[#allocation4 + $0x118] sm:$0xff]
    %v4007 = vld [vmem:[#allocation4 + $0x120] sm:$0xff]
    %v4008 = vld [vmem:[#allocation4 + $0x128] sm:$0xff]
    %v4009 = vld [vmem:[#allocation4 + $0x130] sm:$0xff]
    %v4010 = vld [vmem:[#allocation4 + $0x138] sm:$0xff]
    %v4011 = vld [vmem:[#allocation4 + $0x140] sm:$0xff]
    %v4012 = vld [vmem:[#allocation4 + $0x148] sm:$0xff]
    %v4013 = vld [vmem:[#allocation4 + $0x150] sm:$0xff]
    %v4014 = vld [vmem:[#allocation4 + $0x158] sm:$0xff]
    %v4015 = vld [vmem:[#allocation4 + $0x160] sm:$0xff]
    %v4016 = vld [vmem:[#allocation4 + $0x168] sm:$0xff]
    %v4017 = vld [vmem:[#allocation4 + $0x170] sm:$0xff]
    %v4018 = vld [vmem:[#allocation4 + $0x178] sm:$0xff]
    %v4019 = vld [vmem:[#allocation4 + $0x180] sm:$0xff]
    %v4020 = vld [vmem:[#allocation4 + $0x188] sm:$0xff]
    %v4021 = vld [vmem:[#allocation4 + $0x190] sm:$0xff]
    %v4022 = vld [vmem:[#allocation4 + $0x198] sm:$0xff]
    %v4023 = vld [vmem:[#allocation4 + $0x1a0] sm:$0xff]
    %v4024 = vld [vmem:[#allocation4 + $0x1a8] sm:$0xff]
    %v4025 = vld [vmem:[#allocation4 + $0x1b0] sm:$0xff]
    %v4026 = vld [vmem:[#allocation4 + $0x1b8] sm:$0xff]
    %v4027 = vld [vmem:[#allocation4 + $0x1c0] sm:$0xff]
    %v4028 = vld [vmem:[#allocation4 + $0x1c8] sm:$0xff]
    %v4029 = vld [vmem:[#allocation4 + $0x1d0] sm:$0xff]
    %v4030 = vld [vmem:[#allocation4 + $0x1d8] sm:$0xff]
    %v4031 = vld [vmem:[#allocation4 + $0x1e0] sm:$0xff]
    %v4032 = vld [vmem:[#allocation4 + $0x1e8] sm:$0xff]
    %v4033 = vld [vmem:[#allocation4 + $0x1f0] sm:$0xff]
    %v4034 = vld [vmem:[#allocation4 + $0x1f8] sm:$0xff]
    %v4035 = vld [vmem:[#allocation4 + $0x200] sm:$0xff]
    %v4036 = vld [vmem:[#allocation4 + $0x208] sm:$0xff]
    %v4037 = vld [vmem:[#allocation4 + $0x210] sm:$0xff]
    %v4038 = vld [vmem:[#allocation4 + $0x218] sm:$0xff]
    %v4039 = vld [vmem:[#allocation4 + $0x220] sm:$0xff]
    %v4040 = vld [vmem:[#allocation4 + $0x228] sm:$0xff]
    %v4041 = vld [vmem:[#allocation4 + $0x230] sm:$0xff]
    %v4042 = vld [vmem:[#allocation4 + $0x238] sm:$0xff]
    %v4043 = vld [vmem:[#allocation4 + $0x240] sm:$0xff]
    %v4044 = vld [vmem:[#allocation4 + $0x248] sm:$0xff]
    %v4045 = vld [vmem:[#allocation4 + $0x250] sm:$0xff]
    %v4046 = vld [vmem:[#allocation4 + $0x258] sm:$0xff]
    %v4047 = vld [vmem:[#allocation4 + $0x260] sm:$0xff]
    %v4048 = vld [vmem:[#allocation4 + $0x268] sm:$0xff]
    %v4049 = vld [vmem:[#allocation4 + $0x270] sm:$0xff]
    %v4050 = vld [vmem:[#allocation4 + $0x278] sm:$0xff]
    %v4051 = vld [vmem:[#allocation4 + $0x280] sm:$0xff]
    %v4052 = vld [vmem:[#allocation4 + $0x288] sm:$0xff]
    %v4053 = vld [vmem:[#allocation4 + $0x290] sm:$0xff]
    %v4054 = vld [vmem:[#allocation4 + $0x298] sm:$0xff]
    %v4055 = vld [vmem:[#allocation4 + $0x2a0] sm:$0xff]
    %v4056 = vld [vmem:[#allocation4 + $0x2a8] sm:$0xff]
    %v4057 = vld [vmem:[#allocation4 + $0x2b0] sm:$0xff]
    %v4058 = vld [vmem:[#allocation4 + $0x2b8] sm:$0xff]
    %v4059 = vld [vmem:[#allocation4 + $0x2c0] sm:$0xff]
    %v4060 = vld [vmem:[#allocation4 + $0x2c8] sm:$0xff]
    %v4061 = vld [vmem:[#allocation4 + $0x2d0] sm:$0xff]
    %v4062 = vld [vmem:[#allocation4 + $0x2d8] sm:$0xff]
    %v4063 = vld [vmem:[#allocation4 + $0x2e0] sm:$0xff]
    %v4064 = vld [vmem:[#allocation4 + $0x2e8] sm:$0xff]
    %v4065 = vld [vmem:[#allocation4 + $0x2f0] sm:$0xff]
    %v4066 = vld [vmem:[#allocation4 + $0x2f8] sm:$0xff]
    %v4067 = vld [vmem:[#allocation4 + $0x300] sm:$0xff]
    %v4068 = vld [vmem:[#allocation4 + $0x308] sm:$0xff]
    %v4069 = vld [vmem:[#allocation4 + $0x310] sm:$0xff]
    %v4070 = vld [vmem:[#allocation4 + $0x318] sm:$0xff]
    %v4071 = vld [vmem:[#allocation4 + $0x320] sm:$0xff]
    %v4072 = vld [vmem:[#allocation4 + $0x328] sm:$0xff]
    %v4073 = vld [vmem:[#allocation4 + $0x330] sm:$0xff]
    %v4074 = vld [vmem:[#allocation4 + $0x338] sm:$0xff]
    %v4075 = vld [vmem:[#allocation4 + $0x340] sm:$0xff]
    %v4076 = vld [vmem:[#allocation4 + $0x348] sm:$0xff]
    %v4077 = vld [vmem:[#allocation4 + $0x350] sm:$0xff]
    %v4078 = vld [vmem:[#allocation4 + $0x358] sm:$0xff]
    %v4079 = vld [vmem:[#allocation4 + $0x360] sm:$0xff]
    %v4080 = vld [vmem:[#allocation4 + $0x368] sm:$0xff]
    %v4081 = vld [vmem:[#allocation4 + $0x370] sm:$0xff]
    %v4082 = vld [vmem:[#allocation4 + $0x378] sm:$0xff]
    %v4083 = vld [vmem:[#allocation4 + $0x380] sm:$0xff]
    %v4084 = vld [vmem:[#allocation4 + $0x388] sm:$0xff]
    %v4085 = vld [vmem:[#allocation4 + $0x390] sm:$0xff]
    %v4086 = vld [vmem:[#allocation4 + $0x398] sm:$0xff]
    %v4087 = vld [vmem:[#allocation4 + $0x3a0] sm:$0xff]
    %v4088 = vld [vmem:[#allocation4 + $0x3a8] sm:$0xff]
    %v4089 = vld [vmem:[#allocation4 + $0x3b0] sm:$0xff]
    %v4090 = vld [vmem:[#allocation4 + $0x3b8] sm:$0xff]
    %v4091 = vld [vmem:[#allocation4 + $0x3c0] sm:$0xff]
    %v4092 = vld [vmem:[#allocation4 + $0x3c8] sm:$0xff]
    %v4093 = vld [vmem:[#allocation4 + $0x3d0] sm:$0xff]
    %v4094 = vld [vmem:[#allocation4 + $0x3d8] sm:$0xff]
    %v4095 = vld [vmem:[#allocation4 + $0x3e0] sm:$0xff]
    %v4096 = vld [vmem:[#allocation4 + $0x3e8] sm:$0xff]
    %v4097 = vld [vmem:[#allocation4 + $0x3f0] sm:$0xff]
    %v4098 = vld [vmem:[#allocation4 + $0x3f8] sm:$0xff]
    %v4099 = vld [vmem:[#allocation11] sm:$0xff]
    %v4100 = vld [vmem:[#allocation11 + $0x8] sm:$0xff]
    %v4101 = vld [vmem:[#allocation11 + $0x10] sm:$0xff]
    %v4102 = vld [vmem:[#allocation11 + $0x18] sm:$0xff]
    %v4103 = vld [vmem:[#allocation11 + $0x20] sm:$0xff]
    %v4104 = vld [vmem:[#allocation11 + $0x28] sm:$0xff]
    %v4105 = vld [vmem:[#allocation11 + $0x30] sm:$0xff]
    %v4106 = vld [vmem:[#allocation11 + $0x38] sm:$0xff]
    %v4107 = vld [vmem:[#allocation11 + $0x40] sm:$0xff]
    %v4108 = vld [vmem:[#allocation11 + $0x48] sm:$0xff]
    %v4109 = vld [vmem:[#allocation11 + $0x50] sm:$0xff]
    %v4110 = vld [vmem:[#allocation11 + $0x58] sm:$0xff]
    %v4111 = vld [vmem:[#allocation11 + $0x60] sm:$0xff]
    %v4112 = vld [vmem:[#allocation11 + $0x68] sm:$0xff]
    %v4113 = vld [vmem:[#allocation11 + $0x70] sm:$0xff]
    %v4114 = vld [vmem:[#allocation11 + $0x78] sm:$0xff]
    %v4115 = vld [vmem:[#allocation11 + $0x80] sm:$0xff]
    %v4116 = vld [vmem:[#allocation11 + $0x88] sm:$0xff]
    %v4117 = vld [vmem:[#allocation11 + $0x90] sm:$0xff]
    %v4118 = vld [vmem:[#allocation11 + $0x98] sm:$0xff]
    %v4119 = vld [vmem:[#allocation11 + $0xa0] sm:$0xff]
    %v4120 = vld [vmem:[#allocation11 + $0xa8] sm:$0xff]
    %v4121 = vld [vmem:[#allocation11 + $0xb0] sm:$0xff]
    %v4122 = vld [vmem:[#allocation11 + $0xb8] sm:$0xff]
    %v4123 = vld [vmem:[#allocation11 + $0xc0] sm:$0xff]
    %v4124 = vld [vmem:[#allocation11 + $0xc8] sm:$0xff]
    %v4125 = vld [vmem:[#allocation11 + $0xd0] sm:$0xff]
    %v4126 = vld [vmem:[#allocation11 + $0xd8] sm:$0xff]
    %v4127 = vld [vmem:[#allocation11 + $0xe0] sm:$0xff]
    %v4128 = vld [vmem:[#allocation11 + $0xe8] sm:$0xff]
    %v4129 = vld [vmem:[#allocation11 + $0xf0] sm:$0xff]
    %v4130 = vld [vmem:[#allocation11 + $0xf8] sm:$0xff]
    %v4131 = vld [vmem:[#allocation11 + $0x100] sm:$0xff]
    %v4132 = vld [vmem:[#allocation11 + $0x108] sm:$0xff]
    %v4133 = vld [vmem:[#allocation11 + $0x110] sm:$0xff]
    %v4134 = vld [vmem:[#allocation11 + $0x118] sm:$0xff]
    %v4135 = vld [vmem:[#allocation11 + $0x120] sm:$0xff]
    %v4136 = vld [vmem:[#allocation11 + $0x128] sm:$0xff]
    %v4137 = vld [vmem:[#allocation11 + $0x130] sm:$0xff]
    %v4138 = vld [vmem:[#allocation11 + $0x138] sm:$0xff]
    %v4139 = vld [vmem:[#allocation11 + $0x140] sm:$0xff]
    %v4140 = vld [vmem:[#allocation11 + $0x148] sm:$0xff]
    %v4141 = vld [vmem:[#allocation11 + $0x150] sm:$0xff]
    %v4142 = vld [vmem:[#allocation11 + $0x158] sm:$0xff]
    %v4143 = vld [vmem:[#allocation11 + $0x160] sm:$0xff]
    %v4144 = vld [vmem:[#allocation11 + $0x168] sm:$0xff]
    %v4145 = vld [vmem:[#allocation11 + $0x170] sm:$0xff]
    %v4146 = vld [vmem:[#allocation11 + $0x178] sm:$0xff]
    %v4147 = vld [vmem:[#allocation11 + $0x180] sm:$0xff]
    %v4148 = vld [vmem:[#allocation11 + $0x188] sm:$0xff]
    %v4149 = vld [vmem:[#allocation11 + $0x190] sm:$0xff]
    %v4150 = vld [vmem:[#allocation11 + $0x198] sm:$0xff]
    %v4151 = vld [vmem:[#allocation11 + $0x1a0] sm:$0xff]
    %v4152 = vld [vmem:[#allocation11 + $0x1a8] sm:$0xff]
    %v4153 = vld [vmem:[#allocation11 + $0x1b0] sm:$0xff]
    %v4154 = vld [vmem:[#allocation11 + $0x1b8] sm:$0xff]
    %v4155 = vld [vmem:[#allocation11 + $0x1c0] sm:$0xff]
    %v4156 = vld [vmem:[#allocation11 + $0x1c8] sm:$0xff]
    %v4157 = vld [vmem:[#allocation11 + $0x1d0] sm:$0xff]
    %v4158 = vld [vmem:[#allocation11 + $0x1d8] sm:$0xff]
    %v4159 = vld [vmem:[#allocation11 + $0x1e0] sm:$0xff]
    %v4160 = vld [vmem:[#allocation11 + $0x1e8] sm:$0xff]
    %v4161 = vld [vmem:[#allocation11 + $0x1f0] sm:$0xff]
    %v4162 = vld [vmem:[#allocation11 + $0x1f8] sm:$0xff]
    %v4163 = vld [vmem:[#allocation11 + $0x200] sm:$0xff]
    %v4164 = vld [vmem:[#allocation11 + $0x208] sm:$0xff]
    %v4165 = vld [vmem:[#allocation11 + $0x210] sm:$0xff]
    %v4166 = vld [vmem:[#allocation11 + $0x218] sm:$0xff]
    %v4167 = vld [vmem:[#allocation11 + $0x220] sm:$0xff]
    %v4168 = vld [vmem:[#allocation11 + $0x228] sm:$0xff]
    %v4169 = vld [vmem:[#allocation11 + $0x230] sm:$0xff]
    %v4170 = vld [vmem:[#allocation11 + $0x238] sm:$0xff]
    %v4171 = vld [vmem:[#allocation11 + $0x240] sm:$0xff]
    %v4172 = vld [vmem:[#allocation11 + $0x248] sm:$0xff]
    %v4173 = vld [vmem:[#allocation11 + $0x250] sm:$0xff]
    %v4174 = vld [vmem:[#allocation11 + $0x258] sm:$0xff]
    %v4175 = vld [vmem:[#allocation11 + $0x260] sm:$0xff]
    %v4176 = vld [vmem:[#allocation11 + $0x268] sm:$0xff]
    %v4177 = vld [vmem:[#allocation11 + $0x270] sm:$0xff]
    %v4178 = vld [vmem:[#allocation11 + $0x278] sm:$0xff]
    %v4179 = vld [vmem:[#allocation11 + $0x280] sm:$0xff]
    %v4180 = vld [vmem:[#allocation11 + $0x288] sm:$0xff]
    %v4181 = vld [vmem:[#allocation11 + $0x290] sm:$0xff]
    %v4182 = vld [vmem:[#allocation11 + $0x298] sm:$0xff]
    %v4183 = vld [vmem:[#allocation11 + $0x2a0] sm:$0xff]
    %v4184 = vld [vmem:[#allocation11 + $0x2a8] sm:$0xff]
    %v4185 = vld [vmem:[#allocation11 + $0x2b0] sm:$0xff]
    %v4186 = vld [vmem:[#allocation11 + $0x2b8] sm:$0xff]
    %v4187 = vld [vmem:[#allocation11 + $0x2c0] sm:$0xff]
    %v4188 = vld [vmem:[#allocation11 + $0x2c8] sm:$0xff]
    %v4189 = vld [vmem:[#allocation11 + $0x2d0] sm:$0xff]
    %v4190 = vld [vmem:[#allocation11 + $0x2d8] sm:$0xff]
    %v4191 = vld [vmem:[#allocation11 + $0x2e0] sm:$0xff]
    %v4192 = vld [vmem:[#allocation11 + $0x2e8] sm:$0xff]
    %v4193 = vld [vmem:[#allocation11 + $0x2f0] sm:$0xff]
    %v4194 = vld [vmem:[#allocation11 + $0x2f8] sm:$0xff]
    %v4195 = vld [vmem:[#allocation11 + $0x300] sm:$0xff]
    %v4196 = vld [vmem:[#allocation11 + $0x308] sm:$0xff]
    %v4197 = vld [vmem:[#allocation11 + $0x310] sm:$0xff]
    %v4198 = vld [vmem:[#allocation11 + $0x318] sm:$0xff]
    %v4199 = vld [vmem:[#allocation11 + $0x320] sm:$0xff]
    %v4200 = vld [vmem:[#allocation11 + $0x328] sm:$0xff]
    %v4201 = vld [vmem:[#allocation11 + $0x330] sm:$0xff]
    %v4202 = vld [vmem:[#allocation11 + $0x338] sm:$0xff]
    %v4203 = vld [vmem:[#allocation11 + $0x340] sm:$0xff]
    %v4204 = vld [vmem:[#allocation11 + $0x348] sm:$0xff]
    %v4205 = vld [vmem:[#allocation11 + $0x350] sm:$0xff]
    %v4206 = vld [vmem:[#allocation11 + $0x358] sm:$0xff]
    %v4207 = vld [vmem:[#allocation11 + $0x360] sm:$0xff]
    %v4208 = vld [vmem:[#allocation11 + $0x368] sm:$0xff]
    %v4209 = vld [vmem:[#allocation11 + $0x370] sm:$0xff]
    %v4210 = vld [vmem:[#allocation11 + $0x378] sm:$0xff]
    %v4211 = vld [vmem:[#allocation11 + $0x380] sm:$0xff]
    %v4212 = vld [vmem:[#allocation11 + $0x388] sm:$0xff]
    %v4213 = vld [vmem:[#allocation11 + $0x390] sm:$0xff]
    %v4214 = vld [vmem:[#allocation11 + $0x398] sm:$0xff]
    %v4215 = vld [vmem:[#allocation11 + $0x3a0] sm:$0xff]
    %v4216 = vld [vmem:[#allocation11 + $0x3a8] sm:$0xff]
    %v4217 = vld [vmem:[#allocation11 + $0x3b0] sm:$0xff]
    %v4218 = vld [vmem:[#allocation11 + $0x3b8] sm:$0xff]
    %v4219 = vld [vmem:[#allocation11 + $0x3c0] sm:$0xff]
    %v4220 = vld [vmem:[#allocation11 + $0x3c8] sm:$0xff]
    %v4221 = vld [vmem:[#allocation11 + $0x3d0] sm:$0xff]
    %v4222 = vld [vmem:[#allocation11 + $0x3d8] sm:$0xff]
    %v4223 = vld [vmem:[#allocation11 + $0x3e0] sm:$0xff]
    %v4224 = vld [vmem:[#allocation11 + $0x3e8] sm:$0xff]
    %v4225 = vld [vmem:[#allocation11 + $0x3f0] sm:$0xff]
    %v4226 = vld [vmem:[#allocation11 + $0x3f8] sm:$0xff]
    %v4227 = vld [vmem:[#allocation11 + $0x400] sm:$0xff]
    %v4228 = vld [vmem:[#allocation11 + $0x408] sm:$0xff]
    %v4229 = vld [vmem:[#allocation11 + $0x410] sm:$0xff]
    %v4230 = vld [vmem:[#allocation11 + $0x418] sm:$0xff]
    %v4231 = vld [vmem:[#allocation11 + $0x420] sm:$0xff]
    %v4232 = vld [vmem:[#allocation11 + $0x428] sm:$0xff]
    %v4233 = vld [vmem:[#allocation11 + $0x430] sm:$0xff]
    %v4234 = vld [vmem:[#allocation11 + $0x438] sm:$0xff]
    %v4235 = vld [vmem:[#allocation11 + $0x440] sm:$0xff]
    %v4236 = vld [vmem:[#allocation11 + $0x448] sm:$0xff]
    %v4237 = vld [vmem:[#allocation11 + $0x450] sm:$0xff]
    %v4238 = vld [vmem:[#allocation11 + $0x458] sm:$0xff]
    %v4239 = vld [vmem:[#allocation11 + $0x460] sm:$0xff]
    %v4240 = vld [vmem:[#allocation11 + $0x468] sm:$0xff]
    %v4241 = vld [vmem:[#allocation11 + $0x470] sm:$0xff]
    %v4242 = vld [vmem:[#allocation11 + $0x478] sm:$0xff]
    %v4243 = vld [vmem:[#allocation11 + $0x480] sm:$0xff]
    %v4244 = vld [vmem:[#allocation11 + $0x488] sm:$0xff]
    %v4245 = vld [vmem:[#allocation11 + $0x490] sm:$0xff]
    %v4246 = vld [vmem:[#allocation11 + $0x498] sm:$0xff]
    %v4247 = vld [vmem:[#allocation11 + $0x4a0] sm:$0xff]
    %v4248 = vld [vmem:[#allocation11 + $0x4a8] sm:$0xff]
    %v4249 = vld [vmem:[#allocation11 + $0x4b0] sm:$0xff]
    %v4250 = vld [vmem:[#allocation11 + $0x4b8] sm:$0xff]
    %v4251 = vld [vmem:[#allocation11 + $0x4c0] sm:$0xff]
    %v4252 = vld [vmem:[#allocation11 + $0x4c8] sm:$0xff]
    %v4253 = vld [vmem:[#allocation11 + $0x4d0] sm:$0xff]
    %v4254 = vld [vmem:[#allocation11 + $0x4d8] sm:$0xff]
    %v4255 = vld [vmem:[#allocation11 + $0x4e0] sm:$0xff]
    %v4256 = vld [vmem:[#allocation11 + $0x4e8] sm:$0xff]
    %v4257 = vld [vmem:[#allocation11 + $0x4f0] sm:$0xff]
    %v4258 = vld [vmem:[#allocation11 + $0x4f8] sm:$0xff]
    %v4259 = vld [vmem:[#allocation11 + $0x500] sm:$0xff]
    %v4260 = vld [vmem:[#allocation11 + $0x508] sm:$0xff]
    %v4261 = vld [vmem:[#allocation11 + $0x510] sm:$0xff]
    %v4262 = vld [vmem:[#allocation11 + $0x518] sm:$0xff]
    %v4263 = vld [vmem:[#allocation11 + $0x520] sm:$0xff]
    %v4264 = vld [vmem:[#allocation11 + $0x528] sm:$0xff]
    %v4265 = vld [vmem:[#allocation11 + $0x530] sm:$0xff]
    %v4266 = vld [vmem:[#allocation11 + $0x538] sm:$0xff]
    %v4267 = vld [vmem:[#allocation11 + $0x540] sm:$0xff]
    %v4268 = vld [vmem:[#allocation11 + $0x548] sm:$0xff]
    %v4269 = vld [vmem:[#allocation11 + $0x550] sm:$0xff]
    %v4270 = vld [vmem:[#allocation11 + $0x558] sm:$0xff]
    %v4271 = vld [vmem:[#allocation11 + $0x560] sm:$0xff]
    %v4272 = vld [vmem:[#allocation11 + $0x568] sm:$0xff]
    %v4273 = vld [vmem:[#allocation11 + $0x570] sm:$0xff]
    %v4274 = vld [vmem:[#allocation11 + $0x578] sm:$0xff]
    %v4275 = vld [vmem:[#allocation11 + $0x580] sm:$0xff]
    %v4276 = vld [vmem:[#allocation11 + $0x588] sm:$0xff]
    %v4277 = vld [vmem:[#allocation11 + $0x590] sm:$0xff]
    %v4278 = vld [vmem:[#allocation11 + $0x598] sm:$0xff]
    %v4279 = vld [vmem:[#allocation11 + $0x5a0] sm:$0xff]
    %v4280 = vld [vmem:[#allocation11 + $0x5a8] sm:$0xff]
    %v4281 = vld [vmem:[#allocation11 + $0x5b0] sm:$0xff]
    %v4282 = vld [vmem:[#allocation11 + $0x5b8] sm:$0xff]
    %v4283 = vld [vmem:[#allocation11 + $0x5c0] sm:$0xff]
    %v4284 = vld [vmem:[#allocation11 + $0x5c8] sm:$0xff]
    %v4285 = vld [vmem:[#allocation11 + $0x5d0] sm:$0xff]
    %v4286 = vld [vmem:[#allocation11 + $0x5d8] sm:$0xff]
    %v4287 = vld [vmem:[#allocation11 + $0x5e0] sm:$0xff]
    %v4288 = vld [vmem:[#allocation11 + $0x5e8] sm:$0xff]
    %v4289 = vld [vmem:[#allocation11 + $0x5f0] sm:$0xff]
    %v4290 = vld [vmem:[#allocation11 + $0x5f8] sm:$0xff]
    %v4291 = vld [vmem:[#allocation11 + $0x600] sm:$0xff]
    %v4292 = vld [vmem:[#allocation11 + $0x608] sm:$0xff]
    %v4293 = vld [vmem:[#allocation11 + $0x610] sm:$0xff]
    %v4294 = vld [vmem:[#allocation11 + $0x618] sm:$0xff]
    %v4295 = vld [vmem:[#allocation11 + $0x620] sm:$0xff]
    %v4296 = vld [vmem:[#allocation11 + $0x628] sm:$0xff]
    %v4297 = vld [vmem:[#allocation11 + $0x630] sm:$0xff]
    %v4298 = vld [vmem:[#allocation11 + $0x638] sm:$0xff]
    %v4299 = vld [vmem:[#allocation11 + $0x640] sm:$0xff]
    %v4300 = vld [vmem:[#allocation11 + $0x648] sm:$0xff]
    %v4301 = vld [vmem:[#allocation11 + $0x650] sm:$0xff]
    %v4302 = vld [vmem:[#allocation11 + $0x658] sm:$0xff]
    %v4303 = vld [vmem:[#allocation11 + $0x660] sm:$0xff]
    %v4304 = vld [vmem:[#allocation11 + $0x668] sm:$0xff]
    %v4305 = vld [vmem:[#allocation11 + $0x670] sm:$0xff]
    %v4306 = vld [vmem:[#allocation11 + $0x678] sm:$0xff]
    %v4307 = vld [vmem:[#allocation11 + $0x680] sm:$0xff]
    %v4308 = vld [vmem:[#allocation11 + $0x688] sm:$0xff]
    %v4309 = vld [vmem:[#allocation11 + $0x690] sm:$0xff]
    %v4310 = vld [vmem:[#allocation11 + $0x698] sm:$0xff]
    %v4311 = vld [vmem:[#allocation11 + $0x6a0] sm:$0xff]
    %v4312 = vld [vmem:[#allocation11 + $0x6a8] sm:$0xff]
    %v4313 = vld [vmem:[#allocation11 + $0x6b0] sm:$0xff]
    %v4314 = vld [vmem:[#allocation11 + $0x6b8] sm:$0xff]
    %v4315 = vld [vmem:[#allocation11 + $0x6c0] sm:$0xff]
    %v4316 = vld [vmem:[#allocation11 + $0x6c8] sm:$0xff]
    %v4317 = vld [vmem:[#allocation11 + $0x6d0] sm:$0xff]
    %v4318 = vld [vmem:[#allocation11 + $0x6d8] sm:$0xff]
    %v4319 = vld [vmem:[#allocation11 + $0x6e0] sm:$0xff]
    %v4320 = vld [vmem:[#allocation11 + $0x6e8] sm:$0xff]
    %v4321 = vld [vmem:[#allocation11 + $0x6f0] sm:$0xff]
    %v4322 = vld [vmem:[#allocation11 + $0x6f8] sm:$0xff]
    %v4323 = vld [vmem:[#allocation11 + $0x700] sm:$0xff]
    %v4324 = vld [vmem:[#allocation11 + $0x708] sm:$0xff]
    %v4325 = vld [vmem:[#allocation11 + $0x710] sm:$0xff]
    %v4326 = vld [vmem:[#allocation11 + $0x718] sm:$0xff]
    %v4327 = vld [vmem:[#allocation11 + $0x720] sm:$0xff]
    %v4328 = vld [vmem:[#allocation11 + $0x728] sm:$0xff]
    %v4329 = vld [vmem:[#allocation11 + $0x730] sm:$0xff]
    %v4330 = vld [vmem:[#allocation11 + $0x738] sm:$0xff]
    %v4331 = vld [vmem:[#allocation11 + $0x740] sm:$0xff]
    %v4332 = vld [vmem:[#allocation11 + $0x748] sm:$0xff]
    %v4333 = vld [vmem:[#allocation11 + $0x750] sm:$0xff]
    %v4334 = vld [vmem:[#allocation11 + $0x758] sm:$0xff]
    %v4335 = vld [vmem:[#allocation11 + $0x760] sm:$0xff]
    %v4336 = vld [vmem:[#allocation11 + $0x768] sm:$0xff]
    %v4337 = vld [vmem:[#allocation11 + $0x770] sm:$0xff]
    %v4338 = vld [vmem:[#allocation11 + $0x778] sm:$0xff]
    %v4339 = vld [vmem:[#allocation11 + $0x780] sm:$0xff]
    %v4340 = vld [vmem:[#allocation11 + $0x788] sm:$0xff]
    %v4341 = vld [vmem:[#allocation11 + $0x790] sm:$0xff]
    %v4342 = vld [vmem:[#allocation11 + $0x798] sm:$0xff]
    %v4343 = vld [vmem:[#allocation11 + $0x7a0] sm:$0xff]
    %v4344 = vld [vmem:[#allocation11 + $0x7a8] sm:$0xff]
    %v4345 = vld [vmem:[#allocation11 + $0x7b0] sm:$0xff]
    %v4346 = vld [vmem:[#allocation11 + $0x7b8] sm:$0xff]
    %v4347 = vld [vmem:[#allocation11 + $0x7c0] sm:$0xff]
    %v4348 = vld [vmem:[#allocation11 + $0x7c8] sm:$0xff]
    %v4349 = vld [vmem:[#allocation11 + $0x7d0] sm:$0xff]
    %v4350 = vld [vmem:[#allocation11 + $0x7d8] sm:$0xff]
    %v4351 = vld [vmem:[#allocation11 + $0x7e0] sm:$0xff]
    %v4352 = vld [vmem:[#allocation11 + $0x7e8] sm:$0xff]
    %v4353 = vld [vmem:[#allocation11 + $0x7f0] sm:$0xff]
    %v4354 = vld [vmem:[#allocation11 + $0x7f8] sm:$0xff]
    %4355 = vmatprep.subr.mxu0 %v4100
    %4356 = vmatpush1.msra.mxu0 %v4099
    %4357 = vmatprep.subr.mxu0 %v4104
    %4358 = vmatpush1.msra.mxu0 %v4103
    %4359 = vmatprep.subr.mxu0 %v4108
    %4360 = vmatpush1.msra.mxu0 %v4107
    %4361 = vmatprep.subr.mxu0 %v4112
    %4362 = vmatpush1.msra.mxu0 %v4111
    %4363 = vmatprep.subr.mxu0 %v4116
    %4364 = vmatpush1.msra.mxu0 %v4115
    %4365 = vmatprep.subr.mxu0 %v4120
    %4366 = vmatpush1.msra.mxu0 %v4119
    %4367 = vmatprep.subr.mxu0 %v4124
    %4368 = vmatpush1.msra.mxu0 %v4123
    %4369 = vmatprep.subr.mxu0 %v4128
    %4370 = vmatpush1.msra.mxu0 %v4127
    %4371 = vmatprep.subr.mxu0 %v4132
    %4372 = vmatpush1.msra.mxu0 %v4131
    %4373 = vmatprep.subr.mxu0 %v4136
    %4374 = vmatpush1.msra.mxu0 %v4135
    %4375 = vmatprep.subr.mxu0 %v4140
    %4376 = vmatpush1.msra.mxu0 %v4139
    %4377 = vmatprep.subr.mxu0 %v4144
    %4378 = vmatpush1.msra.mxu0 %v4143
    %4379 = vmatprep.subr.mxu0 %v4148
    %4380 = vmatpush1.msra.mxu0 %v4147
    %4381 = vmatprep.subr.mxu0 %v4152
    %4382 = vmatpush1.msra.mxu0 %v4151
    %4383 = vmatprep.subr.mxu0 %v4156
    %4384 = vmatpush1.msra.mxu0 %v4155
    %4385 = vmatprep.subr.mxu0 %v4160
    %4386 = vmatpush1.msra.mxu0 %v4159
    %4387 = vmatprep.subr.mxu0 %v4164
    %4388 = vmatpush1.msra.mxu0 %v4163
    %4389 = vmatprep.subr.mxu0 %v4168
    %4390 = vmatpush1.msra.mxu0 %v4167
    %4391 = vmatprep.subr.mxu0 %v4172
    %4392 = vmatpush1.msra.mxu0 %v4171
    %4393 = vmatprep.subr.mxu0 %v4176
    %4394 = vmatpush1.msra.mxu0 %v4175
    %4395 = vmatprep.subr.mxu0 %v4180
    %4396 = vmatpush1.msra.mxu0 %v4179
    %4397 = vmatprep.subr.mxu0 %v4184
    %4398 = vmatpush1.msra.mxu0 %v4183
    %4399 = vmatprep.subr.mxu0 %v4188
    %4400 = vmatpush1.msra.mxu0 %v4187
    %4401 = vmatprep.subr.mxu0 %v4192
    %4402 = vmatpush1.msra.mxu0 %v4191
    %4403 = vmatprep.subr.mxu0 %v4196
    %4404 = vmatpush1.msra.mxu0 %v4195
    %4405 = vmatprep.subr.mxu0 %v4200
    %4406 = vmatpush1.msra.mxu0 %v4199
    %4407 = vmatprep.subr.mxu0 %v4204
    %4408 = vmatpush1.msra.mxu0 %v4203
    %4409 = vmatprep.subr.mxu0 %v4208
    %4410 = vmatpush1.msra.mxu0 %v4207
    %4411 = vmatprep.subr.mxu0 %v4212
    %4412 = vmatpush1.msra.mxu0 %v4211
    %4413 = vmatprep.subr.mxu0 %v4216
    %4414 = vmatpush1.msra.mxu0 %v4215
    %4415 = vmatprep.subr.mxu0 %v4220
    %4416 = vmatpush1.msra.mxu0 %v4219
    %4417 = vmatprep.subr.mxu0 %v4224
    %4418 = vmatpush1.msra.mxu0 %v4223
    %4419 = vmatprep.mubr.f32.mxu0 %v508
    %4420 = vmatmul.mubr.f32.gmra.mrb[0].mxu0 %v507
    %v4421 = vpop.f32.mrb[0].mxu0
    %v4422 = vadd.f32 0.0, %v4421
    %v4423 = vpop.f32.mrb[0].mxu0
    %v4424 = vadd.f32 0.0, %v4423
    %4425 = vmatprep.mubr.f32.mxu0 %v512
    %4426 = vmatmul.mubr.f32.gmra.mrb[0].mxu0 %v511
    %v4427 = vpop.f32.mrb[0].mxu0
    %v4428 = vadd.f32 0.0, %v4427
    %v4429 = vpop.f32.mrb[0].mxu0
    %v4430 = vadd.f32 0.0, %v4429
    %4431 = vmatprep.mubr.f32.mxu0 %v516
    %4432 = vmatmul.mubr.f32.gmra.mrb[0].mxu0 %v515
    %v4433 = vpop.f32.mrb[0].mxu0
    %v4434 = vadd.f32 0.0, %v4433
    %v4435 = vpop.f32.mrb[0].mxu0
    %v4436 = vadd.f32 0.0, %v4435
    %4437 = vmatprep.mubr.f32.mxu0 %v520
    %4438 = vmatmul.mubr.f32.gmra.mrb[0].mxu0 %v519
    %v4439 = vpop.f32.mrb[0].mxu0
    %v4440 = vadd.f32 0.0, %v4439
    %v4441 = vpop.f32.mrb[0].mxu0
    %v4442 = vadd.f32 0.0, %v4441
    %4443 = vmatprep.mubr.f32.mxu0 %v524
    %4444 = vmatmul.mubr.f32.gmra.mrb[0].mxu0 %v523
    %v4445 = vpop.f32.mrb[0].mxu0
    %v4446 = vadd.f32 0.0, %v4445
    %v4447 = vpop.f32.mrb[0].mxu0
    %v4448 = vadd.f32 0.0, %v4447
    %4449 = vmatprep.mubr.f32.mxu0 %v528
    %4450 = vmatmul.mubr.f32.gmra.mrb[0].mxu0 %v527
    %v4451 = vpop.f32.mrb[0].mxu0
    %v4452 = vadd.f32 0.0, %v4451
    %v4453 = vpop.f32.mrb[0].mxu0
    %v4454 = vadd.f32 0.0, %v4453
    %4455 = vmatprep.mubr.f32.mxu0 %v532
    %4456 = vmatmul.mubr.f32.gmra.mrb[0].mxu0 %v531
    %v4457 = vpop.f32.mrb[0].mxu0
    %v4458 = vadd.f32 0.0, %v4457
    %v4459 = vpop.f32.mrb[0].mxu0
    %v4460 = vadd.f32 0.0, %v4459
    %4461 = vmatprep.mubr.f32.mxu0 %v536
    %4462 = vmatmul.mubr.f32.gmra.mrb[0].mxu0 %v535
    %v4463 = vpop.f32.mrb[0].mxu0
    %v4464 = vadd.f32 0.0, %v4463
    %v4465 = vpop.f32.mrb[0].mxu0
    %v4466 = vadd.f32 0.0, %v4465
    %4467 = vmatprep.mubr.f32.mxu0 %v540
    %4468 = vmatmul.mubr.f32.gmra.mrb[0].mxu0 %v539
    %v4469 = vpop.f32.mrb[0].mxu0
    %v4470 = vadd.f32 0.0, %v4469
    %v4471 = vpop.f32.mrb[0].mxu0
    %v4472 = vadd.f32 0.0, %v4471
    %4473 = vmatprep.mubr.f32.mxu0 %v544
    %4474 = vmatmul.mubr.f32.gmra.mrb[0].mxu0 %v543
    %v4475 = vpop.f32.mrb[0].mxu0
    %v4476 = vadd.f32 0.0, %v4475
    %v4477 = vpop.f32.mrb[0].mxu0
    %v4478 = vadd.f32 0.0, %v4477
    %4479 = vmatprep.mubr.f32.mxu0 %v548
    %4480 = vmatmul.mubr.f32.gmra.mrb[0].mxu0 %v547
    %v4481 = vpop.f32.mrb[0].mxu0
    %v4482 = vadd.f32 0.0, %v4481
    %v4483 = vpop.f32.mrb[0].mxu0
    %v4484 = vadd.f32 0.0, %v4483
    %4485 = vmatprep.mubr.f32.mxu0 %v552
    %4486 = vmatmul.mubr.f32.gmra.mrb[0].mxu0 %v551
    %v4487 = vpop.f32.mrb[0].mxu0
    %v4488 = vadd.f32 0.0, %v4487
    %v4489 = vpop.f32.mrb[0].mxu0
    %v4490 = vadd.f32 0.0, %v4489
    %4491 = vmatprep.mubr.f32.mxu0 %v556
    %4492 = vmatmul.mubr.f32.gmra.mrb[0].mxu0 %v555
    %v4493 = vpop.f32.mrb[0].mxu0
    %v4494 = vadd.f32 0.0, %v4493
    %v4495 = vpop.f32.mrb[0].mxu0
    %v4496 = vadd.f32 0.0, %v4495
    %4497 = vmatprep.mubr.f32.mxu0 %v560
    %4498 = vmatmul.mubr.f32.gmra.mrb[0].mxu0 %v559
    %v4499 = vpop.f32.mrb[0].mxu0
    %v4500 = vadd.f32 0.0, %v4499
    %v4501 = vpop.f32.mrb[0].mxu0
    %v4502 = vadd.f32 0.0, %v4501
    %4503 = vmatprep.mubr.f32.mxu0 %v564
    %4504 = vmatmul.mubr.f32.gmra.mrb[0].mxu0 %v563
    %v4505 = vpop.f32.mrb[0].mxu0
    %v4506 = vadd.f32 0.0, %v4505
    %v4507 = vpop.f32.mrb[0].mxu0
    %v4508 = vadd.f32 0.0, %v4507
    %4509 = vmatprep.mubr.f32.mxu0 %v568
    %4510 = vmatmul.mubr.f32.gmra.mrb[0].mxu0 %v567
    %v4511 = vpop.f32.mrb[0].mxu0
    %v4512 = vadd.f32 0.0, %v4511
    %v4513 = vpop.f32.mrb[0].mxu0
    %v4514 = vadd.f32 0.0, %v4513
    %4515 = vmatprep.mubr.f32.mxu0 %v572
    %4516 = vmatmul.mubr.f32.gmra.mrb[0].mxu0 %v571
    %v4517 = vpop.f32.mrb[0].mxu0
    %v4518 = vadd.f32 0.0, %v4517
    %v4519 = vpop.f32.mrb[0].mxu0
    %v4520 = vadd.f32 0.0, %v4519
    %4521 = vmatprep.mubr.f32.mxu0 %v576
    %4522 = vmatmul.mubr.f32.gmra.mrb[0].mxu0 %v575
    %v4523 = vpop.f32.mrb[0].mxu0
    %v4524 = vadd.f32 0.0, %v4523
    %v4525 = vpop.f32.mrb[0].mxu0
    %v4526 = vadd.f32 0.0, %v4525
    %4527 = vmatprep.mubr.f32.mxu0 %v580
    %4528 = vmatmul.mubr.f32.gmra.mrb[0].mxu0 %v579
    %v4529 = vpop.f32.mrb[0].mxu0
    %v4530 = vadd.f32 0.0, %v4529
    %v4531 = vpop.f32.mrb[0].mxu0
    %v4532 = vadd.f32 0.0, %v4531
    %4533 = vmatprep.mubr.f32.mxu0 %v584
    %4534 = vmatmul.mubr.f32.gmra.mrb[0].mxu0 %v583
    %v4535 = vpop.f32.mrb[0].mxu0
    %v4536 = vadd.f32 0.0, %v4535
    %v4537 = vpop.f32.mrb[0].mxu0
    %v4538 = vadd.f32 0.0, %v4537
    %4539 = vmatprep.mubr.f32.mxu0 %v588
    %4540 = vmatmul.mubr.f32.gmra.mrb[0].mxu0 %v587
    %v4541 = vpop.f32.mrb[0].mxu0
    %v4542 = vadd.f32 0.0, %v4541
    %v4543 = vpop.f32.mrb[0].mxu0
    %v4544 = vadd.f32 0.0, %v4543
    %4545 = vmatprep.mubr.f32.mxu0 %v592
    %4546 = vmatmul.mubr.f32.gmra.mrb[0].mxu0 %v591
    %v4547 = vpop.f32.mrb[0].mxu0
    %v4548 = vadd.f32 0.0, %v4547
    %v4549 = vpop.f32.mrb[0].mxu0
    %v4550 = vadd.f32 0.0, %v4549
    %4551 = vmatprep.mubr.f32.mxu0 %v596
    %4552 = vmatmul.mubr.f32.gmra.mrb[0].mxu0 %v595
    %v4553 = vpop.f32.mrb[0].mxu0
    %v4554 = vadd.f32 0.0, %v4553
    %v4555 = vpop.f32.mrb[0].mxu0
    %v4556 = vadd.f32 0.0, %v4555
    %4557 = vmatprep.mubr.f32.mxu0 %v600
    %4558 = vmatmul.mubr.f32.gmra.mrb[0].mxu0 %v599
    %v4559 = vpop.f32.mrb[0].mxu0
    %v4560 = vadd.f32 0.0, %v4559
    %v4561 = vpop.f32.mrb[0].mxu0
    %v4562 = vadd.f32 0.0, %v4561
    %4563 = vmatprep.mubr.f32.mxu0 %v604
    %4564 = vmatmul.mubr.f32.gmra.mrb[0].mxu0 %v603
    %v4565 = vpop.f32.mrb[0].mxu0
    %v4566 = vadd.f32 0.0, %v4565
    %v4567 = vpop.f32.mrb[0].mxu0
    %v4568 = vadd.f32 0.0, %v4567
    %4569 = vmatprep.mubr.f32.mxu0 %v608
    %4570 = vmatmul.mubr.f32.gmra.mrb[0].mxu0 %v607
    %v4571 = vpop.f32.mrb[0].mxu0
    %v4572 = vadd.f32 0.0, %v4571
    %v4573 = vpop.f32.mrb[0].mxu0
    %v4574 = vadd.f32 0.0, %v4573
    %4575 = vmatprep.mubr.f32.mxu0 %v612
    %4576 = vmatmul.mubr.f32.gmra.mrb[0].mxu0 %v611
    %v4577 = vpop.f32.mrb[0].mxu0
    %v4578 = vadd.f32 0.0, %v4577
    %v4579 = vpop.f32.mrb[0].mxu0
    %v4580 = vadd.f32 0.0, %v4579
    %4581 = vmatprep.mubr.f32.mxu0 %v616
    %4582 = vmatmul.mubr.f32.gmra.mrb[0].mxu0 %v615
    %v4583 = vpop.f32.mrb[0].mxu0
    %v4584 = vadd.f32 0.0, %v4583
    %v4585 = vpop.f32.mrb[0].mxu0
    %v4586 = vadd.f32 0.0, %v4585
    %4587 = vmatprep.mubr.f32.mxu0 %v620
    %4588 = vmatmul.mubr.f32.gmra.mrb[0].mxu0 %v619
    %v4589 = vpop.f32.mrb[0].mxu0
    %v4590 = vadd.f32 0.0, %v4589
    %v4591 = vpop.f32.mrb[0].mxu0
    %v4592 = vadd.f32 0.0, %v4591
    %4593 = vmatprep.mubr.f32.mxu0 %v624
    %4594 = vmatmul.mubr.f32.gmra.mrb[0].mxu0 %v623
    %v4595 = vpop.f32.mrb[0].mxu0
    %v4596 = vadd.f32 0.0, %v4595
    %v4597 = vpop.f32.mrb[0].mxu0
    %v4598 = vadd.f32 0.0, %v4597
    %4599 = vmatprep.mubr.f32.mxu0 %v628
    %4600 = vmatmul.mubr.f32.gmra.mrb[0].mxu0 %v627
    %v4601 = vpop.f32.mrb[0].mxu0
    %v4602 = vadd.f32 0.0, %v4601
    %v4603 = vpop.f32.mrb[0].mxu0
    %v4604 = vadd.f32 0.0, %v4603
    %4605 = vmatprep.mubr.f32.mxu0 %v632
    %4606 = vmatmul.mubr.f32.gmra.mrb[0].mxu0 %v631
    %v4607 = vpop.f32.mrb[0].mxu0
    %v4608 = vadd.f32 0.0, %v4607
    %v4609 = vpop.f32.mrb[0].mxu0
    %v4610 = vadd.f32 0.0, %v4609
    %4611 = vdwg.mxu0
    %4612 = vmatprep.subr.mxu0 %v4228
    %4613 = vmatpush1.msra.mxu0 %v4227
    %4614 = vmatprep.subr.mxu0 %v4232
    %4615 = vmatpush1.msra.mxu0 %v4231
    %4616 = vmatprep.subr.mxu0 %v4236
    %4617 = vmatpush1.msra.mxu0 %v4235
    %4618 = vmatprep.subr.mxu0 %v4240
    %4619 = vmatpush1.msra.mxu0 %v4239
    %4620 = vmatprep.subr.mxu0 %v4244
    %4621 = vmatpush1.msra.mxu0 %v4243
    %4622 = vmatprep.subr.mxu0 %v4248
    %4623 = vmatpush1.msra.mxu0 %v4247
    %4624 = vmatprep.subr.mxu0 %v4252
    %4625 = vmatpush1.msra.mxu0 %v4251
    %4626 = vmatprep.subr.mxu0 %v4256
    %4627 = vmatpush1.msra.mxu0 %v4255
    %4628 = vmatprep.subr.mxu0 %v4260
    %4629 = vmatpush1.msra.mxu0 %v4259
    %4630 = vmatprep.subr.mxu0 %v4264
    %4631 = vmatpush1.msra.mxu0 %v4263
    %4632 = vmatprep.subr.mxu0 %v4268
    %4633 = vmatpush1.msra.mxu0 %v4267
    %4634 = vmatprep.subr.mxu0 %v4272
    %4635 = vmatpush1.msra.mxu0 %v4271
    %4636 = vmatprep.subr.mxu0 %v4276
    %4637 = vmatpush1.msra.mxu0 %v4275
    %4638 = vmatprep.subr.mxu0 %v4280
    %4639 = vmatpush1.msra.mxu0 %v4279
    %4640 = vmatprep.subr.mxu0 %v4284
    %4641 = vmatpush1.msra.mxu0 %v4283
    %4642 = vmatprep.subr.mxu0 %v4288
    %4643 = vmatpush1.msra.mxu0 %v4287
    %4644 = vmatprep.subr.mxu0 %v4292
    %4645 = vmatpush1.msra.mxu0 %v4291
    %4646 = vmatprep.subr.mxu0 %v4296
    %4647 = vmatpush1.msra.mxu0 %v4295
    %4648 = vmatprep.subr.mxu0 %v4300
    %4649 = vmatpush1.msra.mxu0 %v4299
    %4650 = vmatprep.subr.mxu0 %v4304
    %4651 = vmatpush1.msra.mxu0 %v4303
    %4652 = vmatprep.subr.mxu0 %v4308
    %4653 = vmatpush1.msra.mxu0 %v4307
    %4654 = vmatprep.subr.mxu0 %v4312
    %4655 = vmatpush1.msra.mxu0 %v4311
    %4656 = vmatprep.subr.mxu0 %v4316
    %4657 = vmatpush1.msra.mxu0 %v4315
    %4658 = vmatprep.subr.mxu0 %v4320
    %4659 = vmatpush1.msra.mxu0 %v4319
    %4660 = vmatprep.subr.mxu0 %v4324
    %4661 = vmatpush1.msra.mxu0 %v4323
    %4662 = vmatprep.subr.mxu0 %v4328
    %4663 = vmatpush1.msra.mxu0 %v4327
    %4664 = vmatprep.subr.mxu0 %v4332
    %4665 = vmatpush1.msra.mxu0 %v4331
    %4666 = vmatprep.subr.mxu0 %v4336
    %4667 = vmatpush1.msra.mxu0 %v4335
    %4668 = vmatprep.subr.mxu0 %v4340
    %4669 = vmatpush1.msra.mxu0 %v4339
    %4670 = vmatprep.subr.mxu0 %v4344
    %4671 = vmatpush1.msra.mxu0 %v4343
    %4672 = vmatprep.subr.mxu0 %v4348
    %4673 = vmatpush1.msra.mxu0 %v4347
    %4674 = vmatprep.subr.mxu0 %v4352
    %4675 = vmatpush1.msra.mxu0 %v4351
    %4676 = vmatprep.mubr.f32.mxu0 %v510
    %4677 = vmatmul.mubr.f32.gmra.mrb[0].mxu0 %v509
    %v4678 = vpop.f32.mrb[0].mxu0
    %v4679 = vadd.f32 %v4422, %v4678
    %v4680 = vpop.f32.mrb[0].mxu0
    %v4681 = vadd.f32 %v4424, %v4680
    %4682 = vmatprep.mubr.f32.mxu0 %v514
    %4683 = vmatmul.mubr.f32.gmra.mrb[0].mxu0 %v513
    %v4684 = vpop.f32.mrb[0].mxu0
    %v4685 = vadd.f32 %v4428, %v4684
    %v4686 = vpop.f32.mrb[0].mxu0
    %v4687 = vadd.f32 %v4430, %v4686
    %4688 = vmatprep.mubr.f32.mxu0 %v518
    %4689 = vmatmul.mubr.f32.gmra.mrb[0].mxu0 %v517
    %v4690 = vpop.f32.mrb[0].mxu0
    %v4691 = vadd.f32 %v4434, %v4690
    %v4692 = vpop.f32.mrb[0].mxu0
    %v4693 = vadd.f32 %v4436, %v4692
    %4694 = vmatprep.mubr.f32.mxu0 %v522
    %4695 = vmatmul.mubr.f32.gmra.mrb[0].mxu0 %v521
    %v4696 = vpop.f32.mrb[0].mxu0
    %v4697 = vadd.f32 %v4440, %v4696
    %v4698 = vpop.f32.mrb[0].mxu0
    %v4699 = vadd.f32 %v4442, %v4698
    %4700 = vmatprep.mubr.f32.mxu0 %v526
    %4701 = vmatmul.mubr.f32.gmra.mrb[0].mxu0 %v525
    %v4702 = vpop.f32.mrb[0].mxu0
    %v4703 = vadd.f32 %v4446, %v4702
    %v4704 = vpop.f32.mrb[0].mxu0
    %v4705 = vadd.f32 %v4448, %v4704
    %4706 = vmatprep.mubr.f32.mxu0 %v530
    %4707 = vmatmul.mubr.f32.gmra.mrb[0].mxu0 %v529
    %v4708 = vpop.f32.mrb[0].mxu0
    %v4709 = vadd.f32 %v4452, %v4708
    %v4710 = vpop.f32.mrb[0].mxu0
    %v4711 = vadd.f32 %v4454, %v4710
    %4712 = vmatprep.mubr.f32.mxu0 %v534
    %4713 = vmatmul.mubr.f32.gmra.mrb[0].mxu0 %v533
    %v4714 = vpop.f32.mrb[0].mxu0
    %v4715 = vadd.f32 %v4458, %v4714
    %v4716 = vpop.f32.mrb[0].mxu0
    %v4717 = vadd.f32 %v4460, %v4716
    %4718 = vmatprep.mubr.f32.mxu0 %v538
    %4719 = vmatmul.mubr.f32.gmra.mrb[0].mxu0 %v537
    %v4720 = vpop.f32.mrb[0].mxu0
    %v4721 = vadd.f32 %v4464, %v4720
    %v4722 = vpop.f32.mrb[0].mxu0
    %v4723 = vadd.f32 %v4466, %v4722
    %4724 = vmatprep.mubr.f32.mxu0 %v542
    %4725 = vmatmul.mubr.f32.gmra.mrb[0].mxu0 %v541
    %v4726 = vpop.f32.mrb[0].mxu0
    %v4727 = vadd.f32 %v4470, %v4726
    %v4728 = vpop.f32.mrb[0].mxu0
    %v4729 = vadd.f32 %v4472, %v4728
    %4730 = vmatprep.mubr.f32.mxu0 %v546
    %4731 = vmatmul.mubr.f32.gmra.mrb[0].mxu0 %v545
    %v4732 = vpop.f32.mrb[0].mxu0
    %v4733 = vadd.f32 %v4476, %v4732
    %v4734 = vpop.f32.mrb[0].mxu0
    %v4735 = vadd.f32 %v4478, %v4734
    %4736 = vmatprep.mubr.f32.mxu0 %v550
    %4737 = vmatmul.mubr.f32.gmra.mrb[0].mxu0 %v549
    %v4738 = vpop.f32.mrb[0].mxu0
    %v4739 = vadd.f32 %v4482, %v4738
    %v4740 = vpop.f32.mrb[0].mxu0
    %v4741 = vadd.f32 %v4484, %v4740
    %4742 = vmatprep.mubr.f32.mxu0 %v554
    %4743 = vmatmul.mubr.f32.gmra.mrb[0].mxu0 %v553
    %v4744 = vpop.f32.mrb[0].mxu0
    %v4745 = vadd.f32 %v4488, %v4744
    %v4746 = vpop.f32.mrb[0].mxu0
    %v4747 = vadd.f32 %v4490, %v4746
    %4748 = vmatprep.mubr.f32.mxu0 %v558
    %4749 = vmatmul.mubr.f32.gmra.mrb[0].mxu0 %v557
    %v4750 = vpop.f32.mrb[0].mxu0
    %v4751 = vadd.f32 %v4494, %v4750
    %v4752 = vpop.f32.mrb[0].mxu0
    %v4753 = vadd.f32 %v4496, %v4752
    %4754 = vmatprep.mubr.f32.mxu0 %v562
    %4755 = vmatmul.mubr.f32.gmra.mrb[0].mxu0 %v561
    %v4756 = vpop.f32.mrb[0].mxu0
    %v4757 = vadd.f32 %v4500, %v4756
    %v4758 = vpop.f32.mrb[0].mxu0
    %v4759 = vadd.f32 %v4502, %v4758
    %4760 = vmatprep.mubr.f32.mxu0 %v566
    %4761 = vmatmul.mubr.f32.gmra.mrb[0].mxu0 %v565
    %v4762 = vpop.f32.mrb[0].mxu0
    %v4763 = vadd.f32 %v4506, %v4762
    %v4764 = vpop.f32.mrb[0].mxu0
    %v4765 = vadd.f32 %v4508, %v4764
    %4766 = vmatprep.mubr.f32.mxu0 %v570
    %4767 = vmatmul.mubr.f32.gmra.mrb[0].mxu0 %v569
    %v4768 = vpop.f32.mrb[0].mxu0
    %v4769 = vadd.f32 %v4512, %v4768
    %v4770 = vpop.f32.mrb[0].mxu0
    %v4771 = vadd.f32 %v4514, %v4770
    %4772 = vmatprep.mubr.f32.mxu0 %v574
    %4773 = vmatmul.mubr.f32.gmra.mrb[0].mxu0 %v573
    %v4774 = vpop.f32.mrb[0].mxu0
    %v4775 = vadd.f32 %v4518, %v4774
    %v4776 = vpop.f32.mrb[0].mxu0
    %v4777 = vadd.f32 %v4520, %v4776
    %4778 = vmatprep.mubr.f32.mxu0 %v578
    %4779 = vmatmul.mubr.f32.gmra.mrb[0].mxu0 %v577
    %v4780 = vpop.f32.mrb[0].mxu0
    %v4781 = vadd.f32 %v4524, %v4780
    %v4782 = vpop.f32.mrb[0].mxu0
    %v4783 = vadd.f32 %v4526, %v4782
    %4784 = vmatprep.mubr.f32.mxu0 %v582
    %4785 = vmatmul.mubr.f32.gmra.mrb[0].mxu0 %v581
    %v4786 = vpop.f32.mrb[0].mxu0
    %v4787 = vadd.f32 %v4530, %v4786
    %v4788 = vpop.f32.mrb[0].mxu0
    %v4789 = vadd.f32 %v4532, %v4788
    %4790 = vmatprep.mubr.f32.mxu0 %v586
    %4791 = vmatmul.mubr.f32.gmra.mrb[0].mxu0 %v585
    %v4792 = vpop.f32.mrb[0].mxu0
    %v4793 = vadd.f32 %v4536, %v4792
    %v4794 = vpop.f32.mrb[0].mxu0
    %v4795 = vadd.f32 %v4538, %v4794
    %4796 = vmatprep.mubr.f32.mxu0 %v590
    %4797 = vmatmul.mubr.f32.gmra.mrb[0].mxu0 %v589
    %v4798 = vpop.f32.mrb[0].mxu0
    %v4799 = vadd.f32 %v4542, %v4798
    %v4800 = vpop.f32.mrb[0].mxu0
    %v4801 = vadd.f32 %v4544, %v4800
    %4802 = vmatprep.mubr.f32.mxu0 %v594
    %4803 = vmatmul.mubr.f32.gmra.mrb[0].mxu0 %v593
    %v4804 = vpop.f32.mrb[0].mxu0
    %v4805 = vadd.f32 %v4548, %v4804
    %v4806 = vpop.f32.mrb[0].mxu0
    %v4807 = vadd.f32 %v4550, %v4806
    %4808 = vmatprep.mubr.f32.mxu0 %v598
    %4809 = vmatmul.mubr.f32.gmra.mrb[0].mxu0 %v597
    %v4810 = vpop.f32.mrb[0].mxu0
    %v4811 = vadd.f32 %v4554, %v4810
    %v4812 = vpop.f32.mrb[0].mxu0
    %v4813 = vadd.f32 %v4556, %v4812
    %4814 = vmatprep.mubr.f32.mxu0 %v602
    %4815 = vmatmul.mubr.f32.gmra.mrb[0].mxu0 %v601
    %v4816 = vpop.f32.mrb[0].mxu0
    %v4817 = vadd.f32 %v4560, %v4816
    %v4818 = vpop.f32.mrb[0].mxu0
    %v4819 = vadd.f32 %v4562, %v4818
    %4820 = vmatprep.mubr.f32.mxu0 %v606
    %4821 = vmatmul.mubr.f32.gmra.mrb[0].mxu0 %v605
    %v4822 = vpop.f32.mrb[0].mxu0
    %v4823 = vadd.f32 %v4566, %v4822
    %v4824 = vpop.f32.mrb[0].mxu0
    %v4825 = vadd.f32 %v4568, %v4824
    %4826 = vmatprep.mubr.f32.mxu0 %v610
    %4827 = vmatmul.mubr.f32.gmra.mrb[0].mxu0 %v609
    %v4828 = vpop.f32.mrb[0].mxu0
    %v4829 = vadd.f32 %v4572, %v4828
    %v4830 = vpop.f32.mrb[0].mxu0
    %v4831 = vadd.f32 %v4574, %v4830
    %4832 = vmatprep.mubr.f32.mxu0 %v614
    %4833 = vmatmul.mubr.f32.gmra.mrb[0].mxu0 %v613
    %v4834 = vpop.f32.mrb[0].mxu0
    %v4835 = vadd.f32 %v4578, %v4834
    %v4836 = vpop.f32.mrb[0].mxu0
    %v4837 = vadd.f32 %v4580, %v4836
    %4838 = vmatprep.mubr.f32.mxu0 %v618
    %4839 = vmatmul.mubr.f32.gmra.mrb[0].mxu0 %v617
    %v4840 = vpop.f32.mrb[0].mxu0
    %v4841 = vadd.f32 %v4584, %v4840
    %v4842 = vpop.f32.mrb[0].mxu0
    %v4843 = vadd.f32 %v4586, %v4842
    %4844 = vmatprep.mubr.f32.mxu0 %v622
    %4845 = vmatmul.mubr.f32.gmra.mrb[0].mxu0 %v621
    %v4846 = vpop.f32.mrb[0].mxu0
    %v4847 = vadd.f32 %v4590, %v4846
    %v4848 = vpop.f32.mrb[0].mxu0
    %v4849 = vadd.f32 %v4592, %v4848
    %4850 = vmatprep.mubr.f32.mxu0 %v626
    %4851 = vmatmul.mubr.f32.gmra.mrb[0].mxu0 %v625
    %v4852 = vpop.f32.mrb[0].mxu0
    %v4853 = vadd.f32 %v4596, %v4852
    %v4854 = vpop.f32.mrb[0].mxu0
    %v4855 = vadd.f32 %v4598, %v4854
    %4856 = vmatprep.mubr.f32.mxu0 %v630
    %4857 = vmatmul.mubr.f32.gmra.mrb[0].mxu0 %v629
    %v4858 = vpop.f32.mrb[0].mxu0
    %v4859 = vadd.f32 %v4602, %v4858
    %v4860 = vpop.f32.mrb[0].mxu0
    %v4861 = vadd.f32 %v4604, %v4860
    %4862 = vmatprep.mubr.f32.mxu0 %v634
    %4863 = vmatmul.mubr.f32.gmra.mrb[0].mxu0 %v633
    %v4864 = vpop.f32.mrb[0].mxu0
    %v4865 = vadd.f32 %v4608, %v4864
    %v4866 = vpop.f32.mrb[0].mxu0
    %v4867 = vadd.f32 %v4610, %v4866
    %4868 = vdwg.mxu0
    %4869 = vmatprep.subr.mxu0 %v4102
    %4870 = vmatpush1.msra.mxu0 %v4101
    %4871 = vmatprep.subr.mxu0 %v4106
    %4872 = vmatpush1.msra.mxu0 %v4105
    %4873 = vmatprep.subr.mxu0 %v4110
    %4874 = vmatpush1.msra.mxu0 %v4109
    %4875 = vmatprep.subr.mxu0 %v4114
    %4876 = vmatpush1.msra.mxu0 %v4113
    %4877 = vmatprep.subr.mxu0 %v4118
    %4878 = vmatpush1.msra.mxu0 %v4117
    %4879 = vmatprep.subr.mxu0 %v4122
    %4880 = vmatpush1.msra.mxu0 %v4121
    %4881 = vmatprep.subr.mxu0 %v4126
    %4882 = vmatpush1.msra.mxu0 %v4125
    %4883 = vmatprep.subr.mxu0 %v4130
    %4884 = vmatpush1.msra.mxu0 %v4129
    %4885 = vmatprep.subr.mxu0 %v4134
    %4886 = vmatpush1.msra.mxu0 %v4133
    %4887 = vmatprep.subr.mxu0 %v4138
    %4888 = vmatpush1.msra.mxu0 %v4137
    %4889 = vmatprep.subr.mxu0 %v4142
    %4890 = vmatpush1.msra.mxu0 %v4141
    %4891 = vmatprep.subr.mxu0 %v4146
    %4892 = vmatpush1.msra.mxu0 %v4145
    %4893 = vmatprep.subr.mxu0 %v4150
    %4894 = vmatpush1.msra.mxu0 %v4149
    %4895 = vmatprep.subr.mxu0 %v4154
    %4896 = vmatpush1.msra.mxu0 %v4153
    %4897 = vmatprep.subr.mxu0 %v4158
    %4898 = vmatpush1.msra.mxu0 %v4157
    %4899 = vmatprep.subr.mxu0 %v4162
    %4900 = vmatpush1.msra.mxu0 %v4161
    %4901 = vmatprep.subr.mxu0 %v4166
    %4902 = vmatpush1.msra.mxu0 %v4165
    %4903 = vmatprep.subr.mxu0 %v4170
    %4904 = vmatpush1.msra.mxu0 %v4169
    %4905 = vmatprep.subr.mxu0 %v4174
    %4906 = vmatpush1.msra.mxu0 %v4173
    %4907 = vmatprep.subr.mxu0 %v4178
    %4908 = vmatpush1.msra.mxu0 %v4177
    %4909 = vmatprep.subr.mxu0 %v4182
    %4910 = vmatpush1.msra.mxu0 %v4181
    %4911 = vmatprep.subr.mxu0 %v4186
    %4912 = vmatpush1.msra.mxu0 %v4185
    %4913 = vmatprep.subr.mxu0 %v4190
    %4914 = vmatpush1.msra.mxu0 %v4189
    %4915 = vmatprep.subr.mxu0 %v4194
    %4916 = vmatpush1.msra.mxu0 %v4193
    %4917 = vmatprep.subr.mxu0 %v4198
    %4918 = vmatpush1.msra.mxu0 %v4197
    %4919 = vmatprep.subr.mxu0 %v4202
    %4920 = vmatpush1.msra.mxu0 %v4201
    %4921 = vmatprep.subr.mxu0 %v4206
    %4922 = vmatpush1.msra.mxu0 %v4205
    %4923 = vmatprep.subr.mxu0 %v4210
    %4924 = vmatpush1.msra.mxu0 %v4209
    %4925 = vmatprep.subr.mxu0 %v4214
    %4926 = vmatpush1.msra.mxu0 %v4213
    %4927 = vmatprep.subr.mxu0 %v4218
    %4928 = vmatpush1.msra.mxu0 %v4217
    %4929 = vmatprep.subr.mxu0 %v4222
    %4930 = vmatpush1.msra.mxu0 %v4221
    %4931 = vmatprep.subr.mxu0 %v4226
    %4932 = vmatpush1.msra.mxu0 %v4225
    %4933 = vmatprep.mubr.f32.mxu0 %v508
    %4934 = vmatmul.mubr.f32.gmra.mrb[0].mxu0 %v507
    %v4935 = vpop.f32.mrb[0].mxu0
    %v4936 = vadd.f32 0.0, %v4935
    %v4937 = vpop.f32.mrb[0].mxu0
    %v4938 = vadd.f32 0.0, %v4937
    %4939 = vmatprep.mubr.f32.mxu0 %v512
    %4940 = vmatmul.mubr.f32.gmra.mrb[0].mxu0 %v511
    %v4941 = vpop.f32.mrb[0].mxu0
    %v4942 = vadd.f32 0.0, %v4941
    %v4943 = vpop.f32.mrb[0].mxu0
    %v4944 = vadd.f32 0.0, %v4943
    %4945 = vmatprep.mubr.f32.mxu0 %v516
    %4946 = vmatmul.mubr.f32.gmra.mrb[0].mxu0 %v515
    %v4947 = vpop.f32.mrb[0].mxu0
    %v4948 = vadd.f32 0.0, %v4947
    %v4949 = vpop.f32.mrb[0].mxu0
    %v4950 = vadd.f32 0.0, %v4949
    %4951 = vmatprep.mubr.f32.mxu0 %v520
    %4952 = vmatmul.mubr.f32.gmra.mrb[0].mxu0 %v519
    %v4953 = vpop.f32.mrb[0].mxu0
    %v4954 = vadd.f32 0.0, %v4953
    %v4955 = vpop.f32.mrb[0].mxu0
    %v4956 = vadd.f32 0.0, %v4955
    %4957 = vmatprep.mubr.f32.mxu0 %v524
    %4958 = vmatmul.mubr.f32.gmra.mrb[0].mxu0 %v523
    %v4959 = vpop.f32.mrb[0].mxu0
    %v4960 = vadd.f32 0.0, %v4959
    %v4961 = vpop.f32.mrb[0].mxu0
    %v4962 = vadd.f32 0.0, %v4961
    %4963 = vmatprep.mubr.f32.mxu0 %v528
    %4964 = vmatmul.mubr.f32.gmra.mrb[0].mxu0 %v527
    %v4965 = vpop.f32.mrb[0].mxu0
    %v4966 = vadd.f32 0.0, %v4965
    %v4967 = vpop.f32.mrb[0].mxu0
    %v4968 = vadd.f32 0.0, %v4967
    %4969 = vmatprep.mubr.f32.mxu0 %v532
    %4970 = vmatmul.mubr.f32.gmra.mrb[0].mxu0 %v531
    %v4971 = vpop.f32.mrb[0].mxu0
    %v4972 = vadd.f32 0.0, %v4971
    %v4973 = vpop.f32.mrb[0].mxu0
    %v4974 = vadd.f32 0.0, %v4973
    %4975 = vmatprep.mubr.f32.mxu0 %v536
    %4976 = vmatmul.mubr.f32.gmra.mrb[0].mxu0 %v535
    %v4977 = vpop.f32.mrb[0].mxu0
    %v4978 = vadd.f32 0.0, %v4977
    %v4979 = vpop.f32.mrb[0].mxu0
    %v4980 = vadd.f32 0.0, %v4979
    %4981 = vmatprep.mubr.f32.mxu0 %v540
    %4982 = vmatmul.mubr.f32.gmra.mrb[0].mxu0 %v539
    %v4983 = vpop.f32.mrb[0].mxu0
    %v4984 = vadd.f32 0.0, %v4983
    %v4985 = vpop.f32.mrb[0].mxu0
    %v4986 = vadd.f32 0.0, %v4985
    %4987 = vmatprep.mubr.f32.mxu0 %v544
    %4988 = vmatmul.mubr.f32.gmra.mrb[0].mxu0 %v543
    %v4989 = vpop.f32.mrb[0].mxu0
    %v4990 = vadd.f32 0.0, %v4989
    %v4991 = vpop.f32.mrb[0].mxu0
    %v4992 = vadd.f32 0.0, %v4991
    %4993 = vmatprep.mubr.f32.mxu0 %v548
    %4994 = vmatmul.mubr.f32.gmra.mrb[0].mxu0 %v547
    %v4995 = vpop.f32.mrb[0].mxu0
    %v4996 = vadd.f32 0.0, %v4995
    %v4997 = vpop.f32.mrb[0].mxu0
    %v4998 = vadd.f32 0.0, %v4997
    %4999 = vmatprep.mubr.f32.mxu0 %v552
    %5000 = vmatmul.mubr.f32.gmra.mrb[0].mxu0 %v551
    %v5001 = vpop.f32.mrb[0].mxu0
    %v5002 = vadd.f32 0.0, %v5001
    %v5003 = vpop.f32.mrb[0].mxu0
    %v5004 = vadd.f32 0.0, %v5003
    %5005 = vmatprep.mubr.f32.mxu0 %v556
    %5006 = vmatmul.mubr.f32.gmra.mrb[0].mxu0 %v555
    %v5007 = vpop.f32.mrb[0].mxu0
    %v5008 = vadd.f32 0.0, %v5007
    %v5009 = vpop.f32.mrb[0].mxu0
    %v5010 = vadd.f32 0.0, %v5009
    %5011 = vmatprep.mubr.f32.mxu0 %v560
    %5012 = vmatmul.mubr.f32.gmra.mrb[0].mxu0 %v559
    %v5013 = vpop.f32.mrb[0].mxu0
    %v5014 = vadd.f32 0.0, %v5013
    %v5015 = vpop.f32.mrb[0].mxu0
    %v5016 = vadd.f32 0.0, %v5015
    %5017 = vmatprep.mubr.f32.mxu0 %v564
    %5018 = vmatmul.mubr.f32.gmra.mrb[0].mxu0 %v563
    %v5019 = vpop.f32.mrb[0].mxu0
    %v5020 = vadd.f32 0.0, %v5019
    %v5021 = vpop.f32.mrb[0].mxu0
    %v5022 = vadd.f32 0.0, %v5021
    %5023 = vmatprep.mubr.f32.mxu0 %v568
    %5024 = vmatmul.mubr.f32.gmra.mrb[0].mxu0 %v567
    %v5025 = vpop.f32.mrb[0].mxu0
    %v5026 = vadd.f32 0.0, %v5025
    %v5027 = vpop.f32.mrb[0].mxu0
    %v5028 = vadd.f32 0.0, %v5027
    %5029 = vmatprep.mubr.f32.mxu0 %v572
    %5030 = vmatmul.mubr.f32.gmra.mrb[0].mxu0 %v571
    %v5031 = vpop.f32.mrb[0].mxu0
    %v5032 = vadd.f32 0.0, %v5031
    %v5033 = vpop.f32.mrb[0].mxu0
    %v5034 = vadd.f32 0.0, %v5033
    %5035 = vmatprep.mubr.f32.mxu0 %v576
    %5036 = vmatmul.mubr.f32.gmra.mrb[0].mxu0 %v575
    %v5037 = vpop.f32.mrb[0].mxu0
    %v5038 = vadd.f32 0.0, %v5037
    %v5039 = vpop.f32.mrb[0].mxu0
    %v5040 = vadd.f32 0.0, %v5039
    %5041 = vmatprep.mubr.f32.mxu0 %v580
    %5042 = vmatmul.mubr.f32.gmra.mrb[0].mxu0 %v579
    %v5043 = vpop.f32.mrb[0].mxu0
    %v5044 = vadd.f32 0.0, %v5043
    %v5045 = vpop.f32.mrb[0].mxu0
    %v5046 = vadd.f32 0.0, %v5045
    %5047 = vmatprep.mubr.f32.mxu0 %v584
    %5048 = vmatmul.mubr.f32.gmra.mrb[0].mxu0 %v583
    %v5049 = vpop.f32.mrb[0].mxu0
    %v5050 = vadd.f32 0.0, %v5049
    %v5051 = vpop.f32.mrb[0].mxu0
    %v5052 = vadd.f32 0.0, %v5051
    %5053 = vmatprep.mubr.f32.mxu0 %v588
    %5054 = vmatmul.mubr.f32.gmra.mrb[0].mxu0 %v587
    %v5055 = vpop.f32.mrb[0].mxu0
    %v5056 = vadd.f32 0.0, %v5055
    %v5057 = vpop.f32.mrb[0].mxu0
    %v5058 = vadd.f32 0.0, %v5057
    %5059 = vmatprep.mubr.f32.mxu0 %v592
    %5060 = vmatmul.mubr.f32.gmra.mrb[0].mxu0 %v591
    %v5061 = vpop.f32.mrb[0].mxu0
    %v5062 = vadd.f32 0.0, %v5061
    %v5063 = vpop.f32.mrb[0].mxu0
    %v5064 = vadd.f32 0.0, %v5063
    %5065 = vmatprep.mubr.f32.mxu0 %v596
    %5066 = vmatmul.mubr.f32.gmra.mrb[0].mxu0 %v595
    %v5067 = vpop.f32.mrb[0].mxu0
    %v5068 = vadd.f32 0.0, %v5067
    %v5069 = vpop.f32.mrb[0].mxu0
    %v5070 = vadd.f32 0.0, %v5069
    %5071 = vmatprep.mubr.f32.mxu0 %v600
    %5072 = vmatmul.mubr.f32.gmra.mrb[0].mxu0 %v599
    %v5073 = vpop.f32.mrb[0].mxu0
    %v5074 = vadd.f32 0.0, %v5073
    %v5075 = vpop.f32.mrb[0].mxu0
    %v5076 = vadd.f32 0.0, %v5075
    %5077 = vmatprep.mubr.f32.mxu0 %v604
    %5078 = vmatmul.mubr.f32.gmra.mrb[0].mxu0 %v603
    %v5079 = vpop.f32.mrb[0].mxu0
    %v5080 = vadd.f32 0.0, %v5079
    %v5081 = vpop.f32.mrb[0].mxu0
    %v5082 = vadd.f32 0.0, %v5081
    %5083 = vmatprep.mubr.f32.mxu0 %v608
    %5084 = vmatmul.mubr.f32.gmra.mrb[0].mxu0 %v607
    %v5085 = vpop.f32.mrb[0].mxu0
    %v5086 = vadd.f32 0.0, %v5085
    %v5087 = vpop.f32.mrb[0].mxu0
    %v5088 = vadd.f32 0.0, %v5087
    %5089 = vmatprep.mubr.f32.mxu0 %v612
    %5090 = vmatmul.mubr.f32.gmra.mrb[0].mxu0 %v611
    %v5091 = vpop.f32.mrb[0].mxu0
    %v5092 = vadd.f32 0.0, %v5091
    %v5093 = vpop.f32.mrb[0].mxu0
    %v5094 = vadd.f32 0.0, %v5093
    %5095 = vmatprep.mubr.f32.mxu0 %v616
    %5096 = vmatmul.mubr.f32.gmra.mrb[0].mxu0 %v615
    %v5097 = vpop.f32.mrb[0].mxu0
    %v5098 = vadd.f32 0.0, %v5097
    %v5099 = vpop.f32.mrb[0].mxu0
    %v5100 = vadd.f32 0.0, %v5099
    %5101 = vmatprep.mubr.f32.mxu0 %v620
    %5102 = vmatmul.mubr.f32.gmra.mrb[0].mxu0 %v619
    %v5103 = vpop.f32.mrb[0].mxu0
    %v5104 = vadd.f32 0.0, %v5103
    %v5105 = vpop.f32.mrb[0].mxu0
    %v5106 = vadd.f32 0.0, %v5105
    %5107 = vmatprep.mubr.f32.mxu0 %v624
    %5108 = vmatmul.mubr.f32.gmra.mrb[0].mxu0 %v623
    %v5109 = vpop.f32.mrb[0].mxu0
    %v5110 = vadd.f32 0.0, %v5109
    %v5111 = vpop.f32.mrb[0].mxu0
    %v5112 = vadd.f32 0.0, %v5111
    %5113 = vmatprep.mubr.f32.mxu0 %v628
    %5114 = vmatmul.mubr.f32.gmra.mrb[0].mxu0 %v627
    %v5115 = vpop.f32.mrb[0].mxu0
    %v5116 = vadd.f32 0.0, %v5115
    %v5117 = vpop.f32.mrb[0].mxu0
    %v5118 = vadd.f32 0.0, %v5117
    %5119 = vmatprep.mubr.f32.mxu0 %v632
    %5120 = vmatmul.mubr.f32.gmra.mrb[0].mxu0 %v631
    %v5121 = vpop.f32.mrb[0].mxu0
    %v5122 = vadd.f32 0.0, %v5121
    %v5123 = vpop.f32.mrb[0].mxu0
    %v5124 = vadd.f32 0.0, %v5123
    %5125 = vdwg.mxu0
    %5126 = vmatprep.subr.mxu0 %v4230
    %5127 = vmatpush1.msra.mxu0 %v4229
    %5128 = vmatprep.subr.mxu0 %v4234
    %5129 = vmatpush1.msra.mxu0 %v4233
    %5130 = vmatprep.subr.mxu0 %v4238
    %5131 = vmatpush1.msra.mxu0 %v4237
    %5132 = vmatprep.subr.mxu0 %v4242
    %5133 = vmatpush1.msra.mxu0 %v4241
    %5134 = vmatprep.subr.mxu0 %v4246
    %5135 = vmatpush1.msra.mxu0 %v4245
    %5136 = vmatprep.subr.mxu0 %v4250
    %5137 = vmatpush1.msra.mxu0 %v4249
    %5138 = vmatprep.subr.mxu0 %v4254
    %5139 = vmatpush1.msra.mxu0 %v4253
    %5140 = vmatprep.subr.mxu0 %v4258
    %5141 = vmatpush1.msra.mxu0 %v4257
    %5142 = vmatprep.subr.mxu0 %v4262
    %5143 = vmatpush1.msra.mxu0 %v4261
    %5144 = vmatprep.subr.mxu0 %v4266
    %5145 = vmatpush1.msra.mxu0 %v4265
    %5146 = vmatprep.subr.mxu0 %v4270
    %5147 = vmatpush1.msra.mxu0 %v4269
    %5148 = vmatprep.subr.mxu0 %v4274
    %5149 = vmatpush1.msra.mxu0 %v4273
    %5150 = vmatprep.subr.mxu0 %v4278
    %5151 = vmatpush1.msra.mxu0 %v4277
    %5152 = vmatprep.subr.mxu0 %v4282
    %5153 = vmatpush1.msra.mxu0 %v4281
    %5154 = vmatprep.subr.mxu0 %v4286
    %5155 = vmatpush1.msra.mxu0 %v4285
    %5156 = vmatprep.subr.mxu0 %v4290
    %5157 = vmatpush1.msra.mxu0 %v4289
    %5158 = vmatprep.subr.mxu0 %v4294
    %5159 = vmatpush1.msra.mxu0 %v4293
    %5160 = vmatprep.subr.mxu0 %v4298
    %5161 = vmatpush1.msra.mxu0 %v4297
    %5162 = vmatprep.subr.mxu0 %v4302
    %5163 = vmatpush1.msra.mxu0 %v4301
    %5164 = vmatprep.subr.mxu0 %v4306
    %5165 = vmatpush1.msra.mxu0 %v4305
    %5166 = vmatprep.subr.mxu0 %v4310
    %5167 = vmatpush1.msra.mxu0 %v4309
    %5168 = vmatprep.subr.mxu0 %v4314
    %5169 = vmatpush1.msra.mxu0 %v4313
    %5170 = vmatprep.subr.mxu0 %v4318
    %5171 = vmatpush1.msra.mxu0 %v4317
    %5172 = vmatprep.subr.mxu0 %v4322
    %5173 = vmatpush1.msra.mxu0 %v4321
    %5174 = vmatprep.subr.mxu0 %v4326
    %5175 = vmatpush1.msra.mxu0 %v4325
    %5176 = vmatprep.subr.mxu0 %v4330
    %5177 = vmatpush1.msra.mxu0 %v4329
    %5178 = vmatprep.subr.mxu0 %v4334
    %5179 = vmatpush1.msra.mxu0 %v4333
    %5180 = vmatprep.subr.mxu0 %v4338
    %5181 = vmatpush1.msra.mxu0 %v4337
    %5182 = vmatprep.subr.mxu0 %v4342
    %5183 = vmatpush1.msra.mxu0 %v4341
    %5184 = vmatprep.subr.mxu0 %v4346
    %5185 = vmatpush1.msra.mxu0 %v4345
    %5186 = vmatprep.subr.mxu0 %v4350
    %5187 = vmatpush1.msra.mxu0 %v4349
    %5188 = vmatprep.subr.mxu0 %v4354
    %5189 = vmatpush1.msra.mxu0 %v4353
    %5190 = vmatprep.mubr.f32.mxu0 %v510
    %5191 = vmatmul.mubr.f32.gmra.mrb[0].mxu0 %v509
    %v5192 = vpop.f32.mrb[0].mxu0
    %v5193 = vadd.f32 %v4936, %v5192
    %v5194 = vpop.f32.mrb[0].mxu0
    %v5195 = vadd.f32 %v4938, %v5194
    %5196 = vmatprep.mubr.f32.mxu0 %v514
    %5197 = vmatmul.mubr.f32.gmra.mrb[0].mxu0 %v513
    %v5198 = vpop.f32.mrb[0].mxu0
    %v5199 = vadd.f32 %v4942, %v5198
    %v5200 = vpop.f32.mrb[0].mxu0
    %v5201 = vadd.f32 %v4944, %v5200
    %5202 = vmatprep.mubr.f32.mxu0 %v518
    %5203 = vmatmul.mubr.f32.gmra.mrb[0].mxu0 %v517
    %v5204 = vpop.f32.mrb[0].mxu0
    %v5205 = vadd.f32 %v4948, %v5204
    %v5206 = vpop.f32.mrb[0].mxu0
    %v5207 = vadd.f32 %v4950, %v5206
    %5208 = vmatprep.mubr.f32.mxu0 %v522
    %5209 = vmatmul.mubr.f32.gmra.mrb[0].mxu0 %v521
    %v5210 = vpop.f32.mrb[0].mxu0
    %v5211 = vadd.f32 %v4954, %v5210
    %v5212 = vpop.f32.mrb[0].mxu0
    %v5213 = vadd.f32 %v4956, %v5212
    %5214 = vmatprep.mubr.f32.mxu0 %v526
    %5215 = vmatmul.mubr.f32.gmra.mrb[0].mxu0 %v525
    %v5216 = vpop.f32.mrb[0].mxu0
    %v5217 = vadd.f32 %v4960, %v5216
    %v5218 = vpop.f32.mrb[0].mxu0
    %v5219 = vadd.f32 %v4962, %v5218
    %5220 = vmatprep.mubr.f32.mxu0 %v530
    %5221 = vmatmul.mubr.f32.gmra.mrb[0].mxu0 %v529
    %v5222 = vpop.f32.mrb[0].mxu0
    %v5223 = vadd.f32 %v4966, %v5222
    %v5224 = vpop.f32.mrb[0].mxu0
    %v5225 = vadd.f32 %v4968, %v5224
    %5226 = vmatprep.mubr.f32.mxu0 %v534
    %5227 = vmatmul.mubr.f32.gmra.mrb[0].mxu0 %v533
    %v5228 = vpop.f32.mrb[0].mxu0
    %v5229 = vadd.f32 %v4972, %v5228
    %v5230 = vpop.f32.mrb[0].mxu0
    %v5231 = vadd.f32 %v4974, %v5230
    %5232 = vmatprep.mubr.f32.mxu0 %v538
    %5233 = vmatmul.mubr.f32.gmra.mrb[0].mxu0 %v537
    %v5234 = vpop.f32.mrb[0].mxu0
    %v5235 = vadd.f32 %v4978, %v5234
    %v5236 = vpop.f32.mrb[0].mxu0
    %v5237 = vadd.f32 %v4980, %v5236
    %5238 = vmatprep.mubr.f32.mxu0 %v542
    %5239 = vmatmul.mubr.f32.gmra.mrb[0].mxu0 %v541
    %v5240 = vpop.f32.mrb[0].mxu0
    %v5241 = vadd.f32 %v4984, %v5240
    %v5242 = vpop.f32.mrb[0].mxu0
    %v5243 = vadd.f32 %v4986, %v5242
    %5244 = vmatprep.mubr.f32.mxu0 %v546
    %5245 = vmatmul.mubr.f32.gmra.mrb[0].mxu0 %v545
    %v5246 = vpop.f32.mrb[0].mxu0
    %v5247 = vadd.f32 %v4990, %v5246
    %v5248 = vpop.f32.mrb[0].mxu0
    %v5249 = vadd.f32 %v4992, %v5248
    %5250 = vmatprep.mubr.f32.mxu0 %v550
    %5251 = vmatmul.mubr.f32.gmra.mrb[0].mxu0 %v549
    %v5252 = vpop.f32.mrb[0].mxu0
    %v5253 = vadd.f32 %v4996, %v5252
    %v5254 = vpop.f32.mrb[0].mxu0
    %v5255 = vadd.f32 %v4998, %v5254
    %5256 = vmatprep.mubr.f32.mxu0 %v554
    %5257 = vmatmul.mubr.f32.gmra.mrb[0].mxu0 %v553
    %v5258 = vpop.f32.mrb[0].mxu0
    %v5259 = vadd.f32 %v5002, %v5258
    %v5260 = vpop.f32.mrb[0].mxu0
    %v5261 = vadd.f32 %v5004, %v5260
    %5262 = vmatprep.mubr.f32.mxu0 %v558
    %5263 = vmatmul.mubr.f32.gmra.mrb[0].mxu0 %v557
    %v5264 = vpop.f32.mrb[0].mxu0
    %v5265 = vadd.f32 %v5008, %v5264
    %v5266 = vpop.f32.mrb[0].mxu0
    %v5267 = vadd.f32 %v5010, %v5266
    %5268 = vmatprep.mubr.f32.mxu0 %v562
    %5269 = vmatmul.mubr.f32.gmra.mrb[0].mxu0 %v561
    %v5270 = vpop.f32.mrb[0].mxu0
    %v5271 = vadd.f32 %v5014, %v5270
    %v5272 = vpop.f32.mrb[0].mxu0
    %v5273 = vadd.f32 %v5016, %v5272
    %5274 = vmatprep.mubr.f32.mxu0 %v566
    %5275 = vmatmul.mubr.f32.gmra.mrb[0].mxu0 %v565
    %v5276 = vpop.f32.mrb[0].mxu0
    %v5277 = vadd.f32 %v5020, %v5276
    %v5278 = vpop.f32.mrb[0].mxu0
    %v5279 = vadd.f32 %v5022, %v5278
    %5280 = vmatprep.mubr.f32.mxu0 %v570
    %5281 = vmatmul.mubr.f32.gmra.mrb[0].mxu0 %v569
    %v5282 = vpop.f32.mrb[0].mxu0
    %v5283 = vadd.f32 %v5026, %v5282
    %v5284 = vpop.f32.mrb[0].mxu0
    %v5285 = vadd.f32 %v5028, %v5284
    %5286 = vmatprep.mubr.f32.mxu0 %v574
    %5287 = vmatmul.mubr.f32.gmra.mrb[0].mxu0 %v573
    %v5288 = vpop.f32.mrb[0].mxu0
    %v5289 = vadd.f32 %v5032, %v5288
    %v5290 = vpop.f32.mrb[0].mxu0
    %v5291 = vadd.f32 %v5034, %v5290
    %5292 = vmatprep.mubr.f32.mxu0 %v578
    %5293 = vmatmul.mubr.f32.gmra.mrb[0].mxu0 %v577
    %v5294 = vpop.f32.mrb[0].mxu0
    %v5295 = vadd.f32 %v5038, %v5294
    %v5296 = vpop.f32.mrb[0].mxu0
    %v5297 = vadd.f32 %v5040, %v5296
    %5298 = vmatprep.mubr.f32.mxu0 %v582
    %5299 = vmatmul.mubr.f32.gmra.mrb[0].mxu0 %v581
    %v5300 = vpop.f32.mrb[0].mxu0
    %v5301 = vadd.f32 %v5044, %v5300
    %v5302 = vpop.f32.mrb[0].mxu0
    %v5303 = vadd.f32 %v5046, %v5302
    %5304 = vmatprep.mubr.f32.mxu0 %v586
    %5305 = vmatmul.mubr.f32.gmra.mrb[0].mxu0 %v585
    %v5306 = vpop.f32.mrb[0].mxu0
    %v5307 = vadd.f32 %v5050, %v5306
    %v5308 = vpop.f32.mrb[0].mxu0
    %v5309 = vadd.f32 %v5052, %v5308
    %5310 = vmatprep.mubr.f32.mxu0 %v590
    %5311 = vmatmul.mubr.f32.gmra.mrb[0].mxu0 %v589
    %v5312 = vpop.f32.mrb[0].mxu0
    %v5313 = vadd.f32 %v5056, %v5312
    %v5314 = vpop.f32.mrb[0].mxu0
    %v5315 = vadd.f32 %v5058, %v5314
    %5316 = vmatprep.mubr.f32.mxu0 %v594
    %5317 = vmatmul.mubr.f32.gmra.mrb[0].mxu0 %v593
    %v5318 = vpop.f32.mrb[0].mxu0
    %v5319 = vadd.f32 %v5062, %v5318
    %v5320 = vpop.f32.mrb[0].mxu0
    %v5321 = vadd.f32 %v5064, %v5320
    %5322 = vmatprep.mubr.f32.mxu0 %v598
    %5323 = vmatmul.mubr.f32.gmra.mrb[0].mxu0 %v597
    %v5324 = vpop.f32.mrb[0].mxu0
    %v5325 = vadd.f32 %v5068, %v5324
    %v5326 = vpop.f32.mrb[0].mxu0
    %v5327 = vadd.f32 %v5070, %v5326
    %5328 = vmatprep.mubr.f32.mxu0 %v602
    %5329 = vmatmul.mubr.f32.gmra.mrb[0].mxu0 %v601
    %v5330 = vpop.f32.mrb[0].mxu0
    %v5331 = vadd.f32 %v5074, %v5330
    %v5332 = vpop.f32.mrb[0].mxu0
    %v5333 = vadd.f32 %v5076, %v5332
    %5334 = vmatprep.mubr.f32.mxu0 %v606
    %5335 = vmatmul.mubr.f32.gmra.mrb[0].mxu0 %v605
    %v5336 = vpop.f32.mrb[0].mxu0
    %v5337 = vadd.f32 %v5080, %v5336
    %v5338 = vpop.f32.mrb[0].mxu0
    %v5339 = vadd.f32 %v5082, %v5338
    %5340 = vmatprep.mubr.f32.mxu0 %v610
    %5341 = vmatmul.mubr.f32.gmra.mrb[0].mxu0 %v609
    %v5342 = vpop.f32.mrb[0].mxu0
    %v5343 = vadd.f32 %v5086, %v5342
    %v5344 = vpop.f32.mrb[0].mxu0
    %v5345 = vadd.f32 %v5088, %v5344
    %5346 = vmatprep.mubr.f32.mxu0 %v614
    %5347 = vmatmul.mubr.f32.gmra.mrb[0].mxu0 %v613
    %v5348 = vpop.f32.mrb[0].mxu0
    %v5349 = vadd.f32 %v5092, %v5348
    %v5350 = vpop.f32.mrb[0].mxu0
    %v5351 = vadd.f32 %v5094, %v5350
    %5352 = vmatprep.mubr.f32.mxu0 %v618
    %5353 = vmatmul.mubr.f32.gmra.mrb[0].mxu0 %v617
    %v5354 = vpop.f32.mrb[0].mxu0
    %v5355 = vadd.f32 %v5098, %v5354
    %v5356 = vpop.f32.mrb[0].mxu0
    %v5357 = vadd.f32 %v5100, %v5356
    %5358 = vmatprep.mubr.f32.mxu0 %v622
    %5359 = vmatmul.mubr.f32.gmra.mrb[0].mxu0 %v621
    %v5360 = vpop.f32.mrb[0].mxu0
    %v5361 = vadd.f32 %v5104, %v5360
    %v5362 = vpop.f32.mrb[0].mxu0
    %v5363 = vadd.f32 %v5106, %v5362
    %5364 = vmatprep.mubr.f32.mxu0 %v626
    %5365 = vmatmul.mubr.f32.gmra.mrb[0].mxu0 %v625
    %v5366 = vpop.f32.mrb[0].mxu0
    %v5367 = vadd.f32 %v5110, %v5366
    %v5368 = vpop.f32.mrb[0].mxu0
    %v5369 = vadd.f32 %v5112, %v5368
    %5370 = vmatprep.mubr.f32.mxu0 %v630
    %5371 = vmatmul.mubr.f32.gmra.mrb[0].mxu0 %v629
    %v5372 = vpop.f32.mrb[0].mxu0
    %v5373 = vadd.f32 %v5116, %v5372
    %v5374 = vpop.f32.mrb[0].mxu0
    %v5375 = vadd.f32 %v5118, %v5374
    %5376 = vmatprep.mubr.f32.mxu0 %v634
    %5377 = vmatmul.mubr.f32.gmra.mrb[0].mxu0 %v633
    %v5378 = vpop.f32.mrb[0].mxu0
    %v5379 = vadd.f32 %v5122, %v5378
    %v5380 = vpop.f32.mrb[0].mxu0
    %v5381 = vadd.f32 %v5124, %v5380
    %5382 = vdwg.mxu0
    %v5383 = vadd.f32 %v3971, %v4679
    %v5384 = vadd.f32 %v3972, %v4681
    %v5385 = vadd.f32 %v3973, %v5193
    %v5386 = vadd.f32 %v3974, %v5195
    %v5387 = vadd.f32 %v3975, %v4685
    %v5388 = vadd.f32 %v3976, %v4687
    %v5389 = vadd.f32 %v3977, %v5199
    %v5390 = vadd.f32 %v3978, %v5201
    %v5391 = vadd.f32 %v3979, %v4691
    %v5392 = vadd.f32 %v3980, %v4693
    %v5393 = vadd.f32 %v3981, %v5205
    %v5394 = vadd.f32 %v3982, %v5207
    %v5395 = vadd.f32 %v3983, %v4697
    %v5396 = vadd.f32 %v3984, %v4699
    %v5397 = vadd.f32 %v3985, %v5211
    %v5398 = vadd.f32 %v3986, %v5213
    %v5399 = vadd.f32 %v3987, %v4703
    %v5400 = vadd.f32 %v3988, %v4705
    %v5401 = vadd.f32 %v3989, %v5217
    %v5402 = vadd.f32 %v3990, %v5219
    %v5403 = vadd.f32 %v3991, %v4709
    %v5404 = vadd.f32 %v3992, %v4711
    %v5405 = vadd.f32 %v3993, %v5223
    %v5406 = vadd.f32 %v3994, %v5225
    %v5407 = vadd.f32 %v3995, %v4715
    %v5408 = vadd.f32 %v3996, %v4717
    %v5409 = vadd.f32 %v3997, %v5229
    %v5410 = vadd.f32 %v3998, %v5231
    %v5411 = vadd.f32 %v3999, %v4721
    %v5412 = vadd.f32 %v4000, %v4723
    %v5413 = vadd.f32 %v4001, %v5235
    %v5414 = vadd.f32 %v4002, %v5237
    %v5415 = vadd.f32 %v4003, %v4727
    %v5416 = vadd.f32 %v4004, %v4729
    %v5417 = vadd.f32 %v4005, %v5241
    %v5418 = vadd.f32 %v4006, %v5243
    %v5419 = vadd.f32 %v4007, %v4733
    %v5420 = vadd.f32 %v4008, %v4735
    %v5421 = vadd.f32 %v4009, %v5247
    %v5422 = vadd.f32 %v4010, %v5249
    %v5423 = vadd.f32 %v4011, %v4739
    %v5424 = vadd.f32 %v4012, %v4741
    %v5425 = vadd.f32 %v4013, %v5253
    %v5426 = vadd.f32 %v4014, %v5255
    %v5427 = vadd.f32 %v4015, %v4745
    %v5428 = vadd.f32 %v4016, %v4747
    %v5429 = vadd.f32 %v4017, %v5259
    %v5430 = vadd.f32 %v4018, %v5261
    %v5431 = vadd.f32 %v4019, %v4751
    %v5432 = vadd.f32 %v4020, %v4753
    %v5433 = vadd.f32 %v4021, %v5265
    %v5434 = vadd.f32 %v4022, %v5267
    %v5435 = vadd.f32 %v4023, %v4757
    %v5436 = vadd.f32 %v4024, %v4759
    %v5437 = vadd.f32 %v4025, %v5271
    %v5438 = vadd.f32 %v4026, %v5273
    %v5439 = vadd.f32 %v4027, %v4763
    %v5440 = vadd.f32 %v4028, %v4765
    %v5441 = vadd.f32 %v4029, %v5277
    %v5442 = vadd.f32 %v4030, %v5279
    %v5443 = vadd.f32 %v4031, %v4769
    %v5444 = vadd.f32 %v4032, %v4771
    %v5445 = vadd.f32 %v4033, %v5283
    %v5446 = vadd.f32 %v4034, %v5285
    %v5447 = vadd.f32 %v4035, %v4775
    %v5448 = vadd.f32 %v4036, %v4777
    %v5449 = vadd.f32 %v4037, %v5289
    %v5450 = vadd.f32 %v4038, %v5291
    %v5451 = vadd.f32 %v4039, %v4781
    %v5452 = vadd.f32 %v4040, %v4783
    %v5453 = vadd.f32 %v4041, %v5295
    %v5454 = vadd.f32 %v4042, %v5297
    %v5455 = vadd.f32 %v4043, %v4787
    %v5456 = vadd.f32 %v4044, %v4789
    %v5457 = vadd.f32 %v4045, %v5301
    %v5458 = vadd.f32 %v4046, %v5303
    %v5459 = vadd.f32 %v4047, %v4793
    %v5460 = vadd.f32 %v4048, %v4795
    %v5461 = vadd.f32 %v4049, %v5307
    %v5462 = vadd.f32 %v4050, %v5309
    %v5463 = vadd.f32 %v4051, %v4799
    %v5464 = vadd.f32 %v4052, %v4801
    %v5465 = vadd.f32 %v4053, %v5313
    %v5466 = vadd.f32 %v4054, %v5315
    %v5467 = vadd.f32 %v4055, %v4805
    %v5468 = vadd.f32 %v4056, %v4807
    %v5469 = vadd.f32 %v4057, %v5319
    %v5470 = vadd.f32 %v4058, %v5321
    %v5471 = vadd.f32 %v4059, %v4811
    %v5472 = vadd.f32 %v4060, %v4813
    %v5473 = vadd.f32 %v4061, %v5325
    %v5474 = vadd.f32 %v4062, %v5327
    %v5475 = vadd.f32 %v4063, %v4817
    %v5476 = vadd.f32 %v4064, %v4819
    %v5477 = vadd.f32 %v4065, %v5331
    %v5478 = vadd.f32 %v4066, %v5333
    %v5479 = vadd.f32 %v4067, %v4823
    %v5480 = vadd.f32 %v4068, %v4825
    %v5481 = vadd.f32 %v4069, %v5337
    %v5482 = vadd.f32 %v4070, %v5339
    %v5483 = vadd.f32 %v4071, %v4829
    %v5484 = vadd.f32 %v4072, %v4831
    %v5485 = vadd.f32 %v4073, %v5343
    %v5486 = vadd.f32 %v4074, %v5345
    %v5487 = vadd.f32 %v4075, %v4835
    %v5488 = vadd.f32 %v4076, %v4837
    %v5489 = vadd.f32 %v4077, %v5349
    %v5490 = vadd.f32 %v4078, %v5351
    %v5491 = vadd.f32 %v4079, %v4841
    %v5492 = vadd.f32 %v4080, %v4843
    %v5493 = vadd.f32 %v4081, %v5355
    %v5494 = vadd.f32 %v4082, %v5357
    %v5495 = vadd.f32 %v4083, %v4847
    %v5496 = vadd.f32 %v4084, %v4849
    %v5497 = vadd.f32 %v4085, %v5361
    %v5498 = vadd.f32 %v4086, %v5363
    %v5499 = vadd.f32 %v4087, %v4853
    %v5500 = vadd.f32 %v4088, %v4855
    %v5501 = vadd.f32 %v4089, %v5367
    %v5502 = vadd.f32 %v4090, %v5369
    %v5503 = vadd.f32 %v4091, %v4859
    %v5504 = vadd.f32 %v4092, %v4861
    %v5505 = vadd.f32 %v4093, %v5373
    %v5506 = vadd.f32 %v4094, %v5375
    %v5507 = vadd.f32 %v4095, %v4865
    %v5508 = vadd.f32 %v4096, %v4867
    %v5509 = vadd.f32 %v4097, %v5379
    %v5510 = vadd.f32 %v4098, %v5381
    %5511 = vst [vmem:[#allocation4] sm:$0xff] %v5383
    %5512 = vst [vmem:[#allocation4 + $0x8] sm:$0xff] %v5384
    %5513 = vst [vmem:[#allocation4 + $0x10] sm:$0xff] %v5385
    %5514 = vst [vmem:[#allocation4 + $0x18] sm:$0xff] %v5386
    %5515 = vst [vmem:[#allocation4 + $0x20] sm:$0xff] %v5387
    %5516 = vst [vmem:[#allocation4 + $0x28] sm:$0xff] %v5388
    %5517 = vst [vmem:[#allocation4 + $0x30] sm:$0xff] %v5389
    %5518 = vst [vmem:[#allocation4 + $0x38] sm:$0xff] %v5390
    %5519 = vst [vmem:[#allocation4 + $0x40] sm:$0xff] %v5391
    %5520 = vst [vmem:[#allocation4 + $0x48] sm:$0xff] %v5392
    %5521 = vst [vmem:[#allocation4 + $0x50] sm:$0xff] %v5393
    %5522 = vst [vmem:[#allocation4 + $0x58] sm:$0xff] %v5394
    %5523 = vst [vmem:[#allocation4 + $0x60] sm:$0xff] %v5395
    %5524 = vst [vmem:[#allocation4 + $0x68] sm:$0xff] %v5396
    %5525 = vst [vmem:[#allocation4 + $0x70] sm:$0xff] %v5397
    %5526 = vst [vmem:[#allocation4 + $0x78] sm:$0xff] %v5398
    %5527 = vst [vmem:[#allocation4 + $0x80] sm:$0xff] %v5399
    %5528 = vst [vmem:[#allocation4 + $0x88] sm:$0xff] %v5400
    %5529 = vst [vmem:[#allocation4 + $0x90] sm:$0xff] %v5401
    %5530 = vst [vmem:[#allocation4 + $0x98] sm:$0xff] %v5402
    %5531 = vst [vmem:[#allocation4 + $0xa0] sm:$0xff] %v5403
    %5532 = vst [vmem:[#allocation4 + $0xa8] sm:$0xff] %v5404
    %5533 = vst [vmem:[#allocation4 + $0xb0] sm:$0xff] %v5405
    %5534 = vst [vmem:[#allocation4 + $0xb8] sm:$0xff] %v5406
    %5535 = vst [vmem:[#allocation4 + $0xc0] sm:$0xff] %v5407
    %5536 = vst [vmem:[#allocation4 + $0xc8] sm:$0xff] %v5408
    %5537 = vst [vmem:[#allocation4 + $0xd0] sm:$0xff] %v5409
    %5538 = vst [vmem:[#allocation4 + $0xd8] sm:$0xff] %v5410
    %5539 = vst [vmem:[#allocation4 + $0xe0] sm:$0xff] %v5411
    %5540 = vst [vmem:[#allocation4 + $0xe8] sm:$0xff] %v5412
    %5541 = vst [vmem:[#allocation4 + $0xf0] sm:$0xff] %v5413
    %5542 = vst [vmem:[#allocation4 + $0xf8] sm:$0xff] %v5414
    %5543 = vst [vmem:[#allocation4 + $0x100] sm:$0xff] %v5415
    %5544 = vst [vmem:[#allocation4 + $0x108] sm:$0xff] %v5416
    %5545 = vst [vmem:[#allocation4 + $0x110] sm:$0xff] %v5417
    %5546 = vst [vmem:[#allocation4 + $0x118] sm:$0xff] %v5418
    %5547 = vst [vmem:[#allocation4 + $0x120] sm:$0xff] %v5419
    %5548 = vst [vmem:[#allocation4 + $0x128] sm:$0xff] %v5420
    %5549 = vst [vmem:[#allocation4 + $0x130] sm:$0xff] %v5421
    %5550 = vst [vmem:[#allocation4 + $0x138] sm:$0xff] %v5422
    %5551 = vst [vmem:[#allocation4 + $0x140] sm:$0xff] %v5423
    %5552 = vst [vmem:[#allocation4 + $0x148] sm:$0xff] %v5424
    %5553 = vst [vmem:[#allocation4 + $0x150] sm:$0xff] %v5425
    %5554 = vst [vmem:[#allocation4 + $0x158] sm:$0xff] %v5426
    %5555 = vst [vmem:[#allocation4 + $0x160] sm:$0xff] %v5427
    %5556 = vst [vmem:[#allocation4 + $0x168] sm:$0xff] %v5428
    %5557 = vst [vmem:[#allocation4 + $0x170] sm:$0xff] %v5429
    %5558 = vst [vmem:[#allocation4 + $0x178] sm:$0xff] %v5430
    %5559 = vst [vmem:[#allocation4 + $0x180] sm:$0xff] %v5431
    %5560 = vst [vmem:[#allocation4 + $0x188] sm:$0xff] %v5432
    %5561 = vst [vmem:[#allocation4 + $0x190] sm:$0xff] %v5433
    %5562 = vst [vmem:[#allocation4 + $0x198] sm:$0xff] %v5434
    %5563 = vst [vmem:[#allocation4 + $0x1a0] sm:$0xff] %v5435
    %5564 = vst [vmem:[#allocation4 + $0x1a8] sm:$0xff] %v5436
    %5565 = vst [vmem:[#allocation4 + $0x1b0] sm:$0xff] %v5437
    %5566 = vst [vmem:[#allocation4 + $0x1b8] sm:$0xff] %v5438
    %5567 = vst [vmem:[#allocation4 + $0x1c0] sm:$0xff] %v5439
    %5568 = vst [vmem:[#allocation4 + $0x1c8] sm:$0xff] %v5440
    %5569 = vst [vmem:[#allocation4 + $0x1d0] sm:$0xff] %v5441
    %5570 = vst [vmem:[#allocation4 + $0x1d8] sm:$0xff] %v5442
    %5571 = vst [vmem:[#allocation4 + $0x1e0] sm:$0xff] %v5443
    %5572 = vst [vmem:[#allocation4 + $0x1e8] sm:$0xff] %v5444
    %5573 = vst [vmem:[#allocation4 + $0x1f0] sm:$0xff] %v5445
    %5574 = vst [vmem:[#allocation4 + $0x1f8] sm:$0xff] %v5446
    %5575 = vst [vmem:[#allocation4 + $0x200] sm:$0xff] %v5447
    %5576 = vst [vmem:[#allocation4 + $0x208] sm:$0xff] %v5448
    %5577 = vst [vmem:[#allocation4 + $0x210] sm:$0xff] %v5449
    %5578 = vst [vmem:[#allocation4 + $0x218] sm:$0xff] %v5450
    %5579 = vst [vmem:[#allocation4 + $0x220] sm:$0xff] %v5451
    %5580 = vst [vmem:[#allocation4 + $0x228] sm:$0xff] %v5452
    %5581 = vst [vmem:[#allocation4 + $0x230] sm:$0xff] %v5453
    %5582 = vst [vmem:[#allocation4 + $0x238] sm:$0xff] %v5454
    %5583 = vst [vmem:[#allocation4 + $0x240] sm:$0xff] %v5455
    %5584 = vst [vmem:[#allocation4 + $0x248] sm:$0xff] %v5456
    %5585 = vst [vmem:[#allocation4 + $0x250] sm:$0xff] %v5457
    %5586 = vst [vmem:[#allocation4 + $0x258] sm:$0xff] %v5458
    %5587 = vst [vmem:[#allocation4 + $0x260] sm:$0xff] %v5459
    %5588 = vst [vmem:[#allocation4 + $0x268] sm:$0xff] %v5460
    %5589 = vst [vmem:[#allocation4 + $0x270] sm:$0xff] %v5461
    %5590 = vst [vmem:[#allocation4 + $0x278] sm:$0xff] %v5462
    %5591 = vst [vmem:[#allocation4 + $0x280] sm:$0xff] %v5463
    %5592 = vst [vmem:[#allocation4 + $0x288] sm:$0xff] %v5464
    %5593 = vst [vmem:[#allocation4 + $0x290] sm:$0xff] %v5465
    %5594 = vst [vmem:[#allocation4 + $0x298] sm:$0xff] %v5466
    %5595 = vst [vmem:[#allocation4 + $0x2a0] sm:$0xff] %v5467
    %5596 = vst [vmem:[#allocation4 + $0x2a8] sm:$0xff] %v5468
    %5597 = vst [vmem:[#allocation4 + $0x2b0] sm:$0xff] %v5469
    %5598 = vst [vmem:[#allocation4 + $0x2b8] sm:$0xff] %v5470
    %5599 = vst [vmem:[#allocation4 + $0x2c0] sm:$0xff] %v5471
    %5600 = vst [vmem:[#allocation4 + $0x2c8] sm:$0xff] %v5472
    %5601 = vst [vmem:[#allocation4 + $0x2d0] sm:$0xff] %v5473
    %5602 = vst [vmem:[#allocation4 + $0x2d8] sm:$0xff] %v5474
    %5603 = vst [vmem:[#allocation4 + $0x2e0] sm:$0xff] %v5475
    %5604 = vst [vmem:[#allocation4 + $0x2e8] sm:$0xff] %v5476
    %5605 = vst [vmem:[#allocation4 + $0x2f0] sm:$0xff] %v5477
    %5606 = vst [vmem:[#allocation4 + $0x2f8] sm:$0xff] %v5478
    %5607 = vst [vmem:[#allocation4 + $0x300] sm:$0xff] %v5479
    %5608 = vst [vmem:[#allocation4 + $0x308] sm:$0xff] %v5480
    %5609 = vst [vmem:[#allocation4 + $0x310] sm:$0xff] %v5481
    %5610 = vst [vmem:[#allocation4 + $0x318] sm:$0xff] %v5482
    %5611 = vst [vmem:[#allocation4 + $0x320] sm:$0xff] %v5483
    %5612 = vst [vmem:[#allocation4 + $0x328] sm:$0xff] %v5484
    %5613 = vst [vmem:[#allocation4 + $0x330] sm:$0xff] %v5485
    %5614 = vst [vmem:[#allocation4 + $0x338] sm:$0xff] %v5486
    %5615 = vst [vmem:[#allocation4 + $0x340] sm:$0xff] %v5487
    %5616 = vst [vmem:[#allocation4 + $0x348] sm:$0xff] %v5488
    %5617 = vst [vmem:[#allocation4 + $0x350] sm:$0xff] %v5489
    %5618 = vst [vmem:[#allocation4 + $0x358] sm:$0xff] %v5490
    %5619 = vst [vmem:[#allocation4 + $0x360] sm:$0xff] %v5491
    %5620 = vst [vmem:[#allocation4 + $0x368] sm:$0xff] %v5492
    %5621 = vst [vmem:[#allocation4 + $0x370] sm:$0xff] %v5493
    %5622 = vst [vmem:[#allocation4 + $0x378] sm:$0xff] %v5494
    %5623 = vst [vmem:[#allocation4 + $0x380] sm:$0xff] %v5495
    %5624 = vst [vmem:[#allocation4 + $0x388] sm:$0xff] %v5496
    %5625 = vst [vmem:[#allocation4 + $0x390] sm:$0xff] %v5497
    %5626 = vst [vmem:[#allocation4 + $0x398] sm:$0xff] %v5498
    %5627 = vst [vmem:[#allocation4 + $0x3a0] sm:$0xff] %v5499
    %5628 = vst [vmem:[#allocation4 + $0x3a8] sm:$0xff] %v5500
    %5629 = vst [vmem:[#allocation4 + $0x3b0] sm:$0xff] %v5501
    %5630 = vst [vmem:[#allocation4 + $0x3b8] sm:$0xff] %v5502
    %5631 = vst [vmem:[#allocation4 + $0x3c0] sm:$0xff] %v5503
    %5632 = vst [vmem:[#allocation4 + $0x3c8] sm:$0xff] %v5504
    %5633 = vst [vmem:[#allocation4 + $0x3d0] sm:$0xff] %v5505
    %5634 = vst [vmem:[#allocation4 + $0x3d8] sm:$0xff] %v5506
    %5635 = vst [vmem:[#allocation4 + $0x3e0] sm:$0xff] %v5507
    %5636 = vst [vmem:[#allocation4 + $0x3e8] sm:$0xff] %v5508
    %5637 = vst [vmem:[#allocation4 + $0x3f0] sm:$0xff] %v5509
    %5638 = vst [vmem:[#allocation4 + $0x3f8] sm:$0xff] %v5510
    // Predicated region
    $region66: #{tpu_custom_call.1} parent=1 // pred_check
      %p5639 = pneg %p119
    $region67: #{tpu_custom_call.1} parent=1 // pred_check_branch
      %5641 = sbr.rel (%p5639) target = $region69
    $region68: #{tpu_custom_call.1} parent=1 // pred_region
      %v5642 = vld [vmem:[#allocation13] sm:$0xff]
      %v5643 = vld [vmem:[#allocation13 + $0x8] sm:$0xff]
      %v5644 = vld [vmem:[#allocation13 + $0x10] sm:$0xff]
      %v5645 = vld [vmem:[#allocation13 + $0x18] sm:$0xff]
      %v5646 = vld [vmem:[#allocation13 + $0x20] sm:$0xff]
      %v5647 = vld [vmem:[#allocation13 + $0x28] sm:$0xff]
      %v5648 = vld [vmem:[#allocation13 + $0x30] sm:$0xff]
      %v5649 = vld [vmem:[#allocation13 + $0x38] sm:$0xff]
      %v5650 = vld [vmem:[#allocation13 + $0x40] sm:$0xff]
      %v5651 = vld [vmem:[#allocation13 + $0x48] sm:$0xff]
      %v5652 = vld [vmem:[#allocation13 + $0x50] sm:$0xff]
      %v5653 = vld [vmem:[#allocation13 + $0x58] sm:$0xff]
      %v5654 = vld [vmem:[#allocation13 + $0x60] sm:$0xff]
      %v5655 = vld [vmem:[#allocation13 + $0x68] sm:$0xff]
      %v5656 = vld [vmem:[#allocation13 + $0x70] sm:$0xff]
      %v5657 = vld [vmem:[#allocation13 + $0x78] sm:$0xff]
      %v5658 = vld [vmem:[#allocation13 + $0x80] sm:$0xff]
      %v5659 = vld [vmem:[#allocation13 + $0x88] sm:$0xff]
      %v5660 = vld [vmem:[#allocation13 + $0x90] sm:$0xff]
      %v5661 = vld [vmem:[#allocation13 + $0x98] sm:$0xff]
      %v5662 = vld [vmem:[#allocation13 + $0xa0] sm:$0xff]
      %v5663 = vld [vmem:[#allocation13 + $0xa8] sm:$0xff]
      %v5664 = vld [vmem:[#allocation13 + $0xb0] sm:$0xff]
      %v5665 = vld [vmem:[#allocation13 + $0xb8] sm:$0xff]
      %v5666 = vld [vmem:[#allocation13 + $0xc0] sm:$0xff]
      %v5667 = vld [vmem:[#allocation13 + $0xc8] sm:$0xff]
      %v5668 = vld [vmem:[#allocation13 + $0xd0] sm:$0xff]
      %v5669 = vld [vmem:[#allocation13 + $0xd8] sm:$0xff]
      %v5670 = vld [vmem:[#allocation13 + $0xe0] sm:$0xff]
      %v5671 = vld [vmem:[#allocation13 + $0xe8] sm:$0xff]
      %v5672 = vld [vmem:[#allocation13 + $0xf0] sm:$0xff]
      %v5673 = vld [vmem:[#allocation13 + $0xf8] sm:$0xff]
      %v5674 = vld [vmem:[#allocation14] sm:$0xff]
      %v5675 = vld [vmem:[#allocation14 + $0x8] sm:$0xff]
      %v5676 = vld [vmem:[#allocation14 + $0x10] sm:$0xff]
      %v5677 = vld [vmem:[#allocation14 + $0x18] sm:$0xff]
      %v5678 = vld [vmem:[#allocation14 + $0x20] sm:$0xff]
      %v5679 = vld [vmem:[#allocation14 + $0x28] sm:$0xff]
      %v5680 = vld [vmem:[#allocation14 + $0x30] sm:$0xff]
      %v5681 = vld [vmem:[#allocation14 + $0x38] sm:$0xff]
      %v5682 = vld [vmem:[#allocation14 + $0x40] sm:$0xff]
      %v5683 = vld [vmem:[#allocation14 + $0x48] sm:$0xff]
      %v5684 = vld [vmem:[#allocation14 + $0x50] sm:$0xff]
      %v5685 = vld [vmem:[#allocation14 + $0x58] sm:$0xff]
      %v5686 = vld [vmem:[#allocation14 + $0x60] sm:$0xff]
      %v5687 = vld [vmem:[#allocation14 + $0x68] sm:$0xff]
      %v5688 = vld [vmem:[#allocation14 + $0x70] sm:$0xff]
      %v5689 = vld [vmem:[#allocation14 + $0x78] sm:$0xff]
      %v5690 = vld [vmem:[#allocation14 + $0x80] sm:$0xff]
      %v5691 = vld [vmem:[#allocation14 + $0x88] sm:$0xff]
      %v5692 = vld [vmem:[#allocation14 + $0x90] sm:$0xff]
      %v5693 = vld [vmem:[#allocation14 + $0x98] sm:$0xff]
      %v5694 = vld [vmem:[#allocation14 + $0xa0] sm:$0xff]
      %v5695 = vld [vmem:[#allocation14 + $0xa8] sm:$0xff]
      %v5696 = vld [vmem:[#allocation14 + $0xb0] sm:$0xff]
      %v5697 = vld [vmem:[#allocation14 + $0xb8] sm:$0xff]
      %v5698 = vld [vmem:[#allocation14 + $0xc0] sm:$0xff]
      %v5699 = vld [vmem:[#allocation14 + $0xc8] sm:$0xff]
      %v5700 = vld [vmem:[#allocation14 + $0xd0] sm:$0xff]
      %v5701 = vld [vmem:[#allocation14 + $0xd8] sm:$0xff]
      %v5702 = vld [vmem:[#allocation14 + $0xe0] sm:$0xff]
      %v5703 = vld [vmem:[#allocation14 + $0xe8] sm:$0xff]
      %v5704 = vld [vmem:[#allocation14 + $0xf0] sm:$0xff]
      %v5705 = vld [vmem:[#allocation14 + $0xf8] sm:$0xff]
      %v5706 = vld [vmem:[#allocation4] sm:$0xff]
      %v5707 = vld [vmem:[#allocation4 + $0x8] sm:$0xff]
      %v5708 = vld [vmem:[#allocation4 + $0x10] sm:$0xff]
      %v5709 = vld [vmem:[#allocation4 + $0x18] sm:$0xff]
      %v5710 = vld [vmem:[#allocation4 + $0x20] sm:$0xff]
      %v5711 = vld [vmem:[#allocation4 + $0x28] sm:$0xff]
      %v5712 = vld [vmem:[#allocation4 + $0x30] sm:$0xff]
      %v5713 = vld [vmem:[#allocation4 + $0x38] sm:$0xff]
      %v5714 = vld [vmem:[#allocation4 + $0x40] sm:$0xff]
      %v5715 = vld [vmem:[#allocation4 + $0x48] sm:$0xff]
      %v5716 = vld [vmem:[#allocation4 + $0x50] sm:$0xff]
      %v5717 = vld [vmem:[#allocation4 + $0x58] sm:$0xff]
      %v5718 = vld [vmem:[#allocation4 + $0x60] sm:$0xff]
      %v5719 = vld [vmem:[#allocation4 + $0x68] sm:$0xff]
      %v5720 = vld [vmem:[#allocation4 + $0x70] sm:$0xff]
      %v5721 = vld [vmem:[#allocation4 + $0x78] sm:$0xff]
      %v5722 = vld [vmem:[#allocation4 + $0x80] sm:$0xff]
      %v5723 = vld [vmem:[#allocation4 + $0x88] sm:$0xff]
      %v5724 = vld [vmem:[#allocation4 + $0x90] sm:$0xff]
      %v5725 = vld [vmem:[#allocation4 + $0x98] sm:$0xff]
      %v5726 = vld [vmem:[#allocation4 + $0xa0] sm:$0xff]
      %v5727 = vld [vmem:[#allocation4 + $0xa8] sm:$0xff]
      %v5728 = vld [vmem:[#allocation4 + $0xb0] sm:$0xff]
      %v5729 = vld [vmem:[#allocation4 + $0xb8] sm:$0xff]
      %v5730 = vld [vmem:[#allocation4 + $0xc0] sm:$0xff]
      %v5731 = vld [vmem:[#allocation4 + $0xc8] sm:$0xff]
      %v5732 = vld [vmem:[#allocation4 + $0xd0] sm:$0xff]
      %v5733 = vld [vmem:[#allocation4 + $0xd8] sm:$0xff]
      %v5734 = vld [vmem:[#allocation4 + $0xe0] sm:$0xff]
      %v5735 = vld [vmem:[#allocation4 + $0xe8] sm:$0xff]
      %v5736 = vld [vmem:[#allocation4 + $0xf0] sm:$0xff]
      %v5737 = vld [vmem:[#allocation4 + $0xf8] sm:$0xff]
      %v5738 = vld [vmem:[#allocation4 + $0x100] sm:$0xff]
      %v5739 = vld [vmem:[#allocation4 + $0x108] sm:$0xff]
      %v5740 = vld [vmem:[#allocation4 + $0x110] sm:$0xff]
      %v5741 = vld [vmem:[#allocation4 + $0x118] sm:$0xff]
      %v5742 = vld [vmem:[#allocation4 + $0x120] sm:$0xff]
      %v5743 = vld [vmem:[#allocation4 + $0x128] sm:$0xff]
      %v5744 = vld [vmem:[#allocation4 + $0x130] sm:$0xff]
      %v5745 = vld [vmem:[#allocation4 + $0x138] sm:$0xff]
      %v5746 = vld [vmem:[#allocation4 + $0x140] sm:$0xff]
      %v5747 = vld [vmem:[#allocation4 + $0x148] sm:$0xff]
      %v5748 = vld [vmem:[#allocation4 + $0x150] sm:$0xff]
      %v5749 = vld [vmem:[#allocation4 + $0x158] sm:$0xff]
      %v5750 = vld [vmem:[#allocation4 + $0x160] sm:$0xff]
      %v5751 = vld [vmem:[#allocation4 + $0x168] sm:$0xff]
      %v5752 = vld [vmem:[#allocation4 + $0x170] sm:$0xff]
      %v5753 = vld [vmem:[#allocation4 + $0x178] sm:$0xff]
      %v5754 = vld [vmem:[#allocation4 + $0x180] sm:$0xff]
      %v5755 = vld [vmem:[#allocation4 + $0x188] sm:$0xff]
      %v5756 = vld [vmem:[#allocation4 + $0x190] sm:$0xff]
      %v5757 = vld [vmem:[#allocation4 + $0x198] sm:$0xff]
      %v5758 = vld [vmem:[#allocation4 + $0x1a0] sm:$0xff]
      %v5759 = vld [vmem:[#allocation4 + $0x1a8] sm:$0xff]
      %v5760 = vld [vmem:[#allocation4 + $0x1b0] sm:$0xff]
      %v5761 = vld [vmem:[#allocation4 + $0x1b8] sm:$0xff]
      %v5762 = vld [vmem:[#allocation4 + $0x1c0] sm:$0xff]
      %v5763 = vld [vmem:[#allocation4 + $0x1c8] sm:$0xff]
      %v5764 = vld [vmem:[#allocation4 + $0x1d0] sm:$0xff]
      %v5765 = vld [vmem:[#allocation4 + $0x1d8] sm:$0xff]
      %v5766 = vld [vmem:[#allocation4 + $0x1e0] sm:$0xff]
      %v5767 = vld [vmem:[#allocation4 + $0x1e8] sm:$0xff]
      %v5768 = vld [vmem:[#allocation4 + $0x1f0] sm:$0xff]
      %v5769 = vld [vmem:[#allocation4 + $0x1f8] sm:$0xff]
      %v5770 = vld [vmem:[#allocation4 + $0x200] sm:$0xff]
      %v5771 = vld [vmem:[#allocation4 + $0x208] sm:$0xff]
      %v5772 = vld [vmem:[#allocation4 + $0x210] sm:$0xff]
      %v5773 = vld [vmem:[#allocation4 + $0x218] sm:$0xff]
      %v5774 = vld [vmem:[#allocation4 + $0x220] sm:$0xff]
      %v5775 = vld [vmem:[#allocation4 + $0x228] sm:$0xff]
      %v5776 = vld [vmem:[#allocation4 + $0x230] sm:$0xff]
      %v5777 = vld [vmem:[#allocation4 + $0x238] sm:$0xff]
      %v5778 = vld [vmem:[#allocation4 + $0x240] sm:$0xff]
      %v5779 = vld [vmem:[#allocation4 + $0x248] sm:$0xff]
      %v5780 = vld [vmem:[#allocation4 + $0x250] sm:$0xff]
      %v5781 = vld [vmem:[#allocation4 + $0x258] sm:$0xff]
      %v5782 = vld [vmem:[#allocation4 + $0x260] sm:$0xff]
      %v5783 = vld [vmem:[#allocation4 + $0x268] sm:$0xff]
      %v5784 = vld [vmem:[#allocation4 + $0x270] sm:$0xff]
      %v5785 = vld [vmem:[#allocation4 + $0x278] sm:$0xff]
      %v5786 = vld [vmem:[#allocation4 + $0x280] sm:$0xff]
      %v5787 = vld [vmem:[#allocation4 + $0x288] sm:$0xff]
      %v5788 = vld [vmem:[#allocation4 + $0x290] sm:$0xff]
      %v5789 = vld [vmem:[#allocation4 + $0x298] sm:$0xff]
      %v5790 = vld [vmem:[#allocation4 + $0x2a0] sm:$0xff]
      %v5791 = vld [vmem:[#allocation4 + $0x2a8] sm:$0xff]
      %v5792 = vld [vmem:[#allocation4 + $0x2b0] sm:$0xff]
      %v5793 = vld [vmem:[#allocation4 + $0x2b8] sm:$0xff]
      %v5794 = vld [vmem:[#allocation4 + $0x2c0] sm:$0xff]
      %v5795 = vld [vmem:[#allocation4 + $0x2c8] sm:$0xff]
      %v5796 = vld [vmem:[#allocation4 + $0x2d0] sm:$0xff]
      %v5797 = vld [vmem:[#allocation4 + $0x2d8] sm:$0xff]
      %v5798 = vld [vmem:[#allocation4 + $0x2e0] sm:$0xff]
      %v5799 = vld [vmem:[#allocation4 + $0x2e8] sm:$0xff]
      %v5800 = vld [vmem:[#allocation4 + $0x2f0] sm:$0xff]
      %v5801 = vld [vmem:[#allocation4 + $0x2f8] sm:$0xff]
      %v5802 = vld [vmem:[#allocation4 + $0x300] sm:$0xff]
      %v5803 = vld [vmem:[#allocation4 + $0x308] sm:$0xff]
      %v5804 = vld [vmem:[#allocation4 + $0x310] sm:$0xff]
      %v5805 = vld [vmem:[#allocation4 + $0x318] sm:$0xff]
      %v5806 = vld [vmem:[#allocation4 + $0x320] sm:$0xff]
      %v5807 = vld [vmem:[#allocation4 + $0x328] sm:$0xff]
      %v5808 = vld [vmem:[#allocation4 + $0x330] sm:$0xff]
      %v5809 = vld [vmem:[#allocation4 + $0x338] sm:$0xff]
      %v5810 = vld [vmem:[#allocation4 + $0x340] sm:$0xff]
      %v5811 = vld [vmem:[#allocation4 + $0x348] sm:$0xff]
      %v5812 = vld [vmem:[#allocation4 + $0x350] sm:$0xff]
      %v5813 = vld [vmem:[#allocation4 + $0x358] sm:$0xff]
      %v5814 = vld [vmem:[#allocation4 + $0x360] sm:$0xff]
      %v5815 = vld [vmem:[#allocation4 + $0x368] sm:$0xff]
      %v5816 = vld [vmem:[#allocation4 + $0x370] sm:$0xff]
      %v5817 = vld [vmem:[#allocation4 + $0x378] sm:$0xff]
      %v5818 = vld [vmem:[#allocation4 + $0x380] sm:$0xff]
      %v5819 = vld [vmem:[#allocation4 + $0x388] sm:$0xff]
      %v5820 = vld [vmem:[#allocation4 + $0x390] sm:$0xff]
      %v5821 = vld [vmem:[#allocation4 + $0x398] sm:$0xff]
      %v5822 = vld [vmem:[#allocation4 + $0x3a0] sm:$0xff]
      %v5823 = vld [vmem:[#allocation4 + $0x3a8] sm:$0xff]
      %v5824 = vld [vmem:[#allocation4 + $0x3b0] sm:$0xff]
      %v5825 = vld [vmem:[#allocation4 + $0x3b8] sm:$0xff]
      %v5826 = vld [vmem:[#allocation4 + $0x3c0] sm:$0xff]
      %v5827 = vld [vmem:[#allocation4 + $0x3c8] sm:$0xff]
      %v5828 = vld [vmem:[#allocation4 + $0x3d0] sm:$0xff]
      %v5829 = vld [vmem:[#allocation4 + $0x3d8] sm:$0xff]
      %v5830 = vld [vmem:[#allocation4 + $0x3e0] sm:$0xff]
      %v5831 = vld [vmem:[#allocation4 + $0x3e8] sm:$0xff]
      %v5832 = vld [vmem:[#allocation4 + $0x3f0] sm:$0xff]
      %v5833 = vld [vmem:[#allocation4 + $0x3f8] sm:$0xff]
      %v5834 = vld [vmem:[%s6] sm:$0xf]
      %v5836 = vlaneseq
      %v5837 = vshrl.u32 %v5836, 7
      %v5838 = vsub.s32 0, %v5837
      %v5839 = vrot.slane %v5834, %v5838
      %v5840 = vlaneseq
      %v5841 = vshrl.u32 %v5840, 7
      %v5842 = vsub.s32 1, %v5841
      %v5843 = vrot.slane %v5834, %v5842
      %v5844 = vlaneseq
      %v5845 = vshrl.u32 %v5844, 7
      %v5846 = vsub.s32 2, %v5845
      %v5847 = vrot.slane %v5834, %v5846
      %v5848 = vlaneseq
      %v5849 = vshrl.u32 %v5848, 7
      %v5850 = vsub.s32 3, %v5849
      %v5851 = vrot.slane %v5834, %v5850
      %v5856 = vadd.f32 %v5706, %v5839
      %v5857 = vadd.f32 %v5707, %v5843
      %v5858 = vadd.f32 %v5708, %v5847
      %v5859 = vadd.f32 %v5709, %v5851
      %v5860 = vadd.f32 %v5710, %v5839
      %v5861 = vadd.f32 %v5711, %v5843
      %v5862 = vadd.f32 %v5712, %v5847
      %v5863 = vadd.f32 %v5713, %v5851
      %v5864 = vadd.f32 %v5714, %v5839
      %v5865 = vadd.f32 %v5715, %v5843
      %v5866 = vadd.f32 %v5716, %v5847
      %v5867 = vadd.f32 %v5717, %v5851
      %v5868 = vadd.f32 %v5718, %v5839
      %v5869 = vadd.f32 %v5719, %v5843
      %v5870 = vadd.f32 %v5720, %v5847
      %v5871 = vadd.f32 %v5721, %v5851
      %v5872 = vadd.f32 %v5722, %v5839
      %v5873 = vadd.f32 %v5723, %v5843
      %v5874 = vadd.f32 %v5724, %v5847
      %v5875 = vadd.f32 %v5725, %v5851
      %v5876 = vadd.f32 %v5726, %v5839
      %v5877 = vadd.f32 %v5727, %v5843
      %v5878 = vadd.f32 %v5728, %v5847
      %v5879 = vadd.f32 %v5729, %v5851
      %v5880 = vadd.f32 %v5730, %v5839
      %v5881 = vadd.f32 %v5731, %v5843
      %v5882 = vadd.f32 %v5732, %v5847
      %v5883 = vadd.f32 %v5733, %v5851
      %v5884 = vadd.f32 %v5734, %v5839
      %v5885 = vadd.f32 %v5735, %v5843
      %v5886 = vadd.f32 %v5736, %v5847
      %v5887 = vadd.f32 %v5737, %v5851
      %v5888 = vadd.f32 %v5738, %v5839
      %v5889 = vadd.f32 %v5739, %v5843
      %v5890 = vadd.f32 %v5740, %v5847
      %v5891 = vadd.f32 %v5741, %v5851
      %v5892 = vadd.f32 %v5742, %v5839
      %v5893 = vadd.f32 %v5743, %v5843
      %v5894 = vadd.f32 %v5744, %v5847
      %v5895 = vadd.f32 %v5745, %v5851
      %v5896 = vadd.f32 %v5746, %v5839
      %v5897 = vadd.f32 %v5747, %v5843
      %v5898 = vadd.f32 %v5748, %v5847
      %v5899 = vadd.f32 %v5749, %v5851
      %v5900 = vadd.f32 %v5750, %v5839
      %v5901 = vadd.f32 %v5751, %v5843
      %v5902 = vadd.f32 %v5752, %v5847
      %v5903 = vadd.f32 %v5753, %v5851
      %v5904 = vadd.f32 %v5754, %v5839
      %v5905 = vadd.f32 %v5755, %v5843
      %v5906 = vadd.f32 %v5756, %v5847
      %v5907 = vadd.f32 %v5757, %v5851
      %v5908 = vadd.f32 %v5758, %v5839
      %v5909 = vadd.f32 %v5759, %v5843
      %v5910 = vadd.f32 %v5760, %v5847
      %v5911 = vadd.f32 %v5761, %v5851
      %v5912 = vadd.f32 %v5762, %v5839
      %v5913 = vadd.f32 %v5763, %v5843
      %v5914 = vadd.f32 %v5764, %v5847
      %v5915 = vadd.f32 %v5765, %v5851
      %v5916 = vadd.f32 %v5766, %v5839
      %v5917 = vadd.f32 %v5767, %v5843
      %v5918 = vadd.f32 %v5768, %v5847
      %v5919 = vadd.f32 %v5769, %v5851
      %v5920 = vadd.f32 %v5770, %v5839
      %v5921 = vadd.f32 %v5771, %v5843
      %v5922 = vadd.f32 %v5772, %v5847
      %v5923 = vadd.f32 %v5773, %v5851
      %v5924 = vadd.f32 %v5774, %v5839
      %v5925 = vadd.f32 %v5775, %v5843
      %v5926 = vadd.f32 %v5776, %v5847
      %v5927 = vadd.f32 %v5777, %v5851
      %v5928 = vadd.f32 %v5778, %v5839
      %v5929 = vadd.f32 %v5779, %v5843
      %v5930 = vadd.f32 %v5780, %v5847
      %v5931 = vadd.f32 %v5781, %v5851
      %v5932 = vadd.f32 %v5782, %v5839
      %v5933 = vadd.f32 %v5783, %v5843
      %v5934 = vadd.f32 %v5784, %v5847
      %v5935 = vadd.f32 %v5785, %v5851
      %v5936 = vadd.f32 %v5786, %v5839
      %v5937 = vadd.f32 %v5787, %v5843
      %v5938 = vadd.f32 %v5788, %v5847
      %v5939 = vadd.f32 %v5789, %v5851
      %v5940 = vadd.f32 %v5790, %v5839
      %v5941 = vadd.f32 %v5791, %v5843
      %v5942 = vadd.f32 %v5792, %v5847
      %v5943 = vadd.f32 %v5793, %v5851
      %v5944 = vadd.f32 %v5794, %v5839
      %v5945 = vadd.f32 %v5795, %v5843
      %v5946 = vadd.f32 %v5796, %v5847
      %v5947 = vadd.f32 %v5797, %v5851
      %v5948 = vadd.f32 %v5798, %v5839
      %v5949 = vadd.f32 %v5799, %v5843
      %v5950 = vadd.f32 %v5800, %v5847
      %v5951 = vadd.f32 %v5801, %v5851
      %v5952 = vadd.f32 %v5802, %v5839
      %v5953 = vadd.f32 %v5803, %v5843
      %v5954 = vadd.f32 %v5804, %v5847
      %v5955 = vadd.f32 %v5805, %v5851
      %v5956 = vadd.f32 %v5806, %v5839
      %v5957 = vadd.f32 %v5807, %v5843
      %v5958 = vadd.f32 %v5808, %v5847
      %v5959 = vadd.f32 %v5809, %v5851
      %v5960 = vadd.f32 %v5810, %v5839
      %v5961 = vadd.f32 %v5811, %v5843
      %v5962 = vadd.f32 %v5812, %v5847
      %v5963 = vadd.f32 %v5813, %v5851
      %v5964 = vadd.f32 %v5814, %v5839
      %v5965 = vadd.f32 %v5815, %v5843
      %v5966 = vadd.f32 %v5816, %v5847
      %v5967 = vadd.f32 %v5817, %v5851
      %v5968 = vadd.f32 %v5818, %v5839
      %v5969 = vadd.f32 %v5819, %v5843
      %v5970 = vadd.f32 %v5820, %v5847
      %v5971 = vadd.f32 %v5821, %v5851
      %v5972 = vadd.f32 %v5822, %v5839
      %v5973 = vadd.f32 %v5823, %v5843
      %v5974 = vadd.f32 %v5824, %v5847
      %v5975 = vadd.f32 %v5825, %v5851
      %v5976 = vadd.f32 %v5826, %v5839
      %v5977 = vadd.f32 %v5827, %v5843
      %v5978 = vadd.f32 %v5828, %v5847
      %v5979 = vadd.f32 %v5829, %v5851
      %v5980 = vadd.f32 %v5830, %v5839
      %v5981 = vadd.f32 %v5831, %v5843
      %v5982 = vadd.f32 %v5832, %v5847
      %v5983 = vadd.f32 %v5833, %v5851
      %5984 = vst [vmem:[#allocation19] sm:$0xff] %v5856
      %5985 = vst [vmem:[#allocation19 + $0x8] sm:$0xff] %v5857
      %5986 = vst [vmem:[#allocation19 + $0x10] sm:$0xff] %v5858
      %5987 = vst [vmem:[#allocation19 + $0x18] sm:$0xff] %v5859
      %5988 = vst [vmem:[#allocation19 + $0x20] sm:$0xff] %v5860
      %5989 = vst [vmem:[#allocation19 + $0x28] sm:$0xff] %v5861
      %5990 = vst [vmem:[#allocation19 + $0x30] sm:$0xff] %v5862
      %5991 = vst [vmem:[#allocation19 + $0x38] sm:$0xff] %v5863
      %5992 = vst [vmem:[#allocation19 + $0x40] sm:$0xff] %v5864
      %5993 = vst [vmem:[#allocation19 + $0x48] sm:$0xff] %v5865
      %5994 = vst [vmem:[#allocation19 + $0x50] sm:$0xff] %v5866
      %5995 = vst [vmem:[#allocation19 + $0x58] sm:$0xff] %v5867
      %5996 = vst [vmem:[#allocation19 + $0x60] sm:$0xff] %v5868
      %5997 = vst [vmem:[#allocation19 + $0x68] sm:$0xff] %v5869
      %5998 = vst [vmem:[#allocation19 + $0x70] sm:$0xff] %v5870
      %5999 = vst [vmem:[#allocation19 + $0x78] sm:$0xff] %v5871
      %6000 = vst [vmem:[#allocation19 + $0x80] sm:$0xff] %v5872
      %6001 = vst [vmem:[#allocation19 + $0x88] sm:$0xff] %v5873
      %6002 = vst [vmem:[#allocation19 + $0x90] sm:$0xff] %v5874
      %6003 = vst [vmem:[#allocation19 + $0x98] sm:$0xff] %v5875
      %6004 = vst [vmem:[#allocation19 + $0xa0] sm:$0xff] %v5876
      %6005 = vst [vmem:[#allocation19 + $0xa8] sm:$0xff] %v5877
      %6006 = vst [vmem:[#allocation19 + $0xb0] sm:$0xff] %v5878
      %6007 = vst [vmem:[#allocation19 + $0xb8] sm:$0xff] %v5879
      %6008 = vst [vmem:[#allocation19 + $0xc0] sm:$0xff] %v5880
      %6009 = vst [vmem:[#allocation19 + $0xc8] sm:$0xff] %v5881
      %6010 = vst [vmem:[#allocation19 + $0xd0] sm:$0xff] %v5882
      %6011 = vst [vmem:[#allocation19 + $0xd8] sm:$0xff] %v5883
      %6012 = vst [vmem:[#allocation19 + $0xe0] sm:$0xff] %v5884
      %6013 = vst [vmem:[#allocation19 + $0xe8] sm:$0xff] %v5885
      %6014 = vst [vmem:[#allocation19 + $0xf0] sm:$0xff] %v5886
      %6015 = vst [vmem:[#allocation19 + $0xf8] sm:$0xff] %v5887
      %6016 = vst [vmem:[#allocation19 + $0x100] sm:$0xff] %v5888
      %6017 = vst [vmem:[#allocation19 + $0x108] sm:$0xff] %v5889
      %6018 = vst [vmem:[#allocation19 + $0x110] sm:$0xff] %v5890
      %6019 = vst [vmem:[#allocation19 + $0x118] sm:$0xff] %v5891
      %6020 = vst [vmem:[#allocation19 + $0x120] sm:$0xff] %v5892
      %6021 = vst [vmem:[#allocation19 + $0x128] sm:$0xff] %v5893
      %6022 = vst [vmem:[#allocation19 + $0x130] sm:$0xff] %v5894
      %6023 = vst [vmem:[#allocation19 + $0x138] sm:$0xff] %v5895
      %6024 = vst [vmem:[#allocation19 + $0x140] sm:$0xff] %v5896
      %6025 = vst [vmem:[#allocation19 + $0x148] sm:$0xff] %v5897
      %6026 = vst [vmem:[#allocation19 + $0x150] sm:$0xff] %v5898
      %6027 = vst [vmem:[#allocation19 + $0x158] sm:$0xff] %v5899
      %6028 = vst [vmem:[#allocation19 + $0x160] sm:$0xff] %v5900
      %6029 = vst [vmem:[#allocation19 + $0x168] sm:$0xff] %v5901
      %6030 = vst [vmem:[#allocation19 + $0x170] sm:$0xff] %v5902
      %6031 = vst [vmem:[#allocation19 + $0x178] sm:$0xff] %v5903
      %6032 = vst [vmem:[#allocation19 + $0x180] sm:$0xff] %v5904
      %6033 = vst [vmem:[#allocation19 + $0x188] sm:$0xff] %v5905
      %6034 = vst [vmem:[#allocation19 + $0x190] sm:$0xff] %v5906
      %6035 = vst [vmem:[#allocation19 + $0x198] sm:$0xff] %v5907
      %6036 = vst [vmem:[#allocation19 + $0x1a0] sm:$0xff] %v5908
      %6037 = vst [vmem:[#allocation19 + $0x1a8] sm:$0xff] %v5909
      %6038 = vst [vmem:[#allocation19 + $0x1b0] sm:$0xff] %v5910
      %6039 = vst [vmem:[#allocation19 + $0x1b8] sm:$0xff] %v5911
      %6040 = vst [vmem:[#allocation19 + $0x1c0] sm:$0xff] %v5912
      %6041 = vst [vmem:[#allocation19 + $0x1c8] sm:$0xff] %v5913
      %6042 = vst [vmem:[#allocation19 + $0x1d0] sm:$0xff] %v5914
      %6043 = vst [vmem:[#allocation19 + $0x1d8] sm:$0xff] %v5915
      %6044 = vst [vmem:[#allocation19 + $0x1e0] sm:$0xff] %v5916
      %6045 = vst [vmem:[#allocation19 + $0x1e8] sm:$0xff] %v5917
      %6046 = vst [vmem:[#allocation19 + $0x1f0] sm:$0xff] %v5918
      %6047 = vst [vmem:[#allocation19 + $0x1f8] sm:$0xff] %v5919
      %6048 = vst [vmem:[#allocation19 + $0x200] sm:$0xff] %v5920
      %6049 = vst [vmem:[#allocation19 + $0x208] sm:$0xff] %v5921
      %6050 = vst [vmem:[#allocation19 + $0x210] sm:$0xff] %v5922
      %6051 = vst [vmem:[#allocation19 + $0x218] sm:$0xff] %v5923
      %6052 = vst [vmem:[#allocation19 + $0x220] sm:$0xff] %v5924
      %6053 = vst [vmem:[#allocation19 + $0x228] sm:$0xff] %v5925
      %6054 = vst [vmem:[#allocation19 + $0x230] sm:$0xff] %v5926
      %6055 = vst [vmem:[#allocation19 + $0x238] sm:$0xff] %v5927
      %6056 = vst [vmem:[#allocation19 + $0x240] sm:$0xff] %v5928
      %6057 = vst [vmem:[#allocation19 + $0x248] sm:$0xff] %v5929
      %6058 = vst [vmem:[#allocation19 + $0x250] sm:$0xff] %v5930
      %6059 = vst [vmem:[#allocation19 + $0x258] sm:$0xff] %v5931
      %6060 = vst [vmem:[#allocation19 + $0x260] sm:$0xff] %v5932
      %6061 = vst [vmem:[#allocation19 + $0x268] sm:$0xff] %v5933
      %6062 = vst [vmem:[#allocation19 + $0x270] sm:$0xff] %v5934
      %6063 = vst [vmem:[#allocation19 + $0x278] sm:$0xff] %v5935
      %6064 = vst [vmem:[#allocation19 + $0x280] sm:$0xff] %v5936
      %6065 = vst [vmem:[#allocation19 + $0x288] sm:$0xff] %v5937
      %6066 = vst [vmem:[#allocation19 + $0x290] sm:$0xff] %v5938
      %6067 = vst [vmem:[#allocation19 + $0x298] sm:$0xff] %v5939
      %6068 = vst [vmem:[#allocation19 + $0x2a0] sm:$0xff] %v5940
      %6069 = vst [vmem:[#allocation19 + $0x2a8] sm:$0xff] %v5941
      %6070 = vst [vmem:[#allocation19 + $0x2b0] sm:$0xff] %v5942
      %6071 = vst [vmem:[#allocation19 + $0x2b8] sm:$0xff] %v5943
      %6072 = vst [vmem:[#allocation19 + $0x2c0] sm:$0xff] %v5944
      %6073 = vst [vmem:[#allocation19 + $0x2c8] sm:$0xff] %v5945
      %6074 = vst [vmem:[#allocation19 + $0x2d0] sm:$0xff] %v5946
      %6075 = vst [vmem:[#allocation19 + $0x2d8] sm:$0xff] %v5947
      %6076 = vst [vmem:[#allocation19 + $0x2e0] sm:$0xff] %v5948
      %6077 = vst [vmem:[#allocation19 + $0x2e8] sm:$0xff] %v5949
      %6078 = vst [vmem:[#allocation19 + $0x2f0] sm:$0xff] %v5950
      %6079 = vst [vmem:[#allocation19 + $0x2f8] sm:$0xff] %v5951
      %6080 = vst [vmem:[#allocation19 + $0x300] sm:$0xff] %v5952
      %6081 = vst [vmem:[#allocation19 + $0x308] sm:$0xff] %v5953
      %6082 = vst [vmem:[#allocation19 + $0x310] sm:$0xff] %v5954
      %6083 = vst [vmem:[#allocation19 + $0x318] sm:$0xff] %v5955
      %6084 = vst [vmem:[#allocation19 + $0x320] sm:$0xff] %v5956
      %6085 = vst [vmem:[#allocation19 + $0x328] sm:$0xff] %v5957
      %6086 = vst [vmem:[#allocation19 + $0x330] sm:$0xff] %v5958
      %6087 = vst [vmem:[#allocation19 + $0x338] sm:$0xff] %v5959
      %6088 = vst [vmem:[#allocation19 + $0x340] sm:$0xff] %v5960
      %6089 = vst [vmem:[#allocation19 + $0x348] sm:$0xff] %v5961
      %6090 = vst [vmem:[#allocation19 + $0x350] sm:$0xff] %v5962
      %6091 = vst [vmem:[#allocation19 + $0x358] sm:$0xff] %v5963
      %6092 = vst [vmem:[#allocation19 + $0x360] sm:$0xff] %v5964
      %6093 = vst [vmem:[#allocation19 + $0x368] sm:$0xff] %v5965
      %6094 = vst [vmem:[#allocation19 + $0x370] sm:$0xff] %v5966
      %6095 = vst [vmem:[#allocation19 + $0x378] sm:$0xff] %v5967
      %6096 = vst [vmem:[#allocation19 + $0x380] sm:$0xff] %v5968
      %6097 = vst [vmem:[#allocation19 + $0x388] sm:$0xff] %v5969
      %6098 = vst [vmem:[#allocation19 + $0x390] sm:$0xff] %v5970
      %6099 = vst [vmem:[#allocation19 + $0x398] sm:$0xff] %v5971
      %6100 = vst [vmem:[#allocation19 + $0x3a0] sm:$0xff] %v5972
      %6101 = vst [vmem:[#allocation19 + $0x3a8] sm:$0xff] %v5973
      %6102 = vst [vmem:[#allocation19 + $0x3b0] sm:$0xff] %v5974
      %6103 = vst [vmem:[#allocation19 + $0x3b8] sm:$0xff] %v5975
      %6104 = vst [vmem:[#allocation19 + $0x3c0] sm:$0xff] %v5976
      %6105 = vst [vmem:[#allocation19 + $0x3c8] sm:$0xff] %v5977
      %6106 = vst [vmem:[#allocation19 + $0x3d0] sm:$0xff] %v5978
      %6107 = vst [vmem:[#allocation19 + $0x3d8] sm:$0xff] %v5979
      %6108 = vst [vmem:[#allocation19 + $0x3e0] sm:$0xff] %v5980
      %6109 = vst [vmem:[#allocation19 + $0x3e8] sm:$0xff] %v5981
      %6110 = vst [vmem:[#allocation19 + $0x3f0] sm:$0xff] %v5982
      %6111 = vst [vmem:[#allocation19 + $0x3f8] sm:$0xff] %v5983
      %v6112 = vld [vmem:[#allocation2] sm:$0xff]
      %v6113 = vld [vmem:[#allocation2 + $0x20] sm:$0xff]
      %v6114 = vld [vmem:[#allocation2 + $0x40] sm:$0xff]
      %v6115 = vld [vmem:[#allocation2 + $0x60] sm:$0xff]
      %v6116 = vld [vmem:[#allocation2 + $0x80] sm:$0xff]
      %v6117 = vld [vmem:[#allocation2 + $0xa0] sm:$0xff]
      %v6118 = vld [vmem:[#allocation2 + $0xc0] sm:$0xff]
      %v6119 = vld [vmem:[#allocation2 + $0xe0] sm:$0xff]
      %v6120 = vld [vmem:[#allocation2 + $0x100] sm:$0xff]
      %v6121 = vld [vmem:[#allocation2 + $0x120] sm:$0xff]
      %v6122 = vld [vmem:[#allocation2 + $0x140] sm:$0xff]
      %v6123 = vld [vmem:[#allocation2 + $0x160] sm:$0xff]
      %v6124 = vld [vmem:[#allocation2 + $0x180] sm:$0xff]
      %v6125 = vld [vmem:[#allocation2 + $0x1a0] sm:$0xff]
      %v6126 = vld [vmem:[#allocation2 + $0x1c0] sm:$0xff]
      %v6127 = vld [vmem:[#allocation2 + $0x1e0] sm:$0xff]
      %v6128 = vld [vmem:[#allocation2 + $0x200] sm:$0xff]
      %v6129 = vld [vmem:[#allocation2 + $0x220] sm:$0xff]
      %v6130 = vld [vmem:[#allocation2 + $0x240] sm:$0xff]
      %v6131 = vld [vmem:[#allocation2 + $0x260] sm:$0xff]
      %v6132 = vld [vmem:[#allocation2 + $0x280] sm:$0xff]
      %v6133 = vld [vmem:[#allocation2 + $0x2a0] sm:$0xff]
      %v6134 = vld [vmem:[#allocation2 + $0x2c0] sm:$0xff]
      %v6135 = vld [vmem:[#allocation2 + $0x2e0] sm:$0xff]
      %v6136 = vld [vmem:[#allocation2 + $0x300] sm:$0xff]
      %v6137 = vld [vmem:[#allocation2 + $0x320] sm:$0xff]
      %v6138 = vld [vmem:[#allocation2 + $0x340] sm:$0xff]
      %v6139 = vld [vmem:[#allocation2 + $0x360] sm:$0xff]
      %v6140 = vld [vmem:[#allocation2 + $0x380] sm:$0xff]
      %v6141 = vld [vmem:[#allocation2 + $0x3a0] sm:$0xff]
      %v6142 = vld [vmem:[#allocation2 + $0x3c0] sm:$0xff]
      %v6143 = vld [vmem:[#allocation2 + $0x3e0] sm:$0xff]
      %v6144 = vld [vmem:[%s4] sm:$0x1]
      %v6146 = vlaneseq
      %v6147 = vshrl.u32 %v6146, 7
      %v6148 = vsub.s32 0, %v6147
      %v6149 = vrot.slane %v6144, %v6148
      %v6151 = vadd.f32 %v6112, %v6149
      %v6152 = vadd.f32 %v6113, %v6149
      %v6153 = vadd.f32 %v6114, %v6149
      %v6154 = vadd.f32 %v6115, %v6149
      %v6155 = vadd.f32 %v6116, %v6149
      %v6156 = vadd.f32 %v6117, %v6149
      %v6157 = vadd.f32 %v6118, %v6149
      %v6158 = vadd.f32 %v6119, %v6149
      %v6159 = vadd.f32 %v6120, %v6149
      %v6160 = vadd.f32 %v6121, %v6149
      %v6161 = vadd.f32 %v6122, %v6149
      %v6162 = vadd.f32 %v6123, %v6149
      %v6163 = vadd.f32 %v6124, %v6149
      %v6164 = vadd.f32 %v6125, %v6149
      %v6165 = vadd.f32 %v6126, %v6149
      %v6166 = vadd.f32 %v6127, %v6149
      %v6167 = vadd.f32 %v6128, %v6149
      %v6168 = vadd.f32 %v6129, %v6149
      %v6169 = vadd.f32 %v6130, %v6149
      %v6170 = vadd.f32 %v6131, %v6149
      %v6171 = vadd.f32 %v6132, %v6149
      %v6172 = vadd.f32 %v6133, %v6149
      %v6173 = vadd.f32 %v6134, %v6149
      %v6174 = vadd.f32 %v6135, %v6149
      %v6175 = vadd.f32 %v6136, %v6149
      %v6176 = vadd.f32 %v6137, %v6149
      %v6177 = vadd.f32 %v6138, %v6149
      %v6178 = vadd.f32 %v6139, %v6149
      %v6179 = vadd.f32 %v6140, %v6149
      %v6180 = vadd.f32 %v6141, %v6149
      %v6181 = vadd.f32 %v6142, %v6149
      %v6182 = vadd.f32 %v6143, %v6149
      %v6183 = vld [vmem:[#allocation3] sm:$0xff]
      %v6184 = vld [vmem:[#allocation3 + $0x20] sm:$0xff]
      %v6185 = vld [vmem:[#allocation3 + $0x40] sm:$0xff]
      %v6186 = vld [vmem:[#allocation3 + $0x60] sm:$0xff]
      %v6187 = vld [vmem:[#allocation3 + $0x80] sm:$0xff]
      %v6188 = vld [vmem:[#allocation3 + $0xa0] sm:$0xff]
      %v6189 = vld [vmem:[#allocation3 + $0xc0] sm:$0xff]
      %v6190 = vld [vmem:[#allocation3 + $0xe0] sm:$0xff]
      %v6191 = vld [vmem:[#allocation3 + $0x100] sm:$0xff]
      %v6192 = vld [vmem:[#allocation3 + $0x120] sm:$0xff]
      %v6193 = vld [vmem:[#allocation3 + $0x140] sm:$0xff]
      %v6194 = vld [vmem:[#allocation3 + $0x160] sm:$0xff]
      %v6195 = vld [vmem:[#allocation3 + $0x180] sm:$0xff]
      %v6196 = vld [vmem:[#allocation3 + $0x1a0] sm:$0xff]
      %v6197 = vld [vmem:[#allocation3 + $0x1c0] sm:$0xff]
      %v6198 = vld [vmem:[#allocation3 + $0x1e0] sm:$0xff]
      %v6199 = vld [vmem:[#allocation3 + $0x200] sm:$0xff]
      %v6200 = vld [vmem:[#allocation3 + $0x220] sm:$0xff]
      %v6201 = vld [vmem:[#allocation3 + $0x240] sm:$0xff]
      %v6202 = vld [vmem:[#allocation3 + $0x260] sm:$0xff]
      %v6203 = vld [vmem:[#allocation3 + $0x280] sm:$0xff]
      %v6204 = vld [vmem:[#allocation3 + $0x2a0] sm:$0xff]
      %v6205 = vld [vmem:[#allocation3 + $0x2c0] sm:$0xff]
      %v6206 = vld [vmem:[#allocation3 + $0x2e0] sm:$0xff]
      %v6207 = vld [vmem:[#allocation3 + $0x300] sm:$0xff]
      %v6208 = vld [vmem:[#allocation3 + $0x320] sm:$0xff]
      %v6209 = vld [vmem:[#allocation3 + $0x340] sm:$0xff]
      %v6210 = vld [vmem:[#allocation3 + $0x360] sm:$0xff]
      %v6211 = vld [vmem:[#allocation3 + $0x380] sm:$0xff]
      %v6212 = vld [vmem:[#allocation3 + $0x3a0] sm:$0xff]
      %v6213 = vld [vmem:[#allocation3 + $0x3c0] sm:$0xff]
      %v6214 = vld [vmem:[#allocation3 + $0x3e0] sm:$0xff]
      %v6215 = vld [vmem:[%s5] sm:$0x1]
      %v6217 = vlaneseq
      %v6218 = vshrl.u32 %v6217, 7
      %v6219 = vsub.s32 0, %v6218
      %v6220 = vrot.slane %v6215, %v6219
      %v6222 = vadd.f32 %v6183, %v6220
      %v6223 = vadd.f32 %v6184, %v6220
      %v6224 = vadd.f32 %v6185, %v6220
      %v6225 = vadd.f32 %v6186, %v6220
      %v6226 = vadd.f32 %v6187, %v6220
      %v6227 = vadd.f32 %v6188, %v6220
      %v6228 = vadd.f32 %v6189, %v6220
      %v6229 = vadd.f32 %v6190, %v6220
      %v6230 = vadd.f32 %v6191, %v6220
      %v6231 = vadd.f32 %v6192, %v6220
      %v6232 = vadd.f32 %v6193, %v6220
      %v6233 = vadd.f32 %v6194, %v6220
      %v6234 = vadd.f32 %v6195, %v6220
      %v6235 = vadd.f32 %v6196, %v6220
      %v6236 = vadd.f32 %v6197, %v6220
      %v6237 = vadd.f32 %v6198, %v6220
      %v6238 = vadd.f32 %v6199, %v6220
      %v6239 = vadd.f32 %v6200, %v6220
      %v6240 = vadd.f32 %v6201, %v6220
      %v6241 = vadd.f32 %v6202, %v6220
      %v6242 = vadd.f32 %v6203, %v6220
      %v6243 = vadd.f32 %v6204, %v6220
      %v6244 = vadd.f32 %v6205, %v6220
      %v6245 = vadd.f32 %v6206, %v6220
      %v6246 = vadd.f32 %v6207, %v6220
      %v6247 = vadd.f32 %v6208, %v6220
      %v6248 = vadd.f32 %v6209, %v6220
      %v6249 = vadd.f32 %v6210, %v6220
      %v6250 = vadd.f32 %v6211, %v6220
      %v6251 = vadd.f32 %v6212, %v6220
      %v6252 = vadd.f32 %v6213, %v6220
      %v6253 = vadd.f32 %v6214, %v6220
      %v6254 = vmul.f32 %v6151, %v5642
      %v6255 = vmul.f32 %v6152, %v5643
      %v6256 = vmul.f32 %v6153, %v5644
      %v6257 = vmul.f32 %v6154, %v5645
      %v6258 = vmul.f32 %v6155, %v5646
      %v6259 = vmul.f32 %v6156, %v5647
      %v6260 = vmul.f32 %v6157, %v5648
      %v6261 = vmul.f32 %v6158, %v5649
      %v6262 = vmul.f32 %v6159, %v5650
      %v6263 = vmul.f32 %v6160, %v5651
      %v6264 = vmul.f32 %v6161, %v5652
      %v6265 = vmul.f32 %v6162, %v5653
      %v6266 = vmul.f32 %v6163, %v5654
      %v6267 = vmul.f32 %v6164, %v5655
      %v6268 = vmul.f32 %v6165, %v5656
      %v6269 = vmul.f32 %v6166, %v5657
      %v6270 = vmul.f32 %v6167, %v5658
      %v6271 = vmul.f32 %v6168, %v5659
      %v6272 = vmul.f32 %v6169, %v5660
      %v6273 = vmul.f32 %v6170, %v5661
      %v6274 = vmul.f32 %v6171, %v5662
      %v6275 = vmul.f32 %v6172, %v5663
      %v6276 = vmul.f32 %v6173, %v5664
      %v6277 = vmul.f32 %v6174, %v5665
      %v6278 = vmul.f32 %v6175, %v5666
      %v6279 = vmul.f32 %v6176, %v5667
      %v6280 = vmul.f32 %v6177, %v5668
      %v6281 = vmul.f32 %v6178, %v5669
      %v6282 = vmul.f32 %v6179, %v5670
      %v6283 = vmul.f32 %v6180, %v5671
      %v6284 = vmul.f32 %v6181, %v5672
      %v6285 = vmul.f32 %v6182, %v5673
      %6286 = vrot.lane.b32.xlu0 %v6151, 64
      %v6287 = vpop.permute.xlu0 %6286
      %6288 = vrot.lane.b32.xlu0 %v6152, 64
      %v6289 = vpop.permute.xlu0 %6288
      %6290 = vrot.lane.b32.xlu0 %v6153, 64
      %v6291 = vpop.permute.xlu0 %6290
      %6292 = vrot.lane.b32.xlu0 %v6154, 64
      %v6293 = vpop.permute.xlu0 %6292
      %6294 = vrot.lane.b32.xlu0 %v6155, 64
      %v6295 = vpop.permute.xlu0 %6294
      %6296 = vrot.lane.b32.xlu0 %v6156, 64
      %v6297 = vpop.permute.xlu0 %6296
      %6298 = vrot.lane.b32.xlu0 %v6157, 64
      %v6299 = vpop.permute.xlu0 %6298
      %6300 = vrot.lane.b32.xlu0 %v6158, 64
      %v6301 = vpop.permute.xlu0 %6300
      %6302 = vrot.lane.b32.xlu0 %v6159, 64
      %v6303 = vpop.permute.xlu0 %6302
      %6304 = vrot.lane.b32.xlu0 %v6160, 64
      %v6305 = vpop.permute.xlu0 %6304
      %6306 = vrot.lane.b32.xlu0 %v6161, 64
      %v6307 = vpop.permute.xlu0 %6306
      %6308 = vrot.lane.b32.xlu0 %v6162, 64
      %v6309 = vpop.permute.xlu0 %6308
      %6310 = vrot.lane.b32.xlu0 %v6163, 64
      %v6311 = vpop.permute.xlu0 %6310
      %6312 = vrot.lane.b32.xlu0 %v6164, 64
      %v6313 = vpop.permute.xlu0 %6312
      %6314 = vrot.lane.b32.xlu0 %v6165, 64
      %v6315 = vpop.permute.xlu0 %6314
      %6316 = vrot.lane.b32.xlu0 %v6166, 64
      %v6317 = vpop.permute.xlu0 %6316
      %6318 = vrot.lane.b32.xlu0 %v6167, 64
      %v6319 = vpop.permute.xlu0 %6318
      %6320 = vrot.lane.b32.xlu0 %v6168, 64
      %v6321 = vpop.permute.xlu0 %6320
      %6322 = vrot.lane.b32.xlu0 %v6169, 64
      %v6323 = vpop.permute.xlu0 %6322
      %6324 = vrot.lane.b32.xlu0 %v6170, 64
      %v6325 = vpop.permute.xlu0 %6324
      %6326 = vrot.lane.b32.xlu0 %v6171, 64
      %v6327 = vpop.permute.xlu0 %6326
      %6328 = vrot.lane.b32.xlu0 %v6172, 64
      %v6329 = vpop.permute.xlu0 %6328
      %6330 = vrot.lane.b32.xlu0 %v6173, 64
      %v6331 = vpop.permute.xlu0 %6330
      %6332 = vrot.lane.b32.xlu0 %v6174, 64
      %v6333 = vpop.permute.xlu0 %6332
      %6334 = vrot.lane.b32.xlu0 %v6175, 64
      %v6335 = vpop.permute.xlu0 %6334
      %6336 = vrot.lane.b32.xlu0 %v6176, 64
      %v6337 = vpop.permute.xlu0 %6336
      %6338 = vrot.lane.b32.xlu0 %v6177, 64
      %v6339 = vpop.permute.xlu0 %6338
      %6340 = vrot.lane.b32.xlu0 %v6178, 64
      %v6341 = vpop.permute.xlu0 %6340
      %6342 = vrot.lane.b32.xlu0 %v6179, 64
      %v6343 = vpop.permute.xlu0 %6342
      %6344 = vrot.lane.b32.xlu0 %v6180, 64
      %v6345 = vpop.permute.xlu0 %6344
      %6346 = vrot.lane.b32.xlu0 %v6181, 64
      %v6347 = vpop.permute.xlu0 %6346
      %6348 = vrot.lane.b32.xlu0 %v6182, 64
      %v6349 = vpop.permute.xlu0 %6348
      %v6350 = vmul.f32 %v6287, %v5674
      %v6351 = vmul.f32 %v6289, %v5675
      %v6352 = vmul.f32 %v6291, %v5676
      %v6353 = vmul.f32 %v6293, %v5677
      %v6354 = vmul.f32 %v6295, %v5678
      %v6355 = vmul.f32 %v6297, %v5679
      %v6356 = vmul.f32 %v6299, %v5680
      %v6357 = vmul.f32 %v6301, %v5681
      %v6358 = vmul.f32 %v6303, %v5682
      %v6359 = vmul.f32 %v6305, %v5683
      %v6360 = vmul.f32 %v6307, %v5684
      %v6361 = vmul.f32 %v6309, %v5685
      %v6362 = vmul.f32 %v6311, %v5686
      %v6363 = vmul.f32 %v6313, %v5687
      %v6364 = vmul.f32 %v6315, %v5688
      %v6365 = vmul.f32 %v6317, %v5689
      %v6366 = vmul.f32 %v6319, %v5690
      %v6367 = vmul.f32 %v6321, %v5691
      %v6368 = vmul.f32 %v6323, %v5692
      %v6369 = vmul.f32 %v6325, %v5693
      %v6370 = vmul.f32 %v6327, %v5694
      %v6371 = vmul.f32 %v6329, %v5695
      %v6372 = vmul.f32 %v6331, %v5696
      %v6373 = vmul.f32 %v6333, %v5697
      %v6374 = vmul.f32 %v6335, %v5698
      %v6375 = vmul.f32 %v6337, %v5699
      %v6376 = vmul.f32 %v6339, %v5700
      %v6377 = vmul.f32 %v6341, %v5701
      %v6378 = vmul.f32 %v6343, %v5702
      %v6379 = vmul.f32 %v6345, %v5703
      %v6380 = vmul.f32 %v6347, %v5704
      %v6381 = vmul.f32 %v6349, %v5705
      %v6382 = vadd.f32 %v6254, %v6350
      %v6383 = vadd.f32 %v6255, %v6351
      %v6384 = vadd.f32 %v6256, %v6352
      %v6385 = vadd.f32 %v6257, %v6353
      %v6386 = vadd.f32 %v6258, %v6354
      %v6387 = vadd.f32 %v6259, %v6355
      %v6388 = vadd.f32 %v6260, %v6356
      %v6389 = vadd.f32 %v6261, %v6357
      %v6390 = vadd.f32 %v6262, %v6358
      %v6391 = vadd.f32 %v6263, %v6359
      %v6392 = vadd.f32 %v6264, %v6360
      %v6393 = vadd.f32 %v6265, %v6361
      %v6394 = vadd.f32 %v6266, %v6362
      %v6395 = vadd.f32 %v6267, %v6363
      %v6396 = vadd.f32 %v6268, %v6364
      %v6397 = vadd.f32 %v6269, %v6365
      %v6398 = vadd.f32 %v6270, %v6366
      %v6399 = vadd.f32 %v6271, %v6367
      %v6400 = vadd.f32 %v6272, %v6368
      %v6401 = vadd.f32 %v6273, %v6369
      %v6402 = vadd.f32 %v6274, %v6370
      %v6403 = vadd.f32 %v6275, %v6371
      %v6404 = vadd.f32 %v6276, %v6372
      %v6405 = vadd.f32 %v6277, %v6373
      %v6406 = vadd.f32 %v6278, %v6374
      %v6407 = vadd.f32 %v6279, %v6375
      %v6408 = vadd.f32 %v6280, %v6376
      %v6409 = vadd.f32 %v6281, %v6377
      %v6410 = vadd.f32 %v6282, %v6378
      %v6411 = vadd.f32 %v6283, %v6379
      %v6412 = vadd.f32 %v6284, %v6380
      %v6413 = vadd.f32 %v6285, %v6381
      %6414 = vst [vmem:[#allocation16] sm:$0xff] %v6382
      %6415 = vst [vmem:[#allocation16 + $0x20] sm:$0xff] %v6383
      %6416 = vst [vmem:[#allocation16 + $0x40] sm:$0xff] %v6384
      %6417 = vst [vmem:[#allocation16 + $0x60] sm:$0xff] %v6385
      %6418 = vst [vmem:[#allocation16 + $0x80] sm:$0xff] %v6386
      %6419 = vst [vmem:[#allocation16 + $0xa0] sm:$0xff] %v6387
      %6420 = vst [vmem:[#allocation16 + $0xc0] sm:$0xff] %v6388
      %6421 = vst [vmem:[#allocation16 + $0xe0] sm:$0xff] %v6389
      %6422 = vst [vmem:[#allocation16 + $0x100] sm:$0xff] %v6390
      %6423 = vst [vmem:[#allocation16 + $0x120] sm:$0xff] %v6391
      %6424 = vst [vmem:[#allocation16 + $0x140] sm:$0xff] %v6392
      %6425 = vst [vmem:[#allocation16 + $0x160] sm:$0xff] %v6393
      %6426 = vst [vmem:[#allocation16 + $0x180] sm:$0xff] %v6394
      %6427 = vst [vmem:[#allocation16 + $0x1a0] sm:$0xff] %v6395
      %6428 = vst [vmem:[#allocation16 + $0x1c0] sm:$0xff] %v6396
      %6429 = vst [vmem:[#allocation16 + $0x1e0] sm:$0xff] %v6397
      %6430 = vst [vmem:[#allocation16 + $0x200] sm:$0xff] %v6398
      %6431 = vst [vmem:[#allocation16 + $0x220] sm:$0xff] %v6399
      %6432 = vst [vmem:[#allocation16 + $0x240] sm:$0xff] %v6400
      %6433 = vst [vmem:[#allocation16 + $0x260] sm:$0xff] %v6401
      %6434 = vst [vmem:[#allocation16 + $0x280] sm:$0xff] %v6402
      %6435 = vst [vmem:[#allocation16 + $0x2a0] sm:$0xff] %v6403
      %6436 = vst [vmem:[#allocation16 + $0x2c0] sm:$0xff] %v6404
      %6437 = vst [vmem:[#allocation16 + $0x2e0] sm:$0xff] %v6405
      %6438 = vst [vmem:[#allocation16 + $0x300] sm:$0xff] %v6406
      %6439 = vst [vmem:[#allocation16 + $0x320] sm:$0xff] %v6407
      %6440 = vst [vmem:[#allocation16 + $0x340] sm:$0xff] %v6408
      %6441 = vst [vmem:[#allocation16 + $0x360] sm:$0xff] %v6409
      %6442 = vst [vmem:[#allocation16 + $0x380] sm:$0xff] %v6410
      %6443 = vst [vmem:[#allocation16 + $0x3a0] sm:$0xff] %v6411
      %6444 = vst [vmem:[#allocation16 + $0x3c0] sm:$0xff] %v6412
      %6445 = vst [vmem:[#allocation16 + $0x3e0] sm:$0xff] %v6413
      %v6446 = vmul.f32 %v6222, %v5642
      %v6447 = vmul.f32 %v6223, %v5643
      %v6448 = vmul.f32 %v6224, %v5644
      %v6449 = vmul.f32 %v6225, %v5645
      %v6450 = vmul.f32 %v6226, %v5646
      %v6451 = vmul.f32 %v6227, %v5647
      %v6452 = vmul.f32 %v6228, %v5648
      %v6453 = vmul.f32 %v6229, %v5649
      %v6454 = vmul.f32 %v6230, %v5650
      %v6455 = vmul.f32 %v6231, %v5651
      %v6456 = vmul.f32 %v6232, %v5652
      %v6457 = vmul.f32 %v6233, %v5653
      %v6458 = vmul.f32 %v6234, %v5654
      %v6459 = vmul.f32 %v6235, %v5655
      %v6460 = vmul.f32 %v6236, %v5656
      %v6461 = vmul.f32 %v6237, %v5657
      %v6462 = vmul.f32 %v6238, %v5658
      %v6463 = vmul.f32 %v6239, %v5659
      %v6464 = vmul.f32 %v6240, %v5660
      %v6465 = vmul.f32 %v6241, %v5661
      %v6466 = vmul.f32 %v6242, %v5662
      %v6467 = vmul.f32 %v6243, %v5663
      %v6468 = vmul.f32 %v6244, %v5664
      %v6469 = vmul.f32 %v6245, %v5665
      %v6470 = vmul.f32 %v6246, %v5666
      %v6471 = vmul.f32 %v6247, %v5667
      %v6472 = vmul.f32 %v6248, %v5668
      %v6473 = vmul.f32 %v6249, %v5669
      %v6474 = vmul.f32 %v6250, %v5670
      %v6475 = vmul.f32 %v6251, %v5671
      %v6476 = vmul.f32 %v6252, %v5672
      %v6477 = vmul.f32 %v6253, %v5673
      %6478 = vrot.lane.b32.xlu0 %v6222, 64
      %v6479 = vpop.permute.xlu0 %6478
      %6480 = vrot.lane.b32.xlu0 %v6223, 64
      %v6481 = vpop.permute.xlu0 %6480
      %6482 = vrot.lane.b32.xlu0 %v6224, 64
      %v6483 = vpop.permute.xlu0 %6482
      %6484 = vrot.lane.b32.xlu0 %v6225, 64
      %v6485 = vpop.permute.xlu0 %6484
      %6486 = vrot.lane.b32.xlu0 %v6226, 64
      %v6487 = vpop.permute.xlu0 %6486
      %6488 = vrot.lane.b32.xlu0 %v6227, 64
      %v6489 = vpop.permute.xlu0 %6488
      %6490 = vrot.lane.b32.xlu0 %v6228, 64
      %v6491 = vpop.permute.xlu0 %6490
      %6492 = vrot.lane.b32.xlu0 %v6229, 64
      %v6493 = vpop.permute.xlu0 %6492
      %6494 = vrot.lane.b32.xlu0 %v6230, 64
      %v6495 = vpop.permute.xlu0 %6494
      %6496 = vrot.lane.b32.xlu0 %v6231, 64
      %v6497 = vpop.permute.xlu0 %6496
      %6498 = vrot.lane.b32.xlu0 %v6232, 64
      %v6499 = vpop.permute.xlu0 %6498
      %6500 = vrot.lane.b32.xlu0 %v6233, 64
      %v6501 = vpop.permute.xlu0 %6500
      %6502 = vrot.lane.b32.xlu0 %v6234, 64
      %v6503 = vpop.permute.xlu0 %6502
      %6504 = vrot.lane.b32.xlu0 %v6235, 64
      %v6505 = vpop.permute.xlu0 %6504
      %6506 = vrot.lane.b32.xlu0 %v6236, 64
      %v6507 = vpop.permute.xlu0 %6506
      %6508 = vrot.lane.b32.xlu0 %v6237, 64
      %v6509 = vpop.permute.xlu0 %6508
      %6510 = vrot.lane.b32.xlu0 %v6238, 64
      %v6511 = vpop.permute.xlu0 %6510
      %6512 = vrot.lane.b32.xlu0 %v6239, 64
      %v6513 = vpop.permute.xlu0 %6512
      %6514 = vrot.lane.b32.xlu0 %v6240, 64
      %v6515 = vpop.permute.xlu0 %6514
      %6516 = vrot.lane.b32.xlu0 %v6241, 64
      %v6517 = vpop.permute.xlu0 %6516
      %6518 = vrot.lane.b32.xlu0 %v6242, 64
      %v6519 = vpop.permute.xlu0 %6518
      %6520 = vrot.lane.b32.xlu0 %v6243, 64
      %v6521 = vpop.permute.xlu0 %6520
      %6522 = vrot.lane.b32.xlu0 %v6244, 64
      %v6523 = vpop.permute.xlu0 %6522
      %6524 = vrot.lane.b32.xlu0 %v6245, 64
      %v6525 = vpop.permute.xlu0 %6524
      %6526 = vrot.lane.b32.xlu0 %v6246, 64
      %v6527 = vpop.permute.xlu0 %6526
      %6528 = vrot.lane.b32.xlu0 %v6247, 64
      %v6529 = vpop.permute.xlu0 %6528
      %6530 = vrot.lane.b32.xlu0 %v6248, 64
      %v6531 = vpop.permute.xlu0 %6530
      %6532 = vrot.lane.b32.xlu0 %v6249, 64
      %v6533 = vpop.permute.xlu0 %6532
      %6534 = vrot.lane.b32.xlu0 %v6250, 64
      %v6535 = vpop.permute.xlu0 %6534
      %6536 = vrot.lane.b32.xlu0 %v6251, 64
      %v6537 = vpop.permute.xlu0 %6536
      %6538 = vrot.lane.b32.xlu0 %v6252, 64
      %v6539 = vpop.permute.xlu0 %6538
      %6540 = vrot.lane.b32.xlu0 %v6253, 64
      %v6541 = vpop.permute.xlu0 %6540
      %v6542 = vmul.f32 %v6479, %v5674
      %v6543 = vmul.f32 %v6481, %v5675
      %v6544 = vmul.f32 %v6483, %v5676
      %v6545 = vmul.f32 %v6485, %v5677
      %v6546 = vmul.f32 %v6487, %v5678
      %v6547 = vmul.f32 %v6489, %v5679
      %v6548 = vmul.f32 %v6491, %v5680
      %v6549 = vmul.f32 %v6493, %v5681
      %v6550 = vmul.f32 %v6495, %v5682
      %v6551 = vmul.f32 %v6497, %v5683
      %v6552 = vmul.f32 %v6499, %v5684
      %v6553 = vmul.f32 %v6501, %v5685
      %v6554 = vmul.f32 %v6503, %v5686
      %v6555 = vmul.f32 %v6505, %v5687
      %v6556 = vmul.f32 %v6507, %v5688
      %v6557 = vmul.f32 %v6509, %v5689
      %v6558 = vmul.f32 %v6511, %v5690
      %v6559 = vmul.f32 %v6513, %v5691
      %v6560 = vmul.f32 %v6515, %v5692
      %v6561 = vmul.f32 %v6517, %v5693
      %v6562 = vmul.f32 %v6519, %v5694
      %v6563 = vmul.f32 %v6521, %v5695
      %v6564 = vmul.f32 %v6523, %v5696
      %v6565 = vmul.f32 %v6525, %v5697
      %v6566 = vmul.f32 %v6527, %v5698
      %v6567 = vmul.f32 %v6529, %v5699
      %v6568 = vmul.f32 %v6531, %v5700
      %v6569 = vmul.f32 %v6533, %v5701
      %v6570 = vmul.f32 %v6535, %v5702
      %v6571 = vmul.f32 %v6537, %v5703
      %v6572 = vmul.f32 %v6539, %v5704
      %v6573 = vmul.f32 %v6541, %v5705
      %v6574 = vadd.f32 %v6446, %v6542
      %v6575 = vadd.f32 %v6447, %v6543
      %v6576 = vadd.f32 %v6448, %v6544
      %v6577 = vadd.f32 %v6449, %v6545
      %v6578 = vadd.f32 %v6450, %v6546
      %v6579 = vadd.f32 %v6451, %v6547
      %v6580 = vadd.f32 %v6452, %v6548
      %v6581 = vadd.f32 %v6453, %v6549
      %v6582 = vadd.f32 %v6454, %v6550
      %v6583 = vadd.f32 %v6455, %v6551
      %v6584 = vadd.f32 %v6456, %v6552
      %v6585 = vadd.f32 %v6457, %v6553
      %v6586 = vadd.f32 %v6458, %v6554
      %v6587 = vadd.f32 %v6459, %v6555
      %v6588 = vadd.f32 %v6460, %v6556
      %v6589 = vadd.f32 %v6461, %v6557
      %v6590 = vadd.f32 %v6462, %v6558
      %v6591 = vadd.f32 %v6463, %v6559
      %v6592 = vadd.f32 %v6464, %v6560
      %v6593 = vadd.f32 %v6465, %v6561
      %v6594 = vadd.f32 %v6466, %v6562
      %v6595 = vadd.f32 %v6467, %v6563
      %v6596 = vadd.f32 %v6468, %v6564
      %v6597 = vadd.f32 %v6469, %v6565
      %v6598 = vadd.f32 %v6470, %v6566
      %v6599 = vadd.f32 %v6471, %v6567
      %v6600 = vadd.f32 %v6472, %v6568
      %v6601 = vadd.f32 %v6473, %v6569
      %v6602 = vadd.f32 %v6474, %v6570
      %v6603 = vadd.f32 %v6475, %v6571
      %v6604 = vadd.f32 %v6476, %v6572
      %v6605 = vadd.f32 %v6477, %v6573
      %6606 = vst [vmem:[#allocation17] sm:$0xff] %v6574
      %6607 = vst [vmem:[#allocation17 + $0x20] sm:$0xff] %v6575
      %6608 = vst [vmem:[#allocation17 + $0x40] sm:$0xff] %v6576
      %6609 = vst [vmem:[#allocation17 + $0x60] sm:$0xff] %v6577
      %6610 = vst [vmem:[#allocation17 + $0x80] sm:$0xff] %v6578
      %6611 = vst [vmem:[#allocation17 + $0xa0] sm:$0xff] %v6579
      %6612 = vst [vmem:[#allocation17 + $0xc0] sm:$0xff] %v6580
      %6613 = vst [vmem:[#allocation17 + $0xe0] sm:$0xff] %v6581
      %6614 = vst [vmem:[#allocation17 + $0x100] sm:$0xff] %v6582
      %6615 = vst [vmem:[#allocation17 + $0x120] sm:$0xff] %v6583
      %6616 = vst [vmem:[#allocation17 + $0x140] sm:$0xff] %v6584
      %6617 = vst [vmem:[#allocation17 + $0x160] sm:$0xff] %v6585
      %6618 = vst [vmem:[#allocation17 + $0x180] sm:$0xff] %v6586
      %6619 = vst [vmem:[#allocation17 + $0x1a0] sm:$0xff] %v6587
      %6620 = vst [vmem:[#allocation17 + $0x1c0] sm:$0xff] %v6588
      %6621 = vst [vmem:[#allocation17 + $0x1e0] sm:$0xff] %v6589
      %6622 = vst [vmem:[#allocation17 + $0x200] sm:$0xff] %v6590
      %6623 = vst [vmem:[#allocation17 + $0x220] sm:$0xff] %v6591
      %6624 = vst [vmem:[#allocation17 + $0x240] sm:$0xff] %v6592
      %6625 = vst [vmem:[#allocation17 + $0x260] sm:$0xff] %v6593
      %6626 = vst [vmem:[#allocation17 + $0x280] sm:$0xff] %v6594
      %6627 = vst [vmem:[#allocation17 + $0x2a0] sm:$0xff] %v6595
      %6628 = vst [vmem:[#allocation17 + $0x2c0] sm:$0xff] %v6596
      %6629 = vst [vmem:[#allocation17 + $0x2e0] sm:$0xff] %v6597
      %6630 = vst [vmem:[#allocation17 + $0x300] sm:$0xff] %v6598
      %6631 = vst [vmem:[#allocation17 + $0x320] sm:$0xff] %v6599
      %6632 = vst [vmem:[#allocation17 + $0x340] sm:$0xff] %v6600
      %6633 = vst [vmem:[#allocation17 + $0x360] sm:$0xff] %v6601
      %6634 = vst [vmem:[#allocation17 + $0x380] sm:$0xff] %v6602
      %6635 = vst [vmem:[#allocation17 + $0x3a0] sm:$0xff] %v6603
      %6636 = vst [vmem:[#allocation17 + $0x3c0] sm:$0xff] %v6604
      %6637 = vst [vmem:[#allocation17 + $0x3e0] sm:$0xff] %v6605
      %v6638 = vld [vmem:[#allocation2 + $0x8] sm:$0xff]
      %v6639 = vld [vmem:[#allocation2 + $0x28] sm:$0xff]
      %v6640 = vld [vmem:[#allocation2 + $0x48] sm:$0xff]
      %v6641 = vld [vmem:[#allocation2 + $0x68] sm:$0xff]
      %v6642 = vld [vmem:[#allocation2 + $0x88] sm:$0xff]
      %v6643 = vld [vmem:[#allocation2 + $0xa8] sm:$0xff]
      %v6644 = vld [vmem:[#allocation2 + $0xc8] sm:$0xff]
      %v6645 = vld [vmem:[#allocation2 + $0xe8] sm:$0xff]
      %v6646 = vld [vmem:[#allocation2 + $0x108] sm:$0xff]
      %v6647 = vld [vmem:[#allocation2 + $0x128] sm:$0xff]
      %v6648 = vld [vmem:[#allocation2 + $0x148] sm:$0xff]
      %v6649 = vld [vmem:[#allocation2 + $0x168] sm:$0xff]
      %v6650 = vld [vmem:[#allocation2 + $0x188] sm:$0xff]
      %v6651 = vld [vmem:[#allocation2 + $0x1a8] sm:$0xff]
      %v6652 = vld [vmem:[#allocation2 + $0x1c8] sm:$0xff]
      %v6653 = vld [vmem:[#allocation2 + $0x1e8] sm:$0xff]
      %v6654 = vld [vmem:[#allocation2 + $0x208] sm:$0xff]
      %v6655 = vld [vmem:[#allocation2 + $0x228] sm:$0xff]
      %v6656 = vld [vmem:[#allocation2 + $0x248] sm:$0xff]
      %v6657 = vld [vmem:[#allocation2 + $0x268] sm:$0xff]
      %v6658 = vld [vmem:[#allocation2 + $0x288] sm:$0xff]
      %v6659 = vld [vmem:[#allocation2 + $0x2a8] sm:$0xff]
      %v6660 = vld [vmem:[#allocation2 + $0x2c8] sm:$0xff]
      %v6661 = vld [vmem:[#allocation2 + $0x2e8] sm:$0xff]
      %v6662 = vld [vmem:[#allocation2 + $0x308] sm:$0xff]
      %v6663 = vld [vmem:[#allocation2 + $0x328] sm:$0xff]
      %v6664 = vld [vmem:[#allocation2 + $0x348] sm:$0xff]
      %v6665 = vld [vmem:[#allocation2 + $0x368] sm:$0xff]
      %v6666 = vld [vmem:[#allocation2 + $0x388] sm:$0xff]
      %v6667 = vld [vmem:[#allocation2 + $0x3a8] sm:$0xff]
      %v6668 = vld [vmem:[#allocation2 + $0x3c8] sm:$0xff]
      %v6669 = vld [vmem:[#allocation2 + $0x3e8] sm:$0xff]
      %v6670 = vld [vmem:[%s4 + $0x1] sm:$0x1]
      %v6672 = vlaneseq
      %v6673 = vshrl.u32 %v6672, 7
      %v6674 = vsub.s32 0, %v6673
      %v6675 = vrot.slane %v6670, %v6674
      %v6677 = vadd.f32 %v6638, %v6675
      %v6678 = vadd.f32 %v6639, %v6675
      %v6679 = vadd.f32 %v6640, %v6675
      %v6680 = vadd.f32 %v6641, %v6675
      %v6681 = vadd.f32 %v6642, %v6675
      %v6682 = vadd.f32 %v6643, %v6675
      %v6683 = vadd.f32 %v6644, %v6675
      %v6684 = vadd.f32 %v6645, %v6675
      %v6685 = vadd.f32 %v6646, %v6675
      %v6686 = vadd.f32 %v6647, %v6675
      %v6687 = vadd.f32 %v6648, %v6675
      %v6688 = vadd.f32 %v6649, %v6675
      %v6689 = vadd.f32 %v6650, %v6675
      %v6690 = vadd.f32 %v6651, %v6675
      %v6691 = vadd.f32 %v6652, %v6675
      %v6692 = vadd.f32 %v6653, %v6675
      %v6693 = vadd.f32 %v6654, %v6675
      %v6694 = vadd.f32 %v6655, %v6675
      %v6695 = vadd.f32 %v6656, %v6675
      %v6696 = vadd.f32 %v6657, %v6675
      %v6697 = vadd.f32 %v6658, %v6675
      %v6698 = vadd.f32 %v6659, %v6675
      %v6699 = vadd.f32 %v6660, %v6675
      %v6700 = vadd.f32 %v6661, %v6675
      %v6701 = vadd.f32 %v6662, %v6675
      %v6702 = vadd.f32 %v6663, %v6675
      %v6703 = vadd.f32 %v6664, %v6675
      %v6704 = vadd.f32 %v6665, %v6675
      %v6705 = vadd.f32 %v6666, %v6675
      %v6706 = vadd.f32 %v6667, %v6675
      %v6707 = vadd.f32 %v6668, %v6675
      %v6708 = vadd.f32 %v6669, %v6675
      %v6709 = vld [vmem:[#allocation3 + $0x8] sm:$0xff]
      %v6710 = vld [vmem:[#allocation3 + $0x28] sm:$0xff]
      %v6711 = vld [vmem:[#allocation3 + $0x48] sm:$0xff]
      %v6712 = vld [vmem:[#allocation3 + $0x68] sm:$0xff]
      %v6713 = vld [vmem:[#allocation3 + $0x88] sm:$0xff]
      %v6714 = vld [vmem:[#allocation3 + $0xa8] sm:$0xff]
      %v6715 = vld [vmem:[#allocation3 + $0xc8] sm:$0xff]
      %v6716 = vld [vmem:[#allocation3 + $0xe8] sm:$0xff]
      %v6717 = vld [vmem:[#allocation3 + $0x108] sm:$0xff]
      %v6718 = vld [vmem:[#allocation3 + $0x128] sm:$0xff]
      %v6719 = vld [vmem:[#allocation3 + $0x148] sm:$0xff]
      %v6720 = vld [vmem:[#allocation3 + $0x168] sm:$0xff]
      %v6721 = vld [vmem:[#allocation3 + $0x188] sm:$0xff]
      %v6722 = vld [vmem:[#allocation3 + $0x1a8] sm:$0xff]
      %v6723 = vld [vmem:[#allocation3 + $0x1c8] sm:$0xff]
      %v6724 = vld [vmem:[#allocation3 + $0x1e8] sm:$0xff]
      %v6725 = vld [vmem:[#allocation3 + $0x208] sm:$0xff]
      %v6726 = vld [vmem:[#allocation3 + $0x228] sm:$0xff]
      %v6727 = vld [vmem:[#allocation3 + $0x248] sm:$0xff]
      %v6728 = vld [vmem:[#allocation3 + $0x268] sm:$0xff]
      %v6729 = vld [vmem:[#allocation3 + $0x288] sm:$0xff]
      %v6730 = vld [vmem:[#allocation3 + $0x2a8] sm:$0xff]
      %v6731 = vld [vmem:[#allocation3 + $0x2c8] sm:$0xff]
      %v6732 = vld [vmem:[#allocation3 + $0x2e8] sm:$0xff]
      %v6733 = vld [vmem:[#allocation3 + $0x308] sm:$0xff]
      %v6734 = vld [vmem:[#allocation3 + $0x328] sm:$0xff]
      %v6735 = vld [vmem:[#allocation3 + $0x348] sm:$0xff]
      %v6736 = vld [vmem:[#allocation3 + $0x368] sm:$0xff]
      %v6737 = vld [vmem:[#allocation3 + $0x388] sm:$0xff]
      %v6738 = vld [vmem:[#allocation3 + $0x3a8] sm:$0xff]
      %v6739 = vld [vmem:[#allocation3 + $0x3c8] sm:$0xff]
      %v6740 = vld [vmem:[#allocation3 + $0x3e8] sm:$0xff]
      %v6741 = vld [vmem:[%s5 + $0x1] sm:$0x1]
      %v6743 = vlaneseq
      %v6744 = vshrl.u32 %v6743, 7
      %v6745 = vsub.s32 0, %v6744
      %v6746 = vrot.slane %v6741, %v6745
      %v6748 = vadd.f32 %v6709, %v6746
      %v6749 = vadd.f32 %v6710, %v6746
      %v6750 = vadd.f32 %v6711, %v6746
      %v6751 = vadd.f32 %v6712, %v6746
      %v6752 = vadd.f32 %v6713, %v6746
      %v6753 = vadd.f32 %v6714, %v6746
      %v6754 = vadd.f32 %v6715, %v6746
      %v6755 = vadd.f32 %v6716, %v6746
      %v6756 = vadd.f32 %v6717, %v6746
      %v6757 = vadd.f32 %v6718, %v6746
      %v6758 = vadd.f32 %v6719, %v6746
      %v6759 = vadd.f32 %v6720, %v6746
      %v6760 = vadd.f32 %v6721, %v6746
      %v6761 = vadd.f32 %v6722, %v6746
      %v6762 = vadd.f32 %v6723, %v6746
      %v6763 = vadd.f32 %v6724, %v6746
      %v6764 = vadd.f32 %v6725, %v6746
      %v6765 = vadd.f32 %v6726, %v6746
      %v6766 = vadd.f32 %v6727, %v6746
      %v6767 = vadd.f32 %v6728, %v6746
      %v6768 = vadd.f32 %v6729, %v6746
      %v6769 = vadd.f32 %v6730, %v6746
      %v6770 = vadd.f32 %v6731, %v6746
      %v6771 = vadd.f32 %v6732, %v6746
      %v6772 = vadd.f32 %v6733, %v6746
      %v6773 = vadd.f32 %v6734, %v6746
      %v6774 = vadd.f32 %v6735, %v6746
      %v6775 = vadd.f32 %v6736, %v6746
      %v6776 = vadd.f32 %v6737, %v6746
      %v6777 = vadd.f32 %v6738, %v6746
      %v6778 = vadd.f32 %v6739, %v6746
      %v6779 = vadd.f32 %v6740, %v6746
      %v6780 = vmul.f32 %v6677, %v5642
      %v6781 = vmul.f32 %v6678, %v5643
      %v6782 = vmul.f32 %v6679, %v5644
      %v6783 = vmul.f32 %v6680, %v5645
      %v6784 = vmul.f32 %v6681, %v5646
      %v6785 = vmul.f32 %v6682, %v5647
      %v6786 = vmul.f32 %v6683, %v5648
      %v6787 = vmul.f32 %v6684, %v5649
      %v6788 = vmul.f32 %v6685, %v5650
      %v6789 = vmul.f32 %v6686, %v5651
      %v6790 = vmul.f32 %v6687, %v5652
      %v6791 = vmul.f32 %v6688, %v5653
      %v6792 = vmul.f32 %v6689, %v5654
      %v6793 = vmul.f32 %v6690, %v5655
      %v6794 = vmul.f32 %v6691, %v5656
      %v6795 = vmul.f32 %v6692, %v5657
      %v6796 = vmul.f32 %v6693, %v5658
      %v6797 = vmul.f32 %v6694, %v5659
      %v6798 = vmul.f32 %v6695, %v5660
      %v6799 = vmul.f32 %v6696, %v5661
      %v6800 = vmul.f32 %v6697, %v5662
      %v6801 = vmul.f32 %v6698, %v5663
      %v6802 = vmul.f32 %v6699, %v5664
      %v6803 = vmul.f32 %v6700, %v5665
      %v6804 = vmul.f32 %v6701, %v5666
      %v6805 = vmul.f32 %v6702, %v5667
      %v6806 = vmul.f32 %v6703, %v5668
      %v6807 = vmul.f32 %v6704, %v5669
      %v6808 = vmul.f32 %v6705, %v5670
      %v6809 = vmul.f32 %v6706, %v5671
      %v6810 = vmul.f32 %v6707, %v5672
      %v6811 = vmul.f32 %v6708, %v5673
      %6812 = vrot.lane.b32.xlu0 %v6677, 64
      %v6813 = vpop.permute.xlu0 %6812
      %6814 = vrot.lane.b32.xlu0 %v6678, 64
      %v6815 = vpop.permute.xlu0 %6814
      %6816 = vrot.lane.b32.xlu0 %v6679, 64
      %v6817 = vpop.permute.xlu0 %6816
      %6818 = vrot.lane.b32.xlu0 %v6680, 64
      %v6819 = vpop.permute.xlu0 %6818
      %6820 = vrot.lane.b32.xlu0 %v6681, 64
      %v6821 = vpop.permute.xlu0 %6820
      %6822 = vrot.lane.b32.xlu0 %v6682, 64
      %v6823 = vpop.permute.xlu0 %6822
      %6824 = vrot.lane.b32.xlu0 %v6683, 64
      %v6825 = vpop.permute.xlu0 %6824
      %6826 = vrot.lane.b32.xlu0 %v6684, 64
      %v6827 = vpop.permute.xlu0 %6826
      %6828 = vrot.lane.b32.xlu0 %v6685, 64
      %v6829 = vpop.permute.xlu0 %6828
      %6830 = vrot.lane.b32.xlu0 %v6686, 64
      %v6831 = vpop.permute.xlu0 %6830
      %6832 = vrot.lane.b32.xlu0 %v6687, 64
      %v6833 = vpop.permute.xlu0 %6832
      %6834 = vrot.lane.b32.xlu0 %v6688, 64
      %v6835 = vpop.permute.xlu0 %6834
      %6836 = vrot.lane.b32.xlu0 %v6689, 64
      %v6837 = vpop.permute.xlu0 %6836
      %6838 = vrot.lane.b32.xlu0 %v6690, 64
      %v6839 = vpop.permute.xlu0 %6838
      %6840 = vrot.lane.b32.xlu0 %v6691, 64
      %v6841 = vpop.permute.xlu0 %6840
      %6842 = vrot.lane.b32.xlu0 %v6692, 64
      %v6843 = vpop.permute.xlu0 %6842
      %6844 = vrot.lane.b32.xlu0 %v6693, 64
      %v6845 = vpop.permute.xlu0 %6844
      %6846 = vrot.lane.b32.xlu0 %v6694, 64
      %v6847 = vpop.permute.xlu0 %6846
      %6848 = vrot.lane.b32.xlu0 %v6695, 64
      %v6849 = vpop.permute.xlu0 %6848
      %6850 = vrot.lane.b32.xlu0 %v6696, 64
      %v6851 = vpop.permute.xlu0 %6850
      %6852 = vrot.lane.b32.xlu0 %v6697, 64
      %v6853 = vpop.permute.xlu0 %6852
      %6854 = vrot.lane.b32.xlu0 %v6698, 64
      %v6855 = vpop.permute.xlu0 %6854
      %6856 = vrot.lane.b32.xlu0 %v6699, 64
      %v6857 = vpop.permute.xlu0 %6856
      %6858 = vrot.lane.b32.xlu0 %v6700, 64
      %v6859 = vpop.permute.xlu0 %6858
      %6860 = vrot.lane.b32.xlu0 %v6701, 64
      %v6861 = vpop.permute.xlu0 %6860
      %6862 = vrot.lane.b32.xlu0 %v6702, 64
      %v6863 = vpop.permute.xlu0 %6862
      %6864 = vrot.lane.b32.xlu0 %v6703, 64
      %v6865 = vpop.permute.xlu0 %6864
      %6866 = vrot.lane.b32.xlu0 %v6704, 64
      %v6867 = vpop.permute.xlu0 %6866
      %6868 = vrot.lane.b32.xlu0 %v6705, 64
      %v6869 = vpop.permute.xlu0 %6868
      %6870 = vrot.lane.b32.xlu0 %v6706, 64
      %v6871 = vpop.permute.xlu0 %6870
      %6872 = vrot.lane.b32.xlu0 %v6707, 64
      %v6873 = vpop.permute.xlu0 %6872
      %6874 = vrot.lane.b32.xlu0 %v6708, 64
      %v6875 = vpop.permute.xlu0 %6874
      %v6876 = vmul.f32 %v6813, %v5674
      %v6877 = vmul.f32 %v6815, %v5675
      %v6878 = vmul.f32 %v6817, %v5676
      %v6879 = vmul.f32 %v6819, %v5677
      %v6880 = vmul.f32 %v6821, %v5678
      %v6881 = vmul.f32 %v6823, %v5679
      %v6882 = vmul.f32 %v6825, %v5680
      %v6883 = vmul.f32 %v6827, %v5681
      %v6884 = vmul.f32 %v6829, %v5682
      %v6885 = vmul.f32 %v6831, %v5683
      %v6886 = vmul.f32 %v6833, %v5684
      %v6887 = vmul.f32 %v6835, %v5685
      %v6888 = vmul.f32 %v6837, %v5686
      %v6889 = vmul.f32 %v6839, %v5687
      %v6890 = vmul.f32 %v6841, %v5688
      %v6891 = vmul.f32 %v6843, %v5689
      %v6892 = vmul.f32 %v6845, %v5690
      %v6893 = vmul.f32 %v6847, %v5691
      %v6894 = vmul.f32 %v6849, %v5692
      %v6895 = vmul.f32 %v6851, %v5693
      %v6896 = vmul.f32 %v6853, %v5694
      %v6897 = vmul.f32 %v6855, %v5695
      %v6898 = vmul.f32 %v6857, %v5696
      %v6899 = vmul.f32 %v6859, %v5697
      %v6900 = vmul.f32 %v6861, %v5698
      %v6901 = vmul.f32 %v6863, %v5699
      %v6902 = vmul.f32 %v6865, %v5700
      %v6903 = vmul.f32 %v6867, %v5701
      %v6904 = vmul.f32 %v6869, %v5702
      %v6905 = vmul.f32 %v6871, %v5703
      %v6906 = vmul.f32 %v6873, %v5704
      %v6907 = vmul.f32 %v6875, %v5705
      %v6908 = vadd.f32 %v6780, %v6876
      %v6909 = vadd.f32 %v6781, %v6877
      %v6910 = vadd.f32 %v6782, %v6878
      %v6911 = vadd.f32 %v6783, %v6879
      %v6912 = vadd.f32 %v6784, %v6880
      %v6913 = vadd.f32 %v6785, %v6881
      %v6914 = vadd.f32 %v6786, %v6882
      %v6915 = vadd.f32 %v6787, %v6883
      %v6916 = vadd.f32 %v6788, %v6884
      %v6917 = vadd.f32 %v6789, %v6885
      %v6918 = vadd.f32 %v6790, %v6886
      %v6919 = vadd.f32 %v6791, %v6887
      %v6920 = vadd.f32 %v6792, %v6888
      %v6921 = vadd.f32 %v6793, %v6889
      %v6922 = vadd.f32 %v6794, %v6890
      %v6923 = vadd.f32 %v6795, %v6891
      %v6924 = vadd.f32 %v6796, %v6892
      %v6925 = vadd.f32 %v6797, %v6893
      %v6926 = vadd.f32 %v6798, %v6894
      %v6927 = vadd.f32 %v6799, %v6895
      %v6928 = vadd.f32 %v6800, %v6896
      %v6929 = vadd.f32 %v6801, %v6897
      %v6930 = vadd.f32 %v6802, %v6898
      %v6931 = vadd.f32 %v6803, %v6899
      %v6932 = vadd.f32 %v6804, %v6900
      %v6933 = vadd.f32 %v6805, %v6901
      %v6934 = vadd.f32 %v6806, %v6902
      %v6935 = vadd.f32 %v6807, %v6903
      %v6936 = vadd.f32 %v6808, %v6904
      %v6937 = vadd.f32 %v6809, %v6905
      %v6938 = vadd.f32 %v6810, %v6906
      %v6939 = vadd.f32 %v6811, %v6907
      %6940 = vst [vmem:[#allocation16 + $0x8] sm:$0xff] %v6908
      %6941 = vst [vmem:[#allocation16 + $0x28] sm:$0xff] %v6909
      %6942 = vst [vmem:[#allocation16 + $0x48] sm:$0xff] %v6910
      %6943 = vst [vmem:[#allocation16 + $0x68] sm:$0xff] %v6911
      %6944 = vst [vmem:[#allocation16 + $0x88] sm:$0xff] %v6912
      %6945 = vst [vmem:[#allocation16 + $0xa8] sm:$0xff] %v6913
      %6946 = vst [vmem:[#allocation16 + $0xc8] sm:$0xff] %v6914
      %6947 = vst [vmem:[#allocation16 + $0xe8] sm:$0xff] %v6915
      %6948 = vst [vmem:[#allocation16 + $0x108] sm:$0xff] %v6916
      %6949 = vst [vmem:[#allocation16 + $0x128] sm:$0xff] %v6917
      %6950 = vst [vmem:[#allocation16 + $0x148] sm:$0xff] %v6918
      %6951 = vst [vmem:[#allocation16 + $0x168] sm:$0xff] %v6919
      %6952 = vst [vmem:[#allocation16 + $0x188] sm:$0xff] %v6920
      %6953 = vst [vmem:[#allocation16 + $0x1a8] sm:$0xff] %v6921
      %6954 = vst [vmem:[#allocation16 + $0x1c8] sm:$0xff] %v6922
      %6955 = vst [vmem:[#allocation16 + $0x1e8] sm:$0xff] %v6923
      %6956 = vst [vmem:[#allocation16 + $0x208] sm:$0xff] %v6924
      %6957 = vst [vmem:[#allocation16 + $0x228] sm:$0xff] %v6925
      %6958 = vst [vmem:[#allocation16 + $0x248] sm:$0xff] %v6926
      %6959 = vst [vmem:[#allocation16 + $0x268] sm:$0xff] %v6927
      %6960 = vst [vmem:[#allocation16 + $0x288] sm:$0xff] %v6928
      %6961 = vst [vmem:[#allocation16 + $0x2a8] sm:$0xff] %v6929
      %6962 = vst [vmem:[#allocation16 + $0x2c8] sm:$0xff] %v6930
      %6963 = vst [vmem:[#allocation16 + $0x2e8] sm:$0xff] %v6931
      %6964 = vst [vmem:[#allocation16 + $0x308] sm:$0xff] %v6932
      %6965 = vst [vmem:[#allocation16 + $0x328] sm:$0xff] %v6933
      %6966 = vst [vmem:[#allocation16 + $0x348] sm:$0xff] %v6934
      %6967 = vst [vmem:[#allocation16 + $0x368] sm:$0xff] %v6935
      %6968 = vst [vmem:[#allocation16 + $0x388] sm:$0xff] %v6936
      %6969 = vst [vmem:[#allocation16 + $0x3a8] sm:$0xff] %v6937
      %6970 = vst [vmem:[#allocation16 + $0x3c8] sm:$0xff] %v6938
      %6971 = vst [vmem:[#allocation16 + $0x3e8] sm:$0xff] %v6939
      %v6972 = vmul.f32 %v6748, %v5642
      %v6973 = vmul.f32 %v6749, %v5643
      %v6974 = vmul.f32 %v6750, %v5644
      %v6975 = vmul.f32 %v6751, %v5645
      %v6976 = vmul.f32 %v6752, %v5646
      %v6977 = vmul.f32 %v6753, %v5647
      %v6978 = vmul.f32 %v6754, %v5648
      %v6979 = vmul.f32 %v6755, %v5649
      %v6980 = vmul.f32 %v6756, %v5650
      %v6981 = vmul.f32 %v6757, %v5651
      %v6982 = vmul.f32 %v6758, %v5652
      %v6983 = vmul.f32 %v6759, %v5653
      %v6984 = vmul.f32 %v6760, %v5654
      %v6985 = vmul.f32 %v6761, %v5655
      %v6986 = vmul.f32 %v6762, %v5656
      %v6987 = vmul.f32 %v6763, %v5657
      %v6988 = vmul.f32 %v6764, %v5658
      %v6989 = vmul.f32 %v6765, %v5659
      %v6990 = vmul.f32 %v6766, %v5660
      %v6991 = vmul.f32 %v6767, %v5661
      %v6992 = vmul.f32 %v6768, %v5662
      %v6993 = vmul.f32 %v6769, %v5663
      %v6994 = vmul.f32 %v6770, %v5664
      %v6995 = vmul.f32 %v6771, %v5665
      %v6996 = vmul.f32 %v6772, %v5666
      %v6997 = vmul.f32 %v6773, %v5667
      %v6998 = vmul.f32 %v6774, %v5668
      %v6999 = vmul.f32 %v6775, %v5669
      %v7000 = vmul.f32 %v6776, %v5670
      %v7001 = vmul.f32 %v6777, %v5671
      %v7002 = vmul.f32 %v6778, %v5672
      %v7003 = vmul.f32 %v6779, %v5673
      %7004 = vrot.lane.b32.xlu0 %v6748, 64
      %v7005 = vpop.permute.xlu0 %7004
      %7006 = vrot.lane.b32.xlu0 %v6749, 64
      %v7007 = vpop.permute.xlu0 %7006
      %7008 = vrot.lane.b32.xlu0 %v6750, 64
      %v7009 = vpop.permute.xlu0 %7008
      %7010 = vrot.lane.b32.xlu0 %v6751, 64
      %v7011 = vpop.permute.xlu0 %7010
      %7012 = vrot.lane.b32.xlu0 %v6752, 64
      %v7013 = vpop.permute.xlu0 %7012
      %7014 = vrot.lane.b32.xlu0 %v6753, 64
      %v7015 = vpop.permute.xlu0 %7014
      %7016 = vrot.lane.b32.xlu0 %v6754, 64
      %v7017 = vpop.permute.xlu0 %7016
      %7018 = vrot.lane.b32.xlu0 %v6755, 64
      %v7019 = vpop.permute.xlu0 %7018
      %7020 = vrot.lane.b32.xlu0 %v6756, 64
      %v7021 = vpop.permute.xlu0 %7020
      %7022 = vrot.lane.b32.xlu0 %v6757, 64
      %v7023 = vpop.permute.xlu0 %7022
      %7024 = vrot.lane.b32.xlu0 %v6758, 64
      %v7025 = vpop.permute.xlu0 %7024
      %7026 = vrot.lane.b32.xlu0 %v6759, 64
      %v7027 = vpop.permute.xlu0 %7026
      %7028 = vrot.lane.b32.xlu0 %v6760, 64
      %v7029 = vpop.permute.xlu0 %7028
      %7030 = vrot.lane.b32.xlu0 %v6761, 64
      %v7031 = vpop.permute.xlu0 %7030
      %7032 = vrot.lane.b32.xlu0 %v6762, 64
      %v7033 = vpop.permute.xlu0 %7032
      %7034 = vrot.lane.b32.xlu0 %v6763, 64
      %v7035 = vpop.permute.xlu0 %7034
      %7036 = vrot.lane.b32.xlu0 %v6764, 64
      %v7037 = vpop.permute.xlu0 %7036
      %7038 = vrot.lane.b32.xlu0 %v6765, 64
      %v7039 = vpop.permute.xlu0 %7038
      %7040 = vrot.lane.b32.xlu0 %v6766, 64
      %v7041 = vpop.permute.xlu0 %7040
      %7042 = vrot.lane.b32.xlu0 %v6767, 64
      %v7043 = vpop.permute.xlu0 %7042
      %7044 = vrot.lane.b32.xlu0 %v6768, 64
      %v7045 = vpop.permute.xlu0 %7044
      %7046 = vrot.lane.b32.xlu0 %v6769, 64
      %v7047 = vpop.permute.xlu0 %7046
      %7048 = vrot.lane.b32.xlu0 %v6770, 64
      %v7049 = vpop.permute.xlu0 %7048
      %7050 = vrot.lane.b32.xlu0 %v6771, 64
      %v7051 = vpop.permute.xlu0 %7050
      %7052 = vrot.lane.b32.xlu0 %v6772, 64
      %v7053 = vpop.permute.xlu0 %7052
      %7054 = vrot.lane.b32.xlu0 %v6773, 64
      %v7055 = vpop.permute.xlu0 %7054
      %7056 = vrot.lane.b32.xlu0 %v6774, 64
      %v7057 = vpop.permute.xlu0 %7056
      %7058 = vrot.lane.b32.xlu0 %v6775, 64
      %v7059 = vpop.permute.xlu0 %7058
      %7060 = vrot.lane.b32.xlu0 %v6776, 64
      %v7061 = vpop.permute.xlu0 %7060
      %7062 = vrot.lane.b32.xlu0 %v6777, 64
      %v7063 = vpop.permute.xlu0 %7062
      %7064 = vrot.lane.b32.xlu0 %v6778, 64
      %v7065 = vpop.permute.xlu0 %7064
      %7066 = vrot.lane.b32.xlu0 %v6779, 64
      %v7067 = vpop.permute.xlu0 %7066
      %v7068 = vmul.f32 %v7005, %v5674
      %v7069 = vmul.f32 %v7007, %v5675
      %v7070 = vmul.f32 %v7009, %v5676
      %v7071 = vmul.f32 %v7011, %v5677
      %v7072 = vmul.f32 %v7013, %v5678
      %v7073 = vmul.f32 %v7015, %v5679
      %v7074 = vmul.f32 %v7017, %v5680
      %v7075 = vmul.f32 %v7019, %v5681
      %v7076 = vmul.f32 %v7021, %v5682
      %v7077 = vmul.f32 %v7023, %v5683
      %v7078 = vmul.f32 %v7025, %v5684
      %v7079 = vmul.f32 %v7027, %v5685
      %v7080 = vmul.f32 %v7029, %v5686
      %v7081 = vmul.f32 %v7031, %v5687
      %v7082 = vmul.f32 %v7033, %v5688
      %v7083 = vmul.f32 %v7035, %v5689
      %v7084 = vmul.f32 %v7037, %v5690
      %v7085 = vmul.f32 %v7039, %v5691
      %v7086 = vmul.f32 %v7041, %v5692
      %v7087 = vmul.f32 %v7043, %v5693
      %v7088 = vmul.f32 %v7045, %v5694
      %v7089 = vmul.f32 %v7047, %v5695
      %v7090 = vmul.f32 %v7049, %v5696
      %v7091 = vmul.f32 %v7051, %v5697
      %v7092 = vmul.f32 %v7053, %v5698
      %v7093 = vmul.f32 %v7055, %v5699
      %v7094 = vmul.f32 %v7057, %v5700
      %v7095 = vmul.f32 %v7059, %v5701
      %v7096 = vmul.f32 %v7061, %v5702
      %v7097 = vmul.f32 %v7063, %v5703
      %v7098 = vmul.f32 %v7065, %v5704
      %v7099 = vmul.f32 %v7067, %v5705
      %v7100 = vadd.f32 %v6972, %v7068
      %v7101 = vadd.f32 %v6973, %v7069
      %v7102 = vadd.f32 %v6974, %v7070
      %v7103 = vadd.f32 %v6975, %v7071
      %v7104 = vadd.f32 %v6976, %v7072
      %v7105 = vadd.f32 %v6977, %v7073
      %v7106 = vadd.f32 %v6978, %v7074
      %v7107 = vadd.f32 %v6979, %v7075
      %v7108 = vadd.f32 %v6980, %v7076
      %v7109 = vadd.f32 %v6981, %v7077
      %v7110 = vadd.f32 %v6982, %v7078
      %v7111 = vadd.f32 %v6983, %v7079
      %v7112 = vadd.f32 %v6984, %v7080
      %v7113 = vadd.f32 %v6985, %v7081
      %v7114 = vadd.f32 %v6986, %v7082
      %v7115 = vadd.f32 %v6987, %v7083
      %v7116 = vadd.f32 %v6988, %v7084
      %v7117 = vadd.f32 %v6989, %v7085
      %v7118 = vadd.f32 %v6990, %v7086
      %v7119 = vadd.f32 %v6991, %v7087
      %v7120 = vadd.f32 %v6992, %v7088
      %v7121 = vadd.f32 %v6993, %v7089
      %v7122 = vadd.f32 %v6994, %v7090
      %v7123 = vadd.f32 %v6995, %v7091
      %v7124 = vadd.f32 %v6996, %v7092
      %v7125 = vadd.f32 %v6997, %v7093
      %v7126 = vadd.f32 %v6998, %v7094
      %v7127 = vadd.f32 %v6999, %v7095
      %v7128 = vadd.f32 %v7000, %v7096
      %v7129 = vadd.f32 %v7001, %v7097
      %v7130 = vadd.f32 %v7002, %v7098
      %v7131 = vadd.f32 %v7003, %v7099
      %7132 = vst [vmem:[#allocation17 + $0x8] sm:$0xff] %v7100
      %7133 = vst [vmem:[#allocation17 + $0x28] sm:$0xff] %v7101
      %7134 = vst [vmem:[#allocation17 + $0x48] sm:$0xff] %v7102
      %7135 = vst [vmem:[#allocation17 + $0x68] sm:$0xff] %v7103
      %7136 = vst [vmem:[#allocation17 + $0x88] sm:$0xff] %v7104
      %7137 = vst [vmem:[#allocation17 + $0xa8] sm:$0xff] %v7105
      %7138 = vst [vmem:[#allocation17 + $0xc8] sm:$0xff] %v7106
      %7139 = vst [vmem:[#allocation17 + $0xe8] sm:$0xff] %v7107
      %7140 = vst [vmem:[#allocation17 + $0x108] sm:$0xff] %v7108
      %7141 = vst [vmem:[#allocation17 + $0x128] sm:$0xff] %v7109
      %7142 = vst [vmem:[#allocation17 + $0x148] sm:$0xff] %v7110
      %7143 = vst [vmem:[#allocation17 + $0x168] sm:$0xff] %v7111
      %7144 = vst [vmem:[#allocation17 + $0x188] sm:$0xff] %v7112
      %7145 = vst [vmem:[#allocation17 + $0x1a8] sm:$0xff] %v7113
      %7146 = vst [vmem:[#allocation17 + $0x1c8] sm:$0xff] %v7114
      %7147 = vst [vmem:[#allocation17 + $0x1e8] sm:$0xff] %v7115
      %7148 = vst [vmem:[#allocation17 + $0x208] sm:$0xff] %v7116
      %7149 = vst [vmem:[#allocation17 + $0x228] sm:$0xff] %v7117
      %7150 = vst [vmem:[#allocation17 + $0x248] sm:$0xff] %v7118
      %7151 = vst [vmem:[#allocation17 + $0x268] sm:$0xff] %v7119
      %7152 = vst [vmem:[#allocation17 + $0x288] sm:$0xff] %v7120
      %7153 = vst [vmem:[#allocation17 + $0x2a8] sm:$0xff] %v7121
      %7154 = vst [vmem:[#allocation17 + $0x2c8] sm:$0xff] %v7122
      %7155 = vst [vmem:[#allocation17 + $0x2e8] sm:$0xff] %v7123
      %7156 = vst [vmem:[#allocation17 + $0x308] sm:$0xff] %v7124
      %7157 = vst [vmem:[#allocation17 + $0x328] sm:$0xff] %v7125
      %7158 = vst [vmem:[#allocation17 + $0x348] sm:$0xff] %v7126
      %7159 = vst [vmem:[#allocation17 + $0x368] sm:$0xff] %v7127
      %7160 = vst [vmem:[#allocation17 + $0x388] sm:$0xff] %v7128
      %7161 = vst [vmem:[#allocation17 + $0x3a8] sm:$0xff] %v7129
      %7162 = vst [vmem:[#allocation17 + $0x3c8] sm:$0xff] %v7130
      %7163 = vst [vmem:[#allocation17 + $0x3e8] sm:$0xff] %v7131
      %v7164 = vld [vmem:[#allocation2 + $0x10] sm:$0xff]
      %v7165 = vld [vmem:[#allocation2 + $0x30] sm:$0xff]
      %v7166 = vld [vmem:[#allocation2 + $0x50] sm:$0xff]
      %v7167 = vld [vmem:[#allocation2 + $0x70] sm:$0xff]
      %v7168 = vld [vmem:[#allocation2 + $0x90] sm:$0xff]
      %v7169 = vld [vmem:[#allocation2 + $0xb0] sm:$0xff]
      %v7170 = vld [vmem:[#allocation2 + $0xd0] sm:$0xff]
      %v7171 = vld [vmem:[#allocation2 + $0xf0] sm:$0xff]
      %v7172 = vld [vmem:[#allocation2 + $0x110] sm:$0xff]
      %v7173 = vld [vmem:[#allocation2 + $0x130] sm:$0xff]
      %v7174 = vld [vmem:[#allocation2 + $0x150] sm:$0xff]
      %v7175 = vld [vmem:[#allocation2 + $0x170] sm:$0xff]
      %v7176 = vld [vmem:[#allocation2 + $0x190] sm:$0xff]
      %v7177 = vld [vmem:[#allocation2 + $0x1b0] sm:$0xff]
      %v7178 = vld [vmem:[#allocation2 + $0x1d0] sm:$0xff]
      %v7179 = vld [vmem:[#allocation2 + $0x1f0] sm:$0xff]
      %v7180 = vld [vmem:[#allocation2 + $0x210] sm:$0xff]
      %v7181 = vld [vmem:[#allocation2 + $0x230] sm:$0xff]
      %v7182 = vld [vmem:[#allocation2 + $0x250] sm:$0xff]
      %v7183 = vld [vmem:[#allocation2 + $0x270] sm:$0xff]
      %v7184 = vld [vmem:[#allocation2 + $0x290] sm:$0xff]
      %v7185 = vld [vmem:[#allocation2 + $0x2b0] sm:$0xff]
      %v7186 = vld [vmem:[#allocation2 + $0x2d0] sm:$0xff]
      %v7187 = vld [vmem:[#allocation2 + $0x2f0] sm:$0xff]
      %v7188 = vld [vmem:[#allocation2 + $0x310] sm:$0xff]
      %v7189 = vld [vmem:[#allocation2 + $0x330] sm:$0xff]
      %v7190 = vld [vmem:[#allocation2 + $0x350] sm:$0xff]
      %v7191 = vld [vmem:[#allocation2 + $0x370] sm:$0xff]
      %v7192 = vld [vmem:[#allocation2 + $0x390] sm:$0xff]
      %v7193 = vld [vmem:[#allocation2 + $0x3b0] sm:$0xff]
      %v7194 = vld [vmem:[#allocation2 + $0x3d0] sm:$0xff]
      %v7195 = vld [vmem:[#allocation2 + $0x3f0] sm:$0xff]
      %v7196 = vld [vmem:[%s4 + $0x2] sm:$0x1]
      %v7198 = vlaneseq
      %v7199 = vshrl.u32 %v7198, 7
      %v7200 = vsub.s32 0, %v7199
      %v7201 = vrot.slane %v7196, %v7200
      %v7203 = vadd.f32 %v7164, %v7201
      %v7204 = vadd.f32 %v7165, %v7201
      %v7205 = vadd.f32 %v7166, %v7201
      %v7206 = vadd.f32 %v7167, %v7201
      %v7207 = vadd.f32 %v7168, %v7201
      %v7208 = vadd.f32 %v7169, %v7201
      %v7209 = vadd.f32 %v7170, %v7201
      %v7210 = vadd.f32 %v7171, %v7201
      %v7211 = vadd.f32 %v7172, %v7201
      %v7212 = vadd.f32 %v7173, %v7201
      %v7213 = vadd.f32 %v7174, %v7201
      %v7214 = vadd.f32 %v7175, %v7201
      %v7215 = vadd.f32 %v7176, %v7201
      %v7216 = vadd.f32 %v7177, %v7201
      %v7217 = vadd.f32 %v7178, %v7201
      %v7218 = vadd.f32 %v7179, %v7201
      %v7219 = vadd.f32 %v7180, %v7201
      %v7220 = vadd.f32 %v7181, %v7201
      %v7221 = vadd.f32 %v7182, %v7201
      %v7222 = vadd.f32 %v7183, %v7201
      %v7223 = vadd.f32 %v7184, %v7201
      %v7224 = vadd.f32 %v7185, %v7201
      %v7225 = vadd.f32 %v7186, %v7201
      %v7226 = vadd.f32 %v7187, %v7201
      %v7227 = vadd.f32 %v7188, %v7201
      %v7228 = vadd.f32 %v7189, %v7201
      %v7229 = vadd.f32 %v7190, %v7201
      %v7230 = vadd.f32 %v7191, %v7201
      %v7231 = vadd.f32 %v7192, %v7201
      %v7232 = vadd.f32 %v7193, %v7201
      %v7233 = vadd.f32 %v7194, %v7201
      %v7234 = vadd.f32 %v7195, %v7201
      %v7235 = vld [vmem:[#allocation3 + $0x10] sm:$0xff]
      %v7236 = vld [vmem:[#allocation3 + $0x30] sm:$0xff]
      %v7237 = vld [vmem:[#allocation3 + $0x50] sm:$0xff]
      %v7238 = vld [vmem:[#allocation3 + $0x70] sm:$0xff]
      %v7239 = vld [vmem:[#allocation3 + $0x90] sm:$0xff]
      %v7240 = vld [vmem:[#allocation3 + $0xb0] sm:$0xff]
      %v7241 = vld [vmem:[#allocation3 + $0xd0] sm:$0xff]
      %v7242 = vld [vmem:[#allocation3 + $0xf0] sm:$0xff]
      %v7243 = vld [vmem:[#allocation3 + $0x110] sm:$0xff]
      %v7244 = vld [vmem:[#allocation3 + $0x130] sm:$0xff]
      %v7245 = vld [vmem:[#allocation3 + $0x150] sm:$0xff]
      %v7246 = vld [vmem:[#allocation3 + $0x170] sm:$0xff]
      %v7247 = vld [vmem:[#allocation3 + $0x190] sm:$0xff]
      %v7248 = vld [vmem:[#allocation3 + $0x1b0] sm:$0xff]
      %v7249 = vld [vmem:[#allocation3 + $0x1d0] sm:$0xff]
      %v7250 = vld [vmem:[#allocation3 + $0x1f0] sm:$0xff]
      %v7251 = vld [vmem:[#allocation3 + $0x210] sm:$0xff]
      %v7252 = vld [vmem:[#allocation3 + $0x230] sm:$0xff]
      %v7253 = vld [vmem:[#allocation3 + $0x250] sm:$0xff]
      %v7254 = vld [vmem:[#allocation3 + $0x270] sm:$0xff]
      %v7255 = vld [vmem:[#allocation3 + $0x290] sm:$0xff]
      %v7256 = vld [vmem:[#allocation3 + $0x2b0] sm:$0xff]
      %v7257 = vld [vmem:[#allocation3 + $0x2d0] sm:$0xff]
      %v7258 = vld [vmem:[#allocation3 + $0x2f0] sm:$0xff]
      %v7259 = vld [vmem:[#allocation3 + $0x310] sm:$0xff]
      %v7260 = vld [vmem:[#allocation3 + $0x330] sm:$0xff]
      %v7261 = vld [vmem:[#allocation3 + $0x350] sm:$0xff]
      %v7262 = vld [vmem:[#allocation3 + $0x370] sm:$0xff]
      %v7263 = vld [vmem:[#allocation3 + $0x390] sm:$0xff]
      %v7264 = vld [vmem:[#allocation3 + $0x3b0] sm:$0xff]
      %v7265 = vld [vmem:[#allocation3 + $0x3d0] sm:$0xff]
      %v7266 = vld [vmem:[#allocation3 + $0x3f0] sm:$0xff]
      %v7267 = vld [vmem:[%s5 + $0x2] sm:$0x1]
      %v7269 = vlaneseq
      %v7270 = vshrl.u32 %v7269, 7
      %v7271 = vsub.s32 0, %v7270
      %v7272 = vrot.slane %v7267, %v7271
      %v7274 = vadd.f32 %v7235, %v7272
      %v7275 = vadd.f32 %v7236, %v7272
      %v7276 = vadd.f32 %v7237, %v7272
      %v7277 = vadd.f32 %v7238, %v7272
      %v7278 = vadd.f32 %v7239, %v7272
      %v7279 = vadd.f32 %v7240, %v7272
      %v7280 = vadd.f32 %v7241, %v7272
      %v7281 = vadd.f32 %v7242, %v7272
      %v7282 = vadd.f32 %v7243, %v7272
      %v7283 = vadd.f32 %v7244, %v7272
      %v7284 = vadd.f32 %v7245, %v7272
      %v7285 = vadd.f32 %v7246, %v7272
      %v7286 = vadd.f32 %v7247, %v7272
      %v7287 = vadd.f32 %v7248, %v7272
      %v7288 = vadd.f32 %v7249, %v7272
      %v7289 = vadd.f32 %v7250, %v7272
      %v7290 = vadd.f32 %v7251, %v7272
      %v7291 = vadd.f32 %v7252, %v7272
      %v7292 = vadd.f32 %v7253, %v7272
      %v7293 = vadd.f32 %v7254, %v7272
      %v7294 = vadd.f32 %v7255, %v7272
      %v7295 = vadd.f32 %v7256, %v7272
      %v7296 = vadd.f32 %v7257, %v7272
      %v7297 = vadd.f32 %v7258, %v7272
      %v7298 = vadd.f32 %v7259, %v7272
      %v7299 = vadd.f32 %v7260, %v7272
      %v7300 = vadd.f32 %v7261, %v7272
      %v7301 = vadd.f32 %v7262, %v7272
      %v7302 = vadd.f32 %v7263, %v7272
      %v7303 = vadd.f32 %v7264, %v7272
      %v7304 = vadd.f32 %v7265, %v7272
      %v7305 = vadd.f32 %v7266, %v7272
      %v7306 = vmul.f32 %v7203, %v5642
      %v7307 = vmul.f32 %v7204, %v5643
      %v7308 = vmul.f32 %v7205, %v5644
      %v7309 = vmul.f32 %v7206, %v5645
      %v7310 = vmul.f32 %v7207, %v5646
      %v7311 = vmul.f32 %v7208, %v5647
      %v7312 = vmul.f32 %v7209, %v5648
      %v7313 = vmul.f32 %v7210, %v5649
      %v7314 = vmul.f32 %v7211, %v5650
      %v7315 = vmul.f32 %v7212, %v5651
      %v7316 = vmul.f32 %v7213, %v5652
      %v7317 = vmul.f32 %v7214, %v5653
      %v7318 = vmul.f32 %v7215, %v5654
      %v7319 = vmul.f32 %v7216, %v5655
      %v7320 = vmul.f32 %v7217, %v5656
      %v7321 = vmul.f32 %v7218, %v5657
      %v7322 = vmul.f32 %v7219, %v5658
      %v7323 = vmul.f32 %v7220, %v5659
      %v7324 = vmul.f32 %v7221, %v5660
      %v7325 = vmul.f32 %v7222, %v5661
      %v7326 = vmul.f32 %v7223, %v5662
      %v7327 = vmul.f32 %v7224, %v5663
      %v7328 = vmul.f32 %v7225, %v5664
      %v7329 = vmul.f32 %v7226, %v5665
      %v7330 = vmul.f32 %v7227, %v5666
      %v7331 = vmul.f32 %v7228, %v5667
      %v7332 = vmul.f32 %v7229, %v5668
      %v7333 = vmul.f32 %v7230, %v5669
      %v7334 = vmul.f32 %v7231, %v5670
      %v7335 = vmul.f32 %v7232, %v5671
      %v7336 = vmul.f32 %v7233, %v5672
      %v7337 = vmul.f32 %v7234, %v5673
      %7338 = vrot.lane.b32.xlu0 %v7203, 64
      %v7339 = vpop.permute.xlu0 %7338
      %7340 = vrot.lane.b32.xlu0 %v7204, 64
      %v7341 = vpop.permute.xlu0 %7340
      %7342 = vrot.lane.b32.xlu0 %v7205, 64
      %v7343 = vpop.permute.xlu0 %7342
      %7344 = vrot.lane.b32.xlu0 %v7206, 64
      %v7345 = vpop.permute.xlu0 %7344
      %7346 = vrot.lane.b32.xlu0 %v7207, 64
      %v7347 = vpop.permute.xlu0 %7346
      %7348 = vrot.lane.b32.xlu0 %v7208, 64
      %v7349 = vpop.permute.xlu0 %7348
      %7350 = vrot.lane.b32.xlu0 %v7209, 64
      %v7351 = vpop.permute.xlu0 %7350
      %7352 = vrot.lane.b32.xlu0 %v7210, 64
      %v7353 = vpop.permute.xlu0 %7352
      %7354 = vrot.lane.b32.xlu0 %v7211, 64
      %v7355 = vpop.permute.xlu0 %7354
      %7356 = vrot.lane.b32.xlu0 %v7212, 64
      %v7357 = vpop.permute.xlu0 %7356
      %7358 = vrot.lane.b32.xlu0 %v7213, 64
      %v7359 = vpop.permute.xlu0 %7358
      %7360 = vrot.lane.b32.xlu0 %v7214, 64
      %v7361 = vpop.permute.xlu0 %7360
      %7362 = vrot.lane.b32.xlu0 %v7215, 64
      %v7363 = vpop.permute.xlu0 %7362
      %7364 = vrot.lane.b32.xlu0 %v7216, 64
      %v7365 = vpop.permute.xlu0 %7364
      %7366 = vrot.lane.b32.xlu0 %v7217, 64
      %v7367 = vpop.permute.xlu0 %7366
      %7368 = vrot.lane.b32.xlu0 %v7218, 64
      %v7369 = vpop.permute.xlu0 %7368
      %7370 = vrot.lane.b32.xlu0 %v7219, 64
      %v7371 = vpop.permute.xlu0 %7370
      %7372 = vrot.lane.b32.xlu0 %v7220, 64
      %v7373 = vpop.permute.xlu0 %7372
      %7374 = vrot.lane.b32.xlu0 %v7221, 64
      %v7375 = vpop.permute.xlu0 %7374
      %7376 = vrot.lane.b32.xlu0 %v7222, 64
      %v7377 = vpop.permute.xlu0 %7376
      %7378 = vrot.lane.b32.xlu0 %v7223, 64
      %v7379 = vpop.permute.xlu0 %7378
      %7380 = vrot.lane.b32.xlu0 %v7224, 64
      %v7381 = vpop.permute.xlu0 %7380
      %7382 = vrot.lane.b32.xlu0 %v7225, 64
      %v7383 = vpop.permute.xlu0 %7382
      %7384 = vrot.lane.b32.xlu0 %v7226, 64
      %v7385 = vpop.permute.xlu0 %7384
      %7386 = vrot.lane.b32.xlu0 %v7227, 64
      %v7387 = vpop.permute.xlu0 %7386
      %7388 = vrot.lane.b32.xlu0 %v7228, 64
      %v7389 = vpop.permute.xlu0 %7388
      %7390 = vrot.lane.b32.xlu0 %v7229, 64
      %v7391 = vpop.permute.xlu0 %7390
      %7392 = vrot.lane.b32.xlu0 %v7230, 64
      %v7393 = vpop.permute.xlu0 %7392
      %7394 = vrot.lane.b32.xlu0 %v7231, 64
      %v7395 = vpop.permute.xlu0 %7394
      %7396 = vrot.lane.b32.xlu0 %v7232, 64
      %v7397 = vpop.permute.xlu0 %7396
      %7398 = vrot.lane.b32.xlu0 %v7233, 64
      %v7399 = vpop.permute.xlu0 %7398
      %7400 = vrot.lane.b32.xlu0 %v7234, 64
      %v7401 = vpop.permute.xlu0 %7400
      %v7402 = vmul.f32 %v7339, %v5674
      %v7403 = vmul.f32 %v7341, %v5675
      %v7404 = vmul.f32 %v7343, %v5676
      %v7405 = vmul.f32 %v7345, %v5677
      %v7406 = vmul.f32 %v7347, %v5678
      %v7407 = vmul.f32 %v7349, %v5679
      %v7408 = vmul.f32 %v7351, %v5680
      %v7409 = vmul.f32 %v7353, %v5681
      %v7410 = vmul.f32 %v7355, %v5682
      %v7411 = vmul.f32 %v7357, %v5683
      %v7412 = vmul.f32 %v7359, %v5684
      %v7413 = vmul.f32 %v7361, %v5685
      %v7414 = vmul.f32 %v7363, %v5686
      %v7415 = vmul.f32 %v7365, %v5687
      %v7416 = vmul.f32 %v7367, %v5688
      %v7417 = vmul.f32 %v7369, %v5689
      %v7418 = vmul.f32 %v7371, %v5690
      %v7419 = vmul.f32 %v7373, %v5691
      %v7420 = vmul.f32 %v7375, %v5692
      %v7421 = vmul.f32 %v7377, %v5693
      %v7422 = vmul.f32 %v7379, %v5694
      %v7423 = vmul.f32 %v7381, %v5695
      %v7424 = vmul.f32 %v7383, %v5696
      %v7425 = vmul.f32 %v7385, %v5697
      %v7426 = vmul.f32 %v7387, %v5698
      %v7427 = vmul.f32 %v7389, %v5699
      %v7428 = vmul.f32 %v7391, %v5700
      %v7429 = vmul.f32 %v7393, %v5701
      %v7430 = vmul.f32 %v7395, %v5702
      %v7431 = vmul.f32 %v7397, %v5703
      %v7432 = vmul.f32 %v7399, %v5704
      %v7433 = vmul.f32 %v7401, %v5705
      %v7434 = vadd.f32 %v7306, %v7402
      %v7435 = vadd.f32 %v7307, %v7403
      %v7436 = vadd.f32 %v7308, %v7404
      %v7437 = vadd.f32 %v7309, %v7405
      %v7438 = vadd.f32 %v7310, %v7406
      %v7439 = vadd.f32 %v7311, %v7407
      %v7440 = vadd.f32 %v7312, %v7408
      %v7441 = vadd.f32 %v7313, %v7409
      %v7442 = vadd.f32 %v7314, %v7410
      %v7443 = vadd.f32 %v7315, %v7411
      %v7444 = vadd.f32 %v7316, %v7412
      %v7445 = vadd.f32 %v7317, %v7413
      %v7446 = vadd.f32 %v7318, %v7414
      %v7447 = vadd.f32 %v7319, %v7415
      %v7448 = vadd.f32 %v7320, %v7416
      %v7449 = vadd.f32 %v7321, %v7417
      %v7450 = vadd.f32 %v7322, %v7418
      %v7451 = vadd.f32 %v7323, %v7419
      %v7452 = vadd.f32 %v7324, %v7420
      %v7453 = vadd.f32 %v7325, %v7421
      %v7454 = vadd.f32 %v7326, %v7422
      %v7455 = vadd.f32 %v7327, %v7423
      %v7456 = vadd.f32 %v7328, %v7424
      %v7457 = vadd.f32 %v7329, %v7425
      %v7458 = vadd.f32 %v7330, %v7426
      %v7459 = vadd.f32 %v7331, %v7427
      %v7460 = vadd.f32 %v7332, %v7428
      %v7461 = vadd.f32 %v7333, %v7429
      %v7462 = vadd.f32 %v7334, %v7430
      %v7463 = vadd.f32 %v7335, %v7431
      %v7464 = vadd.f32 %v7336, %v7432
      %v7465 = vadd.f32 %v7337, %v7433
      %7466 = vst [vmem:[#allocation16 + $0x10] sm:$0xff] %v7434
      %7467 = vst [vmem:[#allocation16 + $0x30] sm:$0xff] %v7435
      %7468 = vst [vmem:[#allocation16 + $0x50] sm:$0xff] %v7436
      %7469 = vst [vmem:[#allocation16 + $0x70] sm:$0xff] %v7437
      %7470 = vst [vmem:[#allocation16 + $0x90] sm:$0xff] %v7438
      %7471 = vst [vmem:[#allocation16 + $0xb0] sm:$0xff] %v7439
      %7472 = vst [vmem:[#allocation16 + $0xd0] sm:$0xff] %v7440
      %7473 = vst [vmem:[#allocation16 + $0xf0] sm:$0xff] %v7441
      %7474 = vst [vmem:[#allocation16 + $0x110] sm:$0xff] %v7442
      %7475 = vst [vmem:[#allocation16 + $0x130] sm:$0xff] %v7443
      %7476 = vst [vmem:[#allocation16 + $0x150] sm:$0xff] %v7444
      %7477 = vst [vmem:[#allocation16 + $0x170] sm:$0xff] %v7445
      %7478 = vst [vmem:[#allocation16 + $0x190] sm:$0xff] %v7446
      %7479 = vst [vmem:[#allocation16 + $0x1b0] sm:$0xff] %v7447
      %7480 = vst [vmem:[#allocation16 + $0x1d0] sm:$0xff] %v7448
      %7481 = vst [vmem:[#allocation16 + $0x1f0] sm:$0xff] %v7449
      %7482 = vst [vmem:[#allocation16 + $0x210] sm:$0xff] %v7450
      %7483 = vst [vmem:[#allocation16 + $0x230] sm:$0xff] %v7451
      %7484 = vst [vmem:[#allocation16 + $0x250] sm:$0xff] %v7452
      %7485 = vst [vmem:[#allocation16 + $0x270] sm:$0xff] %v7453
      %7486 = vst [vmem:[#allocation16 + $0x290] sm:$0xff] %v7454
      %7487 = vst [vmem:[#allocation16 + $0x2b0] sm:$0xff] %v7455
      %7488 = vst [vmem:[#allocation16 + $0x2d0] sm:$0xff] %v7456
      %7489 = vst [vmem:[#allocation16 + $0x2f0] sm:$0xff] %v7457
      %7490 = vst [vmem:[#allocation16 + $0x310] sm:$0xff] %v7458
      %7491 = vst [vmem:[#allocation16 + $0x330] sm:$0xff] %v7459
      %7492 = vst [vmem:[#allocation16 + $0x350] sm:$0xff] %v7460
      %7493 = vst [vmem:[#allocation16 + $0x370] sm:$0xff] %v7461
      %7494 = vst [vmem:[#allocation16 + $0x390] sm:$0xff] %v7462
      %7495 = vst [vmem:[#allocation16 + $0x3b0] sm:$0xff] %v7463
      %7496 = vst [vmem:[#allocation16 + $0x3d0] sm:$0xff] %v7464
      %7497 = vst [vmem:[#allocation16 + $0x3f0] sm:$0xff] %v7465
      %v7498 = vmul.f32 %v7274, %v5642
      %v7499 = vmul.f32 %v7275, %v5643
      %v7500 = vmul.f32 %v7276, %v5644
      %v7501 = vmul.f32 %v7277, %v5645
      %v7502 = vmul.f32 %v7278, %v5646
      %v7503 = vmul.f32 %v7279, %v5647
      %v7504 = vmul.f32 %v7280, %v5648
      %v7505 = vmul.f32 %v7281, %v5649
      %v7506 = vmul.f32 %v7282, %v5650
      %v7507 = vmul.f32 %v7283, %v5651
      %v7508 = vmul.f32 %v7284, %v5652
      %v7509 = vmul.f32 %v7285, %v5653
      %v7510 = vmul.f32 %v7286, %v5654
      %v7511 = vmul.f32 %v7287, %v5655
      %v7512 = vmul.f32 %v7288, %v5656
      %v7513 = vmul.f32 %v7289, %v5657
      %v7514 = vmul.f32 %v7290, %v5658
      %v7515 = vmul.f32 %v7291, %v5659
      %v7516 = vmul.f32 %v7292, %v5660
      %v7517 = vmul.f32 %v7293, %v5661
      %v7518 = vmul.f32 %v7294, %v5662
      %v7519 = vmul.f32 %v7295, %v5663
      %v7520 = vmul.f32 %v7296, %v5664
      %v7521 = vmul.f32 %v7297, %v5665
      %v7522 = vmul.f32 %v7298, %v5666
      %v7523 = vmul.f32 %v7299, %v5667
      %v7524 = vmul.f32 %v7300, %v5668
      %v7525 = vmul.f32 %v7301, %v5669
      %v7526 = vmul.f32 %v7302, %v5670
      %v7527 = vmul.f32 %v7303, %v5671
      %v7528 = vmul.f32 %v7304, %v5672
      %v7529 = vmul.f32 %v7305, %v5673
      %7530 = vrot.lane.b32.xlu0 %v7274, 64
      %v7531 = vpop.permute.xlu0 %7530
      %7532 = vrot.lane.b32.xlu0 %v7275, 64
      %v7533 = vpop.permute.xlu0 %7532
      %7534 = vrot.lane.b32.xlu0 %v7276, 64
      %v7535 = vpop.permute.xlu0 %7534
      %7536 = vrot.lane.b32.xlu0 %v7277, 64
      %v7537 = vpop.permute.xlu0 %7536
      %7538 = vrot.lane.b32.xlu0 %v7278, 64
      %v7539 = vpop.permute.xlu0 %7538
      %7540 = vrot.lane.b32.xlu0 %v7279, 64
      %v7541 = vpop.permute.xlu0 %7540
      %7542 = vrot.lane.b32.xlu0 %v7280, 64
      %v7543 = vpop.permute.xlu0 %7542
      %7544 = vrot.lane.b32.xlu0 %v7281, 64
      %v7545 = vpop.permute.xlu0 %7544
      %7546 = vrot.lane.b32.xlu0 %v7282, 64
      %v7547 = vpop.permute.xlu0 %7546
      %7548 = vrot.lane.b32.xlu0 %v7283, 64
      %v7549 = vpop.permute.xlu0 %7548
      %7550 = vrot.lane.b32.xlu0 %v7284, 64
      %v7551 = vpop.permute.xlu0 %7550
      %7552 = vrot.lane.b32.xlu0 %v7285, 64
      %v7553 = vpop.permute.xlu0 %7552
      %7554 = vrot.lane.b32.xlu0 %v7286, 64
      %v7555 = vpop.permute.xlu0 %7554
      %7556 = vrot.lane.b32.xlu0 %v7287, 64
      %v7557 = vpop.permute.xlu0 %7556
      %7558 = vrot.lane.b32.xlu0 %v7288, 64
      %v7559 = vpop.permute.xlu0 %7558
      %7560 = vrot.lane.b32.xlu0 %v7289, 64
      %v7561 = vpop.permute.xlu0 %7560
      %7562 = vrot.lane.b32.xlu0 %v7290, 64
      %v7563 = vpop.permute.xlu0 %7562
      %7564 = vrot.lane.b32.xlu0 %v7291, 64
      %v7565 = vpop.permute.xlu0 %7564
      %7566 = vrot.lane.b32.xlu0 %v7292, 64
      %v7567 = vpop.permute.xlu0 %7566
      %7568 = vrot.lane.b32.xlu0 %v7293, 64
      %v7569 = vpop.permute.xlu0 %7568
      %7570 = vrot.lane.b32.xlu0 %v7294, 64
      %v7571 = vpop.permute.xlu0 %7570
      %7572 = vrot.lane.b32.xlu0 %v7295, 64
      %v7573 = vpop.permute.xlu0 %7572
      %7574 = vrot.lane.b32.xlu0 %v7296, 64
      %v7575 = vpop.permute.xlu0 %7574
      %7576 = vrot.lane.b32.xlu0 %v7297, 64
      %v7577 = vpop.permute.xlu0 %7576
      %7578 = vrot.lane.b32.xlu0 %v7298, 64
      %v7579 = vpop.permute.xlu0 %7578
      %7580 = vrot.lane.b32.xlu0 %v7299, 64
      %v7581 = vpop.permute.xlu0 %7580
      %7582 = vrot.lane.b32.xlu0 %v7300, 64
      %v7583 = vpop.permute.xlu0 %7582
      %7584 = vrot.lane.b32.xlu0 %v7301, 64
      %v7585 = vpop.permute.xlu0 %7584
      %7586 = vrot.lane.b32.xlu0 %v7302, 64
      %v7587 = vpop.permute.xlu0 %7586
      %7588 = vrot.lane.b32.xlu0 %v7303, 64
      %v7589 = vpop.permute.xlu0 %7588
      %7590 = vrot.lane.b32.xlu0 %v7304, 64
      %v7591 = vpop.permute.xlu0 %7590
      %7592 = vrot.lane.b32.xlu0 %v7305, 64
      %v7593 = vpop.permute.xlu0 %7592
      %v7594 = vmul.f32 %v7531, %v5674
      %v7595 = vmul.f32 %v7533, %v5675
      %v7596 = vmul.f32 %v7535, %v5676
      %v7597 = vmul.f32 %v7537, %v5677
      %v7598 = vmul.f32 %v7539, %v5678
      %v7599 = vmul.f32 %v7541, %v5679
      %v7600 = vmul.f32 %v7543, %v5680
      %v7601 = vmul.f32 %v7545, %v5681
      %v7602 = vmul.f32 %v7547, %v5682
      %v7603 = vmul.f32 %v7549, %v5683
      %v7604 = vmul.f32 %v7551, %v5684
      %v7605 = vmul.f32 %v7553, %v5685
      %v7606 = vmul.f32 %v7555, %v5686
      %v7607 = vmul.f32 %v7557, %v5687
      %v7608 = vmul.f32 %v7559, %v5688
      %v7609 = vmul.f32 %v7561, %v5689
      %v7610 = vmul.f32 %v7563, %v5690
      %v7611 = vmul.f32 %v7565, %v5691
      %v7612 = vmul.f32 %v7567, %v5692
      %v7613 = vmul.f32 %v7569, %v5693
      %v7614 = vmul.f32 %v7571, %v5694
      %v7615 = vmul.f32 %v7573, %v5695
      %v7616 = vmul.f32 %v7575, %v5696
      %v7617 = vmul.f32 %v7577, %v5697
      %v7618 = vmul.f32 %v7579, %v5698
      %v7619 = vmul.f32 %v7581, %v5699
      %v7620 = vmul.f32 %v7583, %v5700
      %v7621 = vmul.f32 %v7585, %v5701
      %v7622 = vmul.f32 %v7587, %v5702
      %v7623 = vmul.f32 %v7589, %v5703
      %v7624 = vmul.f32 %v7591, %v5704
      %v7625 = vmul.f32 %v7593, %v5705
      %v7626 = vadd.f32 %v7498, %v7594
      %v7627 = vadd.f32 %v7499, %v7595
      %v7628 = vadd.f32 %v7500, %v7596
      %v7629 = vadd.f32 %v7501, %v7597
      %v7630 = vadd.f32 %v7502, %v7598
      %v7631 = vadd.f32 %v7503, %v7599
      %v7632 = vadd.f32 %v7504, %v7600
      %v7633 = vadd.f32 %v7505, %v7601
      %v7634 = vadd.f32 %v7506, %v7602
      %v7635 = vadd.f32 %v7507, %v7603
      %v7636 = vadd.f32 %v7508, %v7604
      %v7637 = vadd.f32 %v7509, %v7605
      %v7638 = vadd.f32 %v7510, %v7606
      %v7639 = vadd.f32 %v7511, %v7607
      %v7640 = vadd.f32 %v7512, %v7608
      %v7641 = vadd.f32 %v7513, %v7609
      %v7642 = vadd.f32 %v7514, %v7610
      %v7643 = vadd.f32 %v7515, %v7611
      %v7644 = vadd.f32 %v7516, %v7612
      %v7645 = vadd.f32 %v7517, %v7613
      %v7646 = vadd.f32 %v7518, %v7614
      %v7647 = vadd.f32 %v7519, %v7615
      %v7648 = vadd.f32 %v7520, %v7616
      %v7649 = vadd.f32 %v7521, %v7617
      %v7650 = vadd.f32 %v7522, %v7618
      %v7651 = vadd.f32 %v7523, %v7619
      %v7652 = vadd.f32 %v7524, %v7620
      %v7653 = vadd.f32 %v7525, %v7621
      %v7654 = vadd.f32 %v7526, %v7622
      %v7655 = vadd.f32 %v7527, %v7623
      %v7656 = vadd.f32 %v7528, %v7624
      %v7657 = vadd.f32 %v7529, %v7625
      %7658 = vst [vmem:[#allocation17 + $0x10] sm:$0xff] %v7626
      %7659 = vst [vmem:[#allocation17 + $0x30] sm:$0xff] %v7627
      %7660 = vst [vmem:[#allocation17 + $0x50] sm:$0xff] %v7628
      %7661 = vst [vmem:[#allocation17 + $0x70] sm:$0xff] %v7629
      %7662 = vst [vmem:[#allocation17 + $0x90] sm:$0xff] %v7630
      %7663 = vst [vmem:[#allocation17 + $0xb0] sm:$0xff] %v7631
      %7664 = vst [vmem:[#allocation17 + $0xd0] sm:$0xff] %v7632
      %7665 = vst [vmem:[#allocation17 + $0xf0] sm:$0xff] %v7633
      %7666 = vst [vmem:[#allocation17 + $0x110] sm:$0xff] %v7634
      %7667 = vst [vmem:[#allocation17 + $0x130] sm:$0xff] %v7635
      %7668 = vst [vmem:[#allocation17 + $0x150] sm:$0xff] %v7636
      %7669 = vst [vmem:[#allocation17 + $0x170] sm:$0xff] %v7637
      %7670 = vst [vmem:[#allocation17 + $0x190] sm:$0xff] %v7638
      %7671 = vst [vmem:[#allocation17 + $0x1b0] sm:$0xff] %v7639
      %7672 = vst [vmem:[#allocation17 + $0x1d0] sm:$0xff] %v7640
      %7673 = vst [vmem:[#allocation17 + $0x1f0] sm:$0xff] %v7641
      %7674 = vst [vmem:[#allocation17 + $0x210] sm:$0xff] %v7642
      %7675 = vst [vmem:[#allocation17 + $0x230] sm:$0xff] %v7643
      %7676 = vst [vmem:[#allocation17 + $0x250] sm:$0xff] %v7644
      %7677 = vst [vmem:[#allocation17 + $0x270] sm:$0xff] %v7645
      %7678 = vst [vmem:[#allocation17 + $0x290] sm:$0xff] %v7646
      %7679 = vst [vmem:[#allocation17 + $0x2b0] sm:$0xff] %v7647
      %7680 = vst [vmem:[#allocation17 + $0x2d0] sm:$0xff] %v7648
      %7681 = vst [vmem:[#allocation17 + $0x2f0] sm:$0xff] %v7649
      %7682 = vst [vmem:[#allocation17 + $0x310] sm:$0xff] %v7650
      %7683 = vst [vmem:[#allocation17 + $0x330] sm:$0xff] %v7651
      %7684 = vst [vmem:[#allocation17 + $0x350] sm:$0xff] %v7652
      %7685 = vst [vmem:[#allocation17 + $0x370] sm:$0xff] %v7653
      %7686 = vst [vmem:[#allocation17 + $0x390] sm:$0xff] %v7654
      %7687 = vst [vmem:[#allocation17 + $0x3b0] sm:$0xff] %v7655
      %7688 = vst [vmem:[#allocation17 + $0x3d0] sm:$0xff] %v7656
      %7689 = vst [vmem:[#allocation17 + $0x3f0] sm:$0xff] %v7657
      %v7690 = vld [vmem:[#allocation2 + $0x18] sm:$0xff]
      %v7691 = vld [vmem:[#allocation2 + $0x38] sm:$0xff]
      %v7692 = vld [vmem:[#allocation2 + $0x58] sm:$0xff]
      %v7693 = vld [vmem:[#allocation2 + $0x78] sm:$0xff]
      %v7694 = vld [vmem:[#allocation2 + $0x98] sm:$0xff]
      %v7695 = vld [vmem:[#allocation2 + $0xb8] sm:$0xff]
      %v7696 = vld [vmem:[#allocation2 + $0xd8] sm:$0xff]
      %v7697 = vld [vmem:[#allocation2 + $0xf8] sm:$0xff]
      %v7698 = vld [vmem:[#allocation2 + $0x118] sm:$0xff]
      %v7699 = vld [vmem:[#allocation2 + $0x138] sm:$0xff]
      %v7700 = vld [vmem:[#allocation2 + $0x158] sm:$0xff]
      %v7701 = vld [vmem:[#allocation2 + $0x178] sm:$0xff]
      %v7702 = vld [vmem:[#allocation2 + $0x198] sm:$0xff]
      %v7703 = vld [vmem:[#allocation2 + $0x1b8] sm:$0xff]
      %v7704 = vld [vmem:[#allocation2 + $0x1d8] sm:$0xff]
      %v7705 = vld [vmem:[#allocation2 + $0x1f8] sm:$0xff]
      %v7706 = vld [vmem:[#allocation2 + $0x218] sm:$0xff]
      %v7707 = vld [vmem:[#allocation2 + $0x238] sm:$0xff]
      %v7708 = vld [vmem:[#allocation2 + $0x258] sm:$0xff]
      %v7709 = vld [vmem:[#allocation2 + $0x278] sm:$0xff]
      %v7710 = vld [vmem:[#allocation2 + $0x298] sm:$0xff]
      %v7711 = vld [vmem:[#allocation2 + $0x2b8] sm:$0xff]
      %v7712 = vld [vmem:[#allocation2 + $0x2d8] sm:$0xff]
      %v7713 = vld [vmem:[#allocation2 + $0x2f8] sm:$0xff]
      %v7714 = vld [vmem:[#allocation2 + $0x318] sm:$0xff]
      %v7715 = vld [vmem:[#allocation2 + $0x338] sm:$0xff]
      %v7716 = vld [vmem:[#allocation2 + $0x358] sm:$0xff]
      %v7717 = vld [vmem:[#allocation2 + $0x378] sm:$0xff]
      %v7718 = vld [vmem:[#allocation2 + $0x398] sm:$0xff]
      %v7719 = vld [vmem:[#allocation2 + $0x3b8] sm:$0xff]
      %v7720 = vld [vmem:[#allocation2 + $0x3d8] sm:$0xff]
      %v7721 = vld [vmem:[#allocation2 + $0x3f8] sm:$0xff]
      %v7722 = vld [vmem:[%s4 + $0x3] sm:$0x1]
      %v7724 = vlaneseq
      %v7725 = vshrl.u32 %v7724, 7
      %v7726 = vsub.s32 0, %v7725
      %v7727 = vrot.slane %v7722, %v7726
      %v7729 = vadd.f32 %v7690, %v7727
      %v7730 = vadd.f32 %v7691, %v7727
      %v7731 = vadd.f32 %v7692, %v7727
      %v7732 = vadd.f32 %v7693, %v7727
      %v7733 = vadd.f32 %v7694, %v7727
      %v7734 = vadd.f32 %v7695, %v7727
      %v7735 = vadd.f32 %v7696, %v7727
      %v7736 = vadd.f32 %v7697, %v7727
      %v7737 = vadd.f32 %v7698, %v7727
      %v7738 = vadd.f32 %v7699, %v7727
      %v7739 = vadd.f32 %v7700, %v7727
      %v7740 = vadd.f32 %v7701, %v7727
      %v7741 = vadd.f32 %v7702, %v7727
      %v7742 = vadd.f32 %v7703, %v7727
      %v7743 = vadd.f32 %v7704, %v7727
      %v7744 = vadd.f32 %v7705, %v7727
      %v7745 = vadd.f32 %v7706, %v7727
      %v7746 = vadd.f32 %v7707, %v7727
      %v7747 = vadd.f32 %v7708, %v7727
      %v7748 = vadd.f32 %v7709, %v7727
      %v7749 = vadd.f32 %v7710, %v7727
      %v7750 = vadd.f32 %v7711, %v7727
      %v7751 = vadd.f32 %v7712, %v7727
      %v7752 = vadd.f32 %v7713, %v7727
      %v7753 = vadd.f32 %v7714, %v7727
      %v7754 = vadd.f32 %v7715, %v7727
      %v7755 = vadd.f32 %v7716, %v7727
      %v7756 = vadd.f32 %v7717, %v7727
      %v7757 = vadd.f32 %v7718, %v7727
      %v7758 = vadd.f32 %v7719, %v7727
      %v7759 = vadd.f32 %v7720, %v7727
      %v7760 = vadd.f32 %v7721, %v7727
      %v7761 = vld [vmem:[#allocation3 + $0x18] sm:$0xff]
      %v7762 = vld [vmem:[#allocation3 + $0x38] sm:$0xff]
      %v7763 = vld [vmem:[#allocation3 + $0x58] sm:$0xff]
      %v7764 = vld [vmem:[#allocation3 + $0x78] sm:$0xff]
      %v7765 = vld [vmem:[#allocation3 + $0x98] sm:$0xff]
      %v7766 = vld [vmem:[#allocation3 + $0xb8] sm:$0xff]
      %v7767 = vld [vmem:[#allocation3 + $0xd8] sm:$0xff]
      %v7768 = vld [vmem:[#allocation3 + $0xf8] sm:$0xff]
      %v7769 = vld [vmem:[#allocation3 + $0x118] sm:$0xff]
      %v7770 = vld [vmem:[#allocation3 + $0x138] sm:$0xff]
      %v7771 = vld [vmem:[#allocation3 + $0x158] sm:$0xff]
      %v7772 = vld [vmem:[#allocation3 + $0x178] sm:$0xff]
      %v7773 = vld [vmem:[#allocation3 + $0x198] sm:$0xff]
      %v7774 = vld [vmem:[#allocation3 + $0x1b8] sm:$0xff]
      %v7775 = vld [vmem:[#allocation3 + $0x1d8] sm:$0xff]
      %v7776 = vld [vmem:[#allocation3 + $0x1f8] sm:$0xff]
      %v7777 = vld [vmem:[#allocation3 + $0x218] sm:$0xff]
      %v7778 = vld [vmem:[#allocation3 + $0x238] sm:$0xff]
      %v7779 = vld [vmem:[#allocation3 + $0x258] sm:$0xff]
      %v7780 = vld [vmem:[#allocation3 + $0x278] sm:$0xff]
      %v7781 = vld [vmem:[#allocation3 + $0x298] sm:$0xff]
      %v7782 = vld [vmem:[#allocation3 + $0x2b8] sm:$0xff]
      %v7783 = vld [vmem:[#allocation3 + $0x2d8] sm:$0xff]
      %v7784 = vld [vmem:[#allocation3 + $0x2f8] sm:$0xff]
      %v7785 = vld [vmem:[#allocation3 + $0x318] sm:$0xff]
      %v7786 = vld [vmem:[#allocation3 + $0x338] sm:$0xff]
      %v7787 = vld [vmem:[#allocation3 + $0x358] sm:$0xff]
      %v7788 = vld [vmem:[#allocation3 + $0x378] sm:$0xff]
      %v7789 = vld [vmem:[#allocation3 + $0x398] sm:$0xff]
      %v7790 = vld [vmem:[#allocation3 + $0x3b8] sm:$0xff]
      %v7791 = vld [vmem:[#allocation3 + $0x3d8] sm:$0xff]
      %v7792 = vld [vmem:[#allocation3 + $0x3f8] sm:$0xff]
      %v7793 = vld [vmem:[%s5 + $0x3] sm:$0x1]
      %v7795 = vlaneseq
      %v7796 = vshrl.u32 %v7795, 7
      %v7797 = vsub.s32 0, %v7796
      %v7798 = vrot.slane %v7793, %v7797
      %v7800 = vadd.f32 %v7761, %v7798
      %v7801 = vadd.f32 %v7762, %v7798
      %v7802 = vadd.f32 %v7763, %v7798
      %v7803 = vadd.f32 %v7764, %v7798
      %v7804 = vadd.f32 %v7765, %v7798
      %v7805 = vadd.f32 %v7766, %v7798
      %v7806 = vadd.f32 %v7767, %v7798
      %v7807 = vadd.f32 %v7768, %v7798
      %v7808 = vadd.f32 %v7769, %v7798
      %v7809 = vadd.f32 %v7770, %v7798
      %v7810 = vadd.f32 %v7771, %v7798
      %v7811 = vadd.f32 %v7772, %v7798
      %v7812 = vadd.f32 %v7773, %v7798
      %v7813 = vadd.f32 %v7774, %v7798
      %v7814 = vadd.f32 %v7775, %v7798
      %v7815 = vadd.f32 %v7776, %v7798
      %v7816 = vadd.f32 %v7777, %v7798
      %v7817 = vadd.f32 %v7778, %v7798
      %v7818 = vadd.f32 %v7779, %v7798
      %v7819 = vadd.f32 %v7780, %v7798
      %v7820 = vadd.f32 %v7781, %v7798
      %v7821 = vadd.f32 %v7782, %v7798
      %v7822 = vadd.f32 %v7783, %v7798
      %v7823 = vadd.f32 %v7784, %v7798
      %v7824 = vadd.f32 %v7785, %v7798
      %v7825 = vadd.f32 %v7786, %v7798
      %v7826 = vadd.f32 %v7787, %v7798
      %v7827 = vadd.f32 %v7788, %v7798
      %v7828 = vadd.f32 %v7789, %v7798
      %v7829 = vadd.f32 %v7790, %v7798
      %v7830 = vadd.f32 %v7791, %v7798
      %v7831 = vadd.f32 %v7792, %v7798
      %v7832 = vmul.f32 %v7729, %v5642
      %v7833 = vmul.f32 %v7730, %v5643
      %v7834 = vmul.f32 %v7731, %v5644
      %v7835 = vmul.f32 %v7732, %v5645
      %v7836 = vmul.f32 %v7733, %v5646
      %v7837 = vmul.f32 %v7734, %v5647
      %v7838 = vmul.f32 %v7735, %v5648
      %v7839 = vmul.f32 %v7736, %v5649
      %v7840 = vmul.f32 %v7737, %v5650
      %v7841 = vmul.f32 %v7738, %v5651
      %v7842 = vmul.f32 %v7739, %v5652
      %v7843 = vmul.f32 %v7740, %v5653
      %v7844 = vmul.f32 %v7741, %v5654
      %v7845 = vmul.f32 %v7742, %v5655
      %v7846 = vmul.f32 %v7743, %v5656
      %v7847 = vmul.f32 %v7744, %v5657
      %v7848 = vmul.f32 %v7745, %v5658
      %v7849 = vmul.f32 %v7746, %v5659
      %v7850 = vmul.f32 %v7747, %v5660
      %v7851 = vmul.f32 %v7748, %v5661
      %v7852 = vmul.f32 %v7749, %v5662
      %v7853 = vmul.f32 %v7750, %v5663
      %v7854 = vmul.f32 %v7751, %v5664
      %v7855 = vmul.f32 %v7752, %v5665
      %v7856 = vmul.f32 %v7753, %v5666
      %v7857 = vmul.f32 %v7754, %v5667
      %v7858 = vmul.f32 %v7755, %v5668
      %v7859 = vmul.f32 %v7756, %v5669
      %v7860 = vmul.f32 %v7757, %v5670
      %v7861 = vmul.f32 %v7758, %v5671
      %v7862 = vmul.f32 %v7759, %v5672
      %v7863 = vmul.f32 %v7760, %v5673
      %7864 = vrot.lane.b32.xlu0 %v7729, 64
      %v7865 = vpop.permute.xlu0 %7864
      %7866 = vrot.lane.b32.xlu0 %v7730, 64
      %v7867 = vpop.permute.xlu0 %7866
      %7868 = vrot.lane.b32.xlu0 %v7731, 64
      %v7869 = vpop.permute.xlu0 %7868
      %7870 = vrot.lane.b32.xlu0 %v7732, 64
      %v7871 = vpop.permute.xlu0 %7870
      %7872 = vrot.lane.b32.xlu0 %v7733, 64
      %v7873 = vpop.permute.xlu0 %7872
      %7874 = vrot.lane.b32.xlu0 %v7734, 64
      %v7875 = vpop.permute.xlu0 %7874
      %7876 = vrot.lane.b32.xlu0 %v7735, 64
      %v7877 = vpop.permute.xlu0 %7876
      %7878 = vrot.lane.b32.xlu0 %v7736, 64
      %v7879 = vpop.permute.xlu0 %7878
      %7880 = vrot.lane.b32.xlu0 %v7737, 64
      %v7881 = vpop.permute.xlu0 %7880
      %7882 = vrot.lane.b32.xlu0 %v7738, 64
      %v7883 = vpop.permute.xlu0 %7882
      %7884 = vrot.lane.b32.xlu0 %v7739, 64
      %v7885 = vpop.permute.xlu0 %7884
      %7886 = vrot.lane.b32.xlu0 %v7740, 64
      %v7887 = vpop.permute.xlu0 %7886
      %7888 = vrot.lane.b32.xlu0 %v7741, 64
      %v7889 = vpop.permute.xlu0 %7888
      %7890 = vrot.lane.b32.xlu0 %v7742, 64
      %v7891 = vpop.permute.xlu0 %7890
      %7892 = vrot.lane.b32.xlu0 %v7743, 64
      %v7893 = vpop.permute.xlu0 %7892
      %7894 = vrot.lane.b32.xlu0 %v7744, 64
      %v7895 = vpop.permute.xlu0 %7894
      %7896 = vrot.lane.b32.xlu0 %v7745, 64
      %v7897 = vpop.permute.xlu0 %7896
      %7898 = vrot.lane.b32.xlu0 %v7746, 64
      %v7899 = vpop.permute.xlu0 %7898
      %7900 = vrot.lane.b32.xlu0 %v7747, 64
      %v7901 = vpop.permute.xlu0 %7900
      %7902 = vrot.lane.b32.xlu0 %v7748, 64
      %v7903 = vpop.permute.xlu0 %7902
      %7904 = vrot.lane.b32.xlu0 %v7749, 64
      %v7905 = vpop.permute.xlu0 %7904
      %7906 = vrot.lane.b32.xlu0 %v7750, 64
      %v7907 = vpop.permute.xlu0 %7906
      %7908 = vrot.lane.b32.xlu0 %v7751, 64
      %v7909 = vpop.permute.xlu0 %7908
      %7910 = vrot.lane.b32.xlu0 %v7752, 64
      %v7911 = vpop.permute.xlu0 %7910
      %7912 = vrot.lane.b32.xlu0 %v7753, 64
      %v7913 = vpop.permute.xlu0 %7912
      %7914 = vrot.lane.b32.xlu0 %v7754, 64
      %v7915 = vpop.permute.xlu0 %7914
      %7916 = vrot.lane.b32.xlu0 %v7755, 64
      %v7917 = vpop.permute.xlu0 %7916
      %7918 = vrot.lane.b32.xlu0 %v7756, 64
      %v7919 = vpop.permute.xlu0 %7918
      %7920 = vrot.lane.b32.xlu0 %v7757, 64
      %v7921 = vpop.permute.xlu0 %7920
      %7922 = vrot.lane.b32.xlu0 %v7758, 64
      %v7923 = vpop.permute.xlu0 %7922
      %7924 = vrot.lane.b32.xlu0 %v7759, 64
      %v7925 = vpop.permute.xlu0 %7924
      %7926 = vrot.lane.b32.xlu0 %v7760, 64
      %v7927 = vpop.permute.xlu0 %7926
      %v7928 = vmul.f32 %v7865, %v5674
      %v7929 = vmul.f32 %v7867, %v5675
      %v7930 = vmul.f32 %v7869, %v5676
      %v7931 = vmul.f32 %v7871, %v5677
      %v7932 = vmul.f32 %v7873, %v5678
      %v7933 = vmul.f32 %v7875, %v5679
      %v7934 = vmul.f32 %v7877, %v5680
      %v7935 = vmul.f32 %v7879, %v5681
      %v7936 = vmul.f32 %v7881, %v5682
      %v7937 = vmul.f32 %v7883, %v5683
      %v7938 = vmul.f32 %v7885, %v5684
      %v7939 = vmul.f32 %v7887, %v5685
      %v7940 = vmul.f32 %v7889, %v5686
      %v7941 = vmul.f32 %v7891, %v5687
      %v7942 = vmul.f32 %v7893, %v5688
      %v7943 = vmul.f32 %v7895, %v5689
      %v7944 = vmul.f32 %v7897, %v5690
      %v7945 = vmul.f32 %v7899, %v5691
      %v7946 = vmul.f32 %v7901, %v5692
      %v7947 = vmul.f32 %v7903, %v5693
      %v7948 = vmul.f32 %v7905, %v5694
      %v7949 = vmul.f32 %v7907, %v5695
      %v7950 = vmul.f32 %v7909, %v5696
      %v7951 = vmul.f32 %v7911, %v5697
      %v7952 = vmul.f32 %v7913, %v5698
      %v7953 = vmul.f32 %v7915, %v5699
      %v7954 = vmul.f32 %v7917, %v5700
      %v7955 = vmul.f32 %v7919, %v5701
      %v7956 = vmul.f32 %v7921, %v5702
      %v7957 = vmul.f32 %v7923, %v5703
      %v7958 = vmul.f32 %v7925, %v5704
      %v7959 = vmul.f32 %v7927, %v5705
      %v7960 = vadd.f32 %v7832, %v7928
      %v7961 = vadd.f32 %v7833, %v7929
      %v7962 = vadd.f32 %v7834, %v7930
      %v7963 = vadd.f32 %v7835, %v7931
      %v7964 = vadd.f32 %v7836, %v7932
      %v7965 = vadd.f32 %v7837, %v7933
      %v7966 = vadd.f32 %v7838, %v7934
      %v7967 = vadd.f32 %v7839, %v7935
      %v7968 = vadd.f32 %v7840, %v7936
      %v7969 = vadd.f32 %v7841, %v7937
      %v7970 = vadd.f32 %v7842, %v7938
      %v7971 = vadd.f32 %v7843, %v7939
      %v7972 = vadd.f32 %v7844, %v7940
      %v7973 = vadd.f32 %v7845, %v7941
      %v7974 = vadd.f32 %v7846, %v7942
      %v7975 = vadd.f32 %v7847, %v7943
      %v7976 = vadd.f32 %v7848, %v7944
      %v7977 = vadd.f32 %v7849, %v7945
      %v7978 = vadd.f32 %v7850, %v7946
      %v7979 = vadd.f32 %v7851, %v7947
      %v7980 = vadd.f32 %v7852, %v7948
      %v7981 = vadd.f32 %v7853, %v7949
      %v7982 = vadd.f32 %v7854, %v7950
      %v7983 = vadd.f32 %v7855, %v7951
      %v7984 = vadd.f32 %v7856, %v7952
      %v7985 = vadd.f32 %v7857, %v7953
      %v7986 = vadd.f32 %v7858, %v7954
      %v7987 = vadd.f32 %v7859, %v7955
      %v7988 = vadd.f32 %v7860, %v7956
      %v7989 = vadd.f32 %v7861, %v7957
      %v7990 = vadd.f32 %v7862, %v7958
      %v7991 = vadd.f32 %v7863, %v7959
      %7992 = vst [vmem:[#allocation16 + $0x18] sm:$0xff] %v7960
      %7993 = vst [vmem:[#allocation16 + $0x38] sm:$0xff] %v7961
      %7994 = vst [vmem:[#allocation16 + $0x58] sm:$0xff] %v7962
      %7995 = vst [vmem:[#allocation16 + $0x78] sm:$0xff] %v7963
      %7996 = vst [vmem:[#allocation16 + $0x98] sm:$0xff] %v7964
      %7997 = vst [vmem:[#allocation16 + $0xb8] sm:$0xff] %v7965
      %7998 = vst [vmem:[#allocation16 + $0xd8] sm:$0xff] %v7966
      %7999 = vst [vmem:[#allocation16 + $0xf8] sm:$0xff] %v7967
      %8000 = vst [vmem:[#allocation16 + $0x118] sm:$0xff] %v7968
      %8001 = vst [vmem:[#allocation16 + $0x138] sm:$0xff] %v7969
      %8002 = vst [vmem:[#allocation16 + $0x158] sm:$0xff] %v7970
      %8003 = vst [vmem:[#allocation16 + $0x178] sm:$0xff] %v7971
      %8004 = vst [vmem:[#allocation16 + $0x198] sm:$0xff] %v7972
      %8005 = vst [vmem:[#allocation16 + $0x1b8] sm:$0xff] %v7973
      %8006 = vst [vmem:[#allocation16 + $0x1d8] sm:$0xff] %v7974
      %8007 = vst [vmem:[#allocation16 + $0x1f8] sm:$0xff] %v7975
      %8008 = vst [vmem:[#allocation16 + $0x218] sm:$0xff] %v7976
      %8009 = vst [vmem:[#allocation16 + $0x238] sm:$0xff] %v7977
      %8010 = vst [vmem:[#allocation16 + $0x258] sm:$0xff] %v7978
      %8011 = vst [vmem:[#allocation16 + $0x278] sm:$0xff] %v7979
      %8012 = vst [vmem:[#allocation16 + $0x298] sm:$0xff] %v7980
      %8013 = vst [vmem:[#allocation16 + $0x2b8] sm:$0xff] %v7981
      %8014 = vst [vmem:[#allocation16 + $0x2d8] sm:$0xff] %v7982
      %8015 = vst [vmem:[#allocation16 + $0x2f8] sm:$0xff] %v7983
      %8016 = vst [vmem:[#allocation16 + $0x318] sm:$0xff] %v7984
      %8017 = vst [vmem:[#allocation16 + $0x338] sm:$0xff] %v7985
      %8018 = vst [vmem:[#allocation16 + $0x358] sm:$0xff] %v7986
      %8019 = vst [vmem:[#allocation16 + $0x378] sm:$0xff] %v7987
      %8020 = vst [vmem:[#allocation16 + $0x398] sm:$0xff] %v7988
      %8021 = vst [vmem:[#allocation16 + $0x3b8] sm:$0xff] %v7989
      %8022 = vst [vmem:[#allocation16 + $0x3d8] sm:$0xff] %v7990
      %8023 = vst [vmem:[#allocation16 + $0x3f8] sm:$0xff] %v7991
      %v8024 = vmul.f32 %v7800, %v5642
      %v8025 = vmul.f32 %v7801, %v5643
      %v8026 = vmul.f32 %v7802, %v5644
      %v8027 = vmul.f32 %v7803, %v5645
      %v8028 = vmul.f32 %v7804, %v5646
      %v8029 = vmul.f32 %v7805, %v5647
      %v8030 = vmul.f32 %v7806, %v5648
      %v8031 = vmul.f32 %v7807, %v5649
      %v8032 = vmul.f32 %v7808, %v5650
      %v8033 = vmul.f32 %v7809, %v5651
      %v8034 = vmul.f32 %v7810, %v5652
      %v8035 = vmul.f32 %v7811, %v5653
      %v8036 = vmul.f32 %v7812, %v5654
      %v8037 = vmul.f32 %v7813, %v5655
      %v8038 = vmul.f32 %v7814, %v5656
      %v8039 = vmul.f32 %v7815, %v5657
      %v8040 = vmul.f32 %v7816, %v5658
      %v8041 = vmul.f32 %v7817, %v5659
      %v8042 = vmul.f32 %v7818, %v5660
      %v8043 = vmul.f32 %v7819, %v5661
      %v8044 = vmul.f32 %v7820, %v5662
      %v8045 = vmul.f32 %v7821, %v5663
      %v8046 = vmul.f32 %v7822, %v5664
      %v8047 = vmul.f32 %v7823, %v5665
      %v8048 = vmul.f32 %v7824, %v5666
      %v8049 = vmul.f32 %v7825, %v5667
      %v8050 = vmul.f32 %v7826, %v5668
      %v8051 = vmul.f32 %v7827, %v5669
      %v8052 = vmul.f32 %v7828, %v5670
      %v8053 = vmul.f32 %v7829, %v5671
      %v8054 = vmul.f32 %v7830, %v5672
      %v8055 = vmul.f32 %v7831, %v5673
      %8056 = vrot.lane.b32.xlu0 %v7800, 64
      %v8057 = vpop.permute.xlu0 %8056
      %8058 = vrot.lane.b32.xlu0 %v7801, 64
      %v8059 = vpop.permute.xlu0 %8058
      %8060 = vrot.lane.b32.xlu0 %v7802, 64
      %v8061 = vpop.permute.xlu0 %8060
      %8062 = vrot.lane.b32.xlu0 %v7803, 64
      %v8063 = vpop.permute.xlu0 %8062
      %8064 = vrot.lane.b32.xlu0 %v7804, 64
      %v8065 = vpop.permute.xlu0 %8064
      %8066 = vrot.lane.b32.xlu0 %v7805, 64
      %v8067 = vpop.permute.xlu0 %8066
      %8068 = vrot.lane.b32.xlu0 %v7806, 64
      %v8069 = vpop.permute.xlu0 %8068
      %8070 = vrot.lane.b32.xlu0 %v7807, 64
      %v8071 = vpop.permute.xlu0 %8070
      %8072 = vrot.lane.b32.xlu0 %v7808, 64
      %v8073 = vpop.permute.xlu0 %8072
      %8074 = vrot.lane.b32.xlu0 %v7809, 64
      %v8075 = vpop.permute.xlu0 %8074
      %8076 = vrot.lane.b32.xlu0 %v7810, 64
      %v8077 = vpop.permute.xlu0 %8076
      %8078 = vrot.lane.b32.xlu0 %v7811, 64
      %v8079 = vpop.permute.xlu0 %8078
      %8080 = vrot.lane.b32.xlu0 %v7812, 64
      %v8081 = vpop.permute.xlu0 %8080
      %8082 = vrot.lane.b32.xlu0 %v7813, 64
      %v8083 = vpop.permute.xlu0 %8082
      %8084 = vrot.lane.b32.xlu0 %v7814, 64
      %v8085 = vpop.permute.xlu0 %8084
      %8086 = vrot.lane.b32.xlu0 %v7815, 64
      %v8087 = vpop.permute.xlu0 %8086
      %8088 = vrot.lane.b32.xlu0 %v7816, 64
      %v8089 = vpop.permute.xlu0 %8088
      %8090 = vrot.lane.b32.xlu0 %v7817, 64
      %v8091 = vpop.permute.xlu0 %8090
      %8092 = vrot.lane.b32.xlu0 %v7818, 64
      %v8093 = vpop.permute.xlu0 %8092
      %8094 = vrot.lane.b32.xlu0 %v7819, 64
      %v8095 = vpop.permute.xlu0 %8094
      %8096 = vrot.lane.b32.xlu0 %v7820, 64
      %v8097 = vpop.permute.xlu0 %8096
      %8098 = vrot.lane.b32.xlu0 %v7821, 64
      %v8099 = vpop.permute.xlu0 %8098
      %8100 = vrot.lane.b32.xlu0 %v7822, 64
      %v8101 = vpop.permute.xlu0 %8100
      %8102 = vrot.lane.b32.xlu0 %v7823, 64
      %v8103 = vpop.permute.xlu0 %8102
      %8104 = vrot.lane.b32.xlu0 %v7824, 64
      %v8105 = vpop.permute.xlu0 %8104
      %8106 = vrot.lane.b32.xlu0 %v7825, 64
      %v8107 = vpop.permute.xlu0 %8106
      %8108 = vrot.lane.b32.xlu0 %v7826, 64
      %v8109 = vpop.permute.xlu0 %8108
      %8110 = vrot.lane.b32.xlu0 %v7827, 64
      %v8111 = vpop.permute.xlu0 %8110
      %8112 = vrot.lane.b32.xlu0 %v7828, 64
      %v8113 = vpop.permute.xlu0 %8112
      %8114 = vrot.lane.b32.xlu0 %v7829, 64
      %v8115 = vpop.permute.xlu0 %8114
      %8116 = vrot.lane.b32.xlu0 %v7830, 64
      %v8117 = vpop.permute.xlu0 %8116
      %8118 = vrot.lane.b32.xlu0 %v7831, 64
      %v8119 = vpop.permute.xlu0 %8118
      %v8120 = vmul.f32 %v8057, %v5674
      %v8121 = vmul.f32 %v8059, %v5675
      %v8122 = vmul.f32 %v8061, %v5676
      %v8123 = vmul.f32 %v8063, %v5677
      %v8124 = vmul.f32 %v8065, %v5678
      %v8125 = vmul.f32 %v8067, %v5679
      %v8126 = vmul.f32 %v8069, %v5680
      %v8127 = vmul.f32 %v8071, %v5681
      %v8128 = vmul.f32 %v8073, %v5682
      %v8129 = vmul.f32 %v8075, %v5683
      %v8130 = vmul.f32 %v8077, %v5684
      %v8131 = vmul.f32 %v8079, %v5685
      %v8132 = vmul.f32 %v8081, %v5686
      %v8133 = vmul.f32 %v8083, %v5687
      %v8134 = vmul.f32 %v8085, %v5688
      %v8135 = vmul.f32 %v8087, %v5689
      %v8136 = vmul.f32 %v8089, %v5690
      %v8137 = vmul.f32 %v8091, %v5691
      %v8138 = vmul.f32 %v8093, %v5692
      %v8139 = vmul.f32 %v8095, %v5693
      %v8140 = vmul.f32 %v8097, %v5694
      %v8141 = vmul.f32 %v8099, %v5695
      %v8142 = vmul.f32 %v8101, %v5696
      %v8143 = vmul.f32 %v8103, %v5697
      %v8144 = vmul.f32 %v8105, %v5698
      %v8145 = vmul.f32 %v8107, %v5699
      %v8146 = vmul.f32 %v8109, %v5700
      %v8147 = vmul.f32 %v8111, %v5701
      %v8148 = vmul.f32 %v8113, %v5702
      %v8149 = vmul.f32 %v8115, %v5703
      %v8150 = vmul.f32 %v8117, %v5704
      %v8151 = vmul.f32 %v8119, %v5705
      %v8152 = vadd.f32 %v8024, %v8120
      %v8153 = vadd.f32 %v8025, %v8121
      %v8154 = vadd.f32 %v8026, %v8122
      %v8155 = vadd.f32 %v8027, %v8123
      %v8156 = vadd.f32 %v8028, %v8124
      %v8157 = vadd.f32 %v8029, %v8125
      %v8158 = vadd.f32 %v8030, %v8126
      %v8159 = vadd.f32 %v8031, %v8127
      %v8160 = vadd.f32 %v8032, %v8128
      %v8161 = vadd.f32 %v8033, %v8129
      %v8162 = vadd.f32 %v8034, %v8130
      %v8163 = vadd.f32 %v8035, %v8131
      %v8164 = vadd.f32 %v8036, %v8132
      %v8165 = vadd.f32 %v8037, %v8133
      %v8166 = vadd.f32 %v8038, %v8134
      %v8167 = vadd.f32 %v8039, %v8135
      %v8168 = vadd.f32 %v8040, %v8136
      %v8169 = vadd.f32 %v8041, %v8137
      %v8170 = vadd.f32 %v8042, %v8138
      %v8171 = vadd.f32 %v8043, %v8139
      %v8172 = vadd.f32 %v8044, %v8140
      %v8173 = vadd.f32 %v8045, %v8141
      %v8174 = vadd.f32 %v8046, %v8142
      %v8175 = vadd.f32 %v8047, %v8143
      %v8176 = vadd.f32 %v8048, %v8144
      %v8177 = vadd.f32 %v8049, %v8145
      %v8178 = vadd.f32 %v8050, %v8146
      %v8179 = vadd.f32 %v8051, %v8147
      %v8180 = vadd.f32 %v8052, %v8148
      %v8181 = vadd.f32 %v8053, %v8149
      %v8182 = vadd.f32 %v8054, %v8150
      %v8183 = vadd.f32 %v8055, %v8151
      %8184 = vst [vmem:[#allocation17 + $0x18] sm:$0xff] %v8152
      %8185 = vst [vmem:[#allocation17 + $0x38] sm:$0xff] %v8153
      %8186 = vst [vmem:[#allocation17 + $0x58] sm:$0xff] %v8154
      %8187 = vst [vmem:[#allocation17 + $0x78] sm:$0xff] %v8155
      %8188 = vst [vmem:[#allocation17 + $0x98] sm:$0xff] %v8156
      %8189 = vst [vmem:[#allocation17 + $0xb8] sm:$0xff] %v8157
      %8190 = vst [vmem:[#allocation17 + $0xd8] sm:$0xff] %v8158
      %8191 = vst [vmem:[#allocation17 + $0xf8] sm:$0xff] %v8159
      %8192 = vst [vmem:[#allocation17 + $0x118] sm:$0xff] %v8160
      %8193 = vst [vmem:[#allocation17 + $0x138] sm:$0xff] %v8161
      %8194 = vst [vmem:[#allocation17 + $0x158] sm:$0xff] %v8162
      %8195 = vst [vmem:[#allocation17 + $0x178] sm:$0xff] %v8163
      %8196 = vst [vmem:[#allocation17 + $0x198] sm:$0xff] %v8164
      %8197 = vst [vmem:[#allocation17 + $0x1b8] sm:$0xff] %v8165
      %8198 = vst [vmem:[#allocation17 + $0x1d8] sm:$0xff] %v8166
      %8199 = vst [vmem:[#allocation17 + $0x1f8] sm:$0xff] %v8167
      %8200 = vst [vmem:[#allocation17 + $0x218] sm:$0xff] %v8168
      %8201 = vst [vmem:[#allocation17 + $0x238] sm:$0xff] %v8169
      %8202 = vst [vmem:[#allocation17 + $0x258] sm:$0xff] %v8170
      %8203 = vst [vmem:[#allocation17 + $0x278] sm:$0xff] %v8171
      %8204 = vst [vmem:[#allocation17 + $0x298] sm:$0xff] %v8172
      %8205 = vst [vmem:[#allocation17 + $0x2b8] sm:$0xff] %v8173
      %8206 = vst [vmem:[#allocation17 + $0x2d8] sm:$0xff] %v8174
      %8207 = vst [vmem:[#allocation17 + $0x2f8] sm:$0xff] %v8175
      %8208 = vst [vmem:[#allocation17 + $0x318] sm:$0xff] %v8176
      %8209 = vst [vmem:[#allocation17 + $0x338] sm:$0xff] %v8177
      %8210 = vst [vmem:[#allocation17 + $0x358] sm:$0xff] %v8178
      %8211 = vst [vmem:[#allocation17 + $0x378] sm:$0xff] %v8179
      %8212 = vst [vmem:[#allocation17 + $0x398] sm:$0xff] %v8180
      %8213 = vst [vmem:[#allocation17 + $0x3b8] sm:$0xff] %v8181
      %8214 = vst [vmem:[#allocation17 + $0x3d8] sm:$0xff] %v8182
      %8215 = vst [vmem:[#allocation17 + $0x3f8] sm:$0xff] %v8183
    $region69: #{tpu_custom_call.1} parent=1 // pred_fallthru
      _
    // Predicated region
    $region70: #{tpu_custom_call.1} parent=1 // pred_check
      _
    $region71: #{tpu_custom_call.1} parent=1 // pred_check_branch
      %8217 = sbr.rel (0) target = $region73
    $region72: #{tpu_custom_call.1} parent=1 // pred_region
      %s8219 = ssub.s32 16384, 16384
      %8220 = vsyncadd [#allocation7], %s8219
      %s8221 = sshll.u32 [#allocation16], 4
      %s8222 = int_to_ptr.vmem [resolvable:$true] %s8221
      %8227 = dma.vmem_to_hbm [thread:$0]  %s8222, 16384, %s9, [#allocation7], 512, 512, 32
    $region73: #{tpu_custom_call.1} parent=1 // pred_fallthru
      _
    // Predicated region
    $region74: #{tpu_custom_call.1} parent=1 // pred_check
      _
    $region75: #{tpu_custom_call.1} parent=1 // pred_check_branch
      %8229 = sbr.rel (0) target = $region77
    $region76: #{tpu_custom_call.1} parent=1 // pred_region
      %s8231 = ssub.s32 16384, 16384
      %8232 = vsyncadd [#allocation18], %s8231
      %s8233 = sshll.u32 [#allocation17], 4
      %s8234 = int_to_ptr.vmem [resolvable:$true] %s8233
      %8239 = dma.vmem_to_hbm [thread:$0]  %s8234, 16384, %s10, [#allocation18], 512, 512, 32
    $region77: #{tpu_custom_call.1} parent=1 // pred_fallthru
      _
    // Predicated region
    $region78: #{tpu_custom_call.1} parent=1 // pred_check
      _
    $region79: #{tpu_custom_call.1} parent=1 // pred_check_branch
      %8241 = sbr.rel (0) target = $region81
    $region80: #{tpu_custom_call.1} parent=1 // pred_region
      %s8243 = ssub.s32 16384, 16384
      %8244 = vsyncadd [#allocation18], %s8243
      %s8245 = sshll.u32 [#allocation19], 4
      %s8246 = int_to_ptr.vmem [resolvable:$true] %s8245
      %8251 = dma.vmem_to_hbm [thread:$0]  %s8246, 16384, %s11, [#allocation18], 512, 512, 32
    $region81: #{tpu_custom_call.1} parent=1 // pred_fallthru
      _
    // Predicated region
    $region82: #{tpu_custom_call.1} parent=1 // pred_check
      _
    $region83: #{tpu_custom_call.1} parent=1 // pred_check_branch
      %8253 = sbr.rel (0) target = $region85
    $region84: #{tpu_custom_call.1} parent=1 // pred_region
      %8254 = dma.done [#allocation7], 16384
    $region85: #{tpu_custom_call.1} parent=1 // pred_fallthru
      _
    // Predicated region
    $region86: #{tpu_custom_call.1} parent=1 // pred_check
      _
    $region87: #{tpu_custom_call.1} parent=1 // pred_check_branch
      %8256 = sbr.rel (0) target = $region89
    $region88: #{tpu_custom_call.1} parent=1 // pred_region
      %8257 = dma.done [#allocation18], 16384
    $region89: #{tpu_custom_call.1} parent=1 // pred_fallthru
      _
    // Predicated region
    $region90: #{tpu_custom_call.1} parent=1 // pred_check
      _
    $region91: #{tpu_custom_call.1} parent=1 // pred_check_branch
      %8259 = sbr.rel (0) target = $region93
    $region92: #{tpu_custom_call.1} parent=1 // pred_region
      %8260 = dma.done [#allocation18], 16384
    $region93: #{tpu_custom_call.1} parent=1 // pred_fallthru
      _
    %8261 = vsyncpa [#allocation6], 1
    %8262 = vsyncpa [#allocation9], 1
    %8263 = vsyncpa [#allocation12], 1
    %8264 = vsyncpa [#allocation15], 1
    %8265 = vsyncpa [#allocation7], 1
    %8266 = vsyncpa [#allocation18], 1

</llo_original>
